<compile_context>
chip_gen: v7x
topology: tpu7x:2x2x1
jax: 0.10.0
libtpu: 0.0.40
codegen_flags: <defaults>
</compile_context>

<pallas_src>
import jax
import jax.numpy as jnp
from jax.experimental import pallas as pl
from jax.experimental.pallas import tpu as pltpu


def _round_up(x, m):
    return (x + m - 1) // m * m


# ---------------------------------------------------------------------------
# Pallas kernel 1: fused conv-as-matmul + bias + ReLU + 2x2 maxpool
# ---------------------------------------------------------------------------
def _conv_relu_pool_kernel(x_ref, w_ref, b_ref, o_ref):
    # x_ref: (4, TM, K) bf16 im2col patches, 2x2-window-element-major.
    # w_ref: (K, C) bf16 ; b_ref: (1, C) f32 ; o_ref: (TM, C) bf16.
    nw, tm, k = x_ref.shape
    c = w_ref.shape[1]
    # Collapse the 4 window positions into the M dim: one MXU pass per tile
    # (single RHS push) instead of four small matmuls.  TM % 16 == 0, so the
    # reshape is a layout-preserving leading-dim merge.
    x = x_ref[...].reshape(nw * tm, k)
    acc = jnp.dot(x, w_ref[...], preferred_element_type=jnp.float32)
    acc = jnp.maximum(acc + b_ref[...], 0.0)                 # bias + ReLU in f32
    # 2x2 maxpool = max over the 4 window groups (pure VPU elementwise max).
    pooled = jnp.max(acc.reshape(nw, tm, c), axis=0)
    o_ref[...] = pooled.astype(o_ref.dtype)


def conv_relu_pool(cols, w, b, *, tm_max=512):
    """cols: (4, M, K) bf16; w: (K, C) bf16; b: (C,) f32 -> (M, C) bf16."""
    _, m, k = cols.shape
    c = w.shape[1]
    tm = _round_up(m, 16) if m <= tm_max else tm_max
    mp = _round_up(m, tm)
    if mp != m:
        cols = jnp.pad(cols, ((0, 0), (0, mp - m), (0, 0)))
    out = pl.pallas_call(
        _conv_relu_pool_kernel,
        out_shape=jax.ShapeDtypeStruct((mp, c), jnp.bfloat16),
        grid=(mp // tm,),
        in_specs=[
            pl.BlockSpec((4, tm, k), lambda i: (0, i, 0)),   # pipelined row tiles
            pl.BlockSpec((k, c), lambda i: (0, 0)),          # weights resident
            pl.BlockSpec((1, c), lambda i: (0, 0)),          # bias resident
        ],
        out_specs=pl.BlockSpec((tm, c), lambda i: (i, 0)),
        compiler_params=pltpu.CompilerParams(
            dimension_semantics=("parallel",),
            vmem_limit_bytes=32 * 1024 * 1024,
        ),
    )(cols, w, b.reshape(1, c))
    return out[:m] if mp != m else out


# ---------------------------------------------------------------------------
# Pallas kernel 2: fused fc1+ReLU+fc2+ReLU+fc3+log_softmax
# ---------------------------------------------------------------------------
def _fc_tail_kernel(x_ref, w3_ref, b3_ref, w4_ref, b4_ref, w5_ref, b5_ref, o_ref):
    h = jnp.dot(x_ref[...], w3_ref[...], preferred_element_type=jnp.float32)
    h = jnp.maximum(h + b3_ref[...], 0.0)
    h = jnp.dot(h.astype(jnp.bfloat16), w4_ref[...], preferred_element_type=jnp.float32)
    h = jnp.maximum(h + b4_ref[...], 0.0)
    logits = jnp.dot(h.astype(jnp.bfloat16), w5_ref[...], preferred_element_type=jnp.float32)
    logits = logits + b5_ref[...]                 # pad classes carry bias -1e30
    m = jnp.max(logits, axis=-1, keepdims=True)
    z = logits - m
    lse = jnp.log(jnp.sum(jnp.exp(z), axis=-1, keepdims=True))
    o_ref[...] = (z - lse).astype(o_ref.dtype)


def fc_tail(x, w3, b3, w4, b4, w5, b5, *, tb_max=256):
    """x: (N, 1600) bf16 (NHWC-flatten order) -> (N, 128) f32 log-probs."""
    n, k = x.shape
    c = w5.shape[1]                               # 128 (padded classes)
    tb = _round_up(n, 16) if n <= tb_max else tb_max
    np_ = _round_up(n, tb)
    if np_ != n:
        x = jnp.pad(x, ((0, np_ - n), (0, 0)))
    out = pl.pallas_call(
        _fc_tail_kernel,
        out_shape=jax.ShapeDtypeStruct((np_, c), jnp.float32),
        grid=(np_ // tb,),
        in_specs=[
            pl.BlockSpec((tb, k), lambda i: (i, 0)),
            pl.BlockSpec(w3.shape, lambda i: (0, 0)),
            pl.BlockSpec((1, b3.shape[0]), lambda i: (0, 0)),
            pl.BlockSpec(w4.shape, lambda i: (0, 0)),
            pl.BlockSpec((1, b4.shape[0]), lambda i: (0, 0)),
            pl.BlockSpec(w5.shape, lambda i: (0, 0)),
            pl.BlockSpec((1, b5.shape[0]), lambda i: (0, 0)),
        ],
        out_specs=pl.BlockSpec((tb, c), lambda i: (i, 0)),
        compiler_params=pltpu.CompilerParams(
            dimension_semantics=("parallel",),
            vmem_limit_bytes=32 * 1024 * 1024,
        ),
    )(x, w3, b3.reshape(1, -1), w4, b4.reshape(1, -1), w5, b5.reshape(1, -1))
    return out[:n] if np_ != n else out


# ---------------------------------------------------------------------------
# XLA glue: im2col arranged for the fused conv+pool kernel
# ---------------------------------------------------------------------------
def im2col_pooled(x, k):
    """x: (N,H,W,C) NHWC -> (4, N*Po*Qo, k*k*C), 2x2-window-element-major.

    Feature ordering per row is [(ki,kj) outer, C inner], matching the
    (kh,kw,Cin,Cout) weight reshape in prepare_params."""
    n, h, w, c = x.shape
    ho, wo = h - k + 1, w - k + 1
    po, qo = ho // 2, wo // 2
    cols = []
    for i in range(k):
        for j in range(k):
            cols.append(x[:, i:i + ho, j:j + wo, :])     # (N, Ho, Wo, C)
    patches = jnp.stack(cols, axis=3)                    # (N, Ho, Wo, k*k, C)
    patches = patches.reshape(n, ho, wo, k * k * c)
    # group each 2x2 pooling window: (N,Po,2,Qo,2,K) -> (2,2,N,Po,Qo,K)
    patches = patches.reshape(n, po, 2, qo, 2, k * k * c)
    patches = patches.transpose(2, 4, 0, 1, 3, 5)
    return patches.reshape(4, n * po * qo, k * k * c), (n, po, qo)


# ---------------------------------------------------------------------------
# Parameters: PyTorch-layout init + one-time conversion to kernel layouts
# ---------------------------------------------------------------------------
def _uniform(key, shape, fan_in):
    bound = 1.0 / jnp.sqrt(jnp.float32(fan_in))
    return jax.random.uniform(key, shape, jnp.float32, minval=-bound, maxval=bound)


def init_params(key):
    """Parameters in the PyTorch module's native layouts."""
    ks = jax.random.split(key, 10)
    p = {}
    p["w1"] = _uniform(ks[0], (64, 3, 5, 5), 3 * 5 * 5)     # Conv2d(3, 64, 5)
    p["b1"] = _uniform(ks[1], (64,), 3 * 5 * 5)
    p["w2"] = _uniform(ks[2], (64, 64, 5, 5), 64 * 5 * 5)   # Conv2d(64, 64, 5)
    p["b2"] = _uniform(ks[3], (64,), 64 * 5 * 5)
    p["w3"] = _uniform(ks[4], (1600, 384), 1600)            # Linear(1600, 384)
    p["b3"] = _uniform(ks[5], (384,), 1600)
    p["w4"] = _uniform(ks[6], (384, 192), 384)              # Linear(384, 192)
    p["b4"] = _uniform(ks[7], (192,), 384)
    p["w5"] = _uniform(ks[8], (192, 100), 192)              # Linear(192, 100)
    p["b5"] = _uniform(ks[9], (100,), 192)
    return p


def prepare_params(p):
    """One-time (outside jit) conversion to kernel-ready layouts/dtypes."""
    def conv_w(w_oihw):                       # (Cout,Cin,kh,kw) -> (kh*kw*Cin, Cout)
        cout, cin, kh, kw = w_oihw.shape
        return jnp.transpose(w_oihw, (2, 3, 1, 0)).reshape(kh * kw * cin, cout)

    w1 = jnp.pad(conv_w(p["w1"]), ((0, 128 - 75), (0, 0)))      # K: 75 -> 128
    w2 = conv_w(p["w2"])                                         # (1600, 64)
    # fc1: permute rows from PyTorch NCHW-flatten order (c,h,w) to our NHWC
    # flatten order (h,w,c) so no runtime transpose of the activation is needed.
    w3 = p["w3"].reshape(64, 5, 5, 384).transpose(1, 2, 0, 3).reshape(1600, 384)
    # fc3: pad classes 100 -> 128 lanes; pad biases with -1e30 so the padded
    # logits vanish under log_softmax (exp underflows to 0).
    w5 = jnp.pad(p["w5"], ((0, 0), (0, 28)))
    b5 = jnp.pad(p["b5"], ((0, 28),), constant_values=-1e30)

    return {
        "w1": w1.astype(jnp.bfloat16), "b1": p["b1"].astype(jnp.float32),
        "w2": w2.astype(jnp.bfloat16), "b2": p["b2"].astype(jnp.float32),
        "w3": w3.astype(jnp.bfloat16), "b3": p["b3"].astype(jnp.float32),
        "w4": p["w4"].astype(jnp.bfloat16), "b4": p["b4"].astype(jnp.float32),
        "w5": w5.astype(jnp.bfloat16), "b5": b5.astype(jnp.float32),
    }


# ---------------------------------------------------------------------------
# Forward pass (matches LeNet5.forward semantics)
# ---------------------------------------------------------------------------
def lenet5_forward(kp, x_nchw):
    # NCHW -> NHWC, cast to bf16 up front so im2col glue moves half the bytes.
    x = jnp.transpose(x_nchw, (0, 2, 3, 1)).astype(jnp.bfloat16)

    # conv1 + ReLU + 2x2 maxpool (single fused kernel)
    cols, (n, po, qo) = im2col_pooled(x, 5)                       # (4, N*196, 75)
    cols = jnp.pad(cols, ((0, 0), (0, 0), (0, 128 - 75)))         # K 75 -> 128
    y = conv_relu_pool(cols, kp["w1"], kp["b1"])
    y = y.reshape(n, po, qo, 64)                                  # (N,14,14,64) bf16

    # conv2 + ReLU + 2x2 maxpool (single fused kernel)
    cols, (n, po, qo) = im2col_pooled(y, 5)                       # (4, N*25, 1600)
    y = conv_relu_pool(cols, kp["w2"], kp["b2"])                  # (N*25, 64) bf16

    # flatten in NHWC order (fc1 weights were pre-permuted to match),
    # then fused fc1+ReLU+fc2+ReLU+fc3+log_softmax.
    y = y.reshape(n, po * qo * 64)                                # (N, 1600) bf16
    out = fc_tail(y, kp["w3"], kp["b3"], kp["w4"], kp["b4"], kp["w5"], kp["b5"])
    return out[:, :100]                                           # drop padded classes


if __name__ == "__main__":
    key = jax.random.PRNGKey(0)
    pkey, xkey = jax.random.split(key)

    params = prepare_params(init_params(pkey))
    # fc input 64*5*5 implies 32x32 images; batch = 2.
    x = jax.random.normal(xkey, (2, 3, 32, 32), jnp.float32)

    out = jax.jit(lenet5_forward)(params, x)
    out = jax.block_until_ready(out)

    assert out.shape == (2, 100), out.shape
    # log-softmax rows must exponentiate-sum to 1
    row_sums = jnp.exp(out).sum(axis=1)
    assert bool(jnp.all(jnp.abs(row_sums - 1.0) < 1e-3)), row_sums

    print("KERNEL_OK")
</pallas_src>

<mosaic_0001>
module attributes {stable_mosaic.version = 11 : i64} {
  func.func @_conv_relu_pool_kernel(%arg0: i32, %arg1: memref<4x400x128xbf16, #tpu.memory_space<vmem>>, %arg2: memref<128x64xbf16, #tpu.memory_space<vmem>>, %arg3: memref<1x64xf32, #tpu.memory_space<vmem>>, %arg4: memref<400x64xbf16, #tpu.memory_space<vmem>>) attributes {dimension_semantics = [#tpu.dimension_semantics<parallel>], iteration_bounds = array<i64: 1>, scalar_prefetch = 0 : i64, scratch_operands = 0 : i64, tpu.core_type = #tpu.core_type<tc>, window_params = [{transform_indices = @transform_0, window_bounds = array<i64: 4, 400, 128>}, {pipeline_mode = #tpu.pipeline_mode<synchronous>, transform_indices = @transform_1, window_bounds = array<i64: 128, 64>}, {pipeline_mode = #tpu.pipeline_mode<synchronous>, transform_indices = @transform_2, window_bounds = array<i64: 1, 64>}, {transform_indices = @transform_3, window_bounds = array<i64: 400, 64>}]} {
    %c0 = arith.constant 0 : index
    %c0_0 = arith.constant 0 : index
    %c0_1 = arith.constant 0 : index
    %0 = vector.load %arg1[%c0, %c0_0, %c0_1] : memref<4x400x128xbf16, #tpu.memory_space<vmem>>, vector<4x400x128xbf16>
    %1 = vector.shape_cast %0 : vector<4x400x128xbf16> to vector<1600x128xbf16>
    %c0_2 = arith.constant 0 : index
    %c0_3 = arith.constant 0 : index
    %2 = vector.load %arg2[%c0_2, %c0_3] : memref<128x64xbf16, #tpu.memory_space<vmem>>, vector<128x64xbf16>
    %cst = arith.constant dense<0.000000e+00> : vector<1600x64xf32>
    %3 = tpu.matmul %1, %2, %cst {dimension_numbers = #tpu.dot_dimension_numbers<[1], [0], [0], [1], [0, 0, 1, 1], [], []>} : vector<1600x128xbf16>, vector<128x64xbf16>, vector<1600x64xf32> -> vector<1600x64xf32>
    %c0_4 = arith.constant 0 : index
    %c0_5 = arith.constant 0 : index
    %4 = vector.load %arg3[%c0_4, %c0_5] : memref<1x64xf32, #tpu.memory_space<vmem>>, vector<1x64xf32>
    %5 = vector.broadcast %4 : vector<1x64xf32> to vector<1600x64xf32>
    %6 = arith.addf %3, %5 : vector<1600x64xf32>
    %cst_6 = arith.constant 0.000000e+00 : f32
    %7 = vector.broadcast %cst_6 : f32 to vector<1600x64xf32>
    %8 = arith.maximumf %6, %7 : vector<1600x64xf32>
    %9 = vector.shape_cast %8 : vector<1600x64xf32> to vector<4x400x64xf32>
    %cst_7 = arith.constant dense<0xFF800000> : vector<400x64xf32>
    %10 = vector.multi_reduction <maximumf>, %9, %cst_7 [0] : vector<4x400x64xf32> to vector<400x64xf32>
    %11 = arith.truncf %10 : vector<400x64xf32> to vector<400x64xbf16>
    %c0_8 = arith.constant 0 : index
    %c0_9 = arith.constant 0 : index
    %12 = vector.load %arg4[%c0_8, %c0_9] : memref<400x64xbf16, #tpu.memory_space<vmem>>, vector<400x64xbf16>
    tpu.vector_store %arg4[%c0_8, %c0_9], %11 {strides = array<i32>} : memref<400x64xbf16, #tpu.memory_space<vmem>>, vector<400x64xbf16>,
    return
  }
  func.func @transform_0(%arg0: i32) -> (i32, i32, i32) {
    %c0_i32 = arith.constant 0 : i32
    %c0_i32_0 = arith.constant 0 : i32
    %c0_i32_1 = arith.constant 0 : i32
    return %c0_i32, %arg0, %c0_i32_0 : i32, i32, i32
  }
  func.func @transform_1(%arg0: i32) -> (i32, i32) {
    %c0_i32 = arith.constant 0 : i32
    %c0_i32_0 = arith.constant 0 : i32
    %c0_i32_1 = arith.constant 0 : i32
    return %c0_i32, %c0_i32_0 : i32, i32
  }
  func.func @transform_2(%arg0: i32) -> (i32, i32) {
    %c0_i32 = arith.constant 0 : i32
    %c0_i32_0 = arith.constant 0 : i32
    %c0_i32_1 = arith.constant 0 : i32
    return %c0_i32, %c0_i32_0 : i32, i32
  }
  func.func @transform_3(%arg0: i32) -> (i32, i32) {
    %c0_i32 = arith.constant 0 : i32
    %c0_i32_0 = arith.constant 0 : i32
    return %arg0, %c0_i32 : i32, i32
  }
}

module attributes {stable_mosaic.version = 11 : i64} {
  func.func @_conv_relu_pool_kernel(%arg0: i32, %arg1: memref<4x64x1600xbf16, #tpu.memory_space<vmem>>, %arg2: memref<1600x64xbf16, #tpu.memory_space<vmem>>, %arg3: memref<1x64xf32, #tpu.memory_space<vmem>>, %arg4: memref<64x64xbf16, #tpu.memory_space<vmem>>) attributes {dimension_semantics = [#tpu.dimension_semantics<parallel>], iteration_bounds = array<i64: 1>, scalar_prefetch = 0 : i64, scratch_operands = 0 : i64, tpu.core_type = #tpu.core_type<tc>, window_params = [{transform_indices = @transform_0, window_bounds = array<i64: 4, 64, 1600>}, {pipeline_mode = #tpu.pipeline_mode<synchronous>, transform_indices = @transform_1, window_bounds = array<i64: 1600, 64>}, {pipeline_mode = #tpu.pipeline_mode<synchronous>, transform_indices = @transform_2, window_bounds = array<i64: 1, 64>}, {transform_indices = @transform_3, window_bounds = array<i64: 64, 64>}]} {
    %c0 = arith.constant 0 : index
    %c0_0 = arith.constant 0 : index
    %c0_1 = arith.constant 0 : index
    %0 = vector.load %arg1[%c0, %c0_0, %c0_1] : memref<4x64x1600xbf16, #tpu.memory_space<vmem>>, vector<4x64x1600xbf16>
    %1 = vector.shape_cast %0 : vector<4x64x1600xbf16> to vector<256x1600xbf16>
    %c0_2 = arith.constant 0 : index
    %c0_3 = arith.constant 0 : index
    %2 = vector.load %arg2[%c0_2, %c0_3] : memref<1600x64xbf16, #tpu.memory_space<vmem>>, vector<1600x64xbf16>
    %cst = arith.constant dense<0.000000e+00> : vector<256x64xf32>
    %3 = tpu.matmul %1, %2, %cst {dimension_numbers = #tpu.dot_dimension_numbers<[1], [0], [0], [1], [0, 0, 1, 1], [], []>} : vector<256x1600xbf16>, vector<1600x64xbf16>, vector<256x64xf32> -> vector<256x64xf32>
    %c0_4 = arith.constant 0 : index
    %c0_5 = arith.constant 0 : index
    %4 = vector.load %arg3[%c0_4, %c0_5] : memref<1x64xf32, #tpu.memory_space<vmem>>, vector<1x64xf32>
    %5 = vector.broadcast %4 : vector<1x64xf32> to vector<256x64xf32>
    %6 = arith.addf %3, %5 : vector<256x64xf32>
    %cst_6 = arith.constant 0.000000e+00 : f32
    %7 = vector.broadcast %cst_6 : f32 to vector<256x64xf32>
    %8 = arith.maximumf %6, %7 : vector<256x64xf32>
    %9 = vector.shape_cast %8 : vector<256x64xf32> to vector<4x64x64xf32>
    %cst_7 = arith.constant dense<0xFF800000> : vector<64x64xf32>
    %10 = vector.multi_reduction <maximumf>, %9, %cst_7 [0] : vector<4x64x64xf32> to vector<64x64xf32>
    %11 = arith.truncf %10 : vector<64x64xf32> to vector<64x64xbf16>
    %c0_8 = arith.constant 0 : index
    %c0_9 = arith.constant 0 : index
    %12 = vector.load %arg4[%c0_8, %c0_9] : memref<64x64xbf16, #tpu.memory_space<vmem>>, vector<64x64xbf16>
    tpu.vector_store %arg4[%c0_8, %c0_9], %11 {strides = array<i32>} : memref<64x64xbf16, #tpu.memory_space<vmem>>, vector<64x64xbf16>,
    return
  }
  func.func @transform_0(%arg0: i32) -> (i32, i32, i32) {
    %c0_i32 = arith.constant 0 : i32
    %c0_i32_0 = arith.constant 0 : i32
    %c0_i32_1 = arith.constant 0 : i32
    return %c0_i32, %arg0, %c0_i32_0 : i32, i32, i32
  }
  func.func @transform_1(%arg0: i32) -> (i32, i32) {
    %c0_i32 = arith.constant 0 : i32
    %c0_i32_0 = arith.constant 0 : i32
    %c0_i32_1 = arith.constant 0 : i32
    return %c0_i32, %c0_i32_0 : i32, i32
  }
  func.func @transform_2(%arg0: i32) -> (i32, i32) {
    %c0_i32 = arith.constant 0 : i32
    %c0_i32_0 = arith.constant 0 : i32
    %c0_i32_1 = arith.constant 0 : i32
    return %c0_i32, %c0_i32_0 : i32, i32
  }
  func.func @transform_3(%arg0: i32) -> (i32, i32) {
    %c0_i32 = arith.constant 0 : i32
    %c0_i32_0 = arith.constant 0 : i32
    return %arg0, %c0_i32 : i32, i32
  }
}

module attributes {stable_mosaic.version = 11 : i64} {
  func.func @_fc_tail_kernel(%arg0: i32, %arg1: memref<16x1600xbf16, #tpu.memory_space<vmem>>, %arg2: memref<1600x384xbf16, #tpu.memory_space<vmem>>, %arg3: memref<1x384xf32, #tpu.memory_space<vmem>>, %arg4: memref<384x192xbf16, #tpu.memory_space<vmem>>, %arg5: memref<1x192xf32, #tpu.memory_space<vmem>>, %arg6: memref<192x128xbf16, #tpu.memory_space<vmem>>, %arg7: memref<1x128xf32, #tpu.memory_space<vmem>>, %arg8: memref<16x128xf32, #tpu.memory_space<vmem>>) attributes {dimension_semantics = [#tpu.dimension_semantics<parallel>], iteration_bounds = array<i64: 1>, scalar_prefetch = 0 : i64, scratch_operands = 0 : i64, tpu.core_type = #tpu.core_type<tc>, window_params = [{transform_indices = @transform_0, window_bounds = array<i64: 16, 1600>}, {pipeline_mode = #tpu.pipeline_mode<synchronous>, transform_indices = @transform_1, window_bounds = array<i64: 1600, 384>}, {pipeline_mode = #tpu.pipeline_mode<synchronous>, transform_indices = @transform_2, window_bounds = array<i64: 1, 384>}, {pipeline_mode = #tpu.pipeline_mode<synchronous>, transform_indices = @transform_3, window_bounds = array<i64: 384, 192>}, {pipeline_mode = #tpu.pipeline_mode<synchronous>, transform_indices = @transform_4, window_bounds = array<i64: 1, 192>}, {pipeline_mode = #tpu.pipeline_mode<synchronous>, transform_indices = @transform_5, window_bounds = array<i64: 192, 128>}, {pipeline_mode = #tpu.pipeline_mode<synchronous>, transform_indices = @transform_6, window_bounds = array<i64: 1, 128>}, {transform_indices = @transform_7, window_bounds = array<i64: 16, 128>}]} {
    %c0 = arith.constant 0 : index
    %c0_0 = arith.constant 0 : index
    %0 = vector.load %arg1[%c0, %c0_0] : memref<16x1600xbf16, #tpu.memory_space<vmem>>, vector<16x1600xbf16>
    %c0_1 = arith.constant 0 : index
    %c0_2 = arith.constant 0 : index
    %1 = vector.load %arg2[%c0_1, %c0_2] : memref<1600x384xbf16, #tpu.memory_space<vmem>>, vector<1600x384xbf16>
    %cst = arith.constant dense<0.000000e+00> : vector<16x384xf32>
    %2 = tpu.matmul %0, %1, %cst {dimension_numbers = #tpu.dot_dimension_numbers<[1], [0], [0], [1], [0, 0, 1, 1], [], []>} : vector<16x1600xbf16>, vector<1600x384xbf16>, vector<16x384xf32> -> vector<16x384xf32>
    %c0_3 = arith.constant 0 : index
    %c0_4 = arith.constant 0 : index
    %3 = vector.load %arg3[%c0_3, %c0_4] : memref<1x384xf32, #tpu.memory_space<vmem>>, vector<1x384xf32>
    %4 = vector.broadcast %3 : vector<1x384xf32> to vector<16x384xf32>
    %5 = arith.addf %2, %4 : vector<16x384xf32>
    %cst_5 = arith.constant 0.000000e+00 : f32
    %6 = vector.broadcast %cst_5 : f32 to vector<16x384xf32>
    %7 = arith.maximumf %5, %6 : vector<16x384xf32>
    %8 = arith.truncf %7 : vector<16x384xf32> to vector<16x384xbf16>
    %c0_6 = arith.constant 0 : index
    %c0_7 = arith.constant 0 : index
    %9 = vector.load %arg4[%c0_6, %c0_7] : memref<384x192xbf16, #tpu.memory_space<vmem>>, vector<384x192xbf16>
    %cst_8 = arith.constant dense<0.000000e+00> : vector<16x192xf32>
    %10 = tpu.matmul %8, %9, %cst_8 {dimension_numbers = #tpu.dot_dimension_numbers<[1], [0], [0], [1], [0, 0, 1, 1], [], []>} : vector<16x384xbf16>, vector<384x192xbf16>, vector<16x192xf32> -> vector<16x192xf32>
    %c0_9 = arith.constant 0 : index
    %c0_10 = arith.constant 0 : index
    %11 = vector.load %arg5[%c0_9, %c0_10] : memref<1x192xf32, #tpu.memory_space<vmem>>, vector<1x192xf32>
    %12 = vector.broadcast %11 : vector<1x192xf32> to vector<16x192xf32>
    %13 = arith.addf %10, %12 : vector<16x192xf32>
    %cst_11 = arith.constant 0.000000e+00 : f32
    %14 = vector.broadcast %cst_11 : f32 to vector<16x192xf32>
    %15 = arith.maximumf %13, %14 : vector<16x192xf32>
    %16 = arith.truncf %15 : vector<16x192xf32> to vector<16x192xbf16>
    %c0_12 = arith.constant 0 : index
    %c0_13 = arith.constant 0 : index
    %17 = vector.load %arg6[%c0_12, %c0_13] : memref<192x128xbf16, #tpu.memory_space<vmem>>, vector<192x128xbf16>
    %cst_14 = arith.constant dense<0.000000e+00> : vector<16x128xf32>
    %18 = tpu.matmul %16, %17, %cst_14 {dimension_numbers = #tpu.dot_dimension_numbers<[1], [0], [0], [1], [0, 0, 1, 1], [], []>} : vector<16x192xbf16>, vector<192x128xbf16>, vector<16x128xf32> -> vector<16x128xf32>
    %c0_15 = arith.constant 0 : index
    %c0_16 = arith.constant 0 : index
    %19 = vector.load %arg7[%c0_15, %c0_16] : memref<1x128xf32, #tpu.memory_space<vmem>>, vector<1x128xf32>
    %20 = vector.broadcast %19 : vector<1x128xf32> to vector<16x128xf32>
    %21 = arith.addf %18, %20 : vector<16x128xf32>
    %cst_17 = arith.constant dense<0xFF800000> : vector<16xf32>
    %22 = vector.multi_reduction <maximumf>, %21, %cst_17 [1] : vector<16x128xf32> to vector<16xf32>
    %23 = vector.shape_cast %22 : vector<16xf32> to vector<16x1xf32>
    %24 = vector.broadcast %23 : vector<16x1xf32> to vector<16x128xf32>
    %25 = arith.subf %21, %24 : vector<16x128xf32>
    %26 = math.exp %25 : vector<16x128xf32>
    %cst_18 = arith.constant dense<0.000000e+00> : vector<16xf32>
    %27 = vector.multi_reduction <add>, %26, %cst_18 [1] : vector<16x128xf32> to vector<16xf32>
    %28 = vector.shape_cast %27 : vector<16xf32> to vector<16x1xf32>
    %29 = math.log %28 : vector<16x1xf32>
    %30 = vector.broadcast %29 : vector<16x1xf32> to vector<16x128xf32>
    %31 = arith.subf %25, %30 : vector<16x128xf32>
    %c0_19 = arith.constant 0 : index
    %c0_20 = arith.constant 0 : index
    %32 = vector.load %arg8[%c0_19, %c0_20] : memref<16x128xf32, #tpu.memory_space<vmem>>, vector<16x128xf32>
    tpu.vector_store %arg8[%c0_19, %c0_20], %31 {strides = array<i32>} : memref<16x128xf32, #tpu.memory_space<vmem>>, vector<16x128xf32>,
    return
  }
  func.func @transform_0(%arg0: i32) -> (i32, i32) {
    %c0_i32 = arith.constant 0 : i32
    %c0_i32_0 = arith.constant 0 : i32
    return %arg0, %c0_i32 : i32, i32
  }
  func.func @transform_1(%arg0: i32) -> (i32, i32) {
    %c0_i32 = arith.constant 0 : i32
    %c0_i32_0 = arith.constant 0 : i32
    %c0_i32_1 = arith.constant 0 : i32
    return %c0_i32, %c0_i32_0 : i32, i32
  }
  func.func @transform_2(%arg0: i32) -> (i32, i32) {
    %c0_i32 = arith.constant 0 : i32
    %c0_i32_0 = arith.constant 0 : i32
    %c0_i32_1 = arith.constant 0 : i32
    return %c0_i32, %c0_i32_0 : i32, i32
  }
  func.func @transform_3(%arg0: i32) -> (i32, i32) {
    %c0_i32 = arith.constant 0 : i32
    %c0_i32_0 = arith.constant 0 : i32
    %c0_i32_1 = arith.constant 0 : i32
    return %c0_i32, %c0_i32_0 : i32, i32
  }
  func.func @transform_4(%arg0: i32) -> (i32, i32) {
    %c0_i32 = arith.constant 0 : i32
    %c0_i32_0 = arith.constant 0 : i32
    %c0_i32_1 = arith.constant 0 : i32
    return %c0_i32, %c0_i32_0 : i32, i32
  }
  func.func @transform_5(%arg0: i32) -> (i32, i32) {
    %c0_i32 = arith.constant 0 : i32
    %c0_i32_0 = arith.constant 0 : i32
    %c0_i32_1 = arith.constant 0 : i32
    return %c0_i32, %c0_i32_0 : i32, i32
  }
  func.func @transform_6(%arg0: i32) -> (i32, i32) {
    %c0_i32 = arith.constant 0 : i32
    %c0_i32_0 = arith.constant 0 : i32
    %c0_i32_1 = arith.constant 0 : i32
    return %c0_i32, %c0_i32_0 : i32, i32
  }
  func.func @transform_7(%arg0: i32) -> (i32, i32) {
    %c0_i32 = arith.constant 0 : i32
    %c0_i32_0 = arith.constant 0 : i32
    return %arg0, %c0_i32 : i32, i32
  }
}

</mosaic_0001>

<llo_original>
// kernel: lenet5_forward.3
$region0: #{lenet5_forward.3}
  #allocation0 [shape = 'u32[]', space=smem, size = 0x4, offset = 0x4, fixed_abs, tag = 'smem constant byte address 0x4 - core index']
  #allocation1 [shape = 'u32[144,128]{1,0:T(1,128)}', space=vmem, size = 0x12000, scoped, tag = 'internal scratch']
  %s0 = inlined_call_operand.vmem [shape: bf16[4,400,128], index: 0, kind: input, shape index: {}]
  %s1 = inlined_call_operand.vmem [shape: bf16[128,64], index: 1, kind: input, shape index: {}]
  %s2 = inlined_call_operand.vmem [shape: f32[1,64], index: 2, kind: input, shape index: {}]
  %s3 = inlined_call_operand.vmem [shape: bf16[400,64], index: 3, kind: output, shape index: {}]
  %s4 = sld [smem:[#allocation0]]
  $region22: #{lenet5_forward.3} parent=0
    _
  %s6 = ssub.s32 1, %s4
  %s7 = scalar_select 0, %s6, %s4
  // Predicated region
  $region2: #{lenet5_forward.3} parent=0 // pred_check
    _
  $region3: #{lenet5_forward.3} parent=0 // pred_check_branch
    %9 = sbr.rel (0) target = $region5
  $region4: #{lenet5_forward.3} parent=0 // pred_region
    _
  $region5: #{lenet5_forward.3} parent=0 // pred_fallthru
    _
  // Predicated region
  $region6: #{lenet5_forward.3} parent=0 // pred_check
    _
  $region7: #{lenet5_forward.3} parent=0 // pred_check_branch
    %11 = sbr.rel (0) target = $region9
  $region8: #{lenet5_forward.3} parent=0 // pred_region
    _
  $region9: #{lenet5_forward.3} parent=0 // pred_fallthru
    _
  // Predicated region
  $region10: #{lenet5_forward.3} parent=0 // pred_check
    _
  $region11: #{lenet5_forward.3} parent=0 // pred_check_branch
    %13 = sbr.rel (0) target = $region13
  $region12: #{lenet5_forward.3} parent=0 // pred_region
    _
  $region13: #{lenet5_forward.3} parent=0 // pred_fallthru
    _
  %v15 = vld [vmem:[%s0] sm:$0xf]
  %v16 = vld [vmem:[%s0 + $0x4] sm:$0xf]
  %v17 = vld [vmem:[%s0 + $0x8] sm:$0xf]
  %v18 = vld [vmem:[%s0 + $0xc] sm:$0xf]
  %v19 = vld [vmem:[%s0 + $0x10] sm:$0xf]
  %v20 = vld [vmem:[%s0 + $0x14] sm:$0xf]
  %v21 = vld [vmem:[%s0 + $0x18] sm:$0xf]
  %v22 = vld [vmem:[%s0 + $0x1c] sm:$0xf]
  %v23 = vld [vmem:[%s0 + $0x20] sm:$0xf]
  %v24 = vld [vmem:[%s0 + $0x24] sm:$0xf]
  %v25 = vld [vmem:[%s0 + $0x28] sm:$0xf]
  %v26 = vld [vmem:[%s0 + $0x2c] sm:$0xf]
  %v27 = vld [vmem:[%s0 + $0x30] sm:$0xf]
  %v28 = vld [vmem:[%s0 + $0x34] sm:$0xf]
  %v29 = vld [vmem:[%s0 + $0x38] sm:$0xf]
  %v30 = vld [vmem:[%s0 + $0x3c] sm:$0xf]
  %v31 = vld [vmem:[%s0 + $0x40] sm:$0xf]
  %v32 = vld [vmem:[%s0 + $0x44] sm:$0xf]
  %v33 = vld [vmem:[%s0 + $0x48] sm:$0xf]
  %v34 = vld [vmem:[%s0 + $0x4c] sm:$0xf]
  %v35 = vld [vmem:[%s0 + $0x50] sm:$0xf]
  %v36 = vld [vmem:[%s0 + $0x54] sm:$0xf]
  %v37 = vld [vmem:[%s0 + $0x58] sm:$0xf]
  %v38 = vld [vmem:[%s0 + $0x5c] sm:$0xf]
  %v39 = vld [vmem:[%s0 + $0x60] sm:$0xf]
  %v40 = vld [vmem:[%s0 + $0x64] sm:$0xf]
  %v41 = vld [vmem:[%s0 + $0x68] sm:$0xf]
  %v42 = vld [vmem:[%s0 + $0x6c] sm:$0xf]
  %v43 = vld [vmem:[%s0 + $0x70] sm:$0xf]
  %v44 = vld [vmem:[%s0 + $0x74] sm:$0xf]
  %v45 = vld [vmem:[%s0 + $0x78] sm:$0xf]
  %v46 = vld [vmem:[%s0 + $0x7c] sm:$0xf]
  %v47 = vld [vmem:[%s0 + $0x80] sm:$0xf]
  %v48 = vld [vmem:[%s0 + $0x84] sm:$0xf]
  %v49 = vld [vmem:[%s0 + $0x88] sm:$0xf]
  %v50 = vld [vmem:[%s0 + $0x8c] sm:$0xf]
  %v51 = vld [vmem:[%s0 + $0x90] sm:$0xf]
  %v52 = vld [vmem:[%s0 + $0x94] sm:$0xf]
  %v53 = vld [vmem:[%s0 + $0x98] sm:$0xf]
  %v54 = vld [vmem:[%s0 + $0x9c] sm:$0xf]
  %v55 = vld [vmem:[%s0 + $0xa0] sm:$0xf]
  %v56 = vld [vmem:[%s0 + $0xa4] sm:$0xf]
  %v57 = vld [vmem:[%s0 + $0xa8] sm:$0xf]
  %v58 = vld [vmem:[%s0 + $0xac] sm:$0xf]
  %v59 = vld [vmem:[%s0 + $0xb0] sm:$0xf]
  %v60 = vld [vmem:[%s0 + $0xb4] sm:$0xf]
  %v61 = vld [vmem:[%s0 + $0xb8] sm:$0xf]
  %v62 = vld [vmem:[%s0 + $0xbc] sm:$0xf]
  %v63 = vld [vmem:[%s0 + $0xc0] sm:$0xf]
  %v64 = vld [vmem:[%s0 + $0xc4] sm:$0xf]
  %v65 = vld [vmem:[%s0 + $0xc8] sm:$0xf]
  %v66 = vld [vmem:[%s0 + $0xcc] sm:$0xf]
  %v67 = vld [vmem:[%s0 + $0xd0] sm:$0xf]
  %v68 = vld [vmem:[%s0 + $0xd4] sm:$0xf]
  %v69 = vld [vmem:[%s0 + $0xd8] sm:$0xf]
  %v70 = vld [vmem:[%s0 + $0xdc] sm:$0xf]
  %v71 = vld [vmem:[%s0 + $0xe0] sm:$0xf]
  %v72 = vld [vmem:[%s0 + $0xe4] sm:$0xf]
  %v73 = vld [vmem:[%s0 + $0xe8] sm:$0xf]
  %v74 = vld [vmem:[%s0 + $0xec] sm:$0xf]
  %v75 = vld [vmem:[%s0 + $0xf0] sm:$0xf]
  %v76 = vld [vmem:[%s0 + $0xf4] sm:$0xf]
  %v77 = vld [vmem:[%s0 + $0xf8] sm:$0xf]
  %v78 = vld [vmem:[%s0 + $0xfc] sm:$0xf]
  %v79 = vld [vmem:[%s0 + $0x100] sm:$0xf]
  %v80 = vld [vmem:[%s0 + $0x104] sm:$0xf]
  %v81 = vld [vmem:[%s0 + $0x108] sm:$0xf]
  %v82 = vld [vmem:[%s0 + $0x10c] sm:$0xf]
  %v83 = vld [vmem:[%s0 + $0x110] sm:$0xf]
  %v84 = vld [vmem:[%s0 + $0x114] sm:$0xf]
  %v85 = vld [vmem:[%s0 + $0x118] sm:$0xf]
  %v86 = vld [vmem:[%s0 + $0x11c] sm:$0xf]
  %v87 = vld [vmem:[%s0 + $0x120] sm:$0xf]
  %v88 = vld [vmem:[%s0 + $0x124] sm:$0xf]
  %v89 = vld [vmem:[%s0 + $0x128] sm:$0xf]
  %v90 = vld [vmem:[%s0 + $0x12c] sm:$0xf]
  %v91 = vld [vmem:[%s0 + $0x130] sm:$0xf]
  %v92 = vld [vmem:[%s0 + $0x134] sm:$0xf]
  %v93 = vld [vmem:[%s0 + $0x138] sm:$0xf]
  %v94 = vld [vmem:[%s0 + $0x13c] sm:$0xf]
  %v95 = vld [vmem:[%s0 + $0x140] sm:$0xf]
  %v96 = vld [vmem:[%s0 + $0x144] sm:$0xf]
  %v97 = vld [vmem:[%s0 + $0x148] sm:$0xf]
  %v98 = vld [vmem:[%s0 + $0x14c] sm:$0xf]
  %v99 = vld [vmem:[%s0 + $0x150] sm:$0xf]
  %v100 = vld [vmem:[%s0 + $0x154] sm:$0xf]
  %v101 = vld [vmem:[%s0 + $0x158] sm:$0xf]
  %v102 = vld [vmem:[%s0 + $0x15c] sm:$0xf]
  %v103 = vld [vmem:[%s0 + $0x160] sm:$0xf]
  %v104 = vld [vmem:[%s0 + $0x164] sm:$0xf]
  %v105 = vld [vmem:[%s0 + $0x168] sm:$0xf]
  %v106 = vld [vmem:[%s0 + $0x16c] sm:$0xf]
  %v107 = vld [vmem:[%s0 + $0x170] sm:$0xf]
  %v108 = vld [vmem:[%s0 + $0x174] sm:$0xf]
  %v109 = vld [vmem:[%s0 + $0x178] sm:$0xf]
  %v110 = vld [vmem:[%s0 + $0x17c] sm:$0xf]
  %v111 = vld [vmem:[%s0 + $0x180] sm:$0xf]
  %v112 = vld [vmem:[%s0 + $0x184] sm:$0xf]
  %v113 = vld [vmem:[%s0 + $0x188] sm:$0xf]
  %v114 = vld [vmem:[%s0 + $0x18c] sm:$0xf]
  %v115 = vld [vmem:[%s0 + $0x190] sm:$0xf]
  %v116 = vld [vmem:[%s0 + $0x194] sm:$0xf]
  %v117 = vld [vmem:[%s0 + $0x198] sm:$0xf]
  %v118 = vld [vmem:[%s0 + $0x19c] sm:$0xf]
  %v119 = vld [vmem:[%s0 + $0x1a0] sm:$0xf]
  %v120 = vld [vmem:[%s0 + $0x1a4] sm:$0xf]
  %v121 = vld [vmem:[%s0 + $0x1a8] sm:$0xf]
  %v122 = vld [vmem:[%s0 + $0x1ac] sm:$0xf]
  %v123 = vld [vmem:[%s0 + $0x1b0] sm:$0xf]
  %v124 = vld [vmem:[%s0 + $0x1b4] sm:$0xf]
  %v125 = vld [vmem:[%s0 + $0x1b8] sm:$0xf]
  %v126 = vld [vmem:[%s0 + $0x1bc] sm:$0xf]
  %v127 = vld [vmem:[%s0 + $0x1c0] sm:$0xf]
  %v128 = vld [vmem:[%s0 + $0x1c4] sm:$0xf]
  %v129 = vld [vmem:[%s0 + $0x1c8] sm:$0xf]
  %v130 = vld [vmem:[%s0 + $0x1cc] sm:$0xf]
  %v131 = vld [vmem:[%s0 + $0x1d0] sm:$0xf]
  %v132 = vld [vmem:[%s0 + $0x1d4] sm:$0xf]
  %v133 = vld [vmem:[%s0 + $0x1d8] sm:$0xf]
  %v134 = vld [vmem:[%s0 + $0x1dc] sm:$0xf]
  %v135 = vld [vmem:[%s0 + $0x1e0] sm:$0xf]
  %v136 = vld [vmem:[%s0 + $0x1e4] sm:$0xf]
  %v137 = vld [vmem:[%s0 + $0x1e8] sm:$0xf]
  %v138 = vld [vmem:[%s0 + $0x1ec] sm:$0xf]
  %v139 = vld [vmem:[%s0 + $0x1f0] sm:$0xf]
  %v140 = vld [vmem:[%s0 + $0x1f4] sm:$0xf]
  %v141 = vld [vmem:[%s0 + $0x1f8] sm:$0xf]
  %v142 = vld [vmem:[%s0 + $0x1fc] sm:$0xf]
  %v143 = vld [vmem:[%s0 + $0x200] sm:$0xf]
  %v144 = vld [vmem:[%s0 + $0x204] sm:$0xf]
  %v145 = vld [vmem:[%s0 + $0x208] sm:$0xf]
  %v146 = vld [vmem:[%s0 + $0x20c] sm:$0xf]
  %v147 = vld [vmem:[%s0 + $0x210] sm:$0xf]
  %v148 = vld [vmem:[%s0 + $0x214] sm:$0xf]
  %v149 = vld [vmem:[%s0 + $0x218] sm:$0xf]
  %v150 = vld [vmem:[%s0 + $0x21c] sm:$0xf]
  %v151 = vld [vmem:[%s0 + $0x220] sm:$0xf]
  %v152 = vld [vmem:[%s0 + $0x224] sm:$0xf]
  %v153 = vld [vmem:[%s0 + $0x228] sm:$0xf]
  %v154 = vld [vmem:[%s0 + $0x22c] sm:$0xf]
  %v155 = vld [vmem:[%s0 + $0x230] sm:$0xf]
  %v156 = vld [vmem:[%s0 + $0x234] sm:$0xf]
  %v157 = vld [vmem:[%s0 + $0x238] sm:$0xf]
  %v158 = vld [vmem:[%s0 + $0x23c] sm:$0xf]
  %v159 = vld [vmem:[%s0 + $0x240] sm:$0xf]
  %v160 = vld [vmem:[%s0 + $0x244] sm:$0xf]
  %v161 = vld [vmem:[%s0 + $0x248] sm:$0xf]
  %v162 = vld [vmem:[%s0 + $0x24c] sm:$0xf]
  %v163 = vld [vmem:[%s0 + $0x250] sm:$0xf]
  %v164 = vld [vmem:[%s0 + $0x254] sm:$0xf]
  %v165 = vld [vmem:[%s0 + $0x258] sm:$0xf]
  %v166 = vld [vmem:[%s0 + $0x25c] sm:$0xf]
  %v167 = vld [vmem:[%s0 + $0x260] sm:$0xf]
  %v168 = vld [vmem:[%s0 + $0x264] sm:$0xf]
  %v169 = vld [vmem:[%s0 + $0x268] sm:$0xf]
  %v170 = vld [vmem:[%s0 + $0x26c] sm:$0xf]
  %v171 = vld [vmem:[%s0 + $0x270] sm:$0xf]
  %v172 = vld [vmem:[%s0 + $0x274] sm:$0xf]
  %v173 = vld [vmem:[%s0 + $0x278] sm:$0xf]
  %v174 = vld [vmem:[%s0 + $0x27c] sm:$0xf]
  %v175 = vld [vmem:[%s0 + $0x280] sm:$0xf]
  %v176 = vld [vmem:[%s0 + $0x284] sm:$0xf]
  %v177 = vld [vmem:[%s0 + $0x288] sm:$0xf]
  %v178 = vld [vmem:[%s0 + $0x28c] sm:$0xf]
  %v179 = vld [vmem:[%s0 + $0x290] sm:$0xf]
  %v180 = vld [vmem:[%s0 + $0x294] sm:$0xf]
  %v181 = vld [vmem:[%s0 + $0x298] sm:$0xf]
  %v182 = vld [vmem:[%s0 + $0x29c] sm:$0xf]
  %v183 = vld [vmem:[%s0 + $0x2a0] sm:$0xf]
  %v184 = vld [vmem:[%s0 + $0x2a4] sm:$0xf]
  %v185 = vld [vmem:[%s0 + $0x2a8] sm:$0xf]
  %v186 = vld [vmem:[%s0 + $0x2ac] sm:$0xf]
  %v187 = vld [vmem:[%s0 + $0x2b0] sm:$0xf]
  %v188 = vld [vmem:[%s0 + $0x2b4] sm:$0xf]
  %v189 = vld [vmem:[%s0 + $0x2b8] sm:$0xf]
  %v190 = vld [vmem:[%s0 + $0x2bc] sm:$0xf]
  %v191 = vld [vmem:[%s0 + $0x2c0] sm:$0xf]
  %v192 = vld [vmem:[%s0 + $0x2c4] sm:$0xf]
  %v193 = vld [vmem:[%s0 + $0x2c8] sm:$0xf]
  %v194 = vld [vmem:[%s0 + $0x2cc] sm:$0xf]
  %v195 = vld [vmem:[%s0 + $0x2d0] sm:$0xf]
  %v196 = vld [vmem:[%s0 + $0x2d4] sm:$0xf]
  %v197 = vld [vmem:[%s0 + $0x2d8] sm:$0xf]
  %v198 = vld [vmem:[%s0 + $0x2dc] sm:$0xf]
  %v199 = vld [vmem:[%s0 + $0x2e0] sm:$0xf]
  %v200 = vld [vmem:[%s0 + $0x2e4] sm:$0xf]
  %v201 = vld [vmem:[%s0 + $0x2e8] sm:$0xf]
  %v202 = vld [vmem:[%s0 + $0x2ec] sm:$0xf]
  %v203 = vld [vmem:[%s0 + $0x2f0] sm:$0xf]
  %v204 = vld [vmem:[%s0 + $0x2f4] sm:$0xf]
  %v205 = vld [vmem:[%s0 + $0x2f8] sm:$0xf]
  %v206 = vld [vmem:[%s0 + $0x2fc] sm:$0xf]
  %v207 = vld [vmem:[%s0 + $0x300] sm:$0xf]
  %v208 = vld [vmem:[%s0 + $0x304] sm:$0xf]
  %v209 = vld [vmem:[%s0 + $0x308] sm:$0xf]
  %v210 = vld [vmem:[%s0 + $0x30c] sm:$0xf]
  %v211 = vld [vmem:[%s0 + $0x310] sm:$0xf]
  %v212 = vld [vmem:[%s0 + $0x314] sm:$0xf]
  %v213 = vld [vmem:[%s0 + $0x318] sm:$0xf]
  %v214 = vld [vmem:[%s0 + $0x31c] sm:$0xf]
  %v215 = vld [vmem:[%s1] sm:$0xf]
  %v216 = vld [vmem:[%s1 + $0x4] sm:$0xf]
  %v217 = vld [vmem:[%s1 + $0x8] sm:$0xf]
  %v218 = vld [vmem:[%s1 + $0xc] sm:$0xf]
  %v219 = vld [vmem:[%s1 + $0x10] sm:$0xf]
  %v220 = vld [vmem:[%s1 + $0x14] sm:$0xf]
  %v221 = vld [vmem:[%s1 + $0x18] sm:$0xf]
  %v222 = vld [vmem:[%s1 + $0x1c] sm:$0xf]
  %v223 = vld [vmem:[%s1 + $0x20] sm:$0xf]
  %v224 = vld [vmem:[%s1 + $0x24] sm:$0xf]
  %v225 = vld [vmem:[%s1 + $0x28] sm:$0xf]
  %v226 = vld [vmem:[%s1 + $0x2c] sm:$0xf]
  %v227 = vld [vmem:[%s1 + $0x30] sm:$0xf]
  %v228 = vld [vmem:[%s1 + $0x34] sm:$0xf]
  %v229 = vld [vmem:[%s1 + $0x38] sm:$0xf]
  %v230 = vld [vmem:[%s1 + $0x3c] sm:$0xf]
  %v231 = vld [vmem:[%s2] sm:$0x1]
  %v233 = vlaneseq
  %v234 = vshrl.u32 %v233, 7
  %v235 = vsub.s32 0, %v234
  %v236 = vrot.slane %v231, %v235
  %v438 = vunpack.c.l.b16 %v15
  %v439 = vunpack.c.l.b16 %v16
  %v440 = vunpack.c.l.b16 %v17
  %v441 = vunpack.c.l.b16 %v18
  %v442 = vunpack.c.l.b16 %v19
  %v443 = vunpack.c.l.b16 %v20
  %v444 = vunpack.c.l.b16 %v21
  %v445 = vunpack.c.l.b16 %v22
  %v446 = vunpack.c.l.b16 %v23
  %v447 = vunpack.c.l.b16 %v24
  %v448 = vunpack.c.l.b16 %v25
  %v449 = vunpack.c.l.b16 %v26
  %v450 = vunpack.c.l.b16 %v27
  %v451 = vunpack.c.l.b16 %v28
  %v452 = vunpack.c.l.b16 %v29
  %v453 = vunpack.c.l.b16 %v30
  %v454 = vunpack.c.l.b16 %v31
  %v455 = vunpack.c.l.b16 %v32
  %v456 = vunpack.c.l.b16 %v33
  %v457 = vunpack.c.l.b16 %v34
  %v458 = vunpack.c.l.b16 %v35
  %v459 = vunpack.c.l.b16 %v36
  %v460 = vunpack.c.l.b16 %v37
  %v461 = vunpack.c.l.b16 %v38
  %v462 = vunpack.c.l.b16 %v39
  %v463 = vunpack.c.l.b16 %v40
  %v464 = vunpack.c.l.b16 %v41
  %v465 = vunpack.c.l.b16 %v42
  %v466 = vunpack.c.l.b16 %v43
  %v467 = vunpack.c.l.b16 %v44
  %v468 = vunpack.c.l.b16 %v45
  %v469 = vunpack.c.l.b16 %v46
  %v470 = vunpack.c.l.b16 %v47
  %v471 = vunpack.c.l.b16 %v48
  %v472 = vunpack.c.l.b16 %v49
  %v473 = vunpack.c.l.b16 %v50
  %v474 = vunpack.c.l.b16 %v51
  %v475 = vunpack.c.l.b16 %v52
  %v476 = vunpack.c.l.b16 %v53
  %v477 = vunpack.c.l.b16 %v54
  %v478 = vunpack.c.l.b16 %v55
  %v479 = vunpack.c.l.b16 %v56
  %v480 = vunpack.c.l.b16 %v57
  %v481 = vunpack.c.l.b16 %v58
  %v482 = vunpack.c.l.b16 %v59
  %v483 = vunpack.c.l.b16 %v60
  %v484 = vunpack.c.l.b16 %v61
  %v485 = vunpack.c.l.b16 %v62
  %v486 = vunpack.c.l.b16 %v63
  %v487 = vunpack.c.l.b16 %v64
  %v488 = vunpack.c.l.b16 %v65
  %v489 = vunpack.c.l.b16 %v66
  %v490 = vunpack.c.l.b16 %v67
  %v491 = vunpack.c.l.b16 %v68
  %v492 = vunpack.c.l.b16 %v69
  %v493 = vunpack.c.l.b16 %v70
  %v494 = vunpack.c.l.b16 %v71
  %v495 = vunpack.c.l.b16 %v72
  %v496 = vunpack.c.l.b16 %v73
  %v497 = vunpack.c.l.b16 %v74
  %v498 = vunpack.c.l.b16 %v75
  %v499 = vunpack.c.l.b16 %v76
  %v500 = vunpack.c.l.b16 %v77
  %v501 = vunpack.c.l.b16 %v78
  %v502 = vunpack.c.l.b16 %v79
  %v503 = vunpack.c.l.b16 %v80
  %v504 = vunpack.c.l.b16 %v81
  %v505 = vunpack.c.l.b16 %v82
  %v506 = vunpack.c.l.b16 %v83
  %v507 = vunpack.c.l.b16 %v84
  %v508 = vunpack.c.l.b16 %v85
  %v509 = vunpack.c.l.b16 %v86
  %v510 = vunpack.c.l.b16 %v87
  %v511 = vunpack.c.l.b16 %v88
  %v512 = vunpack.c.l.b16 %v89
  %v513 = vunpack.c.l.b16 %v90
  %v514 = vunpack.c.l.b16 %v91
  %v515 = vunpack.c.l.b16 %v92
  %v516 = vunpack.c.l.b16 %v93
  %v517 = vunpack.c.l.b16 %v94
  %v518 = vunpack.c.l.b16 %v95
  %v519 = vunpack.c.l.b16 %v96
  %v520 = vunpack.c.l.b16 %v97
  %v521 = vunpack.c.l.b16 %v98
  %v522 = vunpack.c.l.b16 %v99
  %v523 = vunpack.c.l.b16 %v100
  %v524 = vunpack.c.l.b16 %v101
  %v525 = vunpack.c.l.b16 %v102
  %v526 = vunpack.c.l.b16 %v103
  %v527 = vunpack.c.l.b16 %v104
  %v528 = vunpack.c.l.b16 %v105
  %v529 = vunpack.c.l.b16 %v106
  %v530 = vunpack.c.l.b16 %v107
  %v531 = vunpack.c.l.b16 %v108
  %v532 = vunpack.c.l.b16 %v109
  %v533 = vunpack.c.l.b16 %v110
  %v534 = vunpack.c.l.b16 %v111
  %v535 = vunpack.c.l.b16 %v112
  %v536 = vunpack.c.l.b16 %v113
  %v537 = vunpack.c.l.b16 %v114
  %v538 = vunpack.c.l.b16 %v115
  %v539 = vunpack.c.l.b16 %v116
  %v540 = vunpack.c.l.b16 %v117
  %v541 = vunpack.c.l.b16 %v118
  %v542 = vunpack.c.l.b16 %v119
  %v543 = vunpack.c.l.b16 %v120
  %v544 = vunpack.c.l.b16 %v121
  %v545 = vunpack.c.l.b16 %v122
  %v546 = vunpack.c.l.b16 %v123
  %v547 = vunpack.c.l.b16 %v124
  %v548 = vunpack.c.l.b16 %v125
  %v549 = vunpack.c.l.b16 %v126
  %v550 = vunpack.c.l.b16 %v127
  %v551 = vunpack.c.l.b16 %v128
  %v552 = vunpack.c.l.b16 %v129
  %v553 = vunpack.c.l.b16 %v130
  %v554 = vunpack.c.l.b16 %v131
  %v555 = vunpack.c.l.b16 %v132
  %v556 = vunpack.c.l.b16 %v133
  %v557 = vunpack.c.l.b16 %v134
  %v558 = vunpack.c.l.b16 %v135
  %v559 = vunpack.c.l.b16 %v136
  %v560 = vunpack.c.l.b16 %v137
  %v561 = vunpack.c.l.b16 %v138
  %v562 = vunpack.c.l.b16 %v139
  %v563 = vunpack.c.l.b16 %v140
  %v564 = vunpack.c.l.b16 %v141
  %v565 = vunpack.c.l.b16 %v142
  %v566 = vunpack.c.l.b16 %v143
  %v567 = vunpack.c.l.b16 %v144
  %v568 = vunpack.c.l.b16 %v145
  %v569 = vunpack.c.l.b16 %v146
  %v570 = vunpack.c.l.b16 %v147
  %v571 = vunpack.c.l.b16 %v148
  %v572 = vunpack.c.l.b16 %v149
  %v573 = vunpack.c.l.b16 %v150
  %v574 = vunpack.c.l.b16 %v151
  %v575 = vunpack.c.l.b16 %v152
  %v576 = vunpack.c.l.b16 %v153
  %v577 = vunpack.c.l.b16 %v154
  %v578 = vunpack.c.l.b16 %v155
  %v579 = vunpack.c.l.b16 %v156
  %v580 = vunpack.c.l.b16 %v157
  %v581 = vunpack.c.l.b16 %v158
  %v582 = vunpack.c.l.b16 %v159
  %v583 = vunpack.c.l.b16 %v160
  %v584 = vunpack.c.l.b16 %v161
  %v585 = vunpack.c.l.b16 %v162
  %v586 = vunpack.c.l.b16 %v163
  %v587 = vunpack.c.l.b16 %v164
  %v588 = vunpack.c.l.b16 %v165
  %v589 = vunpack.c.l.b16 %v166
  %v590 = vunpack.c.l.b16 %v167
  %v591 = vunpack.c.l.b16 %v168
  %v592 = vunpack.c.l.b16 %v169
  %v593 = vunpack.c.l.b16 %v170
  %v594 = vunpack.c.l.b16 %v171
  %v595 = vunpack.c.l.b16 %v172
  %v596 = vunpack.c.l.b16 %v173
  %v597 = vunpack.c.l.b16 %v174
  %v598 = vunpack.c.l.b16 %v175
  %v599 = vunpack.c.l.b16 %v176
  %v600 = vunpack.c.l.b16 %v177
  %v601 = vunpack.c.l.b16 %v178
  %v602 = vunpack.c.l.b16 %v179
  %v603 = vunpack.c.l.b16 %v180
  %v604 = vunpack.c.l.b16 %v181
  %v605 = vunpack.c.l.b16 %v182
  %v606 = vunpack.c.l.b16 %v183
  %v607 = vunpack.c.l.b16 %v184
  %v608 = vunpack.c.l.b16 %v185
  %v609 = vunpack.c.l.b16 %v186
  %v610 = vunpack.c.l.b16 %v187
  %v611 = vunpack.c.l.b16 %v188
  %v612 = vunpack.c.l.b16 %v189
  %v613 = vunpack.c.l.b16 %v190
  %v614 = vunpack.c.l.b16 %v191
  %v615 = vunpack.c.l.b16 %v192
  %v616 = vunpack.c.l.b16 %v193
  %v617 = vunpack.c.l.b16 %v194
  %v618 = vunpack.c.l.b16 %v195
  %v619 = vunpack.c.l.b16 %v196
  %v620 = vunpack.c.l.b16 %v197
  %v621 = vunpack.c.l.b16 %v198
  %v622 = vunpack.c.l.b16 %v199
  %v623 = vunpack.c.l.b16 %v200
  %v624 = vunpack.c.l.b16 %v201
  %v625 = vunpack.c.l.b16 %v202
  %v626 = vunpack.c.l.b16 %v203
  %v627 = vunpack.c.l.b16 %v204
  %v628 = vunpack.c.l.b16 %v205
  %v629 = vunpack.c.l.b16 %v206
  %v630 = vunpack.c.l.b16 %v207
  %v631 = vunpack.c.l.b16 %v208
  %v632 = vunpack.c.l.b16 %v209
  %v633 = vunpack.c.l.b16 %v210
  %v634 = vunpack.c.l.b16 %v211
  %v635 = vunpack.c.l.b16 %v212
  %v636 = vunpack.c.l.b16 %v213
  %v637 = vunpack.c.l.b16 %v214
  %v638 = vpack.c.b16 %v439, %v438
  %v639 = vpack.c.b16 %v441, %v440
  %v640 = vpack.c.b16 %v443, %v442
  %v641 = vpack.c.b16 %v445, %v444
  %v642 = vpack.c.b16 %v447, %v446
  %v643 = vpack.c.b16 %v449, %v448
  %v644 = vpack.c.b16 %v451, %v450
  %v645 = vpack.c.b16 %v453, %v452
  %v646 = vpack.c.b16 %v455, %v454
  %v647 = vpack.c.b16 %v457, %v456
  %v648 = vpack.c.b16 %v459, %v458
  %v649 = vpack.c.b16 %v461, %v460
  %v650 = vpack.c.b16 %v463, %v462
  %v651 = vpack.c.b16 %v465, %v464
  %v652 = vpack.c.b16 %v467, %v466
  %v653 = vpack.c.b16 %v469, %v468
  %v654 = vpack.c.b16 %v471, %v470
  %v655 = vpack.c.b16 %v473, %v472
  %v656 = vpack.c.b16 %v475, %v474
  %v657 = vpack.c.b16 %v477, %v476
  %v658 = vpack.c.b16 %v479, %v478
  %v659 = vpack.c.b16 %v481, %v480
  %v660 = vpack.c.b16 %v483, %v482
  %v661 = vpack.c.b16 %v485, %v484
  %v662 = vpack.c.b16 %v487, %v486
  %v663 = vpack.c.b16 %v489, %v488
  %v664 = vpack.c.b16 %v491, %v490
  %v665 = vpack.c.b16 %v493, %v492
  %v666 = vpack.c.b16 %v495, %v494
  %v667 = vpack.c.b16 %v497, %v496
  %v668 = vpack.c.b16 %v499, %v498
  %v669 = vpack.c.b16 %v501, %v500
  %v670 = vpack.c.b16 %v503, %v502
  %v671 = vpack.c.b16 %v505, %v504
  %v672 = vpack.c.b16 %v507, %v506
  %v673 = vpack.c.b16 %v509, %v508
  %v674 = vpack.c.b16 %v511, %v510
  %v675 = vpack.c.b16 %v513, %v512
  %v676 = vpack.c.b16 %v515, %v514
  %v677 = vpack.c.b16 %v517, %v516
  %v678 = vpack.c.b16 %v519, %v518
  %v679 = vpack.c.b16 %v521, %v520
  %v680 = vpack.c.b16 %v523, %v522
  %v681 = vpack.c.b16 %v525, %v524
  %v682 = vpack.c.b16 %v527, %v526
  %v683 = vpack.c.b16 %v529, %v528
  %v684 = vpack.c.b16 %v531, %v530
  %v685 = vpack.c.b16 %v533, %v532
  %v686 = vpack.c.b16 %v535, %v534
  %v687 = vpack.c.b16 %v537, %v536
  %v688 = vpack.c.b16 %v539, %v538
  %v689 = vpack.c.b16 %v541, %v540
  %v690 = vpack.c.b16 %v543, %v542
  %v691 = vpack.c.b16 %v545, %v544
  %v692 = vpack.c.b16 %v547, %v546
  %v693 = vpack.c.b16 %v549, %v548
  %v694 = vpack.c.b16 %v551, %v550
  %v695 = vpack.c.b16 %v553, %v552
  %v696 = vpack.c.b16 %v555, %v554
  %v697 = vpack.c.b16 %v557, %v556
  %v698 = vpack.c.b16 %v559, %v558
  %v699 = vpack.c.b16 %v561, %v560
  %v700 = vpack.c.b16 %v563, %v562
  %v701 = vpack.c.b16 %v565, %v564
  %v702 = vpack.c.b16 %v567, %v566
  %v703 = vpack.c.b16 %v569, %v568
  %v704 = vpack.c.b16 %v571, %v570
  %v705 = vpack.c.b16 %v573, %v572
  %v706 = vpack.c.b16 %v575, %v574
  %v707 = vpack.c.b16 %v577, %v576
  %v708 = vpack.c.b16 %v579, %v578
  %v709 = vpack.c.b16 %v581, %v580
  %v710 = vpack.c.b16 %v583, %v582
  %v711 = vpack.c.b16 %v585, %v584
  %v712 = vpack.c.b16 %v587, %v586
  %v713 = vpack.c.b16 %v589, %v588
  %v714 = vpack.c.b16 %v591, %v590
  %v715 = vpack.c.b16 %v593, %v592
  %v716 = vpack.c.b16 %v595, %v594
  %v717 = vpack.c.b16 %v597, %v596
  %v718 = vpack.c.b16 %v599, %v598
  %v719 = vpack.c.b16 %v601, %v600
  %v720 = vpack.c.b16 %v603, %v602
  %v721 = vpack.c.b16 %v605, %v604
  %v722 = vpack.c.b16 %v607, %v606
  %v723 = vpack.c.b16 %v609, %v608
  %v724 = vpack.c.b16 %v611, %v610
  %v725 = vpack.c.b16 %v613, %v612
  %v726 = vpack.c.b16 %v615, %v614
  %v727 = vpack.c.b16 %v617, %v616
  %v728 = vpack.c.b16 %v619, %v618
  %v729 = vpack.c.b16 %v621, %v620
  %v730 = vpack.c.b16 %v623, %v622
  %v731 = vpack.c.b16 %v625, %v624
  %v732 = vpack.c.b16 %v627, %v626
  %v733 = vpack.c.b16 %v629, %v628
  %v734 = vpack.c.b16 %v631, %v630
  %v735 = vpack.c.b16 %v633, %v632
  %v736 = vpack.c.b16 %v635, %v634
  %v737 = vpack.c.b16 %v637, %v636
  %v854 = vunpack.c.l.b16 %v215
  %v855 = vunpack.c.l.b16 %v216
  %v856 = vunpack.c.l.b16 %v217
  %v857 = vunpack.c.l.b16 %v218
  %v858 = vunpack.c.l.b16 %v219
  %v859 = vunpack.c.l.b16 %v220
  %v860 = vunpack.c.l.b16 %v221
  %v861 = vunpack.c.l.b16 %v222
  %v862 = vunpack.c.l.b16 %v223
  %v863 = vunpack.c.l.b16 %v224
  %v864 = vunpack.c.l.b16 %v225
  %v865 = vunpack.c.l.b16 %v226
  %v866 = vunpack.c.l.b16 %v227
  %v867 = vunpack.c.l.b16 %v228
  %v868 = vunpack.c.l.b16 %v229
  %v869 = vunpack.c.l.b16 %v230
  %v870 = vpack.c.b16 %v855, %v854
  %v871 = vpack.c.b16 %v857, %v856
  %v872 = vpack.c.b16 %v859, %v858
  %v873 = vpack.c.b16 %v861, %v860
  %v874 = vpack.c.b16 %v863, %v862
  %v875 = vpack.c.b16 %v865, %v864
  %v876 = vpack.c.b16 %v867, %v866
  %v877 = vpack.c.b16 %v869, %v868
  %886 = vmatprep.subr.bf16.mxu0 0
  %887 = vmatpush1.bf16.msra.mxu0 %v870
  %888 = vmatprep.subr.bf16.mxu0 0
  %889 = vmatpush1.bf16.msra.mxu0 %v871
  %890 = vmatprep.subr.bf16.mxu0 0
  %891 = vmatpush1.bf16.msra.mxu0 %v872
  %892 = vmatprep.subr.bf16.mxu0 0
  %893 = vmatpush1.bf16.msra.mxu0 %v873
  %894 = vmatprep.subr.bf16.mxu0 0
  %895 = vmatpush1.bf16.msra.mxu0 %v874
  %896 = vmatprep.subr.bf16.mxu0 0
  %897 = vmatpush1.bf16.msra.mxu0 %v875
  %898 = vmatprep.subr.bf16.mxu0 0
  %899 = vmatpush1.bf16.msra.mxu0 %v876
  %900 = vmatprep.subr.bf16.mxu0 0
  %901 = vmatpush1.bf16.msra.mxu0 %v877
  %902 = vmatprep.subr.bf16.mxu0 0
  %903 = vmatpush1.bf16.msra.mxu0 0
  %904 = vmatprep.subr.bf16.mxu0 0
  %905 = vmatpush1.bf16.msra.mxu0 0
  %906 = vmatprep.subr.bf16.mxu0 0
  %907 = vmatpush1.bf16.msra.mxu0 0
  %908 = vmatprep.subr.bf16.mxu0 0
  %909 = vmatpush1.bf16.msra.mxu0 0
  %910 = vmatprep.subr.bf16.mxu0 0
  %911 = vmatpush1.bf16.msra.mxu0 0
  %912 = vmatprep.subr.bf16.mxu0 0
  %913 = vmatpush1.bf16.msra.mxu0 0
  %914 = vmatprep.subr.bf16.mxu0 0
  %915 = vmatpush1.bf16.msra.mxu0 0
  %916 = vmatprep.subr.bf16.mxu0 0
  %917 = vmatpush1.bf16.msra.mxu0 0
  %918 = vmatprep.mubr.bf16.mxu0 0
  %919 = vmatmul.mubr.bf16.gmra.mrb[0].mxu0 %v638
  %v920 = vpop.f32.mrb[0].mxu0
  %v921 = vadd.f32 %v236, %v920
  %v922 = vpop.f32.mrb[0].mxu0
  %v923 = vpop.f32.mrb[0].mxu0
  %v924 = vadd.f32 %v236, %v923
  %v925 = vpop.f32.mrb[0].mxu0
  %926 = vmatprep.mubr.bf16.mxu0 0
  %927 = vmatmul.mubr.bf16.gmra.mrb[0].mxu0 %v639
  %v928 = vpop.f32.mrb[0].mxu0
  %v929 = vadd.f32 %v236, %v928
  %v930 = vpop.f32.mrb[0].mxu0
  %v931 = vpop.f32.mrb[0].mxu0
  %v932 = vadd.f32 %v236, %v931
  %v933 = vpop.f32.mrb[0].mxu0
  %934 = vmatprep.mubr.bf16.mxu0 0
  %935 = vmatmul.mubr.bf16.gmra.mrb[0].mxu0 %v640
  %v936 = vpop.f32.mrb[0].mxu0
  %v937 = vadd.f32 %v236, %v936
  %v938 = vpop.f32.mrb[0].mxu0
  %v939 = vpop.f32.mrb[0].mxu0
  %v940 = vadd.f32 %v236, %v939
  %v941 = vpop.f32.mrb[0].mxu0
  %942 = vmatprep.mubr.bf16.mxu0 0
  %943 = vmatmul.mubr.bf16.gmra.mrb[0].mxu0 %v641
  %v944 = vpop.f32.mrb[0].mxu0
  %v945 = vadd.f32 %v236, %v944
  %v946 = vpop.f32.mrb[0].mxu0
  %v947 = vpop.f32.mrb[0].mxu0
  %v948 = vadd.f32 %v236, %v947
  %v949 = vpop.f32.mrb[0].mxu0
  %950 = vmatprep.mubr.bf16.mxu0 0
  %951 = vmatmul.mubr.bf16.gmra.mrb[0].mxu0 %v642
  %v952 = vpop.f32.mrb[0].mxu0
  %v953 = vadd.f32 %v236, %v952
  %v954 = vpop.f32.mrb[0].mxu0
  %v955 = vpop.f32.mrb[0].mxu0
  %v956 = vadd.f32 %v236, %v955
  %v957 = vpop.f32.mrb[0].mxu0
  %958 = vmatprep.mubr.bf16.mxu0 0
  %959 = vmatmul.mubr.bf16.gmra.mrb[0].mxu0 %v643
  %v960 = vpop.f32.mrb[0].mxu0
  %v961 = vadd.f32 %v236, %v960
  %v962 = vpop.f32.mrb[0].mxu0
  %v963 = vpop.f32.mrb[0].mxu0
  %v964 = vadd.f32 %v236, %v963
  %v965 = vpop.f32.mrb[0].mxu0
  %966 = vmatprep.mubr.bf16.mxu0 0
  %967 = vmatmul.mubr.bf16.gmra.mrb[0].mxu0 %v644
  %v968 = vpop.f32.mrb[0].mxu0
  %v969 = vadd.f32 %v236, %v968
  %v970 = vpop.f32.mrb[0].mxu0
  %v971 = vpop.f32.mrb[0].mxu0
  %v972 = vadd.f32 %v236, %v971
  %v973 = vpop.f32.mrb[0].mxu0
  %974 = vmatprep.mubr.bf16.mxu0 0
  %975 = vmatmul.mubr.bf16.gmra.mrb[0].mxu0 %v645
  %v976 = vpop.f32.mrb[0].mxu0
  %v977 = vadd.f32 %v236, %v976
  %v978 = vpop.f32.mrb[0].mxu0
  %v979 = vpop.f32.mrb[0].mxu0
  %v980 = vadd.f32 %v236, %v979
  %v981 = vpop.f32.mrb[0].mxu0
  %982 = vmatprep.mubr.bf16.mxu0 0
  %983 = vmatmul.mubr.bf16.gmra.mrb[0].mxu0 %v646
  %v984 = vpop.f32.mrb[0].mxu0
  %v985 = vadd.f32 %v236, %v984
  %v986 = vpop.f32.mrb[0].mxu0
  %v987 = vpop.f32.mrb[0].mxu0
  %v988 = vadd.f32 %v236, %v987
  %v989 = vpop.f32.mrb[0].mxu0
  %990 = vmatprep.mubr.bf16.mxu0 0
  %991 = vmatmul.mubr.bf16.gmra.mrb[0].mxu0 %v647
  %v992 = vpop.f32.mrb[0].mxu0
  %v993 = vadd.f32 %v236, %v992
  %v994 = vpop.f32.mrb[0].mxu0
  %v995 = vpop.f32.mrb[0].mxu0
  %v996 = vadd.f32 %v236, %v995
  %v997 = vpop.f32.mrb[0].mxu0
  %998 = vmatprep.mubr.bf16.mxu0 0
  %999 = vmatmul.mubr.bf16.gmra.mrb[0].mxu0 %v648
  %v1000 = vpop.f32.mrb[0].mxu0
  %v1001 = vadd.f32 %v236, %v1000
  %v1002 = vpop.f32.mrb[0].mxu0
  %v1003 = vpop.f32.mrb[0].mxu0
  %v1004 = vadd.f32 %v236, %v1003
  %v1005 = vpop.f32.mrb[0].mxu0
  %1006 = vmatprep.mubr.bf16.mxu0 0
  %1007 = vmatmul.mubr.bf16.gmra.mrb[0].mxu0 %v649
  %v1008 = vpop.f32.mrb[0].mxu0
  %v1009 = vadd.f32 %v236, %v1008
  %v1010 = vpop.f32.mrb[0].mxu0
  %v1011 = vpop.f32.mrb[0].mxu0
  %v1012 = vadd.f32 %v236, %v1011
  %v1013 = vpop.f32.mrb[0].mxu0
  %1014 = vmatprep.mubr.bf16.mxu0 0
  %1015 = vmatmul.mubr.bf16.gmra.mrb[0].mxu0 %v650
  %v1016 = vpop.f32.mrb[0].mxu0
  %v1017 = vadd.f32 %v236, %v1016
  %v1018 = vpop.f32.mrb[0].mxu0
  %v1019 = vpop.f32.mrb[0].mxu0
  %v1020 = vadd.f32 %v236, %v1019
  %v1021 = vpop.f32.mrb[0].mxu0
  %1022 = vmatprep.mubr.bf16.mxu0 0
  %1023 = vmatmul.mubr.bf16.gmra.mrb[0].mxu0 %v651
  %v1024 = vpop.f32.mrb[0].mxu0
  %v1025 = vadd.f32 %v236, %v1024
  %v1026 = vpop.f32.mrb[0].mxu0
  %v1027 = vpop.f32.mrb[0].mxu0
  %v1028 = vadd.f32 %v236, %v1027
  %v1029 = vpop.f32.mrb[0].mxu0
  %1030 = vmatprep.mubr.bf16.mxu0 0
  %1031 = vmatmul.mubr.bf16.gmra.mrb[0].mxu0 %v652
  %v1032 = vpop.f32.mrb[0].mxu0
  %v1033 = vadd.f32 %v236, %v1032
  %v1034 = vpop.f32.mrb[0].mxu0
  %v1035 = vpop.f32.mrb[0].mxu0
  %v1036 = vadd.f32 %v236, %v1035
  %v1037 = vpop.f32.mrb[0].mxu0
  %1038 = vmatprep.mubr.bf16.mxu0 0
  %1039 = vmatmul.mubr.bf16.gmra.mrb[0].mxu0 %v653
  %v1040 = vpop.f32.mrb[0].mxu0
  %v1041 = vadd.f32 %v236, %v1040
  %v1042 = vpop.f32.mrb[0].mxu0
  %v1043 = vpop.f32.mrb[0].mxu0
  %v1044 = vadd.f32 %v236, %v1043
  %v1045 = vpop.f32.mrb[0].mxu0
  %1046 = vmatprep.mubr.bf16.mxu0 0
  %1047 = vmatmul.mubr.bf16.gmra.mrb[0].mxu0 %v654
  %v1048 = vpop.f32.mrb[0].mxu0
  %v1049 = vadd.f32 %v236, %v1048
  %v1050 = vpop.f32.mrb[0].mxu0
  %v1051 = vpop.f32.mrb[0].mxu0
  %v1052 = vadd.f32 %v236, %v1051
  %v1053 = vpop.f32.mrb[0].mxu0
  %1054 = vmatprep.mubr.bf16.mxu0 0
  %1055 = vmatmul.mubr.bf16.gmra.mrb[0].mxu0 %v655
  %v1056 = vpop.f32.mrb[0].mxu0
  %v1057 = vadd.f32 %v236, %v1056
  %v1058 = vpop.f32.mrb[0].mxu0
  %v1059 = vpop.f32.mrb[0].mxu0
  %v1060 = vadd.f32 %v236, %v1059
  %v1061 = vpop.f32.mrb[0].mxu0
  %1062 = vmatprep.mubr.bf16.mxu0 0
  %1063 = vmatmul.mubr.bf16.gmra.mrb[0].mxu0 %v656
  %v1064 = vpop.f32.mrb[0].mxu0
  %v1065 = vadd.f32 %v236, %v1064
  %v1066 = vpop.f32.mrb[0].mxu0
  %v1067 = vpop.f32.mrb[0].mxu0
  %v1068 = vadd.f32 %v236, %v1067
  %v1069 = vpop.f32.mrb[0].mxu0
  %1070 = vmatprep.mubr.bf16.mxu0 0
  %1071 = vmatmul.mubr.bf16.gmra.mrb[0].mxu0 %v657
  %v1072 = vpop.f32.mrb[0].mxu0
  %v1073 = vadd.f32 %v236, %v1072
  %v1074 = vpop.f32.mrb[0].mxu0
  %v1075 = vpop.f32.mrb[0].mxu0
  %v1076 = vadd.f32 %v236, %v1075
  %v1077 = vpop.f32.mrb[0].mxu0
  %1078 = vmatprep.mubr.bf16.mxu0 0
  %1079 = vmatmul.mubr.bf16.gmra.mrb[0].mxu0 %v658
  %v1080 = vpop.f32.mrb[0].mxu0
  %v1081 = vadd.f32 %v236, %v1080
  %v1082 = vpop.f32.mrb[0].mxu0
  %v1083 = vpop.f32.mrb[0].mxu0
  %v1084 = vadd.f32 %v236, %v1083
  %v1085 = vpop.f32.mrb[0].mxu0
  %1086 = vmatprep.mubr.bf16.mxu0 0
  %1087 = vmatmul.mubr.bf16.gmra.mrb[0].mxu0 %v659
  %v1088 = vpop.f32.mrb[0].mxu0
  %v1089 = vadd.f32 %v236, %v1088
  %v1090 = vpop.f32.mrb[0].mxu0
  %v1091 = vpop.f32.mrb[0].mxu0
  %v1092 = vadd.f32 %v236, %v1091
  %v1093 = vpop.f32.mrb[0].mxu0
  %1094 = vmatprep.mubr.bf16.mxu0 0
  %1095 = vmatmul.mubr.bf16.gmra.mrb[0].mxu0 %v660
  %v1096 = vpop.f32.mrb[0].mxu0
  %v1097 = vadd.f32 %v236, %v1096
  %v1098 = vpop.f32.mrb[0].mxu0
  %v1099 = vpop.f32.mrb[0].mxu0
  %v1100 = vadd.f32 %v236, %v1099
  %v1101 = vpop.f32.mrb[0].mxu0
  %1102 = vmatprep.mubr.bf16.mxu0 0
  %1103 = vmatmul.mubr.bf16.gmra.mrb[0].mxu0 %v661
  %v1104 = vpop.f32.mrb[0].mxu0
  %v1105 = vadd.f32 %v236, %v1104
  %v1106 = vpop.f32.mrb[0].mxu0
  %v1107 = vpop.f32.mrb[0].mxu0
  %v1108 = vadd.f32 %v236, %v1107
  %v1109 = vpop.f32.mrb[0].mxu0
  %1110 = vmatprep.mubr.bf16.mxu0 0
  %1111 = vmatmul.mubr.bf16.gmra.mrb[0].mxu0 %v662
  %v1112 = vpop.f32.mrb[0].mxu0
  %v1113 = vadd.f32 %v236, %v1112
  %v1114 = vpop.f32.mrb[0].mxu0
  %v1115 = vpop.f32.mrb[0].mxu0
  %v1116 = vadd.f32 %v236, %v1115
  %v1117 = vpop.f32.mrb[0].mxu0
  %1118 = vmatprep.mubr.bf16.mxu0 0
  %1119 = vmatmul.mubr.bf16.gmra.mrb[0].mxu0 %v663
  %v1120 = vpop.f32.mrb[0].mxu0
  %v1121 = vadd.f32 %v236, %v1120
  %v1122 = vpop.f32.mrb[0].mxu0
  %v1123 = vpop.f32.mrb[0].mxu0
  %v1124 = vadd.f32 %v236, %v1123
  %v1125 = vpop.f32.mrb[0].mxu0
  %1126 = vmatprep.mubr.bf16.mxu0 0
  %1127 = vmatmul.mubr.bf16.gmra.mrb[0].mxu0 %v664
  %v1128 = vpop.f32.mrb[0].mxu0
  %v1129 = vadd.f32 %v236, %v1128
  %v1130 = vpop.f32.mrb[0].mxu0
  %v1131 = vpop.f32.mrb[0].mxu0
  %v1132 = vadd.f32 %v236, %v1131
  %v1133 = vpop.f32.mrb[0].mxu0
  %1134 = vmatprep.mubr.bf16.mxu0 0
  %1135 = vmatmul.mubr.bf16.gmra.mrb[0].mxu0 %v665
  %v1136 = vpop.f32.mrb[0].mxu0
  %v1137 = vadd.f32 %v236, %v1136
  %v1138 = vpop.f32.mrb[0].mxu0
  %v1139 = vpop.f32.mrb[0].mxu0
  %v1140 = vadd.f32 %v236, %v1139
  %v1141 = vpop.f32.mrb[0].mxu0
  %1142 = vmatprep.mubr.bf16.mxu0 0
  %1143 = vmatmul.mubr.bf16.gmra.mrb[0].mxu0 %v666
  %v1144 = vpop.f32.mrb[0].mxu0
  %v1145 = vadd.f32 %v236, %v1144
  %v1146 = vpop.f32.mrb[0].mxu0
  %v1147 = vpop.f32.mrb[0].mxu0
  %v1148 = vadd.f32 %v236, %v1147
  %v1149 = vpop.f32.mrb[0].mxu0
  %1150 = vmatprep.mubr.bf16.mxu0 0
  %1151 = vmatmul.mubr.bf16.gmra.mrb[0].mxu0 %v667
  %v1152 = vpop.f32.mrb[0].mxu0
  %v1153 = vadd.f32 %v236, %v1152
  %v1154 = vpop.f32.mrb[0].mxu0
  %v1155 = vpop.f32.mrb[0].mxu0
  %v1156 = vadd.f32 %v236, %v1155
  %v1157 = vpop.f32.mrb[0].mxu0
  %1158 = vmatprep.mubr.bf16.mxu0 0
  %1159 = vmatmul.mubr.bf16.gmra.mrb[0].mxu0 %v668
  %v1160 = vpop.f32.mrb[0].mxu0
  %v1161 = vadd.f32 %v236, %v1160
  %v1162 = vpop.f32.mrb[0].mxu0
  %v1163 = vpop.f32.mrb[0].mxu0
  %v1164 = vadd.f32 %v236, %v1163
  %v1165 = vpop.f32.mrb[0].mxu0
  %1166 = vmatprep.mubr.bf16.mxu0 0
  %1167 = vmatmul.mubr.bf16.gmra.mrb[0].mxu0 %v669
  %v1168 = vpop.f32.mrb[0].mxu0
  %v1169 = vadd.f32 %v236, %v1168
  %v1170 = vpop.f32.mrb[0].mxu0
  %v1171 = vpop.f32.mrb[0].mxu0
  %v1172 = vadd.f32 %v236, %v1171
  %v1173 = vpop.f32.mrb[0].mxu0
  %1174 = vmatprep.mubr.bf16.mxu0 0
  %1175 = vmatmul.mubr.bf16.gmra.mrb[0].mxu0 %v670
  %v1176 = vpop.f32.mrb[0].mxu0
  %v1177 = vadd.f32 %v236, %v1176
  %v1178 = vpop.f32.mrb[0].mxu0
  %v1179 = vpop.f32.mrb[0].mxu0
  %v1180 = vadd.f32 %v236, %v1179
  %v1181 = vpop.f32.mrb[0].mxu0
  %1182 = vmatprep.mubr.bf16.mxu0 0
  %1183 = vmatmul.mubr.bf16.gmra.mrb[0].mxu0 %v671
  %v1184 = vpop.f32.mrb[0].mxu0
  %v1185 = vadd.f32 %v236, %v1184
  %v1186 = vpop.f32.mrb[0].mxu0
  %v1187 = vpop.f32.mrb[0].mxu0
  %v1188 = vadd.f32 %v236, %v1187
  %v1189 = vpop.f32.mrb[0].mxu0
  %1190 = vmatprep.mubr.bf16.mxu0 0
  %1191 = vmatmul.mubr.bf16.gmra.mrb[0].mxu0 %v672
  %v1192 = vpop.f32.mrb[0].mxu0
  %v1193 = vadd.f32 %v236, %v1192
  %v1194 = vpop.f32.mrb[0].mxu0
  %v1195 = vpop.f32.mrb[0].mxu0
  %v1196 = vadd.f32 %v236, %v1195
  %v1197 = vpop.f32.mrb[0].mxu0
  %1198 = vmatprep.mubr.bf16.mxu0 0
  %1199 = vmatmul.mubr.bf16.gmra.mrb[0].mxu0 %v673
  %v1200 = vpop.f32.mrb[0].mxu0
  %v1201 = vadd.f32 %v236, %v1200
  %v1202 = vpop.f32.mrb[0].mxu0
  %v1203 = vpop.f32.mrb[0].mxu0
  %v1204 = vadd.f32 %v236, %v1203
  %v1205 = vpop.f32.mrb[0].mxu0
  %1206 = vmatprep.mubr.bf16.mxu0 0
  %1207 = vmatmul.mubr.bf16.gmra.mrb[0].mxu0 %v674
  %v1208 = vpop.f32.mrb[0].mxu0
  %v1209 = vadd.f32 %v236, %v1208
  %v1210 = vpop.f32.mrb[0].mxu0
  %v1211 = vpop.f32.mrb[0].mxu0
  %v1212 = vadd.f32 %v236, %v1211
  %v1213 = vpop.f32.mrb[0].mxu0
  %1214 = vmatprep.mubr.bf16.mxu0 0
  %1215 = vmatmul.mubr.bf16.gmra.mrb[0].mxu0 %v675
  %v1216 = vpop.f32.mrb[0].mxu0
  %v1217 = vadd.f32 %v236, %v1216
  %v1218 = vpop.f32.mrb[0].mxu0
  %v1219 = vpop.f32.mrb[0].mxu0
  %v1220 = vadd.f32 %v236, %v1219
  %v1221 = vpop.f32.mrb[0].mxu0
  %1222 = vmatprep.mubr.bf16.mxu0 0
  %1223 = vmatmul.mubr.bf16.gmra.mrb[0].mxu0 %v676
  %v1224 = vpop.f32.mrb[0].mxu0
  %v1225 = vadd.f32 %v236, %v1224
  %v1226 = vpop.f32.mrb[0].mxu0
  %v1227 = vpop.f32.mrb[0].mxu0
  %v1228 = vadd.f32 %v236, %v1227
  %v1229 = vpop.f32.mrb[0].mxu0
  %1230 = vmatprep.mubr.bf16.mxu0 0
  %1231 = vmatmul.mubr.bf16.gmra.mrb[0].mxu0 %v677
  %v1232 = vpop.f32.mrb[0].mxu0
  %v1233 = vadd.f32 %v236, %v1232
  %v1234 = vpop.f32.mrb[0].mxu0
  %v1235 = vpop.f32.mrb[0].mxu0
  %v1236 = vadd.f32 %v236, %v1235
  %v1237 = vpop.f32.mrb[0].mxu0
  %1238 = vmatprep.mubr.bf16.mxu0 0
  %1239 = vmatmul.mubr.bf16.gmra.mrb[0].mxu0 %v678
  %v1240 = vpop.f32.mrb[0].mxu0
  %v1241 = vadd.f32 %v236, %v1240
  %v1242 = vpop.f32.mrb[0].mxu0
  %v1243 = vpop.f32.mrb[0].mxu0
  %v1244 = vadd.f32 %v236, %v1243
  %v1245 = vpop.f32.mrb[0].mxu0
  %1246 = vmatprep.mubr.bf16.mxu0 0
  %1247 = vmatmul.mubr.bf16.gmra.mrb[0].mxu0 %v679
  %v1248 = vpop.f32.mrb[0].mxu0
  %v1249 = vadd.f32 %v236, %v1248
  %v1250 = vpop.f32.mrb[0].mxu0
  %v1251 = vpop.f32.mrb[0].mxu0
  %v1252 = vadd.f32 %v236, %v1251
  %v1253 = vpop.f32.mrb[0].mxu0
  %1254 = vmatprep.mubr.bf16.mxu0 0
  %1255 = vmatmul.mubr.bf16.gmra.mrb[0].mxu0 %v680
  %v1256 = vpop.f32.mrb[0].mxu0
  %v1257 = vadd.f32 %v236, %v1256
  %v1258 = vpop.f32.mrb[0].mxu0
  %v1259 = vpop.f32.mrb[0].mxu0
  %v1260 = vadd.f32 %v236, %v1259
  %v1261 = vpop.f32.mrb[0].mxu0
  %1262 = vmatprep.mubr.bf16.mxu0 0
  %1263 = vmatmul.mubr.bf16.gmra.mrb[0].mxu0 %v681
  %v1264 = vpop.f32.mrb[0].mxu0
  %v1265 = vadd.f32 %v236, %v1264
  %v1266 = vpop.f32.mrb[0].mxu0
  %v1267 = vpop.f32.mrb[0].mxu0
  %v1268 = vadd.f32 %v236, %v1267
  %v1269 = vpop.f32.mrb[0].mxu0
  %1270 = vmatprep.mubr.bf16.mxu0 0
  %1271 = vmatmul.mubr.bf16.gmra.mrb[0].mxu0 %v682
  %v1272 = vpop.f32.mrb[0].mxu0
  %v1273 = vadd.f32 %v236, %v1272
  %v1274 = vpop.f32.mrb[0].mxu0
  %v1275 = vpop.f32.mrb[0].mxu0
  %v1276 = vadd.f32 %v236, %v1275
  %v1277 = vpop.f32.mrb[0].mxu0
  %1278 = vmatprep.mubr.bf16.mxu0 0
  %1279 = vmatmul.mubr.bf16.gmra.mrb[0].mxu0 %v683
  %v1280 = vpop.f32.mrb[0].mxu0
  %v1281 = vadd.f32 %v236, %v1280
  %v1282 = vpop.f32.mrb[0].mxu0
  %v1283 = vpop.f32.mrb[0].mxu0
  %v1284 = vadd.f32 %v236, %v1283
  %v1285 = vpop.f32.mrb[0].mxu0
  %1286 = vmatprep.mubr.bf16.mxu0 0
  %1287 = vmatmul.mubr.bf16.gmra.mrb[0].mxu0 %v684
  %v1288 = vpop.f32.mrb[0].mxu0
  %v1289 = vadd.f32 %v236, %v1288
  %v1290 = vpop.f32.mrb[0].mxu0
  %v1291 = vpop.f32.mrb[0].mxu0
  %v1292 = vadd.f32 %v236, %v1291
  %v1293 = vpop.f32.mrb[0].mxu0
  %1294 = vmatprep.mubr.bf16.mxu0 0
  %1295 = vmatmul.mubr.bf16.gmra.mrb[0].mxu0 %v685
  %v1296 = vpop.f32.mrb[0].mxu0
  %v1297 = vadd.f32 %v236, %v1296
  %v1298 = vpop.f32.mrb[0].mxu0
  %v1299 = vpop.f32.mrb[0].mxu0
  %v1300 = vadd.f32 %v236, %v1299
  %v1301 = vpop.f32.mrb[0].mxu0
  %1302 = vmatprep.mubr.bf16.mxu0 0
  %1303 = vmatmul.mubr.bf16.gmra.mrb[0].mxu0 %v686
  %v1304 = vpop.f32.mrb[0].mxu0
  %v1305 = vadd.f32 %v236, %v1304
  %v1306 = vpop.f32.mrb[0].mxu0
  %v1307 = vpop.f32.mrb[0].mxu0
  %v1308 = vadd.f32 %v236, %v1307
  %v1309 = vpop.f32.mrb[0].mxu0
  %1310 = vmatprep.mubr.bf16.mxu0 0
  %1311 = vmatmul.mubr.bf16.gmra.mrb[0].mxu0 %v687
  %v1312 = vpop.f32.mrb[0].mxu0
  %v1313 = vadd.f32 %v236, %v1312
  %v1314 = vpop.f32.mrb[0].mxu0
  %v1315 = vpop.f32.mrb[0].mxu0
  %v1316 = vadd.f32 %v236, %v1315
  %v1317 = vpop.f32.mrb[0].mxu0
  %1318 = vmatprep.mubr.bf16.mxu0 0
  %1319 = vmatmul.mubr.bf16.gmra.mrb[0].mxu0 %v688
  %v1320 = vpop.f32.mrb[0].mxu0
  %v1321 = vadd.f32 %v236, %v1320
  %v1322 = vpop.f32.mrb[0].mxu0
  %v1323 = vpop.f32.mrb[0].mxu0
  %v1324 = vadd.f32 %v236, %v1323
  %v1325 = vpop.f32.mrb[0].mxu0
  %1326 = vmatprep.mubr.bf16.mxu0 0
  %1327 = vmatmul.mubr.bf16.gmra.mrb[0].mxu0 %v689
  %v1328 = vpop.f32.mrb[0].mxu0
  %v1329 = vadd.f32 %v236, %v1328
  %v1330 = vpop.f32.mrb[0].mxu0
  %v1331 = vpop.f32.mrb[0].mxu0
  %v1332 = vadd.f32 %v236, %v1331
  %v1333 = vpop.f32.mrb[0].mxu0
  %1334 = vmatprep.mubr.bf16.mxu0 0
  %1335 = vmatmul.mubr.bf16.gmra.mrb[0].mxu0 %v690
  %v1336 = vpop.f32.mrb[0].mxu0
  %v1337 = vadd.f32 %v236, %v1336
  %v1338 = vpop.f32.mrb[0].mxu0
  %v1339 = vpop.f32.mrb[0].mxu0
  %v1340 = vadd.f32 %v236, %v1339
  %v1341 = vpop.f32.mrb[0].mxu0
  %1342 = vmatprep.mubr.bf16.mxu0 0
  %1343 = vmatmul.mubr.bf16.gmra.mrb[0].mxu0 %v691
  %v1344 = vpop.f32.mrb[0].mxu0
  %v1345 = vadd.f32 %v236, %v1344
  %v1346 = vpop.f32.mrb[0].mxu0
  %v1347 = vpop.f32.mrb[0].mxu0
  %v1348 = vadd.f32 %v236, %v1347
  %v1349 = vpop.f32.mrb[0].mxu0
  %1350 = vmatprep.mubr.bf16.mxu0 0
  %1351 = vmatmul.mubr.bf16.gmra.mrb[0].mxu0 %v692
  %v1352 = vpop.f32.mrb[0].mxu0
  %v1353 = vadd.f32 %v236, %v1352
  %v1354 = vpop.f32.mrb[0].mxu0
  %v1355 = vpop.f32.mrb[0].mxu0
  %v1356 = vadd.f32 %v236, %v1355
  %v1357 = vpop.f32.mrb[0].mxu0
  %1358 = vmatprep.mubr.bf16.mxu0 0
  %1359 = vmatmul.mubr.bf16.gmra.mrb[0].mxu0 %v693
  %v1360 = vpop.f32.mrb[0].mxu0
  %v1361 = vadd.f32 %v236, %v1360
  %v1362 = vpop.f32.mrb[0].mxu0
  %v1363 = vpop.f32.mrb[0].mxu0
  %v1364 = vadd.f32 %v236, %v1363
  %v1365 = vpop.f32.mrb[0].mxu0
  %1366 = vmatprep.mubr.bf16.mxu0 0
  %1367 = vmatmul.mubr.bf16.gmra.mrb[0].mxu0 %v694
  %v1368 = vpop.f32.mrb[0].mxu0
  %v1369 = vadd.f32 %v236, %v1368
  %v1370 = vpop.f32.mrb[0].mxu0
  %v1371 = vpop.f32.mrb[0].mxu0
  %v1372 = vadd.f32 %v236, %v1371
  %v1373 = vpop.f32.mrb[0].mxu0
  %1374 = vmatprep.mubr.bf16.mxu0 0
  %1375 = vmatmul.mubr.bf16.gmra.mrb[0].mxu0 %v695
  %v1376 = vpop.f32.mrb[0].mxu0
  %v1377 = vadd.f32 %v236, %v1376
  %v1378 = vpop.f32.mrb[0].mxu0
  %v1379 = vpop.f32.mrb[0].mxu0
  %v1380 = vadd.f32 %v236, %v1379
  %v1381 = vpop.f32.mrb[0].mxu0
  %1382 = vmatprep.mubr.bf16.mxu0 0
  %1383 = vmatmul.mubr.bf16.gmra.mrb[0].mxu0 %v696
  %v1384 = vpop.f32.mrb[0].mxu0
  %v1385 = vadd.f32 %v236, %v1384
  %v1386 = vpop.f32.mrb[0].mxu0
  %v1387 = vpop.f32.mrb[0].mxu0
  %v1388 = vadd.f32 %v236, %v1387
  %v1389 = vpop.f32.mrb[0].mxu0
  %1390 = vmatprep.mubr.bf16.mxu0 0
  %1391 = vmatmul.mubr.bf16.gmra.mrb[0].mxu0 %v697
  %v1392 = vpop.f32.mrb[0].mxu0
  %v1393 = vadd.f32 %v236, %v1392
  %v1394 = vpop.f32.mrb[0].mxu0
  %v1395 = vpop.f32.mrb[0].mxu0
  %v1396 = vadd.f32 %v236, %v1395
  %v1397 = vpop.f32.mrb[0].mxu0
  %1398 = vmatprep.mubr.bf16.mxu0 0
  %1399 = vmatmul.mubr.bf16.gmra.mrb[0].mxu0 %v698
  %v1400 = vpop.f32.mrb[0].mxu0
  %v1401 = vadd.f32 %v236, %v1400
  %v1402 = vpop.f32.mrb[0].mxu0
  %v1403 = vpop.f32.mrb[0].mxu0
  %v1404 = vadd.f32 %v236, %v1403
  %v1405 = vpop.f32.mrb[0].mxu0
  %1406 = vmatprep.mubr.bf16.mxu0 0
  %1407 = vmatmul.mubr.bf16.gmra.mrb[0].mxu0 %v699
  %v1408 = vpop.f32.mrb[0].mxu0
  %v1409 = vadd.f32 %v236, %v1408
  %v1410 = vpop.f32.mrb[0].mxu0
  %v1411 = vpop.f32.mrb[0].mxu0
  %v1412 = vadd.f32 %v236, %v1411
  %v1413 = vpop.f32.mrb[0].mxu0
  %1414 = vmatprep.mubr.bf16.mxu0 0
  %1415 = vmatmul.mubr.bf16.gmra.mrb[0].mxu0 %v700
  %v1416 = vpop.f32.mrb[0].mxu0
  %v1417 = vadd.f32 %v236, %v1416
  %v1418 = vpop.f32.mrb[0].mxu0
  %v1419 = vpop.f32.mrb[0].mxu0
  %v1420 = vadd.f32 %v236, %v1419
  %v1421 = vpop.f32.mrb[0].mxu0
  %1422 = vmatprep.mubr.bf16.mxu0 0
  %1423 = vmatmul.mubr.bf16.gmra.mrb[0].mxu0 %v701
  %v1424 = vpop.f32.mrb[0].mxu0
  %v1425 = vadd.f32 %v236, %v1424
  %v1426 = vpop.f32.mrb[0].mxu0
  %v1427 = vpop.f32.mrb[0].mxu0
  %v1428 = vadd.f32 %v236, %v1427
  %v1429 = vpop.f32.mrb[0].mxu0
  %1430 = vmatprep.mubr.bf16.mxu0 0
  %1431 = vmatmul.mubr.bf16.gmra.mrb[0].mxu0 %v702
  %v1432 = vpop.f32.mrb[0].mxu0
  %v1433 = vadd.f32 %v236, %v1432
  %v1434 = vpop.f32.mrb[0].mxu0
  %v1435 = vpop.f32.mrb[0].mxu0
  %v1436 = vadd.f32 %v236, %v1435
  %v1437 = vpop.f32.mrb[0].mxu0
  %1438 = vmatprep.mubr.bf16.mxu0 0
  %1439 = vmatmul.mubr.bf16.gmra.mrb[0].mxu0 %v703
  %v1440 = vpop.f32.mrb[0].mxu0
  %v1441 = vadd.f32 %v236, %v1440
  %v1442 = vpop.f32.mrb[0].mxu0
  %v1443 = vpop.f32.mrb[0].mxu0
  %v1444 = vadd.f32 %v236, %v1443
  %v1445 = vpop.f32.mrb[0].mxu0
  %1446 = vmatprep.mubr.bf16.mxu0 0
  %1447 = vmatmul.mubr.bf16.gmra.mrb[0].mxu0 %v704
  %v1448 = vpop.f32.mrb[0].mxu0
  %v1449 = vadd.f32 %v236, %v1448
  %v1450 = vpop.f32.mrb[0].mxu0
  %v1451 = vpop.f32.mrb[0].mxu0
  %v1452 = vadd.f32 %v236, %v1451
  %v1453 = vpop.f32.mrb[0].mxu0
  %1454 = vmatprep.mubr.bf16.mxu0 0
  %1455 = vmatmul.mubr.bf16.gmra.mrb[0].mxu0 %v705
  %v1456 = vpop.f32.mrb[0].mxu0
  %v1457 = vadd.f32 %v236, %v1456
  %v1458 = vpop.f32.mrb[0].mxu0
  %v1459 = vpop.f32.mrb[0].mxu0
  %v1460 = vadd.f32 %v236, %v1459
  %v1461 = vpop.f32.mrb[0].mxu0
  %1462 = vmatprep.mubr.bf16.mxu0 0
  %1463 = vmatmul.mubr.bf16.gmra.mrb[0].mxu0 %v706
  %v1464 = vpop.f32.mrb[0].mxu0
  %v1465 = vadd.f32 %v236, %v1464
  %v1466 = vpop.f32.mrb[0].mxu0
  %v1467 = vpop.f32.mrb[0].mxu0
  %v1468 = vadd.f32 %v236, %v1467
  %v1469 = vpop.f32.mrb[0].mxu0
  %1470 = vmatprep.mubr.bf16.mxu0 0
  %1471 = vmatmul.mubr.bf16.gmra.mrb[0].mxu0 %v707
  %v1472 = vpop.f32.mrb[0].mxu0
  %v1473 = vadd.f32 %v236, %v1472
  %v1474 = vpop.f32.mrb[0].mxu0
  %v1475 = vpop.f32.mrb[0].mxu0
  %v1476 = vadd.f32 %v236, %v1475
  %v1477 = vpop.f32.mrb[0].mxu0
  %1478 = vmatprep.mubr.bf16.mxu0 0
  %1479 = vmatmul.mubr.bf16.gmra.mrb[0].mxu0 %v708
  %v1480 = vpop.f32.mrb[0].mxu0
  %v1481 = vadd.f32 %v236, %v1480
  %v1482 = vpop.f32.mrb[0].mxu0
  %v1483 = vpop.f32.mrb[0].mxu0
  %v1484 = vadd.f32 %v236, %v1483
  %v1485 = vpop.f32.mrb[0].mxu0
  %1486 = vmatprep.mubr.bf16.mxu0 0
  %1487 = vmatmul.mubr.bf16.gmra.mrb[0].mxu0 %v709
  %v1488 = vpop.f32.mrb[0].mxu0
  %v1489 = vadd.f32 %v236, %v1488
  %v1490 = vpop.f32.mrb[0].mxu0
  %v1491 = vpop.f32.mrb[0].mxu0
  %v1492 = vadd.f32 %v236, %v1491
  %v1493 = vpop.f32.mrb[0].mxu0
  %1494 = vmatprep.mubr.bf16.mxu0 0
  %1495 = vmatmul.mubr.bf16.gmra.mrb[0].mxu0 %v710
  %v1496 = vpop.f32.mrb[0].mxu0
  %v1497 = vadd.f32 %v236, %v1496
  %v1498 = vpop.f32.mrb[0].mxu0
  %v1499 = vpop.f32.mrb[0].mxu0
  %v1500 = vadd.f32 %v236, %v1499
  %v1501 = vpop.f32.mrb[0].mxu0
  %1502 = vmatprep.mubr.bf16.mxu0 0
  %1503 = vmatmul.mubr.bf16.gmra.mrb[0].mxu0 %v711
  %v1504 = vpop.f32.mrb[0].mxu0
  %v1505 = vadd.f32 %v236, %v1504
  %v1506 = vpop.f32.mrb[0].mxu0
  %v1507 = vpop.f32.mrb[0].mxu0
  %v1508 = vadd.f32 %v236, %v1507
  %v1509 = vpop.f32.mrb[0].mxu0
  %1510 = vmatprep.mubr.bf16.mxu0 0
  %1511 = vmatmul.mubr.bf16.gmra.mrb[0].mxu0 %v712
  %v1512 = vpop.f32.mrb[0].mxu0
  %v1513 = vadd.f32 %v236, %v1512
  %v1514 = vpop.f32.mrb[0].mxu0
  %v1515 = vpop.f32.mrb[0].mxu0
  %v1516 = vadd.f32 %v236, %v1515
  %v1517 = vpop.f32.mrb[0].mxu0
  %1518 = vmatprep.mubr.bf16.mxu0 0
  %1519 = vmatmul.mubr.bf16.gmra.mrb[0].mxu0 %v713
  %v1520 = vpop.f32.mrb[0].mxu0
  %v1521 = vadd.f32 %v236, %v1520
  %v1522 = vpop.f32.mrb[0].mxu0
  %v1523 = vpop.f32.mrb[0].mxu0
  %v1524 = vadd.f32 %v236, %v1523
  %v1525 = vpop.f32.mrb[0].mxu0
  %1526 = vmatprep.mubr.bf16.mxu0 0
  %1527 = vmatmul.mubr.bf16.gmra.mrb[0].mxu0 %v714
  %v1528 = vpop.f32.mrb[0].mxu0
  %v1529 = vadd.f32 %v236, %v1528
  %v1530 = vpop.f32.mrb[0].mxu0
  %v1531 = vpop.f32.mrb[0].mxu0
  %v1532 = vadd.f32 %v236, %v1531
  %v1533 = vpop.f32.mrb[0].mxu0
  %1534 = vmatprep.mubr.bf16.mxu0 0
  %1535 = vmatmul.mubr.bf16.gmra.mrb[0].mxu0 %v715
  %v1536 = vpop.f32.mrb[0].mxu0
  %v1537 = vadd.f32 %v236, %v1536
  %v1538 = vpop.f32.mrb[0].mxu0
  %v1539 = vpop.f32.mrb[0].mxu0
  %v1540 = vadd.f32 %v236, %v1539
  %v1541 = vpop.f32.mrb[0].mxu0
  %1542 = vmatprep.mubr.bf16.mxu0 0
  %1543 = vmatmul.mubr.bf16.gmra.mrb[0].mxu0 %v716
  %v1544 = vpop.f32.mrb[0].mxu0
  %v1545 = vadd.f32 %v236, %v1544
  %v1546 = vpop.f32.mrb[0].mxu0
  %v1547 = vpop.f32.mrb[0].mxu0
  %v1548 = vadd.f32 %v236, %v1547
  %v1549 = vpop.f32.mrb[0].mxu0
  %1550 = vmatprep.mubr.bf16.mxu0 0
  %1551 = vmatmul.mubr.bf16.gmra.mrb[0].mxu0 %v717
  %v1552 = vpop.f32.mrb[0].mxu0
  %v1553 = vadd.f32 %v236, %v1552
  %v1554 = vpop.f32.mrb[0].mxu0
  %v1555 = vpop.f32.mrb[0].mxu0
  %v1556 = vadd.f32 %v236, %v1555
  %v1557 = vpop.f32.mrb[0].mxu0
  %1558 = vmatprep.mubr.bf16.mxu0 0
  %1559 = vmatmul.mubr.bf16.gmra.mrb[0].mxu0 %v718
  %v1560 = vpop.f32.mrb[0].mxu0
  %v1561 = vadd.f32 %v236, %v1560
  %v1562 = vpop.f32.mrb[0].mxu0
  %v1563 = vpop.f32.mrb[0].mxu0
  %v1564 = vadd.f32 %v236, %v1563
  %v1565 = vpop.f32.mrb[0].mxu0
  %1566 = vmatprep.mubr.bf16.mxu0 0
  %1567 = vmatmul.mubr.bf16.gmra.mrb[0].mxu0 %v719
  %v1568 = vpop.f32.mrb[0].mxu0
  %v1569 = vadd.f32 %v236, %v1568
  %v1570 = vpop.f32.mrb[0].mxu0
  %v1571 = vpop.f32.mrb[0].mxu0
  %v1572 = vadd.f32 %v236, %v1571
  %v1573 = vpop.f32.mrb[0].mxu0
  %1574 = vmatprep.mubr.bf16.mxu0 0
  %1575 = vmatmul.mubr.bf16.gmra.mrb[0].mxu0 %v720
  %v1576 = vpop.f32.mrb[0].mxu0
  %v1577 = vadd.f32 %v236, %v1576
  %v1578 = vpop.f32.mrb[0].mxu0
  %v1579 = vpop.f32.mrb[0].mxu0
  %v1580 = vadd.f32 %v236, %v1579
  %v1581 = vpop.f32.mrb[0].mxu0
  %1582 = vmatprep.mubr.bf16.mxu0 0
  %1583 = vmatmul.mubr.bf16.gmra.mrb[0].mxu0 %v721
  %v1584 = vpop.f32.mrb[0].mxu0
  %v1585 = vadd.f32 %v236, %v1584
  %v1586 = vpop.f32.mrb[0].mxu0
  %v1587 = vpop.f32.mrb[0].mxu0
  %v1588 = vadd.f32 %v236, %v1587
  %v1589 = vpop.f32.mrb[0].mxu0
  %1590 = vmatprep.mubr.bf16.mxu0 0
  %1591 = vmatmul.mubr.bf16.gmra.mrb[0].mxu0 %v722
  %v1592 = vpop.f32.mrb[0].mxu0
  %v1593 = vadd.f32 %v236, %v1592
  %v1594 = vpop.f32.mrb[0].mxu0
  %v1595 = vpop.f32.mrb[0].mxu0
  %v1596 = vadd.f32 %v236, %v1595
  %v1597 = vpop.f32.mrb[0].mxu0
  %1598 = vmatprep.mubr.bf16.mxu0 0
  %1599 = vmatmul.mubr.bf16.gmra.mrb[0].mxu0 %v723
  %v1600 = vpop.f32.mrb[0].mxu0
  %v1601 = vadd.f32 %v236, %v1600
  %v1602 = vpop.f32.mrb[0].mxu0
  %v1603 = vpop.f32.mrb[0].mxu0
  %v1604 = vadd.f32 %v236, %v1603
  %v1605 = vpop.f32.mrb[0].mxu0
  %1606 = vmatprep.mubr.bf16.mxu0 0
  %1607 = vmatmul.mubr.bf16.gmra.mrb[0].mxu0 %v724
  %v1608 = vpop.f32.mrb[0].mxu0
  %v1609 = vadd.f32 %v236, %v1608
  %v1610 = vpop.f32.mrb[0].mxu0
  %v1611 = vpop.f32.mrb[0].mxu0
  %v1612 = vadd.f32 %v236, %v1611
  %v1613 = vpop.f32.mrb[0].mxu0
  %1614 = vmatprep.mubr.bf16.mxu0 0
  %1615 = vmatmul.mubr.bf16.gmra.mrb[0].mxu0 %v725
  %v1616 = vpop.f32.mrb[0].mxu0
  %v1617 = vadd.f32 %v236, %v1616
  %v1618 = vpop.f32.mrb[0].mxu0
  %v1619 = vpop.f32.mrb[0].mxu0
  %v1620 = vadd.f32 %v236, %v1619
  %v1621 = vpop.f32.mrb[0].mxu0
  %1622 = vmatprep.mubr.bf16.mxu0 0
  %1623 = vmatmul.mubr.bf16.gmra.mrb[0].mxu0 %v726
  %v1624 = vpop.f32.mrb[0].mxu0
  %v1625 = vadd.f32 %v236, %v1624
  %v1626 = vpop.f32.mrb[0].mxu0
  %v1627 = vpop.f32.mrb[0].mxu0
  %v1628 = vadd.f32 %v236, %v1627
  %v1629 = vpop.f32.mrb[0].mxu0
  %1630 = vmatprep.mubr.bf16.mxu0 0
  %1631 = vmatmul.mubr.bf16.gmra.mrb[0].mxu0 %v727
  %v1632 = vpop.f32.mrb[0].mxu0
  %v1633 = vadd.f32 %v236, %v1632
  %v1634 = vpop.f32.mrb[0].mxu0
  %v1635 = vpop.f32.mrb[0].mxu0
  %v1636 = vadd.f32 %v236, %v1635
  %v1637 = vpop.f32.mrb[0].mxu0
  %1638 = vmatprep.mubr.bf16.mxu0 0
  %1639 = vmatmul.mubr.bf16.gmra.mrb[0].mxu0 %v728
  %v1640 = vpop.f32.mrb[0].mxu0
  %v1641 = vadd.f32 %v236, %v1640
  %v1642 = vpop.f32.mrb[0].mxu0
  %v1643 = vpop.f32.mrb[0].mxu0
  %v1644 = vadd.f32 %v236, %v1643
  %v1645 = vpop.f32.mrb[0].mxu0
  %1646 = vmatprep.mubr.bf16.mxu0 0
  %1647 = vmatmul.mubr.bf16.gmra.mrb[0].mxu0 %v729
  %v1648 = vpop.f32.mrb[0].mxu0
  %v1649 = vadd.f32 %v236, %v1648
  %v1650 = vpop.f32.mrb[0].mxu0
  %v1651 = vpop.f32.mrb[0].mxu0
  %v1652 = vadd.f32 %v236, %v1651
  %v1653 = vpop.f32.mrb[0].mxu0
  %1654 = vmatprep.mubr.bf16.mxu0 0
  %1655 = vmatmul.mubr.bf16.gmra.mrb[0].mxu0 %v730
  %v1656 = vpop.f32.mrb[0].mxu0
  %v1657 = vadd.f32 %v236, %v1656
  %v1658 = vpop.f32.mrb[0].mxu0
  %v1659 = vpop.f32.mrb[0].mxu0
  %v1660 = vadd.f32 %v236, %v1659
  %v1661 = vpop.f32.mrb[0].mxu0
  %1662 = vmatprep.mubr.bf16.mxu0 0
  %1663 = vmatmul.mubr.bf16.gmra.mrb[0].mxu0 %v731
  %v1664 = vpop.f32.mrb[0].mxu0
  %v1665 = vadd.f32 %v236, %v1664
  %v1666 = vpop.f32.mrb[0].mxu0
  %v1667 = vpop.f32.mrb[0].mxu0
  %v1668 = vadd.f32 %v236, %v1667
  %v1669 = vpop.f32.mrb[0].mxu0
  %1670 = vmatprep.mubr.bf16.mxu0 0
  %1671 = vmatmul.mubr.bf16.gmra.mrb[0].mxu0 %v732
  %v1672 = vpop.f32.mrb[0].mxu0
  %v1673 = vadd.f32 %v236, %v1672
  %v1674 = vpop.f32.mrb[0].mxu0
  %v1675 = vpop.f32.mrb[0].mxu0
  %v1676 = vadd.f32 %v236, %v1675
  %v1677 = vpop.f32.mrb[0].mxu0
  %1678 = vmatprep.mubr.bf16.mxu0 0
  %1679 = vmatmul.mubr.bf16.gmra.mrb[0].mxu0 %v733
  %v1680 = vpop.f32.mrb[0].mxu0
  %v1681 = vadd.f32 %v236, %v1680
  %v1682 = vpop.f32.mrb[0].mxu0
  %v1683 = vpop.f32.mrb[0].mxu0
  %v1684 = vadd.f32 %v236, %v1683
  %v1685 = vpop.f32.mrb[0].mxu0
  %1686 = vmatprep.mubr.bf16.mxu0 0
  %1687 = vmatmul.mubr.bf16.gmra.mrb[0].mxu0 %v734
  %v1688 = vpop.f32.mrb[0].mxu0
  %v1689 = vadd.f32 %v236, %v1688
  %v1690 = vpop.f32.mrb[0].mxu0
  %v1691 = vpop.f32.mrb[0].mxu0
  %v1692 = vadd.f32 %v236, %v1691
  %v1693 = vpop.f32.mrb[0].mxu0
  %1694 = vmatprep.mubr.bf16.mxu0 0
  %1695 = vmatmul.mubr.bf16.gmra.mrb[0].mxu0 %v735
  %v1696 = vpop.f32.mrb[0].mxu0
  %v1697 = vadd.f32 %v236, %v1696
  %v1698 = vpop.f32.mrb[0].mxu0
  %v1699 = vpop.f32.mrb[0].mxu0
  %v1700 = vadd.f32 %v236, %v1699
  %v1701 = vpop.f32.mrb[0].mxu0
  %1702 = vmatprep.mubr.bf16.mxu0 0
  %1703 = vmatmul.mubr.bf16.gmra.mrb[0].mxu0 %v736
  %v1704 = vpop.f32.mrb[0].mxu0
  %v1705 = vadd.f32 %v236, %v1704
  %v1706 = vpop.f32.mrb[0].mxu0
  %v1707 = vpop.f32.mrb[0].mxu0
  %v1708 = vadd.f32 %v236, %v1707
  %v1709 = vpop.f32.mrb[0].mxu0
  %1710 = vmatprep.mubr.bf16.mxu0 0
  %1711 = vmatmul.mubr.bf16.gmra.mrb[0].mxu0 %v737
  %v1712 = vpop.f32.mrb[0].mxu0
  %v1713 = vadd.f32 %v236, %v1712
  %v1714 = vpop.f32.mrb[0].mxu0
  %v1715 = vpop.f32.mrb[0].mxu0
  %v1716 = vadd.f32 %v236, %v1715
  %v1717 = vpop.f32.mrb[0].mxu0
  %1718 = vdwg.mxu0
  %v1719 = vmax.f32 %v921, 0.0
  %v1720 = vmax.f32 %v924, 0.0
  %v1721 = vmax.f32 %v929, 0.0
  %v1722 = vmax.f32 %v932, 0.0
  %v1723 = vmax.f32 %v937, 0.0
  %v1724 = vmax.f32 %v940, 0.0
  %v1725 = vmax.f32 %v945, 0.0
  %v1726 = vmax.f32 %v948, 0.0
  %v1727 = vmax.f32 %v953, 0.0
  %v1728 = vmax.f32 %v956, 0.0
  %v1729 = vmax.f32 %v961, 0.0
  %v1730 = vmax.f32 %v964, 0.0
  %v1731 = vmax.f32 %v969, 0.0
  %v1732 = vmax.f32 %v972, 0.0
  %v1733 = vmax.f32 %v977, 0.0
  %v1734 = vmax.f32 %v980, 0.0
  %v1735 = vmax.f32 %v985, 0.0
  %v1736 = vmax.f32 %v988, 0.0
  %v1737 = vmax.f32 %v993, 0.0
  %v1738 = vmax.f32 %v996, 0.0
  %v1739 = vmax.f32 %v1001, 0.0
  %v1740 = vmax.f32 %v1004, 0.0
  %v1741 = vmax.f32 %v1009, 0.0
  %v1742 = vmax.f32 %v1012, 0.0
  %v1743 = vmax.f32 %v1017, 0.0
  %v1744 = vmax.f32 %v1020, 0.0
  %v1745 = vmax.f32 %v1025, 0.0
  %v1746 = vmax.f32 %v1028, 0.0
  %v1747 = vmax.f32 %v1033, 0.0
  %v1748 = vmax.f32 %v1036, 0.0
  %v1749 = vmax.f32 %v1041, 0.0
  %v1750 = vmax.f32 %v1044, 0.0
  %v1751 = vmax.f32 %v1049, 0.0
  %v1752 = vmax.f32 %v1052, 0.0
  %v1753 = vmax.f32 %v1057, 0.0
  %v1754 = vmax.f32 %v1060, 0.0
  %v1755 = vmax.f32 %v1065, 0.0
  %v1756 = vmax.f32 %v1068, 0.0
  %v1757 = vmax.f32 %v1073, 0.0
  %v1758 = vmax.f32 %v1076, 0.0
  %v1759 = vmax.f32 %v1081, 0.0
  %v1760 = vmax.f32 %v1084, 0.0
  %v1761 = vmax.f32 %v1089, 0.0
  %v1762 = vmax.f32 %v1092, 0.0
  %v1763 = vmax.f32 %v1097, 0.0
  %v1764 = vmax.f32 %v1100, 0.0
  %v1765 = vmax.f32 %v1105, 0.0
  %v1766 = vmax.f32 %v1108, 0.0
  %v1767 = vmax.f32 %v1113, 0.0
  %v1768 = vmax.f32 %v1116, 0.0
  %v1769 = vmax.f32 %v1121, 0.0
  %v1770 = vmax.f32 %v1124, 0.0
  %v1771 = vmax.f32 %v1129, 0.0
  %v1772 = vmax.f32 %v1132, 0.0
  %v1773 = vmax.f32 %v1137, 0.0
  %v1774 = vmax.f32 %v1140, 0.0
  %v1775 = vmax.f32 %v1145, 0.0
  %v1776 = vmax.f32 %v1148, 0.0
  %v1777 = vmax.f32 %v1153, 0.0
  %v1778 = vmax.f32 %v1156, 0.0
  %v1779 = vmax.f32 %v1161, 0.0
  %v1780 = vmax.f32 %v1164, 0.0
  %v1781 = vmax.f32 %v1169, 0.0
  %v1782 = vmax.f32 %v1172, 0.0
  %v1783 = vmax.f32 %v1177, 0.0
  %v1784 = vmax.f32 %v1180, 0.0
  %v1785 = vmax.f32 %v1185, 0.0
  %v1786 = vmax.f32 %v1188, 0.0
  %v1787 = vmax.f32 %v1193, 0.0
  %v1788 = vmax.f32 %v1196, 0.0
  %v1789 = vmax.f32 %v1201, 0.0
  %v1790 = vmax.f32 %v1204, 0.0
  %v1791 = vmax.f32 %v1209, 0.0
  %v1792 = vmax.f32 %v1212, 0.0
  %v1793 = vmax.f32 %v1217, 0.0
  %v1794 = vmax.f32 %v1220, 0.0
  %v1795 = vmax.f32 %v1225, 0.0
  %v1796 = vmax.f32 %v1228, 0.0
  %v1797 = vmax.f32 %v1233, 0.0
  %v1798 = vmax.f32 %v1236, 0.0
  %v1799 = vmax.f32 %v1241, 0.0
  %v1800 = vmax.f32 %v1244, 0.0
  %v1801 = vmax.f32 %v1249, 0.0
  %v1802 = vmax.f32 %v1252, 0.0
  %v1803 = vmax.f32 %v1257, 0.0
  %v1804 = vmax.f32 %v1260, 0.0
  %v1805 = vmax.f32 %v1265, 0.0
  %v1806 = vmax.f32 %v1268, 0.0
  %v1807 = vmax.f32 %v1273, 0.0
  %v1808 = vmax.f32 %v1276, 0.0
  %v1809 = vmax.f32 %v1281, 0.0
  %v1810 = vmax.f32 %v1284, 0.0
  %v1811 = vmax.f32 %v1289, 0.0
  %v1812 = vmax.f32 %v1292, 0.0
  %v1813 = vmax.f32 %v1297, 0.0
  %v1814 = vmax.f32 %v1300, 0.0
  %v1815 = vmax.f32 %v1305, 0.0
  %v1816 = vmax.f32 %v1308, 0.0
  %v1817 = vmax.f32 %v1313, 0.0
  %v1818 = vmax.f32 %v1316, 0.0
  %v1819 = vmax.f32 %v1321, 0.0
  %v1820 = vmax.f32 %v1324, 0.0
  %v1821 = vmax.f32 %v1329, 0.0
  %v1822 = vmax.f32 %v1332, 0.0
  %v1823 = vmax.f32 %v1337, 0.0
  %v1824 = vmax.f32 %v1340, 0.0
  %v1825 = vmax.f32 %v1345, 0.0
  %v1826 = vmax.f32 %v1348, 0.0
  %v1827 = vmax.f32 %v1353, 0.0
  %v1828 = vmax.f32 %v1356, 0.0
  %v1829 = vmax.f32 %v1361, 0.0
  %v1830 = vmax.f32 %v1364, 0.0
  %v1831 = vmax.f32 %v1369, 0.0
  %v1832 = vmax.f32 %v1372, 0.0
  %v1833 = vmax.f32 %v1377, 0.0
  %v1834 = vmax.f32 %v1380, 0.0
  %v1835 = vmax.f32 %v1385, 0.0
  %v1836 = vmax.f32 %v1388, 0.0
  %v1837 = vmax.f32 %v1393, 0.0
  %v1838 = vmax.f32 %v1396, 0.0
  %v1839 = vmax.f32 %v1401, 0.0
  %v1840 = vmax.f32 %v1404, 0.0
  %v1841 = vmax.f32 %v1409, 0.0
  %v1842 = vmax.f32 %v1412, 0.0
  %v1843 = vmax.f32 %v1417, 0.0
  %v1844 = vmax.f32 %v1420, 0.0
  %v1845 = vmax.f32 %v1425, 0.0
  %v1846 = vmax.f32 %v1428, 0.0
  %v1847 = vmax.f32 %v1433, 0.0
  %v1848 = vmax.f32 %v1436, 0.0
  %v1849 = vmax.f32 %v1441, 0.0
  %v1850 = vmax.f32 %v1444, 0.0
  %v1851 = vmax.f32 %v1449, 0.0
  %v1852 = vmax.f32 %v1452, 0.0
  %v1853 = vmax.f32 %v1457, 0.0
  %v1854 = vmax.f32 %v1460, 0.0
  %v1855 = vmax.f32 %v1465, 0.0
  %v1856 = vmax.f32 %v1468, 0.0
  %v1857 = vmax.f32 %v1473, 0.0
  %v1858 = vmax.f32 %v1476, 0.0
  %v1859 = vmax.f32 %v1481, 0.0
  %v1860 = vmax.f32 %v1484, 0.0
  %v1861 = vmax.f32 %v1489, 0.0
  %v1862 = vmax.f32 %v1492, 0.0
  %v1863 = vmax.f32 %v1497, 0.0
  %v1864 = vmax.f32 %v1500, 0.0
  %v1865 = vmax.f32 %v1505, 0.0
  %v1866 = vmax.f32 %v1508, 0.0
  %v1867 = vmax.f32 %v1513, 0.0
  %v1868 = vmax.f32 %v1516, 0.0
  %v1869 = vmax.f32 %v1521, 0.0
  %v1870 = vmax.f32 %v1524, 0.0
  %v1871 = vmax.f32 %v1529, 0.0
  %v1872 = vmax.f32 %v1532, 0.0
  %v1873 = vmax.f32 %v1537, 0.0
  %v1874 = vmax.f32 %v1540, 0.0
  %v1875 = vmax.f32 %v1545, 0.0
  %v1876 = vmax.f32 %v1548, 0.0
  %v1877 = vmax.f32 %v1553, 0.0
  %v1878 = vmax.f32 %v1556, 0.0
  %v1879 = vmax.f32 %v1561, 0.0
  %v1880 = vmax.f32 %v1564, 0.0
  %v1881 = vmax.f32 %v1569, 0.0
  %v1882 = vmax.f32 %v1572, 0.0
  %v1883 = vmax.f32 %v1577, 0.0
  %v1884 = vmax.f32 %v1580, 0.0
  %v1885 = vmax.f32 %v1585, 0.0
  %v1886 = vmax.f32 %v1588, 0.0
  %v1887 = vmax.f32 %v1593, 0.0
  %v1888 = vmax.f32 %v1596, 0.0
  %v1889 = vmax.f32 %v1601, 0.0
  %v1890 = vmax.f32 %v1604, 0.0
  %v1891 = vmax.f32 %v1609, 0.0
  %v1892 = vmax.f32 %v1612, 0.0
  %v1893 = vmax.f32 %v1617, 0.0
  %v1894 = vmax.f32 %v1620, 0.0
  %v1895 = vmax.f32 %v1625, 0.0
  %v1896 = vmax.f32 %v1628, 0.0
  %v1897 = vmax.f32 %v1633, 0.0
  %v1898 = vmax.f32 %v1636, 0.0
  %v1899 = vmax.f32 %v1641, 0.0
  %v1900 = vmax.f32 %v1644, 0.0
  %v1901 = vmax.f32 %v1649, 0.0
  %v1902 = vmax.f32 %v1652, 0.0
  %v1903 = vmax.f32 %v1657, 0.0
  %v1904 = vmax.f32 %v1660, 0.0
  %v1905 = vmax.f32 %v1665, 0.0
  %v1906 = vmax.f32 %v1668, 0.0
  %v1907 = vmax.f32 %v1673, 0.0
  %v1908 = vmax.f32 %v1676, 0.0
  %v1909 = vmax.f32 %v1681, 0.0
  %v1910 = vmax.f32 %v1684, 0.0
  %v1911 = vmax.f32 %v1689, 0.0
  %v1912 = vmax.f32 %v1692, 0.0
  %v1913 = vmax.f32 %v1697, 0.0
  %v1914 = vmax.f32 %v1700, 0.0
  %v1915 = vmax.f32 %v1705, 0.0
  %v1916 = vmax.f32 %v1708, 0.0
  %v1917 = vmax.f32 %v1713, 0.0
  %v1918 = vmax.f32 %v1716, 0.0
  %vm1919 = vcmask 523264
  %v1920 = vsel %vm1919, %v1719, -inf
  %v1921 = vsel %vm1919, %v1769, -inf
  %v1922 = vmax.f32 %v1920, %v1921
  %v1923 = vsel %vm1919, %v1819, -inf
  %v1924 = vmax.f32 %v1922, %v1923
  %v1925 = vsel %vm1919, %v1869, -inf
  %v1926 = vmax.f32 %v1924, %v1925
  %v1927 = vsel %vm1919, %v1720, -inf
  %v1928 = vsel %vm1919, %v1770, -inf
  %v1929 = vmax.f32 %v1927, %v1928
  %v1930 = vsel %vm1919, %v1820, -inf
  %v1931 = vmax.f32 %v1929, %v1930
  %v1932 = vsel %vm1919, %v1870, -inf
  %v1933 = vmax.f32 %v1931, %v1932
  %v1934 = vsel %vm1919, %v1721, -inf
  %v1935 = vsel %vm1919, %v1771, -inf
  %v1936 = vmax.f32 %v1934, %v1935
  %v1937 = vsel %vm1919, %v1821, -inf
  %v1938 = vmax.f32 %v1936, %v1937
  %v1939 = vsel %vm1919, %v1871, -inf
  %v1940 = vmax.f32 %v1938, %v1939
  %v1941 = vsel %vm1919, %v1722, -inf
  %v1942 = vsel %vm1919, %v1772, -inf
  %v1943 = vmax.f32 %v1941, %v1942
  %v1944 = vsel %vm1919, %v1822, -inf
  %v1945 = vmax.f32 %v1943, %v1944
  %v1946 = vsel %vm1919, %v1872, -inf
  %v1947 = vmax.f32 %v1945, %v1946
  %v1948 = vsel %vm1919, %v1723, -inf
  %v1949 = vsel %vm1919, %v1773, -inf
  %v1950 = vmax.f32 %v1948, %v1949
  %v1951 = vsel %vm1919, %v1823, -inf
  %v1952 = vmax.f32 %v1950, %v1951
  %v1953 = vsel %vm1919, %v1873, -inf
  %v1954 = vmax.f32 %v1952, %v1953
  %v1955 = vsel %vm1919, %v1724, -inf
  %v1956 = vsel %vm1919, %v1774, -inf
  %v1957 = vmax.f32 %v1955, %v1956
  %v1958 = vsel %vm1919, %v1824, -inf
  %v1959 = vmax.f32 %v1957, %v1958
  %v1960 = vsel %vm1919, %v1874, -inf
  %v1961 = vmax.f32 %v1959, %v1960
  %v1962 = vsel %vm1919, %v1725, -inf
  %v1963 = vsel %vm1919, %v1775, -inf
  %v1964 = vmax.f32 %v1962, %v1963
  %v1965 = vsel %vm1919, %v1825, -inf
  %v1966 = vmax.f32 %v1964, %v1965
  %v1967 = vsel %vm1919, %v1875, -inf
  %v1968 = vmax.f32 %v1966, %v1967
  %v1969 = vsel %vm1919, %v1726, -inf
  %v1970 = vsel %vm1919, %v1776, -inf
  %v1971 = vmax.f32 %v1969, %v1970
  %v1972 = vsel %vm1919, %v1826, -inf
  %v1973 = vmax.f32 %v1971, %v1972
  %v1974 = vsel %vm1919, %v1876, -inf
  %v1975 = vmax.f32 %v1973, %v1974
  %v1976 = vsel %vm1919, %v1727, -inf
  %v1977 = vsel %vm1919, %v1777, -inf
  %v1978 = vmax.f32 %v1976, %v1977
  %v1979 = vsel %vm1919, %v1827, -inf
  %v1980 = vmax.f32 %v1978, %v1979
  %v1981 = vsel %vm1919, %v1877, -inf
  %v1982 = vmax.f32 %v1980, %v1981
  %v1983 = vsel %vm1919, %v1728, -inf
  %v1984 = vsel %vm1919, %v1778, -inf
  %v1985 = vmax.f32 %v1983, %v1984
  %v1986 = vsel %vm1919, %v1828, -inf
  %v1987 = vmax.f32 %v1985, %v1986
  %v1988 = vsel %vm1919, %v1878, -inf
  %v1989 = vmax.f32 %v1987, %v1988
  %v1990 = vsel %vm1919, %v1729, -inf
  %v1991 = vsel %vm1919, %v1779, -inf
  %v1992 = vmax.f32 %v1990, %v1991
  %v1993 = vsel %vm1919, %v1829, -inf
  %v1994 = vmax.f32 %v1992, %v1993
  %v1995 = vsel %vm1919, %v1879, -inf
  %v1996 = vmax.f32 %v1994, %v1995
  %v1997 = vsel %vm1919, %v1730, -inf
  %v1998 = vsel %vm1919, %v1780, -inf
  %v1999 = vmax.f32 %v1997, %v1998
  %v2000 = vsel %vm1919, %v1830, -inf
  %v2001 = vmax.f32 %v1999, %v2000
  %v2002 = vsel %vm1919, %v1880, -inf
  %v2003 = vmax.f32 %v2001, %v2002
  %v2004 = vsel %vm1919, %v1731, -inf
  %v2005 = vsel %vm1919, %v1781, -inf
  %v2006 = vmax.f32 %v2004, %v2005
  %v2007 = vsel %vm1919, %v1831, -inf
  %v2008 = vmax.f32 %v2006, %v2007
  %v2009 = vsel %vm1919, %v1881, -inf
  %v2010 = vmax.f32 %v2008, %v2009
  %v2011 = vsel %vm1919, %v1732, -inf
  %v2012 = vsel %vm1919, %v1782, -inf
  %v2013 = vmax.f32 %v2011, %v2012
  %v2014 = vsel %vm1919, %v1832, -inf
  %v2015 = vmax.f32 %v2013, %v2014
  %v2016 = vsel %vm1919, %v1882, -inf
  %v2017 = vmax.f32 %v2015, %v2016
  %v2018 = vsel %vm1919, %v1733, -inf
  %v2019 = vsel %vm1919, %v1783, -inf
  %v2020 = vmax.f32 %v2018, %v2019
  %v2021 = vsel %vm1919, %v1833, -inf
  %v2022 = vmax.f32 %v2020, %v2021
  %v2023 = vsel %vm1919, %v1883, -inf
  %v2024 = vmax.f32 %v2022, %v2023
  %v2025 = vsel %vm1919, %v1734, -inf
  %v2026 = vsel %vm1919, %v1784, -inf
  %v2027 = vmax.f32 %v2025, %v2026
  %v2028 = vsel %vm1919, %v1834, -inf
  %v2029 = vmax.f32 %v2027, %v2028
  %v2030 = vsel %vm1919, %v1884, -inf
  %v2031 = vmax.f32 %v2029, %v2030
  %v2032 = vsel %vm1919, %v1735, -inf
  %v2033 = vsel %vm1919, %v1785, -inf
  %v2034 = vmax.f32 %v2032, %v2033
  %v2035 = vsel %vm1919, %v1835, -inf
  %v2036 = vmax.f32 %v2034, %v2035
  %v2037 = vsel %vm1919, %v1885, -inf
  %v2038 = vmax.f32 %v2036, %v2037
  %v2039 = vsel %vm1919, %v1736, -inf
  %v2040 = vsel %vm1919, %v1786, -inf
  %v2041 = vmax.f32 %v2039, %v2040
  %v2042 = vsel %vm1919, %v1836, -inf
  %v2043 = vmax.f32 %v2041, %v2042
  %v2044 = vsel %vm1919, %v1886, -inf
  %v2045 = vmax.f32 %v2043, %v2044
  %v2046 = vsel %vm1919, %v1737, -inf
  %v2047 = vsel %vm1919, %v1787, -inf
  %v2048 = vmax.f32 %v2046, %v2047
  %v2049 = vsel %vm1919, %v1837, -inf
  %v2050 = vmax.f32 %v2048, %v2049
  %v2051 = vsel %vm1919, %v1887, -inf
  %v2052 = vmax.f32 %v2050, %v2051
  %v2053 = vsel %vm1919, %v1738, -inf
  %v2054 = vsel %vm1919, %v1788, -inf
  %v2055 = vmax.f32 %v2053, %v2054
  %v2056 = vsel %vm1919, %v1838, -inf
  %v2057 = vmax.f32 %v2055, %v2056
  %v2058 = vsel %vm1919, %v1888, -inf
  %v2059 = vmax.f32 %v2057, %v2058
  %v2060 = vsel %vm1919, %v1739, -inf
  %v2061 = vsel %vm1919, %v1789, -inf
  %v2062 = vmax.f32 %v2060, %v2061
  %v2063 = vsel %vm1919, %v1839, -inf
  %v2064 = vmax.f32 %v2062, %v2063
  %v2065 = vsel %vm1919, %v1889, -inf
  %v2066 = vmax.f32 %v2064, %v2065
  %v2067 = vsel %vm1919, %v1740, -inf
  %v2068 = vsel %vm1919, %v1790, -inf
  %v2069 = vmax.f32 %v2067, %v2068
  %v2070 = vsel %vm1919, %v1840, -inf
  %v2071 = vmax.f32 %v2069, %v2070
  %v2072 = vsel %vm1919, %v1890, -inf
  %v2073 = vmax.f32 %v2071, %v2072
  %v2074 = vsel %vm1919, %v1741, -inf
  %v2075 = vsel %vm1919, %v1791, -inf
  %v2076 = vmax.f32 %v2074, %v2075
  %v2077 = vsel %vm1919, %v1841, -inf
  %v2078 = vmax.f32 %v2076, %v2077
  %v2079 = vsel %vm1919, %v1891, -inf
  %v2080 = vmax.f32 %v2078, %v2079
  %v2081 = vsel %vm1919, %v1742, -inf
  %v2082 = vsel %vm1919, %v1792, -inf
  %v2083 = vmax.f32 %v2081, %v2082
  %v2084 = vsel %vm1919, %v1842, -inf
  %v2085 = vmax.f32 %v2083, %v2084
  %v2086 = vsel %vm1919, %v1892, -inf
  %v2087 = vmax.f32 %v2085, %v2086
  %v2088 = vsel %vm1919, %v1743, -inf
  %v2089 = vsel %vm1919, %v1793, -inf
  %v2090 = vmax.f32 %v2088, %v2089
  %v2091 = vsel %vm1919, %v1843, -inf
  %v2092 = vmax.f32 %v2090, %v2091
  %v2093 = vsel %vm1919, %v1893, -inf
  %v2094 = vmax.f32 %v2092, %v2093
  %v2095 = vsel %vm1919, %v1744, -inf
  %v2096 = vsel %vm1919, %v1794, -inf
  %v2097 = vmax.f32 %v2095, %v2096
  %v2098 = vsel %vm1919, %v1844, -inf
  %v2099 = vmax.f32 %v2097, %v2098
  %v2100 = vsel %vm1919, %v1894, -inf
  %v2101 = vmax.f32 %v2099, %v2100
  %v2102 = vsel %vm1919, %v1745, -inf
  %v2103 = vsel %vm1919, %v1795, -inf
  %v2104 = vmax.f32 %v2102, %v2103
  %v2105 = vsel %vm1919, %v1845, -inf
  %v2106 = vmax.f32 %v2104, %v2105
  %v2107 = vsel %vm1919, %v1895, -inf
  %v2108 = vmax.f32 %v2106, %v2107
  %v2109 = vsel %vm1919, %v1746, -inf
  %v2110 = vsel %vm1919, %v1796, -inf
  %v2111 = vmax.f32 %v2109, %v2110
  %v2112 = vsel %vm1919, %v1846, -inf
  %v2113 = vmax.f32 %v2111, %v2112
  %v2114 = vsel %vm1919, %v1896, -inf
  %v2115 = vmax.f32 %v2113, %v2114
  %v2116 = vsel %vm1919, %v1747, -inf
  %v2117 = vsel %vm1919, %v1797, -inf
  %v2118 = vmax.f32 %v2116, %v2117
  %v2119 = vsel %vm1919, %v1847, -inf
  %v2120 = vmax.f32 %v2118, %v2119
  %v2121 = vsel %vm1919, %v1897, -inf
  %v2122 = vmax.f32 %v2120, %v2121
  %v2123 = vsel %vm1919, %v1748, -inf
  %v2124 = vsel %vm1919, %v1798, -inf
  %v2125 = vmax.f32 %v2123, %v2124
  %v2126 = vsel %vm1919, %v1848, -inf
  %v2127 = vmax.f32 %v2125, %v2126
  %v2128 = vsel %vm1919, %v1898, -inf
  %v2129 = vmax.f32 %v2127, %v2128
  %v2130 = vsel %vm1919, %v1749, -inf
  %v2131 = vsel %vm1919, %v1799, -inf
  %v2132 = vmax.f32 %v2130, %v2131
  %v2133 = vsel %vm1919, %v1849, -inf
  %v2134 = vmax.f32 %v2132, %v2133
  %v2135 = vsel %vm1919, %v1899, -inf
  %v2136 = vmax.f32 %v2134, %v2135
  %v2137 = vsel %vm1919, %v1750, -inf
  %v2138 = vsel %vm1919, %v1800, -inf
  %v2139 = vmax.f32 %v2137, %v2138
  %v2140 = vsel %vm1919, %v1850, -inf
  %v2141 = vmax.f32 %v2139, %v2140
  %v2142 = vsel %vm1919, %v1900, -inf
  %v2143 = vmax.f32 %v2141, %v2142
  %v2144 = vsel %vm1919, %v1751, -inf
  %v2145 = vsel %vm1919, %v1801, -inf
  %v2146 = vmax.f32 %v2144, %v2145
  %v2147 = vsel %vm1919, %v1851, -inf
  %v2148 = vmax.f32 %v2146, %v2147
  %v2149 = vsel %vm1919, %v1901, -inf
  %v2150 = vmax.f32 %v2148, %v2149
  %v2151 = vsel %vm1919, %v1752, -inf
  %v2152 = vsel %vm1919, %v1802, -inf
  %v2153 = vmax.f32 %v2151, %v2152
  %v2154 = vsel %vm1919, %v1852, -inf
  %v2155 = vmax.f32 %v2153, %v2154
  %v2156 = vsel %vm1919, %v1902, -inf
  %v2157 = vmax.f32 %v2155, %v2156
  %v2158 = vsel %vm1919, %v1753, -inf
  %v2159 = vsel %vm1919, %v1803, -inf
  %v2160 = vmax.f32 %v2158, %v2159
  %v2161 = vsel %vm1919, %v1853, -inf
  %v2162 = vmax.f32 %v2160, %v2161
  %v2163 = vsel %vm1919, %v1903, -inf
  %v2164 = vmax.f32 %v2162, %v2163
  %v2165 = vsel %vm1919, %v1754, -inf
  %v2166 = vsel %vm1919, %v1804, -inf
  %v2167 = vmax.f32 %v2165, %v2166
  %v2168 = vsel %vm1919, %v1854, -inf
  %v2169 = vmax.f32 %v2167, %v2168
  %v2170 = vsel %vm1919, %v1904, -inf
  %v2171 = vmax.f32 %v2169, %v2170
  %v2172 = vsel %vm1919, %v1755, -inf
  %v2173 = vsel %vm1919, %v1805, -inf
  %v2174 = vmax.f32 %v2172, %v2173
  %v2175 = vsel %vm1919, %v1855, -inf
  %v2176 = vmax.f32 %v2174, %v2175
  %v2177 = vsel %vm1919, %v1905, -inf
  %v2178 = vmax.f32 %v2176, %v2177
  %v2179 = vsel %vm1919, %v1756, -inf
  %v2180 = vsel %vm1919, %v1806, -inf
  %v2181 = vmax.f32 %v2179, %v2180
  %v2182 = vsel %vm1919, %v1856, -inf
  %v2183 = vmax.f32 %v2181, %v2182
  %v2184 = vsel %vm1919, %v1906, -inf
  %v2185 = vmax.f32 %v2183, %v2184
  %v2186 = vsel %vm1919, %v1757, -inf
  %v2187 = vsel %vm1919, %v1807, -inf
  %v2188 = vmax.f32 %v2186, %v2187
  %v2189 = vsel %vm1919, %v1857, -inf
  %v2190 = vmax.f32 %v2188, %v2189
  %v2191 = vsel %vm1919, %v1907, -inf
  %v2192 = vmax.f32 %v2190, %v2191
  %v2193 = vsel %vm1919, %v1758, -inf
  %v2194 = vsel %vm1919, %v1808, -inf
  %v2195 = vmax.f32 %v2193, %v2194
  %v2196 = vsel %vm1919, %v1858, -inf
  %v2197 = vmax.f32 %v2195, %v2196
  %v2198 = vsel %vm1919, %v1908, -inf
  %v2199 = vmax.f32 %v2197, %v2198
  %v2200 = vsel %vm1919, %v1759, -inf
  %v2201 = vsel %vm1919, %v1809, -inf
  %v2202 = vmax.f32 %v2200, %v2201
  %v2203 = vsel %vm1919, %v1859, -inf
  %v2204 = vmax.f32 %v2202, %v2203
  %v2205 = vsel %vm1919, %v1909, -inf
  %v2206 = vmax.f32 %v2204, %v2205
  %v2207 = vsel %vm1919, %v1760, -inf
  %v2208 = vsel %vm1919, %v1810, -inf
  %v2209 = vmax.f32 %v2207, %v2208
  %v2210 = vsel %vm1919, %v1860, -inf
  %v2211 = vmax.f32 %v2209, %v2210
  %v2212 = vsel %vm1919, %v1910, -inf
  %v2213 = vmax.f32 %v2211, %v2212
  %v2214 = vsel %vm1919, %v1761, -inf
  %v2215 = vsel %vm1919, %v1811, -inf
  %v2216 = vmax.f32 %v2214, %v2215
  %v2217 = vsel %vm1919, %v1861, -inf
  %v2218 = vmax.f32 %v2216, %v2217
  %v2219 = vsel %vm1919, %v1911, -inf
  %v2220 = vmax.f32 %v2218, %v2219
  %v2221 = vsel %vm1919, %v1762, -inf
  %v2222 = vsel %vm1919, %v1812, -inf
  %v2223 = vmax.f32 %v2221, %v2222
  %v2224 = vsel %vm1919, %v1862, -inf
  %v2225 = vmax.f32 %v2223, %v2224
  %v2226 = vsel %vm1919, %v1912, -inf
  %v2227 = vmax.f32 %v2225, %v2226
  %v2228 = vsel %vm1919, %v1763, -inf
  %v2229 = vsel %vm1919, %v1813, -inf
  %v2230 = vmax.f32 %v2228, %v2229
  %v2231 = vsel %vm1919, %v1863, -inf
  %v2232 = vmax.f32 %v2230, %v2231
  %v2233 = vsel %vm1919, %v1913, -inf
  %v2234 = vmax.f32 %v2232, %v2233
  %v2235 = vsel %vm1919, %v1764, -inf
  %v2236 = vsel %vm1919, %v1814, -inf
  %v2237 = vmax.f32 %v2235, %v2236
  %v2238 = vsel %vm1919, %v1864, -inf
  %v2239 = vmax.f32 %v2237, %v2238
  %v2240 = vsel %vm1919, %v1914, -inf
  %v2241 = vmax.f32 %v2239, %v2240
  %v2242 = vsel %vm1919, %v1765, -inf
  %v2243 = vsel %vm1919, %v1815, -inf
  %v2244 = vmax.f32 %v2242, %v2243
  %v2245 = vsel %vm1919, %v1865, -inf
  %v2246 = vmax.f32 %v2244, %v2245
  %v2247 = vsel %vm1919, %v1915, -inf
  %v2248 = vmax.f32 %v2246, %v2247
  %v2249 = vsel %vm1919, %v1766, -inf
  %v2250 = vsel %vm1919, %v1816, -inf
  %v2251 = vmax.f32 %v2249, %v2250
  %v2252 = vsel %vm1919, %v1866, -inf
  %v2253 = vmax.f32 %v2251, %v2252
  %v2254 = vsel %vm1919, %v1916, -inf
  %v2255 = vmax.f32 %v2253, %v2254
  %v2256 = vsel %vm1919, %v1767, -inf
  %v2257 = vsel %vm1919, %v1817, -inf
  %v2258 = vmax.f32 %v2256, %v2257
  %v2259 = vsel %vm1919, %v1867, -inf
  %v2260 = vmax.f32 %v2258, %v2259
  %v2261 = vsel %vm1919, %v1917, -inf
  %v2262 = vmax.f32 %v2260, %v2261
  %v2263 = vsel %vm1919, %v1768, -inf
  %v2264 = vsel %vm1919, %v1818, -inf
  %v2265 = vmax.f32 %v2263, %v2264
  %v2266 = vsel %vm1919, %v1868, -inf
  %v2267 = vmax.f32 %v2265, %v2266
  %v2268 = vsel %vm1919, %v1918, -inf
  %v2269 = vmax.f32 %v2267, %v2268
  %v2270 = vpack.c.bf16 %v1933, %v1926
  %v2271 = vpack.c.bf16 %v1947, %v1940
  %v2272 = vpack.c.bf16 %v1961, %v1954
  %v2273 = vpack.c.bf16 %v1975, %v1968
  %v2274 = vpack.c.bf16 %v1989, %v1982
  %v2275 = vpack.c.bf16 %v2003, %v1996
  %v2276 = vpack.c.bf16 %v2017, %v2010
  %v2277 = vpack.c.bf16 %v2031, %v2024
  %v2278 = vpack.c.bf16 %v2045, %v2038
  %v2279 = vpack.c.bf16 %v2059, %v2052
  %v2280 = vpack.c.bf16 %v2073, %v2066
  %v2281 = vpack.c.bf16 %v2087, %v2080
  %v2282 = vpack.c.bf16 %v2101, %v2094
  %v2283 = vpack.c.bf16 %v2115, %v2108
  %v2284 = vpack.c.bf16 %v2129, %v2122
  %v2285 = vpack.c.bf16 %v2143, %v2136
  %v2286 = vpack.c.bf16 %v2157, %v2150
  %v2287 = vpack.c.bf16 %v2171, %v2164
  %v2288 = vpack.c.bf16 %v2185, %v2178
  %v2289 = vpack.c.bf16 %v2199, %v2192
  %v2290 = vpack.c.bf16 %v2213, %v2206
  %v2291 = vpack.c.bf16 %v2227, %v2220
  %v2292 = vpack.c.bf16 %v2241, %v2234
  %v2293 = vpack.c.bf16 %v2255, %v2248
  %v2294 = vpack.c.bf16 %v2269, %v2262
  %v2320 = vunpack.c.l.b16 %v2270
  %v2321 = vunpack.c.h.b16 %v2270
  %v2322 = vunpack.c.l.b16 %v2271
  %v2323 = vunpack.c.h.b16 %v2271
  %v2324 = vunpack.c.l.b16 %v2272
  %v2325 = vunpack.c.h.b16 %v2272
  %v2326 = vunpack.c.l.b16 %v2273
  %v2327 = vunpack.c.h.b16 %v2273
  %v2328 = vunpack.c.l.b16 %v2274
  %v2329 = vunpack.c.h.b16 %v2274
  %v2330 = vunpack.c.l.b16 %v2275
  %v2331 = vunpack.c.h.b16 %v2275
  %v2332 = vunpack.c.l.b16 %v2276
  %v2333 = vunpack.c.h.b16 %v2276
  %v2334 = vunpack.c.l.b16 %v2277
  %v2335 = vunpack.c.h.b16 %v2277
  %v2336 = vunpack.c.l.b16 %v2278
  %v2337 = vunpack.c.h.b16 %v2278
  %v2338 = vunpack.c.l.b16 %v2279
  %v2339 = vunpack.c.h.b16 %v2279
  %v2340 = vunpack.c.l.b16 %v2280
  %v2341 = vunpack.c.h.b16 %v2280
  %v2342 = vunpack.c.l.b16 %v2281
  %v2343 = vunpack.c.h.b16 %v2281
  %v2344 = vunpack.c.l.b16 %v2282
  %v2345 = vunpack.c.h.b16 %v2282
  %v2346 = vunpack.c.l.b16 %v2283
  %v2347 = vunpack.c.h.b16 %v2283
  %v2348 = vunpack.c.l.b16 %v2284
  %v2349 = vunpack.c.h.b16 %v2284
  %v2350 = vunpack.c.l.b16 %v2285
  %v2351 = vunpack.c.h.b16 %v2285
  %v2352 = vunpack.c.l.b16 %v2286
  %v2353 = vunpack.c.h.b16 %v2286
  %v2354 = vunpack.c.l.b16 %v2287
  %v2355 = vunpack.c.h.b16 %v2287
  %v2356 = vunpack.c.l.b16 %v2288
  %v2357 = vunpack.c.h.b16 %v2288
  %v2358 = vunpack.c.l.b16 %v2289
  %v2359 = vunpack.c.h.b16 %v2289
  %v2360 = vunpack.c.l.b16 %v2290
  %v2361 = vunpack.c.h.b16 %v2290
  %v2362 = vunpack.c.l.b16 %v2291
  %v2363 = vunpack.c.h.b16 %v2291
  %v2364 = vunpack.c.l.b16 %v2292
  %v2365 = vunpack.c.h.b16 %v2292
  %v2366 = vunpack.c.l.b16 %v2293
  %v2367 = vunpack.c.h.b16 %v2293
  %v2368 = vunpack.c.l.b16 %v2294
  %v2369 = vunpack.c.h.b16 %v2294
  %v2370 = vpack.c.b16 %v2320, %v2320
  %v2371 = vpack.c.b16 %v2321, %v2321
  %v2372 = vpack.c.b16 %v2322, %v2322
  %v2373 = vpack.c.b16 %v2323, %v2323
  %v2374 = vpack.c.b16 %v2324, %v2324
  %v2375 = vpack.c.b16 %v2325, %v2325
  %v2376 = vpack.c.b16 %v2326, %v2326
  %v2377 = vpack.c.b16 %v2327, %v2327
  %v2378 = vpack.c.b16 %v2328, %v2328
  %v2379 = vpack.c.b16 %v2329, %v2329
  %v2380 = vpack.c.b16 %v2330, %v2330
  %v2381 = vpack.c.b16 %v2331, %v2331
  %v2382 = vpack.c.b16 %v2332, %v2332
  %v2383 = vpack.c.b16 %v2333, %v2333
  %v2384 = vpack.c.b16 %v2334, %v2334
  %v2385 = vpack.c.b16 %v2335, %v2335
  %v2386 = vpack.c.b16 %v2336, %v2336
  %v2387 = vpack.c.b16 %v2337, %v2337
  %v2388 = vpack.c.b16 %v2338, %v2338
  %v2389 = vpack.c.b16 %v2339, %v2339
  %v2390 = vpack.c.b16 %v2340, %v2340
  %v2391 = vpack.c.b16 %v2341, %v2341
  %v2392 = vpack.c.b16 %v2342, %v2342
  %v2393 = vpack.c.b16 %v2343, %v2343
  %v2394 = vpack.c.b16 %v2344, %v2344
  %v2395 = vpack.c.b16 %v2345, %v2345
  %v2396 = vpack.c.b16 %v2346, %v2346
  %v2397 = vpack.c.b16 %v2347, %v2347
  %v2398 = vpack.c.b16 %v2348, %v2348
  %v2399 = vpack.c.b16 %v2349, %v2349
  %v2400 = vpack.c.b16 %v2350, %v2350
  %v2401 = vpack.c.b16 %v2351, %v2351
  %v2402 = vpack.c.b16 %v2352, %v2352
  %v2403 = vpack.c.b16 %v2353, %v2353
  %v2404 = vpack.c.b16 %v2354, %v2354
  %v2405 = vpack.c.b16 %v2355, %v2355
  %v2406 = vpack.c.b16 %v2356, %v2356
  %v2407 = vpack.c.b16 %v2357, %v2357
  %v2408 = vpack.c.b16 %v2358, %v2358
  %v2409 = vpack.c.b16 %v2359, %v2359
  %v2410 = vpack.c.b16 %v2360, %v2360
  %v2411 = vpack.c.b16 %v2361, %v2361
  %v2412 = vpack.c.b16 %v2362, %v2362
  %v2413 = vpack.c.b16 %v2363, %v2363
  %v2414 = vpack.c.b16 %v2364, %v2364
  %v2415 = vpack.c.b16 %v2365, %v2365
  %v2416 = vpack.c.b16 %v2366, %v2366
  %v2417 = vpack.c.b16 %v2367, %v2367
  %v2418 = vpack.c.b16 %v2368, %v2368
  %v2419 = vpack.c.b16 %v2369, %v2369
  %vm2470 = vcmask 519168
  %2471 = vst.msk [vmem:[%s3] sm:$0xf] %vm2470, %v2370
  %2472 = vst.msk [vmem:[%s3 + $0x4] sm:$0xf] %vm2470, %v2371
  %2473 = vst.msk [vmem:[%s3 + $0x8] sm:$0xf] %vm2470, %v2372
  %2474 = vst.msk [vmem:[%s3 + $0xc] sm:$0xf] %vm2470, %v2373
  %2475 = vst.msk [vmem:[%s3 + $0x10] sm:$0xf] %vm2470, %v2374
  %2476 = vst.msk [vmem:[%s3 + $0x14] sm:$0xf] %vm2470, %v2375
  %2477 = vst.msk [vmem:[%s3 + $0x18] sm:$0xf] %vm2470, %v2376
  %2478 = vst.msk [vmem:[%s3 + $0x1c] sm:$0xf] %vm2470, %v2377
  %2479 = vst.msk [vmem:[%s3 + $0x20] sm:$0xf] %vm2470, %v2378
  %2480 = vst.msk [vmem:[%s3 + $0x24] sm:$0xf] %vm2470, %v2379
  %2481 = vst.msk [vmem:[%s3 + $0x28] sm:$0xf] %vm2470, %v2380
  %2482 = vst.msk [vmem:[%s3 + $0x2c] sm:$0xf] %vm2470, %v2381
  %2483 = vst.msk [vmem:[%s3 + $0x30] sm:$0xf] %vm2470, %v2382
  %2484 = vst.msk [vmem:[%s3 + $0x34] sm:$0xf] %vm2470, %v2383
  %2485 = vst.msk [vmem:[%s3 + $0x38] sm:$0xf] %vm2470, %v2384
  %2486 = vst.msk [vmem:[%s3 + $0x3c] sm:$0xf] %vm2470, %v2385
  %2487 = vst.msk [vmem:[%s3 + $0x40] sm:$0xf] %vm2470, %v2386
  %2488 = vst.msk [vmem:[%s3 + $0x44] sm:$0xf] %vm2470, %v2387
  %2489 = vst.msk [vmem:[%s3 + $0x48] sm:$0xf] %vm2470, %v2388
  %2490 = vst.msk [vmem:[%s3 + $0x4c] sm:$0xf] %vm2470, %v2389
  %2491 = vst.msk [vmem:[%s3 + $0x50] sm:$0xf] %vm2470, %v2390
  %2492 = vst.msk [vmem:[%s3 + $0x54] sm:$0xf] %vm2470, %v2391
  %2493 = vst.msk [vmem:[%s3 + $0x58] sm:$0xf] %vm2470, %v2392
  %2494 = vst.msk [vmem:[%s3 + $0x5c] sm:$0xf] %vm2470, %v2393
  %2495 = vst.msk [vmem:[%s3 + $0x60] sm:$0xf] %vm2470, %v2394
  %2496 = vst.msk [vmem:[%s3 + $0x64] sm:$0xf] %vm2470, %v2395
  %2497 = vst.msk [vmem:[%s3 + $0x68] sm:$0xf] %vm2470, %v2396
  %2498 = vst.msk [vmem:[%s3 + $0x6c] sm:$0xf] %vm2470, %v2397
  %2499 = vst.msk [vmem:[%s3 + $0x70] sm:$0xf] %vm2470, %v2398
  %2500 = vst.msk [vmem:[%s3 + $0x74] sm:$0xf] %vm2470, %v2399
  %2501 = vst.msk [vmem:[%s3 + $0x78] sm:$0xf] %vm2470, %v2400
  %2502 = vst.msk [vmem:[%s3 + $0x7c] sm:$0xf] %vm2470, %v2401
  %2503 = vst.msk [vmem:[%s3 + $0x80] sm:$0xf] %vm2470, %v2402
  %2504 = vst.msk [vmem:[%s3 + $0x84] sm:$0xf] %vm2470, %v2403
  %2505 = vst.msk [vmem:[%s3 + $0x88] sm:$0xf] %vm2470, %v2404
  %2506 = vst.msk [vmem:[%s3 + $0x8c] sm:$0xf] %vm2470, %v2405
  %2507 = vst.msk [vmem:[%s3 + $0x90] sm:$0xf] %vm2470, %v2406
  %2508 = vst.msk [vmem:[%s3 + $0x94] sm:$0xf] %vm2470, %v2407
  %2509 = vst.msk [vmem:[%s3 + $0x98] sm:$0xf] %vm2470, %v2408
  %2510 = vst.msk [vmem:[%s3 + $0x9c] sm:$0xf] %vm2470, %v2409
  %2511 = vst.msk [vmem:[%s3 + $0xa0] sm:$0xf] %vm2470, %v2410
  %2512 = vst.msk [vmem:[%s3 + $0xa4] sm:$0xf] %vm2470, %v2411
  %2513 = vst.msk [vmem:[%s3 + $0xa8] sm:$0xf] %vm2470, %v2412
  %2514 = vst.msk [vmem:[%s3 + $0xac] sm:$0xf] %vm2470, %v2413
  %2515 = vst.msk [vmem:[%s3 + $0xb0] sm:$0xf] %vm2470, %v2414
  %2516 = vst.msk [vmem:[%s3 + $0xb4] sm:$0xf] %vm2470, %v2415
  %2517 = vst.msk [vmem:[%s3 + $0xb8] sm:$0xf] %vm2470, %v2416
  %2518 = vst.msk [vmem:[%s3 + $0xbc] sm:$0xf] %vm2470, %v2417
  %2519 = vst.msk [vmem:[%s3 + $0xc0] sm:$0xf] %vm2470, %v2418
  %2520 = vst.msk [vmem:[%s3 + $0xc4] sm:$0xf] %vm2470, %v2419
  // Predicated region
  $region14: #{lenet5_forward.3} parent=0 // pred_check
    _
  $region15: #{lenet5_forward.3} parent=0 // pred_check_branch
    %2522 = sbr.rel (0) target = $region17
  $region16: #{lenet5_forward.3} parent=0 // pred_region
    _
  $region17: #{lenet5_forward.3} parent=0 // pred_fallthru
    _
  // Predicated region
  $region18: #{lenet5_forward.3} parent=0 // pred_check
    _
  $region19: #{lenet5_forward.3} parent=0 // pred_check_branch
    %2524 = sbr.rel (0) target = $region21
  $region20: #{lenet5_forward.3} parent=0 // pred_region
    _
  $region21: #{lenet5_forward.3} parent=0 // pred_fallthru
    _

// kernel: lenet5_forward.4
$region0: #{lenet5_forward.4}
  #allocation0 [shape = 'u32[]', space=smem, size = 0x4, offset = 0x4, fixed_abs, tag = 'smem constant byte address 0x4 - core index']
  #allocation1 [shape = 'u32[144,128]{1,0:T(1,128)}', space=vmem, size = 0x12000, scoped, tag = 'internal scratch']
  %s0 = inlined_call_operand.vmem [shape: bf16[4,64,1600], index: 0, kind: input, shape index: {}]
  %s1 = inlined_call_operand.vmem [shape: bf16[1600,64], index: 1, kind: input, shape index: {}]
  %s2 = inlined_call_operand.vmem [shape: f32[1,64], index: 2, kind: input, shape index: {}]
  %s3 = inlined_call_operand.vmem [shape: bf16[64,64], index: 3, kind: output, shape index: {}]
  %s4 = sld [smem:[#allocation0]]
  $region22: #{lenet5_forward.4} parent=0
    _
  %s6 = ssub.s32 1, %s4
  %s7 = scalar_select 0, %s6, %s4
  // Predicated region
  $region2: #{lenet5_forward.4} parent=0 // pred_check
    _
  $region3: #{lenet5_forward.4} parent=0 // pred_check_branch
    %9 = sbr.rel (0) target = $region5
  $region4: #{lenet5_forward.4} parent=0 // pred_region
    _
  $region5: #{lenet5_forward.4} parent=0 // pred_fallthru
    _
  // Predicated region
  $region6: #{lenet5_forward.4} parent=0 // pred_check
    _
  $region7: #{lenet5_forward.4} parent=0 // pred_check_branch
    %11 = sbr.rel (0) target = $region9
  $region8: #{lenet5_forward.4} parent=0 // pred_region
    _
  $region9: #{lenet5_forward.4} parent=0 // pred_fallthru
    _
  // Predicated region
  $region10: #{lenet5_forward.4} parent=0 // pred_check
    _
  $region11: #{lenet5_forward.4} parent=0 // pred_check_branch
    %13 = sbr.rel (0) target = $region13
  $region12: #{lenet5_forward.4} parent=0 // pred_region
    _
  $region13: #{lenet5_forward.4} parent=0 // pred_fallthru
    _
  %v15 = vld [vmem:[%s0] sm:$0xff]
  %v16 = vld [vmem:[%s0 + $0x8] sm:$0xff]
  %v17 = vld [vmem:[%s0 + $0x10] sm:$0xff]
  %v18 = vld [vmem:[%s0 + $0x18] sm:$0xff]
  %v19 = vld [vmem:[%s0 + $0x20] sm:$0xff]
  %v20 = vld [vmem:[%s0 + $0x28] sm:$0xff]
  %v21 = vld [vmem:[%s0 + $0x30] sm:$0xf]
  %v22 = vld [vmem:[%s0 + $0x34] sm:$0xff]
  %v23 = vld [vmem:[%s0 + $0x3c] sm:$0xff]
  %v24 = vld [vmem:[%s0 + $0x44] sm:$0xff]
  %v25 = vld [vmem:[%s0 + $0x4c] sm:$0xff]
  %v26 = vld [vmem:[%s0 + $0x54] sm:$0xff]
  %v27 = vld [vmem:[%s0 + $0x5c] sm:$0xff]
  %v28 = vld [vmem:[%s0 + $0x64] sm:$0xf]
  %v29 = vld [vmem:[%s0 + $0x68] sm:$0xff]
  %v30 = vld [vmem:[%s0 + $0x70] sm:$0xff]
  %v31 = vld [vmem:[%s0 + $0x78] sm:$0xff]
  %v32 = vld [vmem:[%s0 + $0x80] sm:$0xff]
  %v33 = vld [vmem:[%s0 + $0x88] sm:$0xff]
  %v34 = vld [vmem:[%s0 + $0x90] sm:$0xff]
  %v35 = vld [vmem:[%s0 + $0x98] sm:$0xf]
  %v36 = vld [vmem:[%s0 + $0x9c] sm:$0xff]
  %v37 = vld [vmem:[%s0 + $0xa4] sm:$0xff]
  %v38 = vld [vmem:[%s0 + $0xac] sm:$0xff]
  %v39 = vld [vmem:[%s0 + $0xb4] sm:$0xff]
  %v40 = vld [vmem:[%s0 + $0xbc] sm:$0xff]
  %v41 = vld [vmem:[%s0 + $0xc4] sm:$0xff]
  %v42 = vld [vmem:[%s0 + $0xcc] sm:$0xf]
  %v43 = vld [vmem:[%s0 + $0xd0] sm:$0xff]
  %v44 = vld [vmem:[%s0 + $0xd8] sm:$0xff]
  %v45 = vld [vmem:[%s0 + $0xe0] sm:$0xff]
  %v46 = vld [vmem:[%s0 + $0xe8] sm:$0xff]
  %v47 = vld [vmem:[%s0 + $0xf0] sm:$0xff]
  %v48 = vld [vmem:[%s0 + $0xf8] sm:$0xff]
  %v49 = vld [vmem:[%s0 + $0x100] sm:$0xf]
  %v50 = vld [vmem:[%s0 + $0x104] sm:$0xff]
  %v51 = vld [vmem:[%s0 + $0x10c] sm:$0xff]
  %v52 = vld [vmem:[%s0 + $0x114] sm:$0xff]
  %v53 = vld [vmem:[%s0 + $0x11c] sm:$0xff]
  %v54 = vld [vmem:[%s0 + $0x124] sm:$0xff]
  %v55 = vld [vmem:[%s0 + $0x12c] sm:$0xff]
  %v56 = vld [vmem:[%s0 + $0x134] sm:$0xf]
  %v57 = vld [vmem:[%s0 + $0x138] sm:$0xff]
  %v58 = vld [vmem:[%s0 + $0x140] sm:$0xff]
  %v59 = vld [vmem:[%s0 + $0x148] sm:$0xff]
  %v60 = vld [vmem:[%s0 + $0x150] sm:$0xff]
  %v61 = vld [vmem:[%s0 + $0x158] sm:$0xff]
  %v62 = vld [vmem:[%s0 + $0x160] sm:$0xff]
  %v63 = vld [vmem:[%s0 + $0x168] sm:$0xf]
  %v64 = vld [vmem:[%s0 + $0x16c] sm:$0xff]
  %v65 = vld [vmem:[%s0 + $0x174] sm:$0xff]
  %v66 = vld [vmem:[%s0 + $0x17c] sm:$0xff]
  %v67 = vld [vmem:[%s0 + $0x184] sm:$0xff]
  %v68 = vld [vmem:[%s0 + $0x18c] sm:$0xff]
  %v69 = vld [vmem:[%s0 + $0x194] sm:$0xff]
  %v70 = vld [vmem:[%s0 + $0x19c] sm:$0xf]
  %v71 = vld [vmem:[%s0 + $0x1a0] sm:$0xff]
  %v72 = vld [vmem:[%s0 + $0x1a8] sm:$0xff]
  %v73 = vld [vmem:[%s0 + $0x1b0] sm:$0xff]
  %v74 = vld [vmem:[%s0 + $0x1b8] sm:$0xff]
  %v75 = vld [vmem:[%s0 + $0x1c0] sm:$0xff]
  %v76 = vld [vmem:[%s0 + $0x1c8] sm:$0xff]
  %v77 = vld [vmem:[%s0 + $0x1d0] sm:$0xf]
  %v78 = vld [vmem:[%s0 + $0x1d4] sm:$0xff]
  %v79 = vld [vmem:[%s0 + $0x1dc] sm:$0xff]
  %v80 = vld [vmem:[%s0 + $0x1e4] sm:$0xff]
  %v81 = vld [vmem:[%s0 + $0x1ec] sm:$0xff]
  %v82 = vld [vmem:[%s0 + $0x1f4] sm:$0xff]
  %v83 = vld [vmem:[%s0 + $0x1fc] sm:$0xff]
  %v84 = vld [vmem:[%s0 + $0x204] sm:$0xf]
  %v85 = vld [vmem:[%s0 + $0x208] sm:$0xff]
  %v86 = vld [vmem:[%s0 + $0x210] sm:$0xff]
  %v87 = vld [vmem:[%s0 + $0x218] sm:$0xff]
  %v88 = vld [vmem:[%s0 + $0x220] sm:$0xff]
  %v89 = vld [vmem:[%s0 + $0x228] sm:$0xff]
  %v90 = vld [vmem:[%s0 + $0x230] sm:$0xff]
  %v91 = vld [vmem:[%s0 + $0x238] sm:$0xf]
  %v92 = vld [vmem:[%s0 + $0x23c] sm:$0xff]
  %v93 = vld [vmem:[%s0 + $0x244] sm:$0xff]
  %v94 = vld [vmem:[%s0 + $0x24c] sm:$0xff]
  %v95 = vld [vmem:[%s0 + $0x254] sm:$0xff]
  %v96 = vld [vmem:[%s0 + $0x25c] sm:$0xff]
  %v97 = vld [vmem:[%s0 + $0x264] sm:$0xff]
  %v98 = vld [vmem:[%s0 + $0x26c] sm:$0xf]
  %v99 = vld [vmem:[%s0 + $0x270] sm:$0xff]
  %v100 = vld [vmem:[%s0 + $0x278] sm:$0xff]
  %v101 = vld [vmem:[%s0 + $0x280] sm:$0xff]
  %v102 = vld [vmem:[%s0 + $0x288] sm:$0xff]
  %v103 = vld [vmem:[%s0 + $0x290] sm:$0xff]
  %v104 = vld [vmem:[%s0 + $0x298] sm:$0xff]
  %v105 = vld [vmem:[%s0 + $0x2a0] sm:$0xf]
  %v106 = vld [vmem:[%s0 + $0x2a4] sm:$0xff]
  %v107 = vld [vmem:[%s0 + $0x2ac] sm:$0xff]
  %v108 = vld [vmem:[%s0 + $0x2b4] sm:$0xff]
  %v109 = vld [vmem:[%s0 + $0x2bc] sm:$0xff]
  %v110 = vld [vmem:[%s0 + $0x2c4] sm:$0xff]
  %v111 = vld [vmem:[%s0 + $0x2cc] sm:$0xff]
  %v112 = vld [vmem:[%s0 + $0x2d4] sm:$0xf]
  %v113 = vld [vmem:[%s0 + $0x2d8] sm:$0xff]
  %v114 = vld [vmem:[%s0 + $0x2e0] sm:$0xff]
  %v115 = vld [vmem:[%s0 + $0x2e8] sm:$0xff]
  %v116 = vld [vmem:[%s0 + $0x2f0] sm:$0xff]
  %v117 = vld [vmem:[%s0 + $0x2f8] sm:$0xff]
  %v118 = vld [vmem:[%s0 + $0x300] sm:$0xff]
  %v119 = vld [vmem:[%s0 + $0x308] sm:$0xf]
  %v120 = vld [vmem:[%s0 + $0x30c] sm:$0xff]
  %v121 = vld [vmem:[%s0 + $0x314] sm:$0xff]
  %v122 = vld [vmem:[%s0 + $0x31c] sm:$0xff]
  %v123 = vld [vmem:[%s0 + $0x324] sm:$0xff]
  %v124 = vld [vmem:[%s0 + $0x32c] sm:$0xff]
  %v125 = vld [vmem:[%s0 + $0x334] sm:$0xff]
  %v126 = vld [vmem:[%s0 + $0x33c] sm:$0xf]
  %v127 = vld [vmem:[%s0 + $0x340] sm:$0xff]
  %v128 = vld [vmem:[%s0 + $0x348] sm:$0xff]
  %v129 = vld [vmem:[%s0 + $0x350] sm:$0xff]
  %v130 = vld [vmem:[%s0 + $0x358] sm:$0xff]
  %v131 = vld [vmem:[%s0 + $0x360] sm:$0xff]
  %v132 = vld [vmem:[%s0 + $0x368] sm:$0xff]
  %v133 = vld [vmem:[%s0 + $0x370] sm:$0xf]
  %v134 = vld [vmem:[%s0 + $0x374] sm:$0xff]
  %v135 = vld [vmem:[%s0 + $0x37c] sm:$0xff]
  %v136 = vld [vmem:[%s0 + $0x384] sm:$0xff]
  %v137 = vld [vmem:[%s0 + $0x38c] sm:$0xff]
  %v138 = vld [vmem:[%s0 + $0x394] sm:$0xff]
  %v139 = vld [vmem:[%s0 + $0x39c] sm:$0xff]
  %v140 = vld [vmem:[%s0 + $0x3a4] sm:$0xf]
  %v141 = vld [vmem:[%s0 + $0x3a8] sm:$0xff]
  %v142 = vld [vmem:[%s0 + $0x3b0] sm:$0xff]
  %v143 = vld [vmem:[%s0 + $0x3b8] sm:$0xff]
  %v144 = vld [vmem:[%s0 + $0x3c0] sm:$0xff]
  %v145 = vld [vmem:[%s0 + $0x3c8] sm:$0xff]
  %v146 = vld [vmem:[%s0 + $0x3d0] sm:$0xff]
  %v147 = vld [vmem:[%s0 + $0x3d8] sm:$0xf]
  %v148 = vld [vmem:[%s0 + $0x3dc] sm:$0xff]
  %v149 = vld [vmem:[%s0 + $0x3e4] sm:$0xff]
  %v150 = vld [vmem:[%s0 + $0x3ec] sm:$0xff]
  %v151 = vld [vmem:[%s0 + $0x3f4] sm:$0xff]
  %v152 = vld [vmem:[%s0 + $0x3fc] sm:$0xff]
  %v153 = vld [vmem:[%s0 + $0x404] sm:$0xff]
  %v154 = vld [vmem:[%s0 + $0x40c] sm:$0xf]
  %v155 = vld [vmem:[%s0 + $0x410] sm:$0xff]
  %v156 = vld [vmem:[%s0 + $0x418] sm:$0xff]
  %v157 = vld [vmem:[%s0 + $0x420] sm:$0xff]
  %v158 = vld [vmem:[%s0 + $0x428] sm:$0xff]
  %v159 = vld [vmem:[%s0 + $0x430] sm:$0xff]
  %v160 = vld [vmem:[%s0 + $0x438] sm:$0xff]
  %v161 = vld [vmem:[%s0 + $0x440] sm:$0xf]
  %v162 = vld [vmem:[%s0 + $0x444] sm:$0xff]
  %v163 = vld [vmem:[%s0 + $0x44c] sm:$0xff]
  %v164 = vld [vmem:[%s0 + $0x454] sm:$0xff]
  %v165 = vld [vmem:[%s0 + $0x45c] sm:$0xff]
  %v166 = vld [vmem:[%s0 + $0x464] sm:$0xff]
  %v167 = vld [vmem:[%s0 + $0x46c] sm:$0xff]
  %v168 = vld [vmem:[%s0 + $0x474] sm:$0xf]
  %v169 = vld [vmem:[%s0 + $0x478] sm:$0xff]
  %v170 = vld [vmem:[%s0 + $0x480] sm:$0xff]
  %v171 = vld [vmem:[%s0 + $0x488] sm:$0xff]
  %v172 = vld [vmem:[%s0 + $0x490] sm:$0xff]
  %v173 = vld [vmem:[%s0 + $0x498] sm:$0xff]
  %v174 = vld [vmem:[%s0 + $0x4a0] sm:$0xff]
  %v175 = vld [vmem:[%s0 + $0x4a8] sm:$0xf]
  %v176 = vld [vmem:[%s0 + $0x4ac] sm:$0xff]
  %v177 = vld [vmem:[%s0 + $0x4b4] sm:$0xff]
  %v178 = vld [vmem:[%s0 + $0x4bc] sm:$0xff]
  %v179 = vld [vmem:[%s0 + $0x4c4] sm:$0xff]
  %v180 = vld [vmem:[%s0 + $0x4cc] sm:$0xff]
  %v181 = vld [vmem:[%s0 + $0x4d4] sm:$0xff]
  %v182 = vld [vmem:[%s0 + $0x4dc] sm:$0xf]
  %v183 = vld [vmem:[%s0 + $0x4e0] sm:$0xff]
  %v184 = vld [vmem:[%s0 + $0x4e8] sm:$0xff]
  %v185 = vld [vmem:[%s0 + $0x4f0] sm:$0xff]
  %v186 = vld [vmem:[%s0 + $0x4f8] sm:$0xff]
  %v187 = vld [vmem:[%s0 + $0x500] sm:$0xff]
  %v188 = vld [vmem:[%s0 + $0x508] sm:$0xff]
  %v189 = vld [vmem:[%s0 + $0x510] sm:$0xf]
  %v190 = vld [vmem:[%s0 + $0x514] sm:$0xff]
  %v191 = vld [vmem:[%s0 + $0x51c] sm:$0xff]
  %v192 = vld [vmem:[%s0 + $0x524] sm:$0xff]
  %v193 = vld [vmem:[%s0 + $0x52c] sm:$0xff]
  %v194 = vld [vmem:[%s0 + $0x534] sm:$0xff]
  %v195 = vld [vmem:[%s0 + $0x53c] sm:$0xff]
  %v196 = vld [vmem:[%s0 + $0x544] sm:$0xf]
  %v197 = vld [vmem:[%s0 + $0x548] sm:$0xff]
  %v198 = vld [vmem:[%s0 + $0x550] sm:$0xff]
  %v199 = vld [vmem:[%s0 + $0x558] sm:$0xff]
  %v200 = vld [vmem:[%s0 + $0x560] sm:$0xff]
  %v201 = vld [vmem:[%s0 + $0x568] sm:$0xff]
  %v202 = vld [vmem:[%s0 + $0x570] sm:$0xff]
  %v203 = vld [vmem:[%s0 + $0x578] sm:$0xf]
  %v204 = vld [vmem:[%s0 + $0x57c] sm:$0xff]
  %v205 = vld [vmem:[%s0 + $0x584] sm:$0xff]
  %v206 = vld [vmem:[%s0 + $0x58c] sm:$0xff]
  %v207 = vld [vmem:[%s0 + $0x594] sm:$0xff]
  %v208 = vld [vmem:[%s0 + $0x59c] sm:$0xff]
  %v209 = vld [vmem:[%s0 + $0x5a4] sm:$0xff]
  %v210 = vld [vmem:[%s0 + $0x5ac] sm:$0xf]
  %v211 = vld [vmem:[%s0 + $0x5b0] sm:$0xff]
  %v212 = vld [vmem:[%s0 + $0x5b8] sm:$0xff]
  %v213 = vld [vmem:[%s0 + $0x5c0] sm:$0xff]
  %v214 = vld [vmem:[%s0 + $0x5c8] sm:$0xff]
  %v215 = vld [vmem:[%s0 + $0x5d0] sm:$0xff]
  %v216 = vld [vmem:[%s0 + $0x5d8] sm:$0xff]
  %v217 = vld [vmem:[%s0 + $0x5e0] sm:$0xf]
  %v218 = vld [vmem:[%s0 + $0x5e4] sm:$0xff]
  %v219 = vld [vmem:[%s0 + $0x5ec] sm:$0xff]
  %v220 = vld [vmem:[%s0 + $0x5f4] sm:$0xff]
  %v221 = vld [vmem:[%s0 + $0x5fc] sm:$0xff]
  %v222 = vld [vmem:[%s0 + $0x604] sm:$0xff]
  %v223 = vld [vmem:[%s0 + $0x60c] sm:$0xff]
  %v224 = vld [vmem:[%s0 + $0x614] sm:$0xf]
  %v225 = vld [vmem:[%s0 + $0x618] sm:$0xff]
  %v226 = vld [vmem:[%s0 + $0x620] sm:$0xff]
  %v227 = vld [vmem:[%s0 + $0x628] sm:$0xff]
  %v228 = vld [vmem:[%s0 + $0x630] sm:$0xff]
  %v229 = vld [vmem:[%s0 + $0x638] sm:$0xff]
  %v230 = vld [vmem:[%s0 + $0x640] sm:$0xff]
  %v231 = vld [vmem:[%s0 + $0x648] sm:$0xf]
  %v232 = vld [vmem:[%s0 + $0x64c] sm:$0xff]
  %v233 = vld [vmem:[%s0 + $0x654] sm:$0xff]
  %v234 = vld [vmem:[%s0 + $0x65c] sm:$0xff]
  %v235 = vld [vmem:[%s0 + $0x664] sm:$0xff]
  %v236 = vld [vmem:[%s0 + $0x66c] sm:$0xff]
  %v237 = vld [vmem:[%s0 + $0x674] sm:$0xff]
  %v238 = vld [vmem:[%s0 + $0x67c] sm:$0xf]
  %v239 = vld [vmem:[%s1] sm:$0xf]
  %v240 = vld [vmem:[%s1 + $0x4] sm:$0xf]
  %v241 = vld [vmem:[%s1 + $0x8] sm:$0xf]
  %v242 = vld [vmem:[%s1 + $0xc] sm:$0xf]
  %v243 = vld [vmem:[%s1 + $0x10] sm:$0xf]
  %v244 = vld [vmem:[%s1 + $0x14] sm:$0xf]
  %v245 = vld [vmem:[%s1 + $0x18] sm:$0xf]
  %v246 = vld [vmem:[%s1 + $0x1c] sm:$0xf]
  %v247 = vld [vmem:[%s1 + $0x20] sm:$0xf]
  %v248 = vld [vmem:[%s1 + $0x24] sm:$0xf]
  %v249 = vld [vmem:[%s1 + $0x28] sm:$0xf]
  %v250 = vld [vmem:[%s1 + $0x2c] sm:$0xf]
  %v251 = vld [vmem:[%s1 + $0x30] sm:$0xf]
  %v252 = vld [vmem:[%s1 + $0x34] sm:$0xf]
  %v253 = vld [vmem:[%s1 + $0x38] sm:$0xf]
  %v254 = vld [vmem:[%s1 + $0x3c] sm:$0xf]
  %v255 = vld [vmem:[%s1 + $0x40] sm:$0xf]
  %v256 = vld [vmem:[%s1 + $0x44] sm:$0xf]
  %v257 = vld [vmem:[%s1 + $0x48] sm:$0xf]
  %v258 = vld [vmem:[%s1 + $0x4c] sm:$0xf]
  %v259 = vld [vmem:[%s1 + $0x50] sm:$0xf]
  %v260 = vld [vmem:[%s1 + $0x54] sm:$0xf]
  %v261 = vld [vmem:[%s1 + $0x58] sm:$0xf]
  %v262 = vld [vmem:[%s1 + $0x5c] sm:$0xf]
  %v263 = vld [vmem:[%s1 + $0x60] sm:$0xf]
  %v264 = vld [vmem:[%s1 + $0x64] sm:$0xf]
  %v265 = vld [vmem:[%s1 + $0x68] sm:$0xf]
  %v266 = vld [vmem:[%s1 + $0x6c] sm:$0xf]
  %v267 = vld [vmem:[%s1 + $0x70] sm:$0xf]
  %v268 = vld [vmem:[%s1 + $0x74] sm:$0xf]
  %v269 = vld [vmem:[%s1 + $0x78] sm:$0xf]
  %v270 = vld [vmem:[%s1 + $0x7c] sm:$0xf]
  %v271 = vld [vmem:[%s1 + $0x80] sm:$0xf]
  %v272 = vld [vmem:[%s1 + $0x84] sm:$0xf]
  %v273 = vld [vmem:[%s1 + $0x88] sm:$0xf]
  %v274 = vld [vmem:[%s1 + $0x8c] sm:$0xf]
  %v275 = vld [vmem:[%s1 + $0x90] sm:$0xf]
  %v276 = vld [vmem:[%s1 + $0x94] sm:$0xf]
  %v277 = vld [vmem:[%s1 + $0x98] sm:$0xf]
  %v278 = vld [vmem:[%s1 + $0x9c] sm:$0xf]
  %v279 = vld [vmem:[%s1 + $0xa0] sm:$0xf]
  %v280 = vld [vmem:[%s1 + $0xa4] sm:$0xf]
  %v281 = vld [vmem:[%s1 + $0xa8] sm:$0xf]
  %v282 = vld [vmem:[%s1 + $0xac] sm:$0xf]
  %v283 = vld [vmem:[%s1 + $0xb0] sm:$0xf]
  %v284 = vld [vmem:[%s1 + $0xb4] sm:$0xf]
  %v285 = vld [vmem:[%s1 + $0xb8] sm:$0xf]
  %v286 = vld [vmem:[%s1 + $0xbc] sm:$0xf]
  %v287 = vld [vmem:[%s1 + $0xc0] sm:$0xf]
  %v288 = vld [vmem:[%s1 + $0xc4] sm:$0xf]
  %v289 = vld [vmem:[%s1 + $0xc8] sm:$0xf]
  %v290 = vld [vmem:[%s1 + $0xcc] sm:$0xf]
  %v291 = vld [vmem:[%s1 + $0xd0] sm:$0xf]
  %v292 = vld [vmem:[%s1 + $0xd4] sm:$0xf]
  %v293 = vld [vmem:[%s1 + $0xd8] sm:$0xf]
  %v294 = vld [vmem:[%s1 + $0xdc] sm:$0xf]
  %v295 = vld [vmem:[%s1 + $0xe0] sm:$0xf]
  %v296 = vld [vmem:[%s1 + $0xe4] sm:$0xf]
  %v297 = vld [vmem:[%s1 + $0xe8] sm:$0xf]
  %v298 = vld [vmem:[%s1 + $0xec] sm:$0xf]
  %v299 = vld [vmem:[%s1 + $0xf0] sm:$0xf]
  %v300 = vld [vmem:[%s1 + $0xf4] sm:$0xf]
  %v301 = vld [vmem:[%s1 + $0xf8] sm:$0xf]
  %v302 = vld [vmem:[%s1 + $0xfc] sm:$0xf]
  %v303 = vld [vmem:[%s1 + $0x100] sm:$0xf]
  %v304 = vld [vmem:[%s1 + $0x104] sm:$0xf]
  %v305 = vld [vmem:[%s1 + $0x108] sm:$0xf]
  %v306 = vld [vmem:[%s1 + $0x10c] sm:$0xf]
  %v307 = vld [vmem:[%s1 + $0x110] sm:$0xf]
  %v308 = vld [vmem:[%s1 + $0x114] sm:$0xf]
  %v309 = vld [vmem:[%s1 + $0x118] sm:$0xf]
  %v310 = vld [vmem:[%s1 + $0x11c] sm:$0xf]
  %v311 = vld [vmem:[%s1 + $0x120] sm:$0xf]
  %v312 = vld [vmem:[%s1 + $0x124] sm:$0xf]
  %v313 = vld [vmem:[%s1 + $0x128] sm:$0xf]
  %v314 = vld [vmem:[%s1 + $0x12c] sm:$0xf]
  %v315 = vld [vmem:[%s1 + $0x130] sm:$0xf]
  %v316 = vld [vmem:[%s1 + $0x134] sm:$0xf]
  %v317 = vld [vmem:[%s1 + $0x138] sm:$0xf]
  %v318 = vld [vmem:[%s1 + $0x13c] sm:$0xf]
  %v319 = vld [vmem:[%s1 + $0x140] sm:$0xf]
  %v320 = vld [vmem:[%s1 + $0x144] sm:$0xf]
  %v321 = vld [vmem:[%s1 + $0x148] sm:$0xf]
  %v322 = vld [vmem:[%s1 + $0x14c] sm:$0xf]
  %v323 = vld [vmem:[%s1 + $0x150] sm:$0xf]
  %v324 = vld [vmem:[%s1 + $0x154] sm:$0xf]
  %v325 = vld [vmem:[%s1 + $0x158] sm:$0xf]
  %v326 = vld [vmem:[%s1 + $0x15c] sm:$0xf]
  %v327 = vld [vmem:[%s1 + $0x160] sm:$0xf]
  %v328 = vld [vmem:[%s1 + $0x164] sm:$0xf]
  %v329 = vld [vmem:[%s1 + $0x168] sm:$0xf]
  %v330 = vld [vmem:[%s1 + $0x16c] sm:$0xf]
  %v331 = vld [vmem:[%s1 + $0x170] sm:$0xf]
  %v332 = vld [vmem:[%s1 + $0x174] sm:$0xf]
  %v333 = vld [vmem:[%s1 + $0x178] sm:$0xf]
  %v334 = vld [vmem:[%s1 + $0x17c] sm:$0xf]
  %v335 = vld [vmem:[%s1 + $0x180] sm:$0xf]
  %v336 = vld [vmem:[%s1 + $0x184] sm:$0xf]
  %v337 = vld [vmem:[%s1 + $0x188] sm:$0xf]
  %v338 = vld [vmem:[%s1 + $0x18c] sm:$0xf]
  %v339 = vld [vmem:[%s1 + $0x190] sm:$0xf]
  %v340 = vld [vmem:[%s1 + $0x194] sm:$0xf]
  %v341 = vld [vmem:[%s1 + $0x198] sm:$0xf]
  %v342 = vld [vmem:[%s1 + $0x19c] sm:$0xf]
  %v343 = vld [vmem:[%s1 + $0x1a0] sm:$0xf]
  %v344 = vld [vmem:[%s1 + $0x1a4] sm:$0xf]
  %v345 = vld [vmem:[%s1 + $0x1a8] sm:$0xf]
  %v346 = vld [vmem:[%s1 + $0x1ac] sm:$0xf]
  %v347 = vld [vmem:[%s1 + $0x1b0] sm:$0xf]
  %v348 = vld [vmem:[%s1 + $0x1b4] sm:$0xf]
  %v349 = vld [vmem:[%s1 + $0x1b8] sm:$0xf]
  %v350 = vld [vmem:[%s1 + $0x1bc] sm:$0xf]
  %v351 = vld [vmem:[%s1 + $0x1c0] sm:$0xf]
  %v352 = vld [vmem:[%s1 + $0x1c4] sm:$0xf]
  %v353 = vld [vmem:[%s1 + $0x1c8] sm:$0xf]
  %v354 = vld [vmem:[%s1 + $0x1cc] sm:$0xf]
  %v355 = vld [vmem:[%s1 + $0x1d0] sm:$0xf]
  %v356 = vld [vmem:[%s1 + $0x1d4] sm:$0xf]
  %v357 = vld [vmem:[%s1 + $0x1d8] sm:$0xf]
  %v358 = vld [vmem:[%s1 + $0x1dc] sm:$0xf]
  %v359 = vld [vmem:[%s1 + $0x1e0] sm:$0xf]
  %v360 = vld [vmem:[%s1 + $0x1e4] sm:$0xf]
  %v361 = vld [vmem:[%s1 + $0x1e8] sm:$0xf]
  %v362 = vld [vmem:[%s1 + $0x1ec] sm:$0xf]
  %v363 = vld [vmem:[%s1 + $0x1f0] sm:$0xf]
  %v364 = vld [vmem:[%s1 + $0x1f4] sm:$0xf]
  %v365 = vld [vmem:[%s1 + $0x1f8] sm:$0xf]
  %v366 = vld [vmem:[%s1 + $0x1fc] sm:$0xf]
  %v367 = vld [vmem:[%s1 + $0x200] sm:$0xf]
  %v368 = vld [vmem:[%s1 + $0x204] sm:$0xf]
  %v369 = vld [vmem:[%s1 + $0x208] sm:$0xf]
  %v370 = vld [vmem:[%s1 + $0x20c] sm:$0xf]
  %v371 = vld [vmem:[%s1 + $0x210] sm:$0xf]
  %v372 = vld [vmem:[%s1 + $0x214] sm:$0xf]
  %v373 = vld [vmem:[%s1 + $0x218] sm:$0xf]
  %v374 = vld [vmem:[%s1 + $0x21c] sm:$0xf]
  %v375 = vld [vmem:[%s1 + $0x220] sm:$0xf]
  %v376 = vld [vmem:[%s1 + $0x224] sm:$0xf]
  %v377 = vld [vmem:[%s1 + $0x228] sm:$0xf]
  %v378 = vld [vmem:[%s1 + $0x22c] sm:$0xf]
  %v379 = vld [vmem:[%s1 + $0x230] sm:$0xf]
  %v380 = vld [vmem:[%s1 + $0x234] sm:$0xf]
  %v381 = vld [vmem:[%s1 + $0x238] sm:$0xf]
  %v382 = vld [vmem:[%s1 + $0x23c] sm:$0xf]
  %v383 = vld [vmem:[%s1 + $0x240] sm:$0xf]
  %v384 = vld [vmem:[%s1 + $0x244] sm:$0xf]
  %v385 = vld [vmem:[%s1 + $0x248] sm:$0xf]
  %v386 = vld [vmem:[%s1 + $0x24c] sm:$0xf]
  %v387 = vld [vmem:[%s1 + $0x250] sm:$0xf]
  %v388 = vld [vmem:[%s1 + $0x254] sm:$0xf]
  %v389 = vld [vmem:[%s1 + $0x258] sm:$0xf]
  %v390 = vld [vmem:[%s1 + $0x25c] sm:$0xf]
  %v391 = vld [vmem:[%s1 + $0x260] sm:$0xf]
  %v392 = vld [vmem:[%s1 + $0x264] sm:$0xf]
  %v393 = vld [vmem:[%s1 + $0x268] sm:$0xf]
  %v394 = vld [vmem:[%s1 + $0x26c] sm:$0xf]
  %v395 = vld [vmem:[%s1 + $0x270] sm:$0xf]
  %v396 = vld [vmem:[%s1 + $0x274] sm:$0xf]
  %v397 = vld [vmem:[%s1 + $0x278] sm:$0xf]
  %v398 = vld [vmem:[%s1 + $0x27c] sm:$0xf]
  %v399 = vld [vmem:[%s1 + $0x280] sm:$0xf]
  %v400 = vld [vmem:[%s1 + $0x284] sm:$0xf]
  %v401 = vld [vmem:[%s1 + $0x288] sm:$0xf]
  %v402 = vld [vmem:[%s1 + $0x28c] sm:$0xf]
  %v403 = vld [vmem:[%s1 + $0x290] sm:$0xf]
  %v404 = vld [vmem:[%s1 + $0x294] sm:$0xf]
  %v405 = vld [vmem:[%s1 + $0x298] sm:$0xf]
  %v406 = vld [vmem:[%s1 + $0x29c] sm:$0xf]
  %v407 = vld [vmem:[%s1 + $0x2a0] sm:$0xf]
  %v408 = vld [vmem:[%s1 + $0x2a4] sm:$0xf]
  %v409 = vld [vmem:[%s1 + $0x2a8] sm:$0xf]
  %v410 = vld [vmem:[%s1 + $0x2ac] sm:$0xf]
  %v411 = vld [vmem:[%s1 + $0x2b0] sm:$0xf]
  %v412 = vld [vmem:[%s1 + $0x2b4] sm:$0xf]
  %v413 = vld [vmem:[%s1 + $0x2b8] sm:$0xf]
  %v414 = vld [vmem:[%s1 + $0x2bc] sm:$0xf]
  %v415 = vld [vmem:[%s1 + $0x2c0] sm:$0xf]
  %v416 = vld [vmem:[%s1 + $0x2c4] sm:$0xf]
  %v417 = vld [vmem:[%s1 + $0x2c8] sm:$0xf]
  %v418 = vld [vmem:[%s1 + $0x2cc] sm:$0xf]
  %v419 = vld [vmem:[%s1 + $0x2d0] sm:$0xf]
  %v420 = vld [vmem:[%s1 + $0x2d4] sm:$0xf]
  %v421 = vld [vmem:[%s1 + $0x2d8] sm:$0xf]
  %v422 = vld [vmem:[%s1 + $0x2dc] sm:$0xf]
  %v423 = vld [vmem:[%s1 + $0x2e0] sm:$0xf]
  %v424 = vld [vmem:[%s1 + $0x2e4] sm:$0xf]
  %v425 = vld [vmem:[%s1 + $0x2e8] sm:$0xf]
  %v426 = vld [vmem:[%s1 + $0x2ec] sm:$0xf]
  %v427 = vld [vmem:[%s1 + $0x2f0] sm:$0xf]
  %v428 = vld [vmem:[%s1 + $0x2f4] sm:$0xf]
  %v429 = vld [vmem:[%s1 + $0x2f8] sm:$0xf]
  %v430 = vld [vmem:[%s1 + $0x2fc] sm:$0xf]
  %v431 = vld [vmem:[%s1 + $0x300] sm:$0xf]
  %v432 = vld [vmem:[%s1 + $0x304] sm:$0xf]
  %v433 = vld [vmem:[%s1 + $0x308] sm:$0xf]
  %v434 = vld [vmem:[%s1 + $0x30c] sm:$0xf]
  %v435 = vld [vmem:[%s1 + $0x310] sm:$0xf]
  %v436 = vld [vmem:[%s1 + $0x314] sm:$0xf]
  %v437 = vld [vmem:[%s1 + $0x318] sm:$0xf]
  %v438 = vld [vmem:[%s1 + $0x31c] sm:$0xf]
  %v439 = vld [vmem:[%s2] sm:$0x1]
  %v441 = vlaneseq
  %v442 = vshrl.u32 %v441, 7
  %v443 = vsub.s32 0, %v442
  %v444 = vrot.slane %v439, %v443
  %v670 = vunpack.c.l.b16 %v15
  %v671 = vunpack.c.h.b16 %v15
  %v672 = vunpack.c.l.b16 %v16
  %v673 = vunpack.c.h.b16 %v16
  %v674 = vunpack.c.l.b16 %v17
  %v675 = vunpack.c.h.b16 %v17
  %v676 = vunpack.c.l.b16 %v18
  %v677 = vunpack.c.h.b16 %v18
  %v678 = vunpack.c.l.b16 %v19
  %v679 = vunpack.c.h.b16 %v19
  %v680 = vunpack.c.l.b16 %v20
  %v681 = vunpack.c.h.b16 %v20
  %v682 = vunpack.c.l.b16 %v21
  %v683 = vunpack.c.l.b16 %v22
  %v684 = vunpack.c.h.b16 %v22
  %v685 = vunpack.c.l.b16 %v23
  %v686 = vunpack.c.h.b16 %v23
  %v687 = vunpack.c.l.b16 %v24
  %v688 = vunpack.c.h.b16 %v24
  %v689 = vunpack.c.l.b16 %v25
  %v690 = vunpack.c.h.b16 %v25
  %v691 = vunpack.c.l.b16 %v26
  %v692 = vunpack.c.h.b16 %v26
  %v693 = vunpack.c.l.b16 %v27
  %v694 = vunpack.c.h.b16 %v27
  %v695 = vunpack.c.l.b16 %v28
  %v696 = vunpack.c.l.b16 %v29
  %v697 = vunpack.c.h.b16 %v29
  %v698 = vunpack.c.l.b16 %v30
  %v699 = vunpack.c.h.b16 %v30
  %v700 = vunpack.c.l.b16 %v31
  %v701 = vunpack.c.h.b16 %v31
  %v702 = vunpack.c.l.b16 %v32
  %v703 = vunpack.c.h.b16 %v32
  %v704 = vunpack.c.l.b16 %v33
  %v705 = vunpack.c.h.b16 %v33
  %v706 = vunpack.c.l.b16 %v34
  %v707 = vunpack.c.h.b16 %v34
  %v708 = vunpack.c.l.b16 %v35
  %v709 = vunpack.c.l.b16 %v36
  %v710 = vunpack.c.h.b16 %v36
  %v711 = vunpack.c.l.b16 %v37
  %v712 = vunpack.c.h.b16 %v37
  %v713 = vunpack.c.l.b16 %v38
  %v714 = vunpack.c.h.b16 %v38
  %v715 = vunpack.c.l.b16 %v39
  %v716 = vunpack.c.h.b16 %v39
  %v717 = vunpack.c.l.b16 %v40
  %v718 = vunpack.c.h.b16 %v40
  %v719 = vunpack.c.l.b16 %v41
  %v720 = vunpack.c.h.b16 %v41
  %v721 = vunpack.c.l.b16 %v42
  %v722 = vunpack.c.l.b16 %v43
  %v723 = vunpack.c.h.b16 %v43
  %v724 = vunpack.c.l.b16 %v44
  %v725 = vunpack.c.h.b16 %v44
  %v726 = vunpack.c.l.b16 %v45
  %v727 = vunpack.c.h.b16 %v45
  %v728 = vunpack.c.l.b16 %v46
  %v729 = vunpack.c.h.b16 %v46
  %v730 = vunpack.c.l.b16 %v47
  %v731 = vunpack.c.h.b16 %v47
  %v732 = vunpack.c.l.b16 %v48
  %v733 = vunpack.c.h.b16 %v48
  %v734 = vunpack.c.l.b16 %v49
  %v735 = vunpack.c.l.b16 %v50
  %v736 = vunpack.c.h.b16 %v50
  %v737 = vunpack.c.l.b16 %v51
  %v738 = vunpack.c.h.b16 %v51
  %v739 = vunpack.c.l.b16 %v52
  %v740 = vunpack.c.h.b16 %v52
  %v741 = vunpack.c.l.b16 %v53
  %v742 = vunpack.c.h.b16 %v53
  %v743 = vunpack.c.l.b16 %v54
  %v744 = vunpack.c.h.b16 %v54
  %v745 = vunpack.c.l.b16 %v55
  %v746 = vunpack.c.h.b16 %v55
  %v747 = vunpack.c.l.b16 %v56
  %v748 = vunpack.c.l.b16 %v57
  %v749 = vunpack.c.h.b16 %v57
  %v750 = vunpack.c.l.b16 %v58
  %v751 = vunpack.c.h.b16 %v58
  %v752 = vunpack.c.l.b16 %v59
  %v753 = vunpack.c.h.b16 %v59
  %v754 = vunpack.c.l.b16 %v60
  %v755 = vunpack.c.h.b16 %v60
  %v756 = vunpack.c.l.b16 %v61
  %v757 = vunpack.c.h.b16 %v61
  %v758 = vunpack.c.l.b16 %v62
  %v759 = vunpack.c.h.b16 %v62
  %v760 = vunpack.c.l.b16 %v63
  %v761 = vunpack.c.l.b16 %v64
  %v762 = vunpack.c.h.b16 %v64
  %v763 = vunpack.c.l.b16 %v65
  %v764 = vunpack.c.h.b16 %v65
  %v765 = vunpack.c.l.b16 %v66
  %v766 = vunpack.c.h.b16 %v66
  %v767 = vunpack.c.l.b16 %v67
  %v768 = vunpack.c.h.b16 %v67
  %v769 = vunpack.c.l.b16 %v68
  %v770 = vunpack.c.h.b16 %v68
  %v771 = vunpack.c.l.b16 %v69
  %v772 = vunpack.c.h.b16 %v69
  %v773 = vunpack.c.l.b16 %v70
  %v774 = vunpack.c.l.b16 %v71
  %v775 = vunpack.c.h.b16 %v71
  %v776 = vunpack.c.l.b16 %v72
  %v777 = vunpack.c.h.b16 %v72
  %v778 = vunpack.c.l.b16 %v73
  %v779 = vunpack.c.h.b16 %v73
  %v780 = vunpack.c.l.b16 %v74
  %v781 = vunpack.c.h.b16 %v74
  %v782 = vunpack.c.l.b16 %v75
  %v783 = vunpack.c.h.b16 %v75
  %v784 = vunpack.c.l.b16 %v76
  %v785 = vunpack.c.h.b16 %v76
  %v786 = vunpack.c.l.b16 %v77
  %v787 = vunpack.c.l.b16 %v78
  %v788 = vunpack.c.h.b16 %v78
  %v789 = vunpack.c.l.b16 %v79
  %v790 = vunpack.c.h.b16 %v79
  %v791 = vunpack.c.l.b16 %v80
  %v792 = vunpack.c.h.b16 %v80
  %v793 = vunpack.c.l.b16 %v81
  %v794 = vunpack.c.h.b16 %v81
  %v795 = vunpack.c.l.b16 %v82
  %v796 = vunpack.c.h.b16 %v82
  %v797 = vunpack.c.l.b16 %v83
  %v798 = vunpack.c.h.b16 %v83
  %v799 = vunpack.c.l.b16 %v84
  %v800 = vunpack.c.l.b16 %v85
  %v801 = vunpack.c.h.b16 %v85
  %v802 = vunpack.c.l.b16 %v86
  %v803 = vunpack.c.h.b16 %v86
  %v804 = vunpack.c.l.b16 %v87
  %v805 = vunpack.c.h.b16 %v87
  %v806 = vunpack.c.l.b16 %v88
  %v807 = vunpack.c.h.b16 %v88
  %v808 = vunpack.c.l.b16 %v89
  %v809 = vunpack.c.h.b16 %v89
  %v810 = vunpack.c.l.b16 %v90
  %v811 = vunpack.c.h.b16 %v90
  %v812 = vunpack.c.l.b16 %v91
  %v813 = vunpack.c.l.b16 %v92
  %v814 = vunpack.c.h.b16 %v92
  %v815 = vunpack.c.l.b16 %v93
  %v816 = vunpack.c.h.b16 %v93
  %v817 = vunpack.c.l.b16 %v94
  %v818 = vunpack.c.h.b16 %v94
  %v819 = vunpack.c.l.b16 %v95
  %v820 = vunpack.c.h.b16 %v95
  %v821 = vunpack.c.l.b16 %v96
  %v822 = vunpack.c.h.b16 %v96
  %v823 = vunpack.c.l.b16 %v97
  %v824 = vunpack.c.h.b16 %v97
  %v825 = vunpack.c.l.b16 %v98
  %v826 = vunpack.c.l.b16 %v99
  %v827 = vunpack.c.h.b16 %v99
  %v828 = vunpack.c.l.b16 %v100
  %v829 = vunpack.c.h.b16 %v100
  %v830 = vunpack.c.l.b16 %v101
  %v831 = vunpack.c.h.b16 %v101
  %v832 = vunpack.c.l.b16 %v102
  %v833 = vunpack.c.h.b16 %v102
  %v834 = vunpack.c.l.b16 %v103
  %v835 = vunpack.c.h.b16 %v103
  %v836 = vunpack.c.l.b16 %v104
  %v837 = vunpack.c.h.b16 %v104
  %v838 = vunpack.c.l.b16 %v105
  %v839 = vunpack.c.l.b16 %v106
  %v840 = vunpack.c.h.b16 %v106
  %v841 = vunpack.c.l.b16 %v107
  %v842 = vunpack.c.h.b16 %v107
  %v843 = vunpack.c.l.b16 %v108
  %v844 = vunpack.c.h.b16 %v108
  %v845 = vunpack.c.l.b16 %v109
  %v846 = vunpack.c.h.b16 %v109
  %v847 = vunpack.c.l.b16 %v110
  %v848 = vunpack.c.h.b16 %v110
  %v849 = vunpack.c.l.b16 %v111
  %v850 = vunpack.c.h.b16 %v111
  %v851 = vunpack.c.l.b16 %v112
  %v852 = vunpack.c.l.b16 %v113
  %v853 = vunpack.c.h.b16 %v113
  %v854 = vunpack.c.l.b16 %v114
  %v855 = vunpack.c.h.b16 %v114
  %v856 = vunpack.c.l.b16 %v115
  %v857 = vunpack.c.h.b16 %v115
  %v858 = vunpack.c.l.b16 %v116
  %v859 = vunpack.c.h.b16 %v116
  %v860 = vunpack.c.l.b16 %v117
  %v861 = vunpack.c.h.b16 %v117
  %v862 = vunpack.c.l.b16 %v118
  %v863 = vunpack.c.h.b16 %v118
  %v864 = vunpack.c.l.b16 %v119
  %v865 = vunpack.c.l.b16 %v120
  %v866 = vunpack.c.h.b16 %v120
  %v867 = vunpack.c.l.b16 %v121
  %v868 = vunpack.c.h.b16 %v121
  %v869 = vunpack.c.l.b16 %v122
  %v870 = vunpack.c.h.b16 %v122
  %v871 = vunpack.c.l.b16 %v123
  %v872 = vunpack.c.h.b16 %v123
  %v873 = vunpack.c.l.b16 %v124
  %v874 = vunpack.c.h.b16 %v124
  %v875 = vunpack.c.l.b16 %v125
  %v876 = vunpack.c.h.b16 %v125
  %v877 = vunpack.c.l.b16 %v126
  %v878 = vunpack.c.l.b16 %v127
  %v879 = vunpack.c.h.b16 %v127
  %v880 = vunpack.c.l.b16 %v128
  %v881 = vunpack.c.h.b16 %v128
  %v882 = vunpack.c.l.b16 %v129
  %v883 = vunpack.c.h.b16 %v129
  %v884 = vunpack.c.l.b16 %v130
  %v885 = vunpack.c.h.b16 %v130
  %v886 = vunpack.c.l.b16 %v131
  %v887 = vunpack.c.h.b16 %v131
  %v888 = vunpack.c.l.b16 %v132
  %v889 = vunpack.c.h.b16 %v132
  %v890 = vunpack.c.l.b16 %v133
  %v891 = vunpack.c.l.b16 %v134
  %v892 = vunpack.c.h.b16 %v134
  %v893 = vunpack.c.l.b16 %v135
  %v894 = vunpack.c.h.b16 %v135
  %v895 = vunpack.c.l.b16 %v136
  %v896 = vunpack.c.h.b16 %v136
  %v897 = vunpack.c.l.b16 %v137
  %v898 = vunpack.c.h.b16 %v137
  %v899 = vunpack.c.l.b16 %v138
  %v900 = vunpack.c.h.b16 %v138
  %v901 = vunpack.c.l.b16 %v139
  %v902 = vunpack.c.h.b16 %v139
  %v903 = vunpack.c.l.b16 %v140
  %v904 = vunpack.c.l.b16 %v141
  %v905 = vunpack.c.h.b16 %v141
  %v906 = vunpack.c.l.b16 %v142
  %v907 = vunpack.c.h.b16 %v142
  %v908 = vunpack.c.l.b16 %v143
  %v909 = vunpack.c.h.b16 %v143
  %v910 = vunpack.c.l.b16 %v144
  %v911 = vunpack.c.h.b16 %v144
  %v912 = vunpack.c.l.b16 %v145
  %v913 = vunpack.c.h.b16 %v145
  %v914 = vunpack.c.l.b16 %v146
  %v915 = vunpack.c.h.b16 %v146
  %v916 = vunpack.c.l.b16 %v147
  %v917 = vunpack.c.l.b16 %v148
  %v918 = vunpack.c.h.b16 %v148
  %v919 = vunpack.c.l.b16 %v149
  %v920 = vunpack.c.h.b16 %v149
  %v921 = vunpack.c.l.b16 %v150
  %v922 = vunpack.c.h.b16 %v150
  %v923 = vunpack.c.l.b16 %v151
  %v924 = vunpack.c.h.b16 %v151
  %v925 = vunpack.c.l.b16 %v152
  %v926 = vunpack.c.h.b16 %v152
  %v927 = vunpack.c.l.b16 %v153
  %v928 = vunpack.c.h.b16 %v153
  %v929 = vunpack.c.l.b16 %v154
  %v930 = vunpack.c.l.b16 %v155
  %v931 = vunpack.c.h.b16 %v155
  %v932 = vunpack.c.l.b16 %v156
  %v933 = vunpack.c.h.b16 %v156
  %v934 = vunpack.c.l.b16 %v157
  %v935 = vunpack.c.h.b16 %v157
  %v936 = vunpack.c.l.b16 %v158
  %v937 = vunpack.c.h.b16 %v158
  %v938 = vunpack.c.l.b16 %v159
  %v939 = vunpack.c.h.b16 %v159
  %v940 = vunpack.c.l.b16 %v160
  %v941 = vunpack.c.h.b16 %v160
  %v942 = vunpack.c.l.b16 %v161
  %v943 = vunpack.c.l.b16 %v162
  %v944 = vunpack.c.h.b16 %v162
  %v945 = vunpack.c.l.b16 %v163
  %v946 = vunpack.c.h.b16 %v163
  %v947 = vunpack.c.l.b16 %v164
  %v948 = vunpack.c.h.b16 %v164
  %v949 = vunpack.c.l.b16 %v165
  %v950 = vunpack.c.h.b16 %v165
  %v951 = vunpack.c.l.b16 %v166
  %v952 = vunpack.c.h.b16 %v166
  %v953 = vunpack.c.l.b16 %v167
  %v954 = vunpack.c.h.b16 %v167
  %v955 = vunpack.c.l.b16 %v168
  %v956 = vunpack.c.l.b16 %v169
  %v957 = vunpack.c.h.b16 %v169
  %v958 = vunpack.c.l.b16 %v170
  %v959 = vunpack.c.h.b16 %v170
  %v960 = vunpack.c.l.b16 %v171
  %v961 = vunpack.c.h.b16 %v171
  %v962 = vunpack.c.l.b16 %v172
  %v963 = vunpack.c.h.b16 %v172
  %v964 = vunpack.c.l.b16 %v173
  %v965 = vunpack.c.h.b16 %v173
  %v966 = vunpack.c.l.b16 %v174
  %v967 = vunpack.c.h.b16 %v174
  %v968 = vunpack.c.l.b16 %v175
  %v969 = vunpack.c.l.b16 %v176
  %v970 = vunpack.c.h.b16 %v176
  %v971 = vunpack.c.l.b16 %v177
  %v972 = vunpack.c.h.b16 %v177
  %v973 = vunpack.c.l.b16 %v178
  %v974 = vunpack.c.h.b16 %v178
  %v975 = vunpack.c.l.b16 %v179
  %v976 = vunpack.c.h.b16 %v179
  %v977 = vunpack.c.l.b16 %v180
  %v978 = vunpack.c.h.b16 %v180
  %v979 = vunpack.c.l.b16 %v181
  %v980 = vunpack.c.h.b16 %v181
  %v981 = vunpack.c.l.b16 %v182
  %v982 = vunpack.c.l.b16 %v183
  %v983 = vunpack.c.h.b16 %v183
  %v984 = vunpack.c.l.b16 %v184
  %v985 = vunpack.c.h.b16 %v184
  %v986 = vunpack.c.l.b16 %v185
  %v987 = vunpack.c.h.b16 %v185
  %v988 = vunpack.c.l.b16 %v186
  %v989 = vunpack.c.h.b16 %v186
  %v990 = vunpack.c.l.b16 %v187
  %v991 = vunpack.c.h.b16 %v187
  %v992 = vunpack.c.l.b16 %v188
  %v993 = vunpack.c.h.b16 %v188
  %v994 = vunpack.c.l.b16 %v189
  %v995 = vunpack.c.l.b16 %v190
  %v996 = vunpack.c.h.b16 %v190
  %v997 = vunpack.c.l.b16 %v191
  %v998 = vunpack.c.h.b16 %v191
  %v999 = vunpack.c.l.b16 %v192
  %v1000 = vunpack.c.h.b16 %v192
  %v1001 = vunpack.c.l.b16 %v193
  %v1002 = vunpack.c.h.b16 %v193
  %v1003 = vunpack.c.l.b16 %v194
  %v1004 = vunpack.c.h.b16 %v194
  %v1005 = vunpack.c.l.b16 %v195
  %v1006 = vunpack.c.h.b16 %v195
  %v1007 = vunpack.c.l.b16 %v196
  %v1008 = vunpack.c.l.b16 %v197
  %v1009 = vunpack.c.h.b16 %v197
  %v1010 = vunpack.c.l.b16 %v198
  %v1011 = vunpack.c.h.b16 %v198
  %v1012 = vunpack.c.l.b16 %v199
  %v1013 = vunpack.c.h.b16 %v199
  %v1014 = vunpack.c.l.b16 %v200
  %v1015 = vunpack.c.h.b16 %v200
  %v1016 = vunpack.c.l.b16 %v201
  %v1017 = vunpack.c.h.b16 %v201
  %v1018 = vunpack.c.l.b16 %v202
  %v1019 = vunpack.c.h.b16 %v202
  %v1020 = vunpack.c.l.b16 %v203
  %v1021 = vunpack.c.l.b16 %v204
  %v1022 = vunpack.c.h.b16 %v204
  %v1023 = vunpack.c.l.b16 %v205
  %v1024 = vunpack.c.h.b16 %v205
  %v1025 = vunpack.c.l.b16 %v206
  %v1026 = vunpack.c.h.b16 %v206
  %v1027 = vunpack.c.l.b16 %v207
  %v1028 = vunpack.c.h.b16 %v207
  %v1029 = vunpack.c.l.b16 %v208
  %v1030 = vunpack.c.h.b16 %v208
  %v1031 = vunpack.c.l.b16 %v209
  %v1032 = vunpack.c.h.b16 %v209
  %v1033 = vunpack.c.l.b16 %v210
  %v1034 = vunpack.c.l.b16 %v211
  %v1035 = vunpack.c.h.b16 %v211
  %v1036 = vunpack.c.l.b16 %v212
  %v1037 = vunpack.c.h.b16 %v212
  %v1038 = vunpack.c.l.b16 %v213
  %v1039 = vunpack.c.h.b16 %v213
  %v1040 = vunpack.c.l.b16 %v214
  %v1041 = vunpack.c.h.b16 %v214
  %v1042 = vunpack.c.l.b16 %v215
  %v1043 = vunpack.c.h.b16 %v215
  %v1044 = vunpack.c.l.b16 %v216
  %v1045 = vunpack.c.h.b16 %v216
  %v1046 = vunpack.c.l.b16 %v217
  %v1047 = vunpack.c.l.b16 %v218
  %v1048 = vunpack.c.h.b16 %v218
  %v1049 = vunpack.c.l.b16 %v219
  %v1050 = vunpack.c.h.b16 %v219
  %v1051 = vunpack.c.l.b16 %v220
  %v1052 = vunpack.c.h.b16 %v220
  %v1053 = vunpack.c.l.b16 %v221
  %v1054 = vunpack.c.h.b16 %v221
  %v1055 = vunpack.c.l.b16 %v222
  %v1056 = vunpack.c.h.b16 %v222
  %v1057 = vunpack.c.l.b16 %v223
  %v1058 = vunpack.c.h.b16 %v223
  %v1059 = vunpack.c.l.b16 %v224
  %v1060 = vunpack.c.l.b16 %v225
  %v1061 = vunpack.c.h.b16 %v225
  %v1062 = vunpack.c.l.b16 %v226
  %v1063 = vunpack.c.h.b16 %v226
  %v1064 = vunpack.c.l.b16 %v227
  %v1065 = vunpack.c.h.b16 %v227
  %v1066 = vunpack.c.l.b16 %v228
  %v1067 = vunpack.c.h.b16 %v228
  %v1068 = vunpack.c.l.b16 %v229
  %v1069 = vunpack.c.h.b16 %v229
  %v1070 = vunpack.c.l.b16 %v230
  %v1071 = vunpack.c.h.b16 %v230
  %v1072 = vunpack.c.l.b16 %v231
  %v1073 = vunpack.c.l.b16 %v232
  %v1074 = vunpack.c.h.b16 %v232
  %v1075 = vunpack.c.l.b16 %v233
  %v1076 = vunpack.c.h.b16 %v233
  %v1077 = vunpack.c.l.b16 %v234
  %v1078 = vunpack.c.h.b16 %v234
  %v1079 = vunpack.c.l.b16 %v235
  %v1080 = vunpack.c.h.b16 %v235
  %v1081 = vunpack.c.l.b16 %v236
  %v1082 = vunpack.c.h.b16 %v236
  %v1083 = vunpack.c.l.b16 %v237
  %v1084 = vunpack.c.h.b16 %v237
  %v1085 = vunpack.c.l.b16 %v238
  %v1086 = vpack.c.b16 %v683, %v670
  %v1087 = vpack.c.b16 %v684, %v671
  %v1088 = vpack.c.b16 %v685, %v672
  %v1089 = vpack.c.b16 %v686, %v673
  %v1090 = vpack.c.b16 %v687, %v674
  %v1091 = vpack.c.b16 %v688, %v675
  %v1092 = vpack.c.b16 %v689, %v676
  %v1093 = vpack.c.b16 %v690, %v677
  %v1094 = vpack.c.b16 %v691, %v678
  %v1095 = vpack.c.b16 %v692, %v679
  %v1096 = vpack.c.b16 %v693, %v680
  %v1097 = vpack.c.b16 %v694, %v681
  %v1098 = vpack.c.b16 %v695, %v682
  %v1099 = vpack.c.b16 %v709, %v696
  %v1100 = vpack.c.b16 %v710, %v697
  %v1101 = vpack.c.b16 %v711, %v698
  %v1102 = vpack.c.b16 %v712, %v699
  %v1103 = vpack.c.b16 %v713, %v700
  %v1104 = vpack.c.b16 %v714, %v701
  %v1105 = vpack.c.b16 %v715, %v702
  %v1106 = vpack.c.b16 %v716, %v703
  %v1107 = vpack.c.b16 %v717, %v704
  %v1108 = vpack.c.b16 %v718, %v705
  %v1109 = vpack.c.b16 %v719, %v706
  %v1110 = vpack.c.b16 %v720, %v707
  %v1111 = vpack.c.b16 %v721, %v708
  %v1112 = vpack.c.b16 %v735, %v722
  %v1113 = vpack.c.b16 %v736, %v723
  %v1114 = vpack.c.b16 %v737, %v724
  %v1115 = vpack.c.b16 %v738, %v725
  %v1116 = vpack.c.b16 %v739, %v726
  %v1117 = vpack.c.b16 %v740, %v727
  %v1118 = vpack.c.b16 %v741, %v728
  %v1119 = vpack.c.b16 %v742, %v729
  %v1120 = vpack.c.b16 %v743, %v730
  %v1121 = vpack.c.b16 %v744, %v731
  %v1122 = vpack.c.b16 %v745, %v732
  %v1123 = vpack.c.b16 %v746, %v733
  %v1124 = vpack.c.b16 %v747, %v734
  %v1125 = vpack.c.b16 %v761, %v748
  %v1126 = vpack.c.b16 %v762, %v749
  %v1127 = vpack.c.b16 %v763, %v750
  %v1128 = vpack.c.b16 %v764, %v751
  %v1129 = vpack.c.b16 %v765, %v752
  %v1130 = vpack.c.b16 %v766, %v753
  %v1131 = vpack.c.b16 %v767, %v754
  %v1132 = vpack.c.b16 %v768, %v755
  %v1133 = vpack.c.b16 %v769, %v756
  %v1134 = vpack.c.b16 %v770, %v757
  %v1135 = vpack.c.b16 %v771, %v758
  %v1136 = vpack.c.b16 %v772, %v759
  %v1137 = vpack.c.b16 %v773, %v760
  %v1138 = vpack.c.b16 %v787, %v774
  %v1139 = vpack.c.b16 %v788, %v775
  %v1140 = vpack.c.b16 %v789, %v776
  %v1141 = vpack.c.b16 %v790, %v777
  %v1142 = vpack.c.b16 %v791, %v778
  %v1143 = vpack.c.b16 %v792, %v779
  %v1144 = vpack.c.b16 %v793, %v780
  %v1145 = vpack.c.b16 %v794, %v781
  %v1146 = vpack.c.b16 %v795, %v782
  %v1147 = vpack.c.b16 %v796, %v783
  %v1148 = vpack.c.b16 %v797, %v784
  %v1149 = vpack.c.b16 %v798, %v785
  %v1150 = vpack.c.b16 %v799, %v786
  %v1151 = vpack.c.b16 %v813, %v800
  %v1152 = vpack.c.b16 %v814, %v801
  %v1153 = vpack.c.b16 %v815, %v802
  %v1154 = vpack.c.b16 %v816, %v803
  %v1155 = vpack.c.b16 %v817, %v804
  %v1156 = vpack.c.b16 %v818, %v805
  %v1157 = vpack.c.b16 %v819, %v806
  %v1158 = vpack.c.b16 %v820, %v807
  %v1159 = vpack.c.b16 %v821, %v808
  %v1160 = vpack.c.b16 %v822, %v809
  %v1161 = vpack.c.b16 %v823, %v810
  %v1162 = vpack.c.b16 %v824, %v811
  %v1163 = vpack.c.b16 %v825, %v812
  %v1164 = vpack.c.b16 %v839, %v826
  %v1165 = vpack.c.b16 %v840, %v827
  %v1166 = vpack.c.b16 %v841, %v828
  %v1167 = vpack.c.b16 %v842, %v829
  %v1168 = vpack.c.b16 %v843, %v830
  %v1169 = vpack.c.b16 %v844, %v831
  %v1170 = vpack.c.b16 %v845, %v832
  %v1171 = vpack.c.b16 %v846, %v833
  %v1172 = vpack.c.b16 %v847, %v834
  %v1173 = vpack.c.b16 %v848, %v835
  %v1174 = vpack.c.b16 %v849, %v836
  %v1175 = vpack.c.b16 %v850, %v837
  %v1176 = vpack.c.b16 %v851, %v838
  %v1177 = vpack.c.b16 %v865, %v852
  %v1178 = vpack.c.b16 %v866, %v853
  %v1179 = vpack.c.b16 %v867, %v854
  %v1180 = vpack.c.b16 %v868, %v855
  %v1181 = vpack.c.b16 %v869, %v856
  %v1182 = vpack.c.b16 %v870, %v857
  %v1183 = vpack.c.b16 %v871, %v858
  %v1184 = vpack.c.b16 %v872, %v859
  %v1185 = vpack.c.b16 %v873, %v860
  %v1186 = vpack.c.b16 %v874, %v861
  %v1187 = vpack.c.b16 %v875, %v862
  %v1188 = vpack.c.b16 %v876, %v863
  %v1189 = vpack.c.b16 %v877, %v864
  %v1190 = vpack.c.b16 %v891, %v878
  %v1191 = vpack.c.b16 %v892, %v879
  %v1192 = vpack.c.b16 %v893, %v880
  %v1193 = vpack.c.b16 %v894, %v881
  %v1194 = vpack.c.b16 %v895, %v882
  %v1195 = vpack.c.b16 %v896, %v883
  %v1196 = vpack.c.b16 %v897, %v884
  %v1197 = vpack.c.b16 %v898, %v885
  %v1198 = vpack.c.b16 %v899, %v886
  %v1199 = vpack.c.b16 %v900, %v887
  %v1200 = vpack.c.b16 %v901, %v888
  %v1201 = vpack.c.b16 %v902, %v889
  %v1202 = vpack.c.b16 %v903, %v890
  %v1203 = vpack.c.b16 %v917, %v904
  %v1204 = vpack.c.b16 %v918, %v905
  %v1205 = vpack.c.b16 %v919, %v906
  %v1206 = vpack.c.b16 %v920, %v907
  %v1207 = vpack.c.b16 %v921, %v908
  %v1208 = vpack.c.b16 %v922, %v909
  %v1209 = vpack.c.b16 %v923, %v910
  %v1210 = vpack.c.b16 %v924, %v911
  %v1211 = vpack.c.b16 %v925, %v912
  %v1212 = vpack.c.b16 %v926, %v913
  %v1213 = vpack.c.b16 %v927, %v914
  %v1214 = vpack.c.b16 %v928, %v915
  %v1215 = vpack.c.b16 %v929, %v916
  %v1216 = vpack.c.b16 %v943, %v930
  %v1217 = vpack.c.b16 %v944, %v931
  %v1218 = vpack.c.b16 %v945, %v932
  %v1219 = vpack.c.b16 %v946, %v933
  %v1220 = vpack.c.b16 %v947, %v934
  %v1221 = vpack.c.b16 %v948, %v935
  %v1222 = vpack.c.b16 %v949, %v936
  %v1223 = vpack.c.b16 %v950, %v937
  %v1224 = vpack.c.b16 %v951, %v938
  %v1225 = vpack.c.b16 %v952, %v939
  %v1226 = vpack.c.b16 %v953, %v940
  %v1227 = vpack.c.b16 %v954, %v941
  %v1228 = vpack.c.b16 %v955, %v942
  %v1229 = vpack.c.b16 %v969, %v956
  %v1230 = vpack.c.b16 %v970, %v957
  %v1231 = vpack.c.b16 %v971, %v958
  %v1232 = vpack.c.b16 %v972, %v959
  %v1233 = vpack.c.b16 %v973, %v960
  %v1234 = vpack.c.b16 %v974, %v961
  %v1235 = vpack.c.b16 %v975, %v962
  %v1236 = vpack.c.b16 %v976, %v963
  %v1237 = vpack.c.b16 %v977, %v964
  %v1238 = vpack.c.b16 %v978, %v965
  %v1239 = vpack.c.b16 %v979, %v966
  %v1240 = vpack.c.b16 %v980, %v967
  %v1241 = vpack.c.b16 %v981, %v968
  %v1242 = vpack.c.b16 %v995, %v982
  %v1243 = vpack.c.b16 %v996, %v983
  %v1244 = vpack.c.b16 %v997, %v984
  %v1245 = vpack.c.b16 %v998, %v985
  %v1246 = vpack.c.b16 %v999, %v986
  %v1247 = vpack.c.b16 %v1000, %v987
  %v1248 = vpack.c.b16 %v1001, %v988
  %v1249 = vpack.c.b16 %v1002, %v989
  %v1250 = vpack.c.b16 %v1003, %v990
  %v1251 = vpack.c.b16 %v1004, %v991
  %v1252 = vpack.c.b16 %v1005, %v992
  %v1253 = vpack.c.b16 %v1006, %v993
  %v1254 = vpack.c.b16 %v1007, %v994
  %v1255 = vpack.c.b16 %v1021, %v1008
  %v1256 = vpack.c.b16 %v1022, %v1009
  %v1257 = vpack.c.b16 %v1023, %v1010
  %v1258 = vpack.c.b16 %v1024, %v1011
  %v1259 = vpack.c.b16 %v1025, %v1012
  %v1260 = vpack.c.b16 %v1026, %v1013
  %v1261 = vpack.c.b16 %v1027, %v1014
  %v1262 = vpack.c.b16 %v1028, %v1015
  %v1263 = vpack.c.b16 %v1029, %v1016
  %v1264 = vpack.c.b16 %v1030, %v1017
  %v1265 = vpack.c.b16 %v1031, %v1018
  %v1266 = vpack.c.b16 %v1032, %v1019
  %v1267 = vpack.c.b16 %v1033, %v1020
  %v1268 = vpack.c.b16 %v1047, %v1034
  %v1269 = vpack.c.b16 %v1048, %v1035
  %v1270 = vpack.c.b16 %v1049, %v1036
  %v1271 = vpack.c.b16 %v1050, %v1037
  %v1272 = vpack.c.b16 %v1051, %v1038
  %v1273 = vpack.c.b16 %v1052, %v1039
  %v1274 = vpack.c.b16 %v1053, %v1040
  %v1275 = vpack.c.b16 %v1054, %v1041
  %v1276 = vpack.c.b16 %v1055, %v1042
  %v1277 = vpack.c.b16 %v1056, %v1043
  %v1278 = vpack.c.b16 %v1057, %v1044
  %v1279 = vpack.c.b16 %v1058, %v1045
  %v1280 = vpack.c.b16 %v1059, %v1046
  %v1281 = vpack.c.b16 %v1073, %v1060
  %v1282 = vpack.c.b16 %v1074, %v1061
  %v1283 = vpack.c.b16 %v1075, %v1062
  %v1284 = vpack.c.b16 %v1076, %v1063
  %v1285 = vpack.c.b16 %v1077, %v1064
  %v1286 = vpack.c.b16 %v1078, %v1065
  %v1287 = vpack.c.b16 %v1079, %v1066
  %v1288 = vpack.c.b16 %v1080, %v1067
  %v1289 = vpack.c.b16 %v1081, %v1068
  %v1290 = vpack.c.b16 %v1082, %v1069
  %v1291 = vpack.c.b16 %v1083, %v1070
  %v1292 = vpack.c.b16 %v1084, %v1071
  %v1293 = vpack.c.b16 %v1085, %v1072
  %v1686 = vunpack.c.l.b16 %v239
  %v1687 = vunpack.c.l.b16 %v240
  %v1688 = vunpack.c.l.b16 %v241
  %v1689 = vunpack.c.l.b16 %v242
  %v1690 = vunpack.c.l.b16 %v243
  %v1691 = vunpack.c.l.b16 %v244
  %v1692 = vunpack.c.l.b16 %v245
  %v1693 = vunpack.c.l.b16 %v246
  %v1694 = vunpack.c.l.b16 %v247
  %v1695 = vunpack.c.l.b16 %v248
  %v1696 = vunpack.c.l.b16 %v249
  %v1697 = vunpack.c.l.b16 %v250
  %v1698 = vunpack.c.l.b16 %v251
  %v1699 = vunpack.c.l.b16 %v252
  %v1700 = vunpack.c.l.b16 %v253
  %v1701 = vunpack.c.l.b16 %v254
  %v1702 = vunpack.c.l.b16 %v255
  %v1703 = vunpack.c.l.b16 %v256
  %v1704 = vunpack.c.l.b16 %v257
  %v1705 = vunpack.c.l.b16 %v258
  %v1706 = vunpack.c.l.b16 %v259
  %v1707 = vunpack.c.l.b16 %v260
  %v1708 = vunpack.c.l.b16 %v261
  %v1709 = vunpack.c.l.b16 %v262
  %v1710 = vunpack.c.l.b16 %v263
  %v1711 = vunpack.c.l.b16 %v264
  %v1712 = vunpack.c.l.b16 %v265
  %v1713 = vunpack.c.l.b16 %v266
  %v1714 = vunpack.c.l.b16 %v267
  %v1715 = vunpack.c.l.b16 %v268
  %v1716 = vunpack.c.l.b16 %v269
  %v1717 = vunpack.c.l.b16 %v270
  %v1718 = vunpack.c.l.b16 %v271
  %v1719 = vunpack.c.l.b16 %v272
  %v1720 = vunpack.c.l.b16 %v273
  %v1721 = vunpack.c.l.b16 %v274
  %v1722 = vunpack.c.l.b16 %v275
  %v1723 = vunpack.c.l.b16 %v276
  %v1724 = vunpack.c.l.b16 %v277
  %v1725 = vunpack.c.l.b16 %v278
  %v1726 = vunpack.c.l.b16 %v279
  %v1727 = vunpack.c.l.b16 %v280
  %v1728 = vunpack.c.l.b16 %v281
  %v1729 = vunpack.c.l.b16 %v282
  %v1730 = vunpack.c.l.b16 %v283
  %v1731 = vunpack.c.l.b16 %v284
  %v1732 = vunpack.c.l.b16 %v285
  %v1733 = vunpack.c.l.b16 %v286
  %v1734 = vunpack.c.l.b16 %v287
  %v1735 = vunpack.c.l.b16 %v288
  %v1736 = vunpack.c.l.b16 %v289
  %v1737 = vunpack.c.l.b16 %v290
  %v1738 = vunpack.c.l.b16 %v291
  %v1739 = vunpack.c.l.b16 %v292
  %v1740 = vunpack.c.l.b16 %v293
  %v1741 = vunpack.c.l.b16 %v294
  %v1742 = vunpack.c.l.b16 %v295
  %v1743 = vunpack.c.l.b16 %v296
  %v1744 = vunpack.c.l.b16 %v297
  %v1745 = vunpack.c.l.b16 %v298
  %v1746 = vunpack.c.l.b16 %v299
  %v1747 = vunpack.c.l.b16 %v300
  %v1748 = vunpack.c.l.b16 %v301
  %v1749 = vunpack.c.l.b16 %v302
  %v1750 = vunpack.c.l.b16 %v303
  %v1751 = vunpack.c.l.b16 %v304
  %v1752 = vunpack.c.l.b16 %v305
  %v1753 = vunpack.c.l.b16 %v306
  %v1754 = vunpack.c.l.b16 %v307
  %v1755 = vunpack.c.l.b16 %v308
  %v1756 = vunpack.c.l.b16 %v309
  %v1757 = vunpack.c.l.b16 %v310
  %v1758 = vunpack.c.l.b16 %v311
  %v1759 = vunpack.c.l.b16 %v312
  %v1760 = vunpack.c.l.b16 %v313
  %v1761 = vunpack.c.l.b16 %v314
  %v1762 = vunpack.c.l.b16 %v315
  %v1763 = vunpack.c.l.b16 %v316
  %v1764 = vunpack.c.l.b16 %v317
  %v1765 = vunpack.c.l.b16 %v318
  %v1766 = vunpack.c.l.b16 %v319
  %v1767 = vunpack.c.l.b16 %v320
  %v1768 = vunpack.c.l.b16 %v321
  %v1769 = vunpack.c.l.b16 %v322
  %v1770 = vunpack.c.l.b16 %v323
  %v1771 = vunpack.c.l.b16 %v324
  %v1772 = vunpack.c.l.b16 %v325
  %v1773 = vunpack.c.l.b16 %v326
  %v1774 = vunpack.c.l.b16 %v327
  %v1775 = vunpack.c.l.b16 %v328
  %v1776 = vunpack.c.l.b16 %v329
  %v1777 = vunpack.c.l.b16 %v330
  %v1778 = vunpack.c.l.b16 %v331
  %v1779 = vunpack.c.l.b16 %v332
  %v1780 = vunpack.c.l.b16 %v333
  %v1781 = vunpack.c.l.b16 %v334
  %v1782 = vunpack.c.l.b16 %v335
  %v1783 = vunpack.c.l.b16 %v336
  %v1784 = vunpack.c.l.b16 %v337
  %v1785 = vunpack.c.l.b16 %v338
  %v1786 = vunpack.c.l.b16 %v339
  %v1787 = vunpack.c.l.b16 %v340
  %v1788 = vunpack.c.l.b16 %v341
  %v1789 = vunpack.c.l.b16 %v342
  %v1790 = vunpack.c.l.b16 %v343
  %v1791 = vunpack.c.l.b16 %v344
  %v1792 = vunpack.c.l.b16 %v345
  %v1793 = vunpack.c.l.b16 %v346
  %v1794 = vunpack.c.l.b16 %v347
  %v1795 = vunpack.c.l.b16 %v348
  %v1796 = vunpack.c.l.b16 %v349
  %v1797 = vunpack.c.l.b16 %v350
  %v1798 = vunpack.c.l.b16 %v351
  %v1799 = vunpack.c.l.b16 %v352
  %v1800 = vunpack.c.l.b16 %v353
  %v1801 = vunpack.c.l.b16 %v354
  %v1802 = vunpack.c.l.b16 %v355
  %v1803 = vunpack.c.l.b16 %v356
  %v1804 = vunpack.c.l.b16 %v357
  %v1805 = vunpack.c.l.b16 %v358
  %v1806 = vunpack.c.l.b16 %v359
  %v1807 = vunpack.c.l.b16 %v360
  %v1808 = vunpack.c.l.b16 %v361
  %v1809 = vunpack.c.l.b16 %v362
  %v1810 = vunpack.c.l.b16 %v363
  %v1811 = vunpack.c.l.b16 %v364
  %v1812 = vunpack.c.l.b16 %v365
  %v1813 = vunpack.c.l.b16 %v366
  %v1814 = vunpack.c.l.b16 %v367
  %v1815 = vunpack.c.l.b16 %v368
  %v1816 = vunpack.c.l.b16 %v369
  %v1817 = vunpack.c.l.b16 %v370
  %v1818 = vunpack.c.l.b16 %v371
  %v1819 = vunpack.c.l.b16 %v372
  %v1820 = vunpack.c.l.b16 %v373
  %v1821 = vunpack.c.l.b16 %v374
  %v1822 = vunpack.c.l.b16 %v375
  %v1823 = vunpack.c.l.b16 %v376
  %v1824 = vunpack.c.l.b16 %v377
  %v1825 = vunpack.c.l.b16 %v378
  %v1826 = vunpack.c.l.b16 %v379
  %v1827 = vunpack.c.l.b16 %v380
  %v1828 = vunpack.c.l.b16 %v381
  %v1829 = vunpack.c.l.b16 %v382
  %v1830 = vunpack.c.l.b16 %v383
  %v1831 = vunpack.c.l.b16 %v384
  %v1832 = vunpack.c.l.b16 %v385
  %v1833 = vunpack.c.l.b16 %v386
  %v1834 = vunpack.c.l.b16 %v387
  %v1835 = vunpack.c.l.b16 %v388
  %v1836 = vunpack.c.l.b16 %v389
  %v1837 = vunpack.c.l.b16 %v390
  %v1838 = vunpack.c.l.b16 %v391
  %v1839 = vunpack.c.l.b16 %v392
  %v1840 = vunpack.c.l.b16 %v393
  %v1841 = vunpack.c.l.b16 %v394
  %v1842 = vunpack.c.l.b16 %v395
  %v1843 = vunpack.c.l.b16 %v396
  %v1844 = vunpack.c.l.b16 %v397
  %v1845 = vunpack.c.l.b16 %v398
  %v1846 = vunpack.c.l.b16 %v399
  %v1847 = vunpack.c.l.b16 %v400
  %v1848 = vunpack.c.l.b16 %v401
  %v1849 = vunpack.c.l.b16 %v402
  %v1850 = vunpack.c.l.b16 %v403
  %v1851 = vunpack.c.l.b16 %v404
  %v1852 = vunpack.c.l.b16 %v405
  %v1853 = vunpack.c.l.b16 %v406
  %v1854 = vunpack.c.l.b16 %v407
  %v1855 = vunpack.c.l.b16 %v408
  %v1856 = vunpack.c.l.b16 %v409
  %v1857 = vunpack.c.l.b16 %v410
  %v1858 = vunpack.c.l.b16 %v411
  %v1859 = vunpack.c.l.b16 %v412
  %v1860 = vunpack.c.l.b16 %v413
  %v1861 = vunpack.c.l.b16 %v414
  %v1862 = vunpack.c.l.b16 %v415
  %v1863 = vunpack.c.l.b16 %v416
  %v1864 = vunpack.c.l.b16 %v417
  %v1865 = vunpack.c.l.b16 %v418
  %v1866 = vunpack.c.l.b16 %v419
  %v1867 = vunpack.c.l.b16 %v420
  %v1868 = vunpack.c.l.b16 %v421
  %v1869 = vunpack.c.l.b16 %v422
  %v1870 = vunpack.c.l.b16 %v423
  %v1871 = vunpack.c.l.b16 %v424
  %v1872 = vunpack.c.l.b16 %v425
  %v1873 = vunpack.c.l.b16 %v426
  %v1874 = vunpack.c.l.b16 %v427
  %v1875 = vunpack.c.l.b16 %v428
  %v1876 = vunpack.c.l.b16 %v429
  %v1877 = vunpack.c.l.b16 %v430
  %v1878 = vunpack.c.l.b16 %v431
  %v1879 = vunpack.c.l.b16 %v432
  %v1880 = vunpack.c.l.b16 %v433
  %v1881 = vunpack.c.l.b16 %v434
  %v1882 = vunpack.c.l.b16 %v435
  %v1883 = vunpack.c.l.b16 %v436
  %v1884 = vunpack.c.l.b16 %v437
  %v1885 = vunpack.c.l.b16 %v438
  %v1886 = vpack.c.b16 %v1687, %v1686
  %v1887 = vpack.c.b16 %v1689, %v1688
  %v1888 = vpack.c.b16 %v1691, %v1690
  %v1889 = vpack.c.b16 %v1693, %v1692
  %v1890 = vpack.c.b16 %v1695, %v1694
  %v1891 = vpack.c.b16 %v1697, %v1696
  %v1892 = vpack.c.b16 %v1699, %v1698
  %v1893 = vpack.c.b16 %v1701, %v1700
  %v1894 = vpack.c.b16 %v1703, %v1702
  %v1895 = vpack.c.b16 %v1705, %v1704
  %v1896 = vpack.c.b16 %v1707, %v1706
  %v1897 = vpack.c.b16 %v1709, %v1708
  %v1898 = vpack.c.b16 %v1711, %v1710
  %v1899 = vpack.c.b16 %v1713, %v1712
  %v1900 = vpack.c.b16 %v1715, %v1714
  %v1901 = vpack.c.b16 %v1717, %v1716
  %v1902 = vpack.c.b16 %v1719, %v1718
  %v1903 = vpack.c.b16 %v1721, %v1720
  %v1904 = vpack.c.b16 %v1723, %v1722
  %v1905 = vpack.c.b16 %v1725, %v1724
  %v1906 = vpack.c.b16 %v1727, %v1726
  %v1907 = vpack.c.b16 %v1729, %v1728
  %v1908 = vpack.c.b16 %v1731, %v1730
  %v1909 = vpack.c.b16 %v1733, %v1732
  %v1910 = vpack.c.b16 %v1735, %v1734
  %v1911 = vpack.c.b16 %v1737, %v1736
  %v1912 = vpack.c.b16 %v1739, %v1738
  %v1913 = vpack.c.b16 %v1741, %v1740
  %v1914 = vpack.c.b16 %v1743, %v1742
  %v1915 = vpack.c.b16 %v1745, %v1744
  %v1916 = vpack.c.b16 %v1747, %v1746
  %v1917 = vpack.c.b16 %v1749, %v1748
  %v1918 = vpack.c.b16 %v1751, %v1750
  %v1919 = vpack.c.b16 %v1753, %v1752
  %v1920 = vpack.c.b16 %v1755, %v1754
  %v1921 = vpack.c.b16 %v1757, %v1756
  %v1922 = vpack.c.b16 %v1759, %v1758
  %v1923 = vpack.c.b16 %v1761, %v1760
  %v1924 = vpack.c.b16 %v1763, %v1762
  %v1925 = vpack.c.b16 %v1765, %v1764
  %v1926 = vpack.c.b16 %v1767, %v1766
  %v1927 = vpack.c.b16 %v1769, %v1768
  %v1928 = vpack.c.b16 %v1771, %v1770
  %v1929 = vpack.c.b16 %v1773, %v1772
  %v1930 = vpack.c.b16 %v1775, %v1774
  %v1931 = vpack.c.b16 %v1777, %v1776
  %v1932 = vpack.c.b16 %v1779, %v1778
  %v1933 = vpack.c.b16 %v1781, %v1780
  %v1934 = vpack.c.b16 %v1783, %v1782
  %v1935 = vpack.c.b16 %v1785, %v1784
  %v1936 = vpack.c.b16 %v1787, %v1786
  %v1937 = vpack.c.b16 %v1789, %v1788
  %v1938 = vpack.c.b16 %v1791, %v1790
  %v1939 = vpack.c.b16 %v1793, %v1792
  %v1940 = vpack.c.b16 %v1795, %v1794
  %v1941 = vpack.c.b16 %v1797, %v1796
  %v1942 = vpack.c.b16 %v1799, %v1798
  %v1943 = vpack.c.b16 %v1801, %v1800
  %v1944 = vpack.c.b16 %v1803, %v1802
  %v1945 = vpack.c.b16 %v1805, %v1804
  %v1946 = vpack.c.b16 %v1807, %v1806
  %v1947 = vpack.c.b16 %v1809, %v1808
  %v1948 = vpack.c.b16 %v1811, %v1810
  %v1949 = vpack.c.b16 %v1813, %v1812
  %v1950 = vpack.c.b16 %v1815, %v1814
  %v1951 = vpack.c.b16 %v1817, %v1816
  %v1952 = vpack.c.b16 %v1819, %v1818
  %v1953 = vpack.c.b16 %v1821, %v1820
  %v1954 = vpack.c.b16 %v1823, %v1822
  %v1955 = vpack.c.b16 %v1825, %v1824
  %v1956 = vpack.c.b16 %v1827, %v1826
  %v1957 = vpack.c.b16 %v1829, %v1828
  %v1958 = vpack.c.b16 %v1831, %v1830
  %v1959 = vpack.c.b16 %v1833, %v1832
  %v1960 = vpack.c.b16 %v1835, %v1834
  %v1961 = vpack.c.b16 %v1837, %v1836
  %v1962 = vpack.c.b16 %v1839, %v1838
  %v1963 = vpack.c.b16 %v1841, %v1840
  %v1964 = vpack.c.b16 %v1843, %v1842
  %v1965 = vpack.c.b16 %v1845, %v1844
  %v1966 = vpack.c.b16 %v1847, %v1846
  %v1967 = vpack.c.b16 %v1849, %v1848
  %v1968 = vpack.c.b16 %v1851, %v1850
  %v1969 = vpack.c.b16 %v1853, %v1852
  %v1970 = vpack.c.b16 %v1855, %v1854
  %v1971 = vpack.c.b16 %v1857, %v1856
  %v1972 = vpack.c.b16 %v1859, %v1858
  %v1973 = vpack.c.b16 %v1861, %v1860
  %v1974 = vpack.c.b16 %v1863, %v1862
  %v1975 = vpack.c.b16 %v1865, %v1864
  %v1976 = vpack.c.b16 %v1867, %v1866
  %v1977 = vpack.c.b16 %v1869, %v1868
  %v1978 = vpack.c.b16 %v1871, %v1870
  %v1979 = vpack.c.b16 %v1873, %v1872
  %v1980 = vpack.c.b16 %v1875, %v1874
  %v1981 = vpack.c.b16 %v1877, %v1876
  %v1982 = vpack.c.b16 %v1879, %v1878
  %v1983 = vpack.c.b16 %v1881, %v1880
  %v1984 = vpack.c.b16 %v1883, %v1882
  %v1985 = vpack.c.b16 %v1885, %v1884
  %vm2086 = vcmask 523264
  %v2088 = vsel %vm2086, %v1098, 0
  %v2091 = vsel %vm2086, %v1111, 0
  %v2094 = vsel %vm2086, %v1124, 0
  %v2097 = vsel %vm2086, %v1137, 0
  %v2100 = vsel %vm2086, %v1150, 0
  %v2103 = vsel %vm2086, %v1163, 0
  %v2106 = vsel %vm2086, %v1176, 0
  %v2109 = vsel %vm2086, %v1189, 0
  %v2112 = vsel %vm2086, %v1202, 0
  %v2115 = vsel %vm2086, %v1215, 0
  %v2118 = vsel %vm2086, %v1228, 0
  %v2121 = vsel %vm2086, %v1241, 0
  %v2124 = vsel %vm2086, %v1254, 0
  %v2127 = vsel %vm2086, %v1267, 0
  %v2130 = vsel %vm2086, %v1280, 0
  %v2133 = vsel %vm2086, %v1293, 0
  %2135 = vmatprep.subr.bf16.mxu0 0
  %2136 = vmatpush1.bf16.msra.mxu0 %v1886
  %2137 = vmatprep.subr.bf16.mxu0 0
  %2138 = vmatpush1.bf16.msra.mxu0 %v1887
  %2139 = vmatprep.subr.bf16.mxu0 0
  %2140 = vmatpush1.bf16.msra.mxu0 %v1888
  %2141 = vmatprep.subr.bf16.mxu0 0
  %2142 = vmatpush1.bf16.msra.mxu0 %v1889
  %2143 = vmatprep.subr.bf16.mxu0 0
  %2144 = vmatpush1.bf16.msra.mxu0 %v1890
  %2145 = vmatprep.subr.bf16.mxu0 0
  %2146 = vmatpush1.bf16.msra.mxu0 %v1891
  %2147 = vmatprep.subr.bf16.mxu0 0
  %2148 = vmatpush1.bf16.msra.mxu0 %v1892
  %2149 = vmatprep.subr.bf16.mxu0 0
  %2150 = vmatpush1.bf16.msra.mxu0 %v1893
  %2151 = vmatprep.subr.bf16.mxu0 0
  %2152 = vmatpush1.bf16.msra.mxu0 %v1894
  %2153 = vmatprep.subr.bf16.mxu0 0
  %2154 = vmatpush1.bf16.msra.mxu0 %v1895
  %2155 = vmatprep.subr.bf16.mxu0 0
  %2156 = vmatpush1.bf16.msra.mxu0 %v1896
  %2157 = vmatprep.subr.bf16.mxu0 0
  %2158 = vmatpush1.bf16.msra.mxu0 %v1897
  %2159 = vmatprep.subr.bf16.mxu0 0
  %2160 = vmatpush1.bf16.msra.mxu0 %v1898
  %2161 = vmatprep.subr.bf16.mxu0 0
  %2162 = vmatpush1.bf16.msra.mxu0 %v1899
  %2163 = vmatprep.subr.bf16.mxu0 0
  %2164 = vmatpush1.bf16.msra.mxu0 %v1900
  %2165 = vmatprep.subr.bf16.mxu0 0
  %2166 = vmatpush1.bf16.msra.mxu0 %v1901
  %2167 = vmatprep.mubr.bf16.mxu0 %v1087
  %2168 = vmatmul.mubr.bf16.gmra.mrb[0].mxu0 %v1086
  %v2169 = vpop.f32.mrb[0].mxu0
  %v2170 = vadd.f32 %v444, %v2169
  %v2171 = vpop.f32.mrb[0].mxu0
  %v2172 = vpop.f32.mrb[0].mxu0
  %v2173 = vadd.f32 %v444, %v2172
  %v2174 = vpop.f32.mrb[0].mxu0
  %2175 = vmatprep.mubr.bf16.mxu0 %v1100
  %2176 = vmatmul.mubr.bf16.gmra.mrb[0].mxu0 %v1099
  %v2177 = vpop.f32.mrb[0].mxu0
  %v2178 = vadd.f32 %v444, %v2177
  %v2179 = vpop.f32.mrb[0].mxu0
  %v2180 = vpop.f32.mrb[0].mxu0
  %v2181 = vadd.f32 %v444, %v2180
  %v2182 = vpop.f32.mrb[0].mxu0
  %2183 = vmatprep.mubr.bf16.mxu0 %v1113
  %2184 = vmatmul.mubr.bf16.gmra.mrb[0].mxu0 %v1112
  %v2185 = vpop.f32.mrb[0].mxu0
  %v2186 = vadd.f32 %v444, %v2185
  %v2187 = vpop.f32.mrb[0].mxu0
  %v2188 = vpop.f32.mrb[0].mxu0
  %v2189 = vadd.f32 %v444, %v2188
  %v2190 = vpop.f32.mrb[0].mxu0
  %2191 = vmatprep.mubr.bf16.mxu0 %v1126
  %2192 = vmatmul.mubr.bf16.gmra.mrb[0].mxu0 %v1125
  %v2193 = vpop.f32.mrb[0].mxu0
  %v2194 = vadd.f32 %v444, %v2193
  %v2195 = vpop.f32.mrb[0].mxu0
  %v2196 = vpop.f32.mrb[0].mxu0
  %v2197 = vadd.f32 %v444, %v2196
  %v2198 = vpop.f32.mrb[0].mxu0
  %2199 = vmatprep.mubr.bf16.mxu0 %v1139
  %2200 = vmatmul.mubr.bf16.gmra.mrb[0].mxu0 %v1138
  %v2201 = vpop.f32.mrb[0].mxu0
  %v2202 = vadd.f32 %v444, %v2201
  %v2203 = vpop.f32.mrb[0].mxu0
  %v2204 = vpop.f32.mrb[0].mxu0
  %v2205 = vadd.f32 %v444, %v2204
  %v2206 = vpop.f32.mrb[0].mxu0
  %2207 = vmatprep.mubr.bf16.mxu0 %v1152
  %2208 = vmatmul.mubr.bf16.gmra.mrb[0].mxu0 %v1151
  %v2209 = vpop.f32.mrb[0].mxu0
  %v2210 = vadd.f32 %v444, %v2209
  %v2211 = vpop.f32.mrb[0].mxu0
  %v2212 = vpop.f32.mrb[0].mxu0
  %v2213 = vadd.f32 %v444, %v2212
  %v2214 = vpop.f32.mrb[0].mxu0
  %2215 = vmatprep.mubr.bf16.mxu0 %v1165
  %2216 = vmatmul.mubr.bf16.gmra.mrb[0].mxu0 %v1164
  %v2217 = vpop.f32.mrb[0].mxu0
  %v2218 = vadd.f32 %v444, %v2217
  %v2219 = vpop.f32.mrb[0].mxu0
  %v2220 = vpop.f32.mrb[0].mxu0
  %v2221 = vadd.f32 %v444, %v2220
  %v2222 = vpop.f32.mrb[0].mxu0
  %2223 = vmatprep.mubr.bf16.mxu0 %v1178
  %2224 = vmatmul.mubr.bf16.gmra.mrb[0].mxu0 %v1177
  %v2225 = vpop.f32.mrb[0].mxu0
  %v2226 = vadd.f32 %v444, %v2225
  %v2227 = vpop.f32.mrb[0].mxu0
  %v2228 = vpop.f32.mrb[0].mxu0
  %v2229 = vadd.f32 %v444, %v2228
  %v2230 = vpop.f32.mrb[0].mxu0
  %2231 = vmatprep.mubr.bf16.mxu0 %v1191
  %2232 = vmatmul.mubr.bf16.gmra.mrb[0].mxu0 %v1190
  %v2233 = vpop.f32.mrb[0].mxu0
  %v2234 = vadd.f32 %v444, %v2233
  %v2235 = vpop.f32.mrb[0].mxu0
  %v2236 = vpop.f32.mrb[0].mxu0
  %v2237 = vadd.f32 %v444, %v2236
  %v2238 = vpop.f32.mrb[0].mxu0
  %2239 = vmatprep.mubr.bf16.mxu0 %v1204
  %2240 = vmatmul.mubr.bf16.gmra.mrb[0].mxu0 %v1203
  %v2241 = vpop.f32.mrb[0].mxu0
  %v2242 = vadd.f32 %v444, %v2241
  %v2243 = vpop.f32.mrb[0].mxu0
  %v2244 = vpop.f32.mrb[0].mxu0
  %v2245 = vadd.f32 %v444, %v2244
  %v2246 = vpop.f32.mrb[0].mxu0
  %2247 = vmatprep.mubr.bf16.mxu0 %v1217
  %2248 = vmatmul.mubr.bf16.gmra.mrb[0].mxu0 %v1216
  %v2249 = vpop.f32.mrb[0].mxu0
  %v2250 = vadd.f32 %v444, %v2249
  %v2251 = vpop.f32.mrb[0].mxu0
  %v2252 = vpop.f32.mrb[0].mxu0
  %v2253 = vadd.f32 %v444, %v2252
  %v2254 = vpop.f32.mrb[0].mxu0
  %2255 = vmatprep.mubr.bf16.mxu0 %v1230
  %2256 = vmatmul.mubr.bf16.gmra.mrb[0].mxu0 %v1229
  %v2257 = vpop.f32.mrb[0].mxu0
  %v2258 = vadd.f32 %v444, %v2257
  %v2259 = vpop.f32.mrb[0].mxu0
  %v2260 = vpop.f32.mrb[0].mxu0
  %v2261 = vadd.f32 %v444, %v2260
  %v2262 = vpop.f32.mrb[0].mxu0
  %2263 = vmatprep.mubr.bf16.mxu0 %v1243
  %2264 = vmatmul.mubr.bf16.gmra.mrb[0].mxu0 %v1242
  %v2265 = vpop.f32.mrb[0].mxu0
  %v2266 = vadd.f32 %v444, %v2265
  %v2267 = vpop.f32.mrb[0].mxu0
  %v2268 = vpop.f32.mrb[0].mxu0
  %v2269 = vadd.f32 %v444, %v2268
  %v2270 = vpop.f32.mrb[0].mxu0
  %2271 = vmatprep.mubr.bf16.mxu0 %v1256
  %2272 = vmatmul.mubr.bf16.gmra.mrb[0].mxu0 %v1255
  %v2273 = vpop.f32.mrb[0].mxu0
  %v2274 = vadd.f32 %v444, %v2273
  %v2275 = vpop.f32.mrb[0].mxu0
  %v2276 = vpop.f32.mrb[0].mxu0
  %v2277 = vadd.f32 %v444, %v2276
  %v2278 = vpop.f32.mrb[0].mxu0
  %2279 = vmatprep.mubr.bf16.mxu0 %v1269
  %2280 = vmatmul.mubr.bf16.gmra.mrb[0].mxu0 %v1268
  %v2281 = vpop.f32.mrb[0].mxu0
  %v2282 = vadd.f32 %v444, %v2281
  %v2283 = vpop.f32.mrb[0].mxu0
  %v2284 = vpop.f32.mrb[0].mxu0
  %v2285 = vadd.f32 %v444, %v2284
  %v2286 = vpop.f32.mrb[0].mxu0
  %2287 = vmatprep.mubr.bf16.mxu0 %v1282
  %2288 = vmatmul.mubr.bf16.gmra.mrb[0].mxu0 %v1281
  %v2289 = vpop.f32.mrb[0].mxu0
  %v2290 = vadd.f32 %v444, %v2289
  %v2291 = vpop.f32.mrb[0].mxu0
  %v2292 = vpop.f32.mrb[0].mxu0
  %v2293 = vadd.f32 %v444, %v2292
  %v2294 = vpop.f32.mrb[0].mxu0
  %2295 = vdwg.mxu0
  %2296 = vmatprep.subr.bf16.mxu0 0
  %2297 = vmatpush1.bf16.msra.mxu0 %v1902
  %2298 = vmatprep.subr.bf16.mxu0 0
  %2299 = vmatpush1.bf16.msra.mxu0 %v1903
  %2300 = vmatprep.subr.bf16.mxu0 0
  %2301 = vmatpush1.bf16.msra.mxu0 %v1904
  %2302 = vmatprep.subr.bf16.mxu0 0
  %2303 = vmatpush1.bf16.msra.mxu0 %v1905
  %2304 = vmatprep.subr.bf16.mxu0 0
  %2305 = vmatpush1.bf16.msra.mxu0 %v1906
  %2306 = vmatprep.subr.bf16.mxu0 0
  %2307 = vmatpush1.bf16.msra.mxu0 %v1907
  %2308 = vmatprep.subr.bf16.mxu0 0
  %2309 = vmatpush1.bf16.msra.mxu0 %v1908
  %2310 = vmatprep.subr.bf16.mxu0 0
  %2311 = vmatpush1.bf16.msra.mxu0 %v1909
  %2312 = vmatprep.subr.bf16.mxu0 0
  %2313 = vmatpush1.bf16.msra.mxu0 %v1910
  %2314 = vmatprep.subr.bf16.mxu0 0
  %2315 = vmatpush1.bf16.msra.mxu0 %v1911
  %2316 = vmatprep.subr.bf16.mxu0 0
  %2317 = vmatpush1.bf16.msra.mxu0 %v1912
  %2318 = vmatprep.subr.bf16.mxu0 0
  %2319 = vmatpush1.bf16.msra.mxu0 %v1913
  %2320 = vmatprep.subr.bf16.mxu0 0
  %2321 = vmatpush1.bf16.msra.mxu0 %v1914
  %2322 = vmatprep.subr.bf16.mxu0 0
  %2323 = vmatpush1.bf16.msra.mxu0 %v1915
  %2324 = vmatprep.subr.bf16.mxu0 0
  %2325 = vmatpush1.bf16.msra.mxu0 %v1916
  %2326 = vmatprep.subr.bf16.mxu0 0
  %2327 = vmatpush1.bf16.msra.mxu0 %v1917
  %2328 = vmatprep.mubr.bf16.mxu0 %v1089
  %2329 = vmatmul.mubr.bf16.gmra.mrb[0].mxu0 %v1088
  %v2330 = vpop.f32.mrb[0].mxu0
  %v2331 = vadd.f32 %v2170, %v2330
  %v2332 = vpop.f32.mrb[0].mxu0
  %v2333 = vpop.f32.mrb[0].mxu0
  %v2334 = vadd.f32 %v2173, %v2333
  %v2335 = vpop.f32.mrb[0].mxu0
  %2336 = vmatprep.mubr.bf16.mxu0 %v1102
  %2337 = vmatmul.mubr.bf16.gmra.mrb[0].mxu0 %v1101
  %v2338 = vpop.f32.mrb[0].mxu0
  %v2339 = vadd.f32 %v2178, %v2338
  %v2340 = vpop.f32.mrb[0].mxu0
  %v2341 = vpop.f32.mrb[0].mxu0
  %v2342 = vadd.f32 %v2181, %v2341
  %v2343 = vpop.f32.mrb[0].mxu0
  %2344 = vmatprep.mubr.bf16.mxu0 %v1115
  %2345 = vmatmul.mubr.bf16.gmra.mrb[0].mxu0 %v1114
  %v2346 = vpop.f32.mrb[0].mxu0
  %v2347 = vadd.f32 %v2186, %v2346
  %v2348 = vpop.f32.mrb[0].mxu0
  %v2349 = vpop.f32.mrb[0].mxu0
  %v2350 = vadd.f32 %v2189, %v2349
  %v2351 = vpop.f32.mrb[0].mxu0
  %2352 = vmatprep.mubr.bf16.mxu0 %v1128
  %2353 = vmatmul.mubr.bf16.gmra.mrb[0].mxu0 %v1127
  %v2354 = vpop.f32.mrb[0].mxu0
  %v2355 = vadd.f32 %v2194, %v2354
  %v2356 = vpop.f32.mrb[0].mxu0
  %v2357 = vpop.f32.mrb[0].mxu0
  %v2358 = vadd.f32 %v2197, %v2357
  %v2359 = vpop.f32.mrb[0].mxu0
  %2360 = vmatprep.mubr.bf16.mxu0 %v1141
  %2361 = vmatmul.mubr.bf16.gmra.mrb[0].mxu0 %v1140
  %v2362 = vpop.f32.mrb[0].mxu0
  %v2363 = vadd.f32 %v2202, %v2362
  %v2364 = vpop.f32.mrb[0].mxu0
  %v2365 = vpop.f32.mrb[0].mxu0
  %v2366 = vadd.f32 %v2205, %v2365
  %v2367 = vpop.f32.mrb[0].mxu0
  %2368 = vmatprep.mubr.bf16.mxu0 %v1154
  %2369 = vmatmul.mubr.bf16.gmra.mrb[0].mxu0 %v1153
  %v2370 = vpop.f32.mrb[0].mxu0
  %v2371 = vadd.f32 %v2210, %v2370
  %v2372 = vpop.f32.mrb[0].mxu0
  %v2373 = vpop.f32.mrb[0].mxu0
  %v2374 = vadd.f32 %v2213, %v2373
  %v2375 = vpop.f32.mrb[0].mxu0
  %2376 = vmatprep.mubr.bf16.mxu0 %v1167
  %2377 = vmatmul.mubr.bf16.gmra.mrb[0].mxu0 %v1166
  %v2378 = vpop.f32.mrb[0].mxu0
  %v2379 = vadd.f32 %v2218, %v2378
  %v2380 = vpop.f32.mrb[0].mxu0
  %v2381 = vpop.f32.mrb[0].mxu0
  %v2382 = vadd.f32 %v2221, %v2381
  %v2383 = vpop.f32.mrb[0].mxu0
  %2384 = vmatprep.mubr.bf16.mxu0 %v1180
  %2385 = vmatmul.mubr.bf16.gmra.mrb[0].mxu0 %v1179
  %v2386 = vpop.f32.mrb[0].mxu0
  %v2387 = vadd.f32 %v2226, %v2386
  %v2388 = vpop.f32.mrb[0].mxu0
  %v2389 = vpop.f32.mrb[0].mxu0
  %v2390 = vadd.f32 %v2229, %v2389
  %v2391 = vpop.f32.mrb[0].mxu0
  %2392 = vmatprep.mubr.bf16.mxu0 %v1193
  %2393 = vmatmul.mubr.bf16.gmra.mrb[0].mxu0 %v1192
  %v2394 = vpop.f32.mrb[0].mxu0
  %v2395 = vadd.f32 %v2234, %v2394
  %v2396 = vpop.f32.mrb[0].mxu0
  %v2397 = vpop.f32.mrb[0].mxu0
  %v2398 = vadd.f32 %v2237, %v2397
  %v2399 = vpop.f32.mrb[0].mxu0
  %2400 = vmatprep.mubr.bf16.mxu0 %v1206
  %2401 = vmatmul.mubr.bf16.gmra.mrb[0].mxu0 %v1205
  %v2402 = vpop.f32.mrb[0].mxu0
  %v2403 = vadd.f32 %v2242, %v2402
  %v2404 = vpop.f32.mrb[0].mxu0
  %v2405 = vpop.f32.mrb[0].mxu0
  %v2406 = vadd.f32 %v2245, %v2405
  %v2407 = vpop.f32.mrb[0].mxu0
  %2408 = vmatprep.mubr.bf16.mxu0 %v1219
  %2409 = vmatmul.mubr.bf16.gmra.mrb[0].mxu0 %v1218
  %v2410 = vpop.f32.mrb[0].mxu0
  %v2411 = vadd.f32 %v2250, %v2410
  %v2412 = vpop.f32.mrb[0].mxu0
  %v2413 = vpop.f32.mrb[0].mxu0
  %v2414 = vadd.f32 %v2253, %v2413
  %v2415 = vpop.f32.mrb[0].mxu0
  %2416 = vmatprep.mubr.bf16.mxu0 %v1232
  %2417 = vmatmul.mubr.bf16.gmra.mrb[0].mxu0 %v1231
  %v2418 = vpop.f32.mrb[0].mxu0
  %v2419 = vadd.f32 %v2258, %v2418
  %v2420 = vpop.f32.mrb[0].mxu0
  %v2421 = vpop.f32.mrb[0].mxu0
  %v2422 = vadd.f32 %v2261, %v2421
  %v2423 = vpop.f32.mrb[0].mxu0
  %2424 = vmatprep.mubr.bf16.mxu0 %v1245
  %2425 = vmatmul.mubr.bf16.gmra.mrb[0].mxu0 %v1244
  %v2426 = vpop.f32.mrb[0].mxu0
  %v2427 = vadd.f32 %v2266, %v2426
  %v2428 = vpop.f32.mrb[0].mxu0
  %v2429 = vpop.f32.mrb[0].mxu0
  %v2430 = vadd.f32 %v2269, %v2429
  %v2431 = vpop.f32.mrb[0].mxu0
  %2432 = vmatprep.mubr.bf16.mxu0 %v1258
  %2433 = vmatmul.mubr.bf16.gmra.mrb[0].mxu0 %v1257
  %v2434 = vpop.f32.mrb[0].mxu0
  %v2435 = vadd.f32 %v2274, %v2434
  %v2436 = vpop.f32.mrb[0].mxu0
  %v2437 = vpop.f32.mrb[0].mxu0
  %v2438 = vadd.f32 %v2277, %v2437
  %v2439 = vpop.f32.mrb[0].mxu0
  %2440 = vmatprep.mubr.bf16.mxu0 %v1271
  %2441 = vmatmul.mubr.bf16.gmra.mrb[0].mxu0 %v1270
  %v2442 = vpop.f32.mrb[0].mxu0
  %v2443 = vadd.f32 %v2282, %v2442
  %v2444 = vpop.f32.mrb[0].mxu0
  %v2445 = vpop.f32.mrb[0].mxu0
  %v2446 = vadd.f32 %v2285, %v2445
  %v2447 = vpop.f32.mrb[0].mxu0
  %2448 = vmatprep.mubr.bf16.mxu0 %v1284
  %2449 = vmatmul.mubr.bf16.gmra.mrb[0].mxu0 %v1283
  %v2450 = vpop.f32.mrb[0].mxu0
  %v2451 = vadd.f32 %v2290, %v2450
  %v2452 = vpop.f32.mrb[0].mxu0
  %v2453 = vpop.f32.mrb[0].mxu0
  %v2454 = vadd.f32 %v2293, %v2453
  %v2455 = vpop.f32.mrb[0].mxu0
  %2456 = vdwg.mxu0
  %2457 = vmatprep.subr.bf16.mxu0 0
  %2458 = vmatpush1.bf16.msra.mxu0 %v1918
  %2459 = vmatprep.subr.bf16.mxu0 0
  %2460 = vmatpush1.bf16.msra.mxu0 %v1919
  %2461 = vmatprep.subr.bf16.mxu0 0
  %2462 = vmatpush1.bf16.msra.mxu0 %v1920
  %2463 = vmatprep.subr.bf16.mxu0 0
  %2464 = vmatpush1.bf16.msra.mxu0 %v1921
  %2465 = vmatprep.subr.bf16.mxu0 0
  %2466 = vmatpush1.bf16.msra.mxu0 %v1922
  %2467 = vmatprep.subr.bf16.mxu0 0
  %2468 = vmatpush1.bf16.msra.mxu0 %v1923
  %2469 = vmatprep.subr.bf16.mxu0 0
  %2470 = vmatpush1.bf16.msra.mxu0 %v1924
  %2471 = vmatprep.subr.bf16.mxu0 0
  %2472 = vmatpush1.bf16.msra.mxu0 %v1925
  %2473 = vmatprep.subr.bf16.mxu0 0
  %2474 = vmatpush1.bf16.msra.mxu0 %v1926
  %2475 = vmatprep.subr.bf16.mxu0 0
  %2476 = vmatpush1.bf16.msra.mxu0 %v1927
  %2477 = vmatprep.subr.bf16.mxu0 0
  %2478 = vmatpush1.bf16.msra.mxu0 %v1928
  %2479 = vmatprep.subr.bf16.mxu0 0
  %2480 = vmatpush1.bf16.msra.mxu0 %v1929
  %2481 = vmatprep.subr.bf16.mxu0 0
  %2482 = vmatpush1.bf16.msra.mxu0 %v1930
  %2483 = vmatprep.subr.bf16.mxu0 0
  %2484 = vmatpush1.bf16.msra.mxu0 %v1931
  %2485 = vmatprep.subr.bf16.mxu0 0
  %2486 = vmatpush1.bf16.msra.mxu0 %v1932
  %2487 = vmatprep.subr.bf16.mxu0 0
  %2488 = vmatpush1.bf16.msra.mxu0 %v1933
  %2489 = vmatprep.mubr.bf16.mxu0 %v1091
  %2490 = vmatmul.mubr.bf16.gmra.mrb[0].mxu0 %v1090
  %v2491 = vpop.f32.mrb[0].mxu0
  %v2492 = vadd.f32 %v2331, %v2491
  %v2493 = vpop.f32.mrb[0].mxu0
  %v2494 = vpop.f32.mrb[0].mxu0
  %v2495 = vadd.f32 %v2334, %v2494
  %v2496 = vpop.f32.mrb[0].mxu0
  %2497 = vmatprep.mubr.bf16.mxu0 %v1104
  %2498 = vmatmul.mubr.bf16.gmra.mrb[0].mxu0 %v1103
  %v2499 = vpop.f32.mrb[0].mxu0
  %v2500 = vadd.f32 %v2339, %v2499
  %v2501 = vpop.f32.mrb[0].mxu0
  %v2502 = vpop.f32.mrb[0].mxu0
  %v2503 = vadd.f32 %v2342, %v2502
  %v2504 = vpop.f32.mrb[0].mxu0
  %2505 = vmatprep.mubr.bf16.mxu0 %v1117
  %2506 = vmatmul.mubr.bf16.gmra.mrb[0].mxu0 %v1116
  %v2507 = vpop.f32.mrb[0].mxu0
  %v2508 = vadd.f32 %v2347, %v2507
  %v2509 = vpop.f32.mrb[0].mxu0
  %v2510 = vpop.f32.mrb[0].mxu0
  %v2511 = vadd.f32 %v2350, %v2510
  %v2512 = vpop.f32.mrb[0].mxu0
  %2513 = vmatprep.mubr.bf16.mxu0 %v1130
  %2514 = vmatmul.mubr.bf16.gmra.mrb[0].mxu0 %v1129
  %v2515 = vpop.f32.mrb[0].mxu0
  %v2516 = vadd.f32 %v2355, %v2515
  %v2517 = vpop.f32.mrb[0].mxu0
  %v2518 = vpop.f32.mrb[0].mxu0
  %v2519 = vadd.f32 %v2358, %v2518
  %v2520 = vpop.f32.mrb[0].mxu0
  %2521 = vmatprep.mubr.bf16.mxu0 %v1143
  %2522 = vmatmul.mubr.bf16.gmra.mrb[0].mxu0 %v1142
  %v2523 = vpop.f32.mrb[0].mxu0
  %v2524 = vadd.f32 %v2363, %v2523
  %v2525 = vpop.f32.mrb[0].mxu0
  %v2526 = vpop.f32.mrb[0].mxu0
  %v2527 = vadd.f32 %v2366, %v2526
  %v2528 = vpop.f32.mrb[0].mxu0
  %2529 = vmatprep.mubr.bf16.mxu0 %v1156
  %2530 = vmatmul.mubr.bf16.gmra.mrb[0].mxu0 %v1155
  %v2531 = vpop.f32.mrb[0].mxu0
  %v2532 = vadd.f32 %v2371, %v2531
  %v2533 = vpop.f32.mrb[0].mxu0
  %v2534 = vpop.f32.mrb[0].mxu0
  %v2535 = vadd.f32 %v2374, %v2534
  %v2536 = vpop.f32.mrb[0].mxu0
  %2537 = vmatprep.mubr.bf16.mxu0 %v1169
  %2538 = vmatmul.mubr.bf16.gmra.mrb[0].mxu0 %v1168
  %v2539 = vpop.f32.mrb[0].mxu0
  %v2540 = vadd.f32 %v2379, %v2539
  %v2541 = vpop.f32.mrb[0].mxu0
  %v2542 = vpop.f32.mrb[0].mxu0
  %v2543 = vadd.f32 %v2382, %v2542
  %v2544 = vpop.f32.mrb[0].mxu0
  %2545 = vmatprep.mubr.bf16.mxu0 %v1182
  %2546 = vmatmul.mubr.bf16.gmra.mrb[0].mxu0 %v1181
  %v2547 = vpop.f32.mrb[0].mxu0
  %v2548 = vadd.f32 %v2387, %v2547
  %v2549 = vpop.f32.mrb[0].mxu0
  %v2550 = vpop.f32.mrb[0].mxu0
  %v2551 = vadd.f32 %v2390, %v2550
  %v2552 = vpop.f32.mrb[0].mxu0
  %2553 = vmatprep.mubr.bf16.mxu0 %v1195
  %2554 = vmatmul.mubr.bf16.gmra.mrb[0].mxu0 %v1194
  %v2555 = vpop.f32.mrb[0].mxu0
  %v2556 = vadd.f32 %v2395, %v2555
  %v2557 = vpop.f32.mrb[0].mxu0
  %v2558 = vpop.f32.mrb[0].mxu0
  %v2559 = vadd.f32 %v2398, %v2558
  %v2560 = vpop.f32.mrb[0].mxu0
  %2561 = vmatprep.mubr.bf16.mxu0 %v1208
  %2562 = vmatmul.mubr.bf16.gmra.mrb[0].mxu0 %v1207
  %v2563 = vpop.f32.mrb[0].mxu0
  %v2564 = vadd.f32 %v2403, %v2563
  %v2565 = vpop.f32.mrb[0].mxu0
  %v2566 = vpop.f32.mrb[0].mxu0
  %v2567 = vadd.f32 %v2406, %v2566
  %v2568 = vpop.f32.mrb[0].mxu0
  %2569 = vmatprep.mubr.bf16.mxu0 %v1221
  %2570 = vmatmul.mubr.bf16.gmra.mrb[0].mxu0 %v1220
  %v2571 = vpop.f32.mrb[0].mxu0
  %v2572 = vadd.f32 %v2411, %v2571
  %v2573 = vpop.f32.mrb[0].mxu0
  %v2574 = vpop.f32.mrb[0].mxu0
  %v2575 = vadd.f32 %v2414, %v2574
  %v2576 = vpop.f32.mrb[0].mxu0
  %2577 = vmatprep.mubr.bf16.mxu0 %v1234
  %2578 = vmatmul.mubr.bf16.gmra.mrb[0].mxu0 %v1233
  %v2579 = vpop.f32.mrb[0].mxu0
  %v2580 = vadd.f32 %v2419, %v2579
  %v2581 = vpop.f32.mrb[0].mxu0
  %v2582 = vpop.f32.mrb[0].mxu0
  %v2583 = vadd.f32 %v2422, %v2582
  %v2584 = vpop.f32.mrb[0].mxu0
  %2585 = vmatprep.mubr.bf16.mxu0 %v1247
  %2586 = vmatmul.mubr.bf16.gmra.mrb[0].mxu0 %v1246
  %v2587 = vpop.f32.mrb[0].mxu0
  %v2588 = vadd.f32 %v2427, %v2587
  %v2589 = vpop.f32.mrb[0].mxu0
  %v2590 = vpop.f32.mrb[0].mxu0
  %v2591 = vadd.f32 %v2430, %v2590
  %v2592 = vpop.f32.mrb[0].mxu0
  %2593 = vmatprep.mubr.bf16.mxu0 %v1260
  %2594 = vmatmul.mubr.bf16.gmra.mrb[0].mxu0 %v1259
  %v2595 = vpop.f32.mrb[0].mxu0
  %v2596 = vadd.f32 %v2435, %v2595
  %v2597 = vpop.f32.mrb[0].mxu0
  %v2598 = vpop.f32.mrb[0].mxu0
  %v2599 = vadd.f32 %v2438, %v2598
  %v2600 = vpop.f32.mrb[0].mxu0
  %2601 = vmatprep.mubr.bf16.mxu0 %v1273
  %2602 = vmatmul.mubr.bf16.gmra.mrb[0].mxu0 %v1272
  %v2603 = vpop.f32.mrb[0].mxu0
  %v2604 = vadd.f32 %v2443, %v2603
  %v2605 = vpop.f32.mrb[0].mxu0
  %v2606 = vpop.f32.mrb[0].mxu0
  %v2607 = vadd.f32 %v2446, %v2606
  %v2608 = vpop.f32.mrb[0].mxu0
  %2609 = vmatprep.mubr.bf16.mxu0 %v1286
  %2610 = vmatmul.mubr.bf16.gmra.mrb[0].mxu0 %v1285
  %v2611 = vpop.f32.mrb[0].mxu0
  %v2612 = vadd.f32 %v2451, %v2611
  %v2613 = vpop.f32.mrb[0].mxu0
  %v2614 = vpop.f32.mrb[0].mxu0
  %v2615 = vadd.f32 %v2454, %v2614
  %v2616 = vpop.f32.mrb[0].mxu0
  %2617 = vdwg.mxu0
  %2618 = vmatprep.subr.bf16.mxu0 0
  %2619 = vmatpush1.bf16.msra.mxu0 %v1934
  %2620 = vmatprep.subr.bf16.mxu0 0
  %2621 = vmatpush1.bf16.msra.mxu0 %v1935
  %2622 = vmatprep.subr.bf16.mxu0 0
  %2623 = vmatpush1.bf16.msra.mxu0 %v1936
  %2624 = vmatprep.subr.bf16.mxu0 0
  %2625 = vmatpush1.bf16.msra.mxu0 %v1937
  %2626 = vmatprep.subr.bf16.mxu0 0
  %2627 = vmatpush1.bf16.msra.mxu0 %v1938
  %2628 = vmatprep.subr.bf16.mxu0 0
  %2629 = vmatpush1.bf16.msra.mxu0 %v1939
  %2630 = vmatprep.subr.bf16.mxu0 0
  %2631 = vmatpush1.bf16.msra.mxu0 %v1940
  %2632 = vmatprep.subr.bf16.mxu0 0
  %2633 = vmatpush1.bf16.msra.mxu0 %v1941
  %2634 = vmatprep.subr.bf16.mxu0 0
  %2635 = vmatpush1.bf16.msra.mxu0 %v1942
  %2636 = vmatprep.subr.bf16.mxu0 0
  %2637 = vmatpush1.bf16.msra.mxu0 %v1943
  %2638 = vmatprep.subr.bf16.mxu0 0
  %2639 = vmatpush1.bf16.msra.mxu0 %v1944
  %2640 = vmatprep.subr.bf16.mxu0 0
  %2641 = vmatpush1.bf16.msra.mxu0 %v1945
  %2642 = vmatprep.subr.bf16.mxu0 0
  %2643 = vmatpush1.bf16.msra.mxu0 %v1946
  %2644 = vmatprep.subr.bf16.mxu0 0
  %2645 = vmatpush1.bf16.msra.mxu0 %v1947
  %2646 = vmatprep.subr.bf16.mxu0 0
  %2647 = vmatpush1.bf16.msra.mxu0 %v1948
  %2648 = vmatprep.subr.bf16.mxu0 0
  %2649 = vmatpush1.bf16.msra.mxu0 %v1949
  %2650 = vmatprep.mubr.bf16.mxu0 %v1093
  %2651 = vmatmul.mubr.bf16.gmra.mrb[0].mxu0 %v1092
  %v2652 = vpop.f32.mrb[0].mxu0
  %v2653 = vadd.f32 %v2492, %v2652
  %v2654 = vpop.f32.mrb[0].mxu0
  %v2655 = vpop.f32.mrb[0].mxu0
  %v2656 = vadd.f32 %v2495, %v2655
  %v2657 = vpop.f32.mrb[0].mxu0
  %2658 = vmatprep.mubr.bf16.mxu0 %v1106
  %2659 = vmatmul.mubr.bf16.gmra.mrb[0].mxu0 %v1105
  %v2660 = vpop.f32.mrb[0].mxu0
  %v2661 = vadd.f32 %v2500, %v2660
  %v2662 = vpop.f32.mrb[0].mxu0
  %v2663 = vpop.f32.mrb[0].mxu0
  %v2664 = vadd.f32 %v2503, %v2663
  %v2665 = vpop.f32.mrb[0].mxu0
  %2666 = vmatprep.mubr.bf16.mxu0 %v1119
  %2667 = vmatmul.mubr.bf16.gmra.mrb[0].mxu0 %v1118
  %v2668 = vpop.f32.mrb[0].mxu0
  %v2669 = vadd.f32 %v2508, %v2668
  %v2670 = vpop.f32.mrb[0].mxu0
  %v2671 = vpop.f32.mrb[0].mxu0
  %v2672 = vadd.f32 %v2511, %v2671
  %v2673 = vpop.f32.mrb[0].mxu0
  %2674 = vmatprep.mubr.bf16.mxu0 %v1132
  %2675 = vmatmul.mubr.bf16.gmra.mrb[0].mxu0 %v1131
  %v2676 = vpop.f32.mrb[0].mxu0
  %v2677 = vadd.f32 %v2516, %v2676
  %v2678 = vpop.f32.mrb[0].mxu0
  %v2679 = vpop.f32.mrb[0].mxu0
  %v2680 = vadd.f32 %v2519, %v2679
  %v2681 = vpop.f32.mrb[0].mxu0
  %2682 = vmatprep.mubr.bf16.mxu0 %v1145
  %2683 = vmatmul.mubr.bf16.gmra.mrb[0].mxu0 %v1144
  %v2684 = vpop.f32.mrb[0].mxu0
  %v2685 = vadd.f32 %v2524, %v2684
  %v2686 = vpop.f32.mrb[0].mxu0
  %v2687 = vpop.f32.mrb[0].mxu0
  %v2688 = vadd.f32 %v2527, %v2687
  %v2689 = vpop.f32.mrb[0].mxu0
  %2690 = vmatprep.mubr.bf16.mxu0 %v1158
  %2691 = vmatmul.mubr.bf16.gmra.mrb[0].mxu0 %v1157
  %v2692 = vpop.f32.mrb[0].mxu0
  %v2693 = vadd.f32 %v2532, %v2692
  %v2694 = vpop.f32.mrb[0].mxu0
  %v2695 = vpop.f32.mrb[0].mxu0
  %v2696 = vadd.f32 %v2535, %v2695
  %v2697 = vpop.f32.mrb[0].mxu0
  %2698 = vmatprep.mubr.bf16.mxu0 %v1171
  %2699 = vmatmul.mubr.bf16.gmra.mrb[0].mxu0 %v1170
  %v2700 = vpop.f32.mrb[0].mxu0
  %v2701 = vadd.f32 %v2540, %v2700
  %v2702 = vpop.f32.mrb[0].mxu0
  %v2703 = vpop.f32.mrb[0].mxu0
  %v2704 = vadd.f32 %v2543, %v2703
  %v2705 = vpop.f32.mrb[0].mxu0
  %2706 = vmatprep.mubr.bf16.mxu0 %v1184
  %2707 = vmatmul.mubr.bf16.gmra.mrb[0].mxu0 %v1183
  %v2708 = vpop.f32.mrb[0].mxu0
  %v2709 = vadd.f32 %v2548, %v2708
  %v2710 = vpop.f32.mrb[0].mxu0
  %v2711 = vpop.f32.mrb[0].mxu0
  %v2712 = vadd.f32 %v2551, %v2711
  %v2713 = vpop.f32.mrb[0].mxu0
  %2714 = vmatprep.mubr.bf16.mxu0 %v1197
  %2715 = vmatmul.mubr.bf16.gmra.mrb[0].mxu0 %v1196
  %v2716 = vpop.f32.mrb[0].mxu0
  %v2717 = vadd.f32 %v2556, %v2716
  %v2718 = vpop.f32.mrb[0].mxu0
  %v2719 = vpop.f32.mrb[0].mxu0
  %v2720 = vadd.f32 %v2559, %v2719
  %v2721 = vpop.f32.mrb[0].mxu0
  %2722 = vmatprep.mubr.bf16.mxu0 %v1210
  %2723 = vmatmul.mubr.bf16.gmra.mrb[0].mxu0 %v1209
  %v2724 = vpop.f32.mrb[0].mxu0
  %v2725 = vadd.f32 %v2564, %v2724
  %v2726 = vpop.f32.mrb[0].mxu0
  %v2727 = vpop.f32.mrb[0].mxu0
  %v2728 = vadd.f32 %v2567, %v2727
  %v2729 = vpop.f32.mrb[0].mxu0
  %2730 = vmatprep.mubr.bf16.mxu0 %v1223
  %2731 = vmatmul.mubr.bf16.gmra.mrb[0].mxu0 %v1222
  %v2732 = vpop.f32.mrb[0].mxu0
  %v2733 = vadd.f32 %v2572, %v2732
  %v2734 = vpop.f32.mrb[0].mxu0
  %v2735 = vpop.f32.mrb[0].mxu0
  %v2736 = vadd.f32 %v2575, %v2735
  %v2737 = vpop.f32.mrb[0].mxu0
  %2738 = vmatprep.mubr.bf16.mxu0 %v1236
  %2739 = vmatmul.mubr.bf16.gmra.mrb[0].mxu0 %v1235
  %v2740 = vpop.f32.mrb[0].mxu0
  %v2741 = vadd.f32 %v2580, %v2740
  %v2742 = vpop.f32.mrb[0].mxu0
  %v2743 = vpop.f32.mrb[0].mxu0
  %v2744 = vadd.f32 %v2583, %v2743
  %v2745 = vpop.f32.mrb[0].mxu0
  %2746 = vmatprep.mubr.bf16.mxu0 %v1249
  %2747 = vmatmul.mubr.bf16.gmra.mrb[0].mxu0 %v1248
  %v2748 = vpop.f32.mrb[0].mxu0
  %v2749 = vadd.f32 %v2588, %v2748
  %v2750 = vpop.f32.mrb[0].mxu0
  %v2751 = vpop.f32.mrb[0].mxu0
  %v2752 = vadd.f32 %v2591, %v2751
  %v2753 = vpop.f32.mrb[0].mxu0
  %2754 = vmatprep.mubr.bf16.mxu0 %v1262
  %2755 = vmatmul.mubr.bf16.gmra.mrb[0].mxu0 %v1261
  %v2756 = vpop.f32.mrb[0].mxu0
  %v2757 = vadd.f32 %v2596, %v2756
  %v2758 = vpop.f32.mrb[0].mxu0
  %v2759 = vpop.f32.mrb[0].mxu0
  %v2760 = vadd.f32 %v2599, %v2759
  %v2761 = vpop.f32.mrb[0].mxu0
  %2762 = vmatprep.mubr.bf16.mxu0 %v1275
  %2763 = vmatmul.mubr.bf16.gmra.mrb[0].mxu0 %v1274
  %v2764 = vpop.f32.mrb[0].mxu0
  %v2765 = vadd.f32 %v2604, %v2764
  %v2766 = vpop.f32.mrb[0].mxu0
  %v2767 = vpop.f32.mrb[0].mxu0
  %v2768 = vadd.f32 %v2607, %v2767
  %v2769 = vpop.f32.mrb[0].mxu0
  %2770 = vmatprep.mubr.bf16.mxu0 %v1288
  %2771 = vmatmul.mubr.bf16.gmra.mrb[0].mxu0 %v1287
  %v2772 = vpop.f32.mrb[0].mxu0
  %v2773 = vadd.f32 %v2612, %v2772
  %v2774 = vpop.f32.mrb[0].mxu0
  %v2775 = vpop.f32.mrb[0].mxu0
  %v2776 = vadd.f32 %v2615, %v2775
  %v2777 = vpop.f32.mrb[0].mxu0
  %2778 = vdwg.mxu0
  %2779 = vmatprep.subr.bf16.mxu0 0
  %2780 = vmatpush1.bf16.msra.mxu0 %v1950
  %2781 = vmatprep.subr.bf16.mxu0 0
  %2782 = vmatpush1.bf16.msra.mxu0 %v1951
  %2783 = vmatprep.subr.bf16.mxu0 0
  %2784 = vmatpush1.bf16.msra.mxu0 %v1952
  %2785 = vmatprep.subr.bf16.mxu0 0
  %2786 = vmatpush1.bf16.msra.mxu0 %v1953
  %2787 = vmatprep.subr.bf16.mxu0 0
  %2788 = vmatpush1.bf16.msra.mxu0 %v1954
  %2789 = vmatprep.subr.bf16.mxu0 0
  %2790 = vmatpush1.bf16.msra.mxu0 %v1955
  %2791 = vmatprep.subr.bf16.mxu0 0
  %2792 = vmatpush1.bf16.msra.mxu0 %v1956
  %2793 = vmatprep.subr.bf16.mxu0 0
  %2794 = vmatpush1.bf16.msra.mxu0 %v1957
  %2795 = vmatprep.subr.bf16.mxu0 0
  %2796 = vmatpush1.bf16.msra.mxu0 %v1958
  %2797 = vmatprep.subr.bf16.mxu0 0
  %2798 = vmatpush1.bf16.msra.mxu0 %v1959
  %2799 = vmatprep.subr.bf16.mxu0 0
  %2800 = vmatpush1.bf16.msra.mxu0 %v1960
  %2801 = vmatprep.subr.bf16.mxu0 0
  %2802 = vmatpush1.bf16.msra.mxu0 %v1961
  %2803 = vmatprep.subr.bf16.mxu0 0
  %2804 = vmatpush1.bf16.msra.mxu0 %v1962
  %2805 = vmatprep.subr.bf16.mxu0 0
  %2806 = vmatpush1.bf16.msra.mxu0 %v1963
  %2807 = vmatprep.subr.bf16.mxu0 0
  %2808 = vmatpush1.bf16.msra.mxu0 %v1964
  %2809 = vmatprep.subr.bf16.mxu0 0
  %2810 = vmatpush1.bf16.msra.mxu0 %v1965
  %2811 = vmatprep.mubr.bf16.mxu0 %v1095
  %2812 = vmatmul.mubr.bf16.gmra.mrb[0].mxu0 %v1094
  %v2813 = vpop.f32.mrb[0].mxu0
  %v2814 = vadd.f32 %v2653, %v2813
  %v2815 = vpop.f32.mrb[0].mxu0
  %v2816 = vpop.f32.mrb[0].mxu0
  %v2817 = vadd.f32 %v2656, %v2816
  %v2818 = vpop.f32.mrb[0].mxu0
  %2819 = vmatprep.mubr.bf16.mxu0 %v1108
  %2820 = vmatmul.mubr.bf16.gmra.mrb[0].mxu0 %v1107
  %v2821 = vpop.f32.mrb[0].mxu0
  %v2822 = vadd.f32 %v2661, %v2821
  %v2823 = vpop.f32.mrb[0].mxu0
  %v2824 = vpop.f32.mrb[0].mxu0
  %v2825 = vadd.f32 %v2664, %v2824
  %v2826 = vpop.f32.mrb[0].mxu0
  %2827 = vmatprep.mubr.bf16.mxu0 %v1121
  %2828 = vmatmul.mubr.bf16.gmra.mrb[0].mxu0 %v1120
  %v2829 = vpop.f32.mrb[0].mxu0
  %v2830 = vadd.f32 %v2669, %v2829
  %v2831 = vpop.f32.mrb[0].mxu0
  %v2832 = vpop.f32.mrb[0].mxu0
  %v2833 = vadd.f32 %v2672, %v2832
  %v2834 = vpop.f32.mrb[0].mxu0
  %2835 = vmatprep.mubr.bf16.mxu0 %v1134
  %2836 = vmatmul.mubr.bf16.gmra.mrb[0].mxu0 %v1133
  %v2837 = vpop.f32.mrb[0].mxu0
  %v2838 = vadd.f32 %v2677, %v2837
  %v2839 = vpop.f32.mrb[0].mxu0
  %v2840 = vpop.f32.mrb[0].mxu0
  %v2841 = vadd.f32 %v2680, %v2840
  %v2842 = vpop.f32.mrb[0].mxu0
  %2843 = vmatprep.mubr.bf16.mxu0 %v1147
  %2844 = vmatmul.mubr.bf16.gmra.mrb[0].mxu0 %v1146
  %v2845 = vpop.f32.mrb[0].mxu0
  %v2846 = vadd.f32 %v2685, %v2845
  %v2847 = vpop.f32.mrb[0].mxu0
  %v2848 = vpop.f32.mrb[0].mxu0
  %v2849 = vadd.f32 %v2688, %v2848
  %v2850 = vpop.f32.mrb[0].mxu0
  %2851 = vmatprep.mubr.bf16.mxu0 %v1160
  %2852 = vmatmul.mubr.bf16.gmra.mrb[0].mxu0 %v1159
  %v2853 = vpop.f32.mrb[0].mxu0
  %v2854 = vadd.f32 %v2693, %v2853
  %v2855 = vpop.f32.mrb[0].mxu0
  %v2856 = vpop.f32.mrb[0].mxu0
  %v2857 = vadd.f32 %v2696, %v2856
  %v2858 = vpop.f32.mrb[0].mxu0
  %2859 = vmatprep.mubr.bf16.mxu0 %v1173
  %2860 = vmatmul.mubr.bf16.gmra.mrb[0].mxu0 %v1172
  %v2861 = vpop.f32.mrb[0].mxu0
  %v2862 = vadd.f32 %v2701, %v2861
  %v2863 = vpop.f32.mrb[0].mxu0
  %v2864 = vpop.f32.mrb[0].mxu0
  %v2865 = vadd.f32 %v2704, %v2864
  %v2866 = vpop.f32.mrb[0].mxu0
  %2867 = vmatprep.mubr.bf16.mxu0 %v1186
  %2868 = vmatmul.mubr.bf16.gmra.mrb[0].mxu0 %v1185
  %v2869 = vpop.f32.mrb[0].mxu0
  %v2870 = vadd.f32 %v2709, %v2869
  %v2871 = vpop.f32.mrb[0].mxu0
  %v2872 = vpop.f32.mrb[0].mxu0
  %v2873 = vadd.f32 %v2712, %v2872
  %v2874 = vpop.f32.mrb[0].mxu0
  %2875 = vmatprep.mubr.bf16.mxu0 %v1199
  %2876 = vmatmul.mubr.bf16.gmra.mrb[0].mxu0 %v1198
  %v2877 = vpop.f32.mrb[0].mxu0
  %v2878 = vadd.f32 %v2717, %v2877
  %v2879 = vpop.f32.mrb[0].mxu0
  %v2880 = vpop.f32.mrb[0].mxu0
  %v2881 = vadd.f32 %v2720, %v2880
  %v2882 = vpop.f32.mrb[0].mxu0
  %2883 = vmatprep.mubr.bf16.mxu0 %v1212
  %2884 = vmatmul.mubr.bf16.gmra.mrb[0].mxu0 %v1211
  %v2885 = vpop.f32.mrb[0].mxu0
  %v2886 = vadd.f32 %v2725, %v2885
  %v2887 = vpop.f32.mrb[0].mxu0
  %v2888 = vpop.f32.mrb[0].mxu0
  %v2889 = vadd.f32 %v2728, %v2888
  %v2890 = vpop.f32.mrb[0].mxu0
  %2891 = vmatprep.mubr.bf16.mxu0 %v1225
  %2892 = vmatmul.mubr.bf16.gmra.mrb[0].mxu0 %v1224
  %v2893 = vpop.f32.mrb[0].mxu0
  %v2894 = vadd.f32 %v2733, %v2893
  %v2895 = vpop.f32.mrb[0].mxu0
  %v2896 = vpop.f32.mrb[0].mxu0
  %v2897 = vadd.f32 %v2736, %v2896
  %v2898 = vpop.f32.mrb[0].mxu0
  %2899 = vmatprep.mubr.bf16.mxu0 %v1238
  %2900 = vmatmul.mubr.bf16.gmra.mrb[0].mxu0 %v1237
  %v2901 = vpop.f32.mrb[0].mxu0
  %v2902 = vadd.f32 %v2741, %v2901
  %v2903 = vpop.f32.mrb[0].mxu0
  %v2904 = vpop.f32.mrb[0].mxu0
  %v2905 = vadd.f32 %v2744, %v2904
  %v2906 = vpop.f32.mrb[0].mxu0
  %2907 = vmatprep.mubr.bf16.mxu0 %v1251
  %2908 = vmatmul.mubr.bf16.gmra.mrb[0].mxu0 %v1250
  %v2909 = vpop.f32.mrb[0].mxu0
  %v2910 = vadd.f32 %v2749, %v2909
  %v2911 = vpop.f32.mrb[0].mxu0
  %v2912 = vpop.f32.mrb[0].mxu0
  %v2913 = vadd.f32 %v2752, %v2912
  %v2914 = vpop.f32.mrb[0].mxu0
  %2915 = vmatprep.mubr.bf16.mxu0 %v1264
  %2916 = vmatmul.mubr.bf16.gmra.mrb[0].mxu0 %v1263
  %v2917 = vpop.f32.mrb[0].mxu0
  %v2918 = vadd.f32 %v2757, %v2917
  %v2919 = vpop.f32.mrb[0].mxu0
  %v2920 = vpop.f32.mrb[0].mxu0
  %v2921 = vadd.f32 %v2760, %v2920
  %v2922 = vpop.f32.mrb[0].mxu0
  %2923 = vmatprep.mubr.bf16.mxu0 %v1277
  %2924 = vmatmul.mubr.bf16.gmra.mrb[0].mxu0 %v1276
  %v2925 = vpop.f32.mrb[0].mxu0
  %v2926 = vadd.f32 %v2765, %v2925
  %v2927 = vpop.f32.mrb[0].mxu0
  %v2928 = vpop.f32.mrb[0].mxu0
  %v2929 = vadd.f32 %v2768, %v2928
  %v2930 = vpop.f32.mrb[0].mxu0
  %2931 = vmatprep.mubr.bf16.mxu0 %v1290
  %2932 = vmatmul.mubr.bf16.gmra.mrb[0].mxu0 %v1289
  %v2933 = vpop.f32.mrb[0].mxu0
  %v2934 = vadd.f32 %v2773, %v2933
  %v2935 = vpop.f32.mrb[0].mxu0
  %v2936 = vpop.f32.mrb[0].mxu0
  %v2937 = vadd.f32 %v2776, %v2936
  %v2938 = vpop.f32.mrb[0].mxu0
  %2939 = vdwg.mxu0
  %2940 = vmatprep.subr.bf16.mxu0 0
  %2941 = vmatpush1.bf16.msra.mxu0 %v1966
  %2942 = vmatprep.subr.bf16.mxu0 0
  %2943 = vmatpush1.bf16.msra.mxu0 %v1967
  %2944 = vmatprep.subr.bf16.mxu0 0
  %2945 = vmatpush1.bf16.msra.mxu0 %v1968
  %2946 = vmatprep.subr.bf16.mxu0 0
  %2947 = vmatpush1.bf16.msra.mxu0 %v1969
  %2948 = vmatprep.subr.bf16.mxu0 0
  %2949 = vmatpush1.bf16.msra.mxu0 %v1970
  %2950 = vmatprep.subr.bf16.mxu0 0
  %2951 = vmatpush1.bf16.msra.mxu0 %v1971
  %2952 = vmatprep.subr.bf16.mxu0 0
  %2953 = vmatpush1.bf16.msra.mxu0 %v1972
  %2954 = vmatprep.subr.bf16.mxu0 0
  %2955 = vmatpush1.bf16.msra.mxu0 %v1973
  %2956 = vmatprep.subr.bf16.mxu0 0
  %2957 = vmatpush1.bf16.msra.mxu0 %v1974
  %2958 = vmatprep.subr.bf16.mxu0 0
  %2959 = vmatpush1.bf16.msra.mxu0 %v1975
  %2960 = vmatprep.subr.bf16.mxu0 0
  %2961 = vmatpush1.bf16.msra.mxu0 %v1976
  %2962 = vmatprep.subr.bf16.mxu0 0
  %2963 = vmatpush1.bf16.msra.mxu0 %v1977
  %2964 = vmatprep.subr.bf16.mxu0 0
  %2965 = vmatpush1.bf16.msra.mxu0 %v1978
  %2966 = vmatprep.subr.bf16.mxu0 0
  %2967 = vmatpush1.bf16.msra.mxu0 %v1979
  %2968 = vmatprep.subr.bf16.mxu0 0
  %2969 = vmatpush1.bf16.msra.mxu0 %v1980
  %2970 = vmatprep.subr.bf16.mxu0 0
  %2971 = vmatpush1.bf16.msra.mxu0 %v1981
  %2972 = vmatprep.mubr.bf16.mxu0 %v1097
  %2973 = vmatmul.mubr.bf16.gmra.mrb[0].mxu0 %v1096
  %v2974 = vpop.f32.mrb[0].mxu0
  %v2975 = vadd.f32 %v2814, %v2974
  %v2976 = vpop.f32.mrb[0].mxu0
  %v2977 = vpop.f32.mrb[0].mxu0
  %v2978 = vadd.f32 %v2817, %v2977
  %v2979 = vpop.f32.mrb[0].mxu0
  %2980 = vmatprep.mubr.bf16.mxu0 %v1110
  %2981 = vmatmul.mubr.bf16.gmra.mrb[0].mxu0 %v1109
  %v2982 = vpop.f32.mrb[0].mxu0
  %v2983 = vadd.f32 %v2822, %v2982
  %v2984 = vpop.f32.mrb[0].mxu0
  %v2985 = vpop.f32.mrb[0].mxu0
  %v2986 = vadd.f32 %v2825, %v2985
  %v2987 = vpop.f32.mrb[0].mxu0
  %2988 = vmatprep.mubr.bf16.mxu0 %v1123
  %2989 = vmatmul.mubr.bf16.gmra.mrb[0].mxu0 %v1122
  %v2990 = vpop.f32.mrb[0].mxu0
  %v2991 = vadd.f32 %v2830, %v2990
  %v2992 = vpop.f32.mrb[0].mxu0
  %v2993 = vpop.f32.mrb[0].mxu0
  %v2994 = vadd.f32 %v2833, %v2993
  %v2995 = vpop.f32.mrb[0].mxu0
  %2996 = vmatprep.mubr.bf16.mxu0 %v1136
  %2997 = vmatmul.mubr.bf16.gmra.mrb[0].mxu0 %v1135
  %v2998 = vpop.f32.mrb[0].mxu0
  %v2999 = vadd.f32 %v2838, %v2998
  %v3000 = vpop.f32.mrb[0].mxu0
  %v3001 = vpop.f32.mrb[0].mxu0
  %v3002 = vadd.f32 %v2841, %v3001
  %v3003 = vpop.f32.mrb[0].mxu0
  %3004 = vmatprep.mubr.bf16.mxu0 %v1149
  %3005 = vmatmul.mubr.bf16.gmra.mrb[0].mxu0 %v1148
  %v3006 = vpop.f32.mrb[0].mxu0
  %v3007 = vadd.f32 %v2846, %v3006
  %v3008 = vpop.f32.mrb[0].mxu0
  %v3009 = vpop.f32.mrb[0].mxu0
  %v3010 = vadd.f32 %v2849, %v3009
  %v3011 = vpop.f32.mrb[0].mxu0
  %3012 = vmatprep.mubr.bf16.mxu0 %v1162
  %3013 = vmatmul.mubr.bf16.gmra.mrb[0].mxu0 %v1161
  %v3014 = vpop.f32.mrb[0].mxu0
  %v3015 = vadd.f32 %v2854, %v3014
  %v3016 = vpop.f32.mrb[0].mxu0
  %v3017 = vpop.f32.mrb[0].mxu0
  %v3018 = vadd.f32 %v2857, %v3017
  %v3019 = vpop.f32.mrb[0].mxu0
  %3020 = vmatprep.mubr.bf16.mxu0 %v1175
  %3021 = vmatmul.mubr.bf16.gmra.mrb[0].mxu0 %v1174
  %v3022 = vpop.f32.mrb[0].mxu0
  %v3023 = vadd.f32 %v2862, %v3022
  %v3024 = vpop.f32.mrb[0].mxu0
  %v3025 = vpop.f32.mrb[0].mxu0
  %v3026 = vadd.f32 %v2865, %v3025
  %v3027 = vpop.f32.mrb[0].mxu0
  %3028 = vmatprep.mubr.bf16.mxu0 %v1188
  %3029 = vmatmul.mubr.bf16.gmra.mrb[0].mxu0 %v1187
  %v3030 = vpop.f32.mrb[0].mxu0
  %v3031 = vadd.f32 %v2870, %v3030
  %v3032 = vpop.f32.mrb[0].mxu0
  %v3033 = vpop.f32.mrb[0].mxu0
  %v3034 = vadd.f32 %v2873, %v3033
  %v3035 = vpop.f32.mrb[0].mxu0
  %3036 = vmatprep.mubr.bf16.mxu0 %v1201
  %3037 = vmatmul.mubr.bf16.gmra.mrb[0].mxu0 %v1200
  %v3038 = vpop.f32.mrb[0].mxu0
  %v3039 = vadd.f32 %v2878, %v3038
  %v3040 = vpop.f32.mrb[0].mxu0
  %v3041 = vpop.f32.mrb[0].mxu0
  %v3042 = vadd.f32 %v2881, %v3041
  %v3043 = vpop.f32.mrb[0].mxu0
  %3044 = vmatprep.mubr.bf16.mxu0 %v1214
  %3045 = vmatmul.mubr.bf16.gmra.mrb[0].mxu0 %v1213
  %v3046 = vpop.f32.mrb[0].mxu0
  %v3047 = vadd.f32 %v2886, %v3046
  %v3048 = vpop.f32.mrb[0].mxu0
  %v3049 = vpop.f32.mrb[0].mxu0
  %v3050 = vadd.f32 %v2889, %v3049
  %v3051 = vpop.f32.mrb[0].mxu0
  %3052 = vmatprep.mubr.bf16.mxu0 %v1227
  %3053 = vmatmul.mubr.bf16.gmra.mrb[0].mxu0 %v1226
  %v3054 = vpop.f32.mrb[0].mxu0
  %v3055 = vadd.f32 %v2894, %v3054
  %v3056 = vpop.f32.mrb[0].mxu0
  %v3057 = vpop.f32.mrb[0].mxu0
  %v3058 = vadd.f32 %v2897, %v3057
  %v3059 = vpop.f32.mrb[0].mxu0
  %3060 = vmatprep.mubr.bf16.mxu0 %v1240
  %3061 = vmatmul.mubr.bf16.gmra.mrb[0].mxu0 %v1239
  %v3062 = vpop.f32.mrb[0].mxu0
  %v3063 = vadd.f32 %v2902, %v3062
  %v3064 = vpop.f32.mrb[0].mxu0
  %v3065 = vpop.f32.mrb[0].mxu0
  %v3066 = vadd.f32 %v2905, %v3065
  %v3067 = vpop.f32.mrb[0].mxu0
  %3068 = vmatprep.mubr.bf16.mxu0 %v1253
  %3069 = vmatmul.mubr.bf16.gmra.mrb[0].mxu0 %v1252
  %v3070 = vpop.f32.mrb[0].mxu0
  %v3071 = vadd.f32 %v2910, %v3070
  %v3072 = vpop.f32.mrb[0].mxu0
  %v3073 = vpop.f32.mrb[0].mxu0
  %v3074 = vadd.f32 %v2913, %v3073
  %v3075 = vpop.f32.mrb[0].mxu0
  %3076 = vmatprep.mubr.bf16.mxu0 %v1266
  %3077 = vmatmul.mubr.bf16.gmra.mrb[0].mxu0 %v1265
  %v3078 = vpop.f32.mrb[0].mxu0
  %v3079 = vadd.f32 %v2918, %v3078
  %v3080 = vpop.f32.mrb[0].mxu0
  %v3081 = vpop.f32.mrb[0].mxu0
  %v3082 = vadd.f32 %v2921, %v3081
  %v3083 = vpop.f32.mrb[0].mxu0
  %3084 = vmatprep.mubr.bf16.mxu0 %v1279
  %3085 = vmatmul.mubr.bf16.gmra.mrb[0].mxu0 %v1278
  %v3086 = vpop.f32.mrb[0].mxu0
  %v3087 = vadd.f32 %v2926, %v3086
  %v3088 = vpop.f32.mrb[0].mxu0
  %v3089 = vpop.f32.mrb[0].mxu0
  %v3090 = vadd.f32 %v2929, %v3089
  %v3091 = vpop.f32.mrb[0].mxu0
  %3092 = vmatprep.mubr.bf16.mxu0 %v1292
  %3093 = vmatmul.mubr.bf16.gmra.mrb[0].mxu0 %v1291
  %v3094 = vpop.f32.mrb[0].mxu0
  %v3095 = vadd.f32 %v2934, %v3094
  %v3096 = vpop.f32.mrb[0].mxu0
  %v3097 = vpop.f32.mrb[0].mxu0
  %v3098 = vadd.f32 %v2937, %v3097
  %v3099 = vpop.f32.mrb[0].mxu0
  %3100 = vdwg.mxu0
  %3101 = vmatprep.subr.bf16.mxu0 0
  %3102 = vmatpush1.bf16.msra.mxu0 %v1982
  %3103 = vmatprep.subr.bf16.mxu0 0
  %3104 = vmatpush1.bf16.msra.mxu0 %v1983
  %3105 = vmatprep.subr.bf16.mxu0 0
  %3106 = vmatpush1.bf16.msra.mxu0 %v1984
  %3107 = vmatprep.subr.bf16.mxu0 0
  %3108 = vmatpush1.bf16.msra.mxu0 %v1985
  %3109 = vmatprep.subr.bf16.mxu0 0
  %3110 = vmatpush1.bf16.msra.mxu0 0
  %3111 = vmatprep.subr.bf16.mxu0 0
  %3112 = vmatpush1.bf16.msra.mxu0 0
  %3113 = vmatprep.subr.bf16.mxu0 0
  %3114 = vmatpush1.bf16.msra.mxu0 0
  %3115 = vmatprep.subr.bf16.mxu0 0
  %3116 = vmatpush1.bf16.msra.mxu0 0
  %3117 = vmatprep.subr.bf16.mxu0 0
  %3118 = vmatpush1.bf16.msra.mxu0 0
  %3119 = vmatprep.subr.bf16.mxu0 0
  %3120 = vmatpush1.bf16.msra.mxu0 0
  %3121 = vmatprep.subr.bf16.mxu0 0
  %3122 = vmatpush1.bf16.msra.mxu0 0
  %3123 = vmatprep.subr.bf16.mxu0 0
  %3124 = vmatpush1.bf16.msra.mxu0 0
  %3125 = vmatprep.subr.bf16.mxu0 0
  %3126 = vmatpush1.bf16.msra.mxu0 0
  %3127 = vmatprep.subr.bf16.mxu0 0
  %3128 = vmatpush1.bf16.msra.mxu0 0
  %3129 = vmatprep.subr.bf16.mxu0 0
  %3130 = vmatpush1.bf16.msra.mxu0 0
  %3131 = vmatprep.subr.bf16.mxu0 0
  %3132 = vmatpush1.bf16.msra.mxu0 0
  %3133 = vmatprep.mubr.bf16.mxu0 0
  %3134 = vmatmul.mubr.bf16.gmra.mrb[0].mxu0 %v2088
  %v3135 = vpop.f32.mrb[0].mxu0
  %v3136 = vadd.f32 %v2975, %v3135
  %v3137 = vpop.f32.mrb[0].mxu0
  %v3138 = vpop.f32.mrb[0].mxu0
  %v3139 = vadd.f32 %v2978, %v3138
  %v3140 = vpop.f32.mrb[0].mxu0
  %3141 = vmatprep.mubr.bf16.mxu0 0
  %3142 = vmatmul.mubr.bf16.gmra.mrb[0].mxu0 %v2091
  %v3143 = vpop.f32.mrb[0].mxu0
  %v3144 = vadd.f32 %v2983, %v3143
  %v3145 = vpop.f32.mrb[0].mxu0
  %v3146 = vpop.f32.mrb[0].mxu0
  %v3147 = vadd.f32 %v2986, %v3146
  %v3148 = vpop.f32.mrb[0].mxu0
  %3149 = vmatprep.mubr.bf16.mxu0 0
  %3150 = vmatmul.mubr.bf16.gmra.mrb[0].mxu0 %v2094
  %v3151 = vpop.f32.mrb[0].mxu0
  %v3152 = vadd.f32 %v2991, %v3151
  %v3153 = vpop.f32.mrb[0].mxu0
  %v3154 = vpop.f32.mrb[0].mxu0
  %v3155 = vadd.f32 %v2994, %v3154
  %v3156 = vpop.f32.mrb[0].mxu0
  %3157 = vmatprep.mubr.bf16.mxu0 0
  %3158 = vmatmul.mubr.bf16.gmra.mrb[0].mxu0 %v2097
  %v3159 = vpop.f32.mrb[0].mxu0
  %v3160 = vadd.f32 %v2999, %v3159
  %v3161 = vpop.f32.mrb[0].mxu0
  %v3162 = vpop.f32.mrb[0].mxu0
  %v3163 = vadd.f32 %v3002, %v3162
  %v3164 = vpop.f32.mrb[0].mxu0
  %3165 = vmatprep.mubr.bf16.mxu0 0
  %3166 = vmatmul.mubr.bf16.gmra.mrb[0].mxu0 %v2100
  %v3167 = vpop.f32.mrb[0].mxu0
  %v3168 = vadd.f32 %v3007, %v3167
  %v3169 = vpop.f32.mrb[0].mxu0
  %v3170 = vpop.f32.mrb[0].mxu0
  %v3171 = vadd.f32 %v3010, %v3170
  %v3172 = vpop.f32.mrb[0].mxu0
  %3173 = vmatprep.mubr.bf16.mxu0 0
  %3174 = vmatmul.mubr.bf16.gmra.mrb[0].mxu0 %v2103
  %v3175 = vpop.f32.mrb[0].mxu0
  %v3176 = vadd.f32 %v3015, %v3175
  %v3177 = vpop.f32.mrb[0].mxu0
  %v3178 = vpop.f32.mrb[0].mxu0
  %v3179 = vadd.f32 %v3018, %v3178
  %v3180 = vpop.f32.mrb[0].mxu0
  %3181 = vmatprep.mubr.bf16.mxu0 0
  %3182 = vmatmul.mubr.bf16.gmra.mrb[0].mxu0 %v2106
  %v3183 = vpop.f32.mrb[0].mxu0
  %v3184 = vadd.f32 %v3023, %v3183
  %v3185 = vpop.f32.mrb[0].mxu0
  %v3186 = vpop.f32.mrb[0].mxu0
  %v3187 = vadd.f32 %v3026, %v3186
  %v3188 = vpop.f32.mrb[0].mxu0
  %3189 = vmatprep.mubr.bf16.mxu0 0
  %3190 = vmatmul.mubr.bf16.gmra.mrb[0].mxu0 %v2109
  %v3191 = vpop.f32.mrb[0].mxu0
  %v3192 = vadd.f32 %v3031, %v3191
  %v3193 = vpop.f32.mrb[0].mxu0
  %v3194 = vpop.f32.mrb[0].mxu0
  %v3195 = vadd.f32 %v3034, %v3194
  %v3196 = vpop.f32.mrb[0].mxu0
  %3197 = vmatprep.mubr.bf16.mxu0 0
  %3198 = vmatmul.mubr.bf16.gmra.mrb[0].mxu0 %v2112
  %v3199 = vpop.f32.mrb[0].mxu0
  %v3200 = vadd.f32 %v3039, %v3199
  %v3201 = vpop.f32.mrb[0].mxu0
  %v3202 = vpop.f32.mrb[0].mxu0
  %v3203 = vadd.f32 %v3042, %v3202
  %v3204 = vpop.f32.mrb[0].mxu0
  %3205 = vmatprep.mubr.bf16.mxu0 0
  %3206 = vmatmul.mubr.bf16.gmra.mrb[0].mxu0 %v2115
  %v3207 = vpop.f32.mrb[0].mxu0
  %v3208 = vadd.f32 %v3047, %v3207
  %v3209 = vpop.f32.mrb[0].mxu0
  %v3210 = vpop.f32.mrb[0].mxu0
  %v3211 = vadd.f32 %v3050, %v3210
  %v3212 = vpop.f32.mrb[0].mxu0
  %3213 = vmatprep.mubr.bf16.mxu0 0
  %3214 = vmatmul.mubr.bf16.gmra.mrb[0].mxu0 %v2118
  %v3215 = vpop.f32.mrb[0].mxu0
  %v3216 = vadd.f32 %v3055, %v3215
  %v3217 = vpop.f32.mrb[0].mxu0
  %v3218 = vpop.f32.mrb[0].mxu0
  %v3219 = vadd.f32 %v3058, %v3218
  %v3220 = vpop.f32.mrb[0].mxu0
  %3221 = vmatprep.mubr.bf16.mxu0 0
  %3222 = vmatmul.mubr.bf16.gmra.mrb[0].mxu0 %v2121
  %v3223 = vpop.f32.mrb[0].mxu0
  %v3224 = vadd.f32 %v3063, %v3223
  %v3225 = vpop.f32.mrb[0].mxu0
  %v3226 = vpop.f32.mrb[0].mxu0
  %v3227 = vadd.f32 %v3066, %v3226
  %v3228 = vpop.f32.mrb[0].mxu0
  %3229 = vmatprep.mubr.bf16.mxu0 0
  %3230 = vmatmul.mubr.bf16.gmra.mrb[0].mxu0 %v2124
  %v3231 = vpop.f32.mrb[0].mxu0
  %v3232 = vadd.f32 %v3071, %v3231
  %v3233 = vpop.f32.mrb[0].mxu0
  %v3234 = vpop.f32.mrb[0].mxu0
  %v3235 = vadd.f32 %v3074, %v3234
  %v3236 = vpop.f32.mrb[0].mxu0
  %3237 = vmatprep.mubr.bf16.mxu0 0
  %3238 = vmatmul.mubr.bf16.gmra.mrb[0].mxu0 %v2127
  %v3239 = vpop.f32.mrb[0].mxu0
  %v3240 = vadd.f32 %v3079, %v3239
  %v3241 = vpop.f32.mrb[0].mxu0
  %v3242 = vpop.f32.mrb[0].mxu0
  %v3243 = vadd.f32 %v3082, %v3242
  %v3244 = vpop.f32.mrb[0].mxu0
  %3245 = vmatprep.mubr.bf16.mxu0 0
  %3246 = vmatmul.mubr.bf16.gmra.mrb[0].mxu0 %v2130
  %v3247 = vpop.f32.mrb[0].mxu0
  %v3248 = vadd.f32 %v3087, %v3247
  %v3249 = vpop.f32.mrb[0].mxu0
  %v3250 = vpop.f32.mrb[0].mxu0
  %v3251 = vadd.f32 %v3090, %v3250
  %v3252 = vpop.f32.mrb[0].mxu0
  %3253 = vmatprep.mubr.bf16.mxu0 0
  %3254 = vmatmul.mubr.bf16.gmra.mrb[0].mxu0 %v2133
  %v3255 = vpop.f32.mrb[0].mxu0
  %v3256 = vadd.f32 %v3095, %v3255
  %v3257 = vpop.f32.mrb[0].mxu0
  %v3258 = vpop.f32.mrb[0].mxu0
  %v3259 = vadd.f32 %v3098, %v3258
  %v3260 = vpop.f32.mrb[0].mxu0
  %3261 = vdwg.mxu0
  %v3262 = vmax.f32 %v3136, 0.0
  %v3263 = vmax.f32 %v3139, 0.0
  %v3264 = vmax.f32 %v3144, 0.0
  %v3265 = vmax.f32 %v3147, 0.0
  %v3266 = vmax.f32 %v3152, 0.0
  %v3267 = vmax.f32 %v3155, 0.0
  %v3268 = vmax.f32 %v3160, 0.0
  %v3269 = vmax.f32 %v3163, 0.0
  %v3270 = vmax.f32 %v3168, 0.0
  %v3271 = vmax.f32 %v3171, 0.0
  %v3272 = vmax.f32 %v3176, 0.0
  %v3273 = vmax.f32 %v3179, 0.0
  %v3274 = vmax.f32 %v3184, 0.0
  %v3275 = vmax.f32 %v3187, 0.0
  %v3276 = vmax.f32 %v3192, 0.0
  %v3277 = vmax.f32 %v3195, 0.0
  %v3278 = vmax.f32 %v3200, 0.0
  %v3279 = vmax.f32 %v3203, 0.0
  %v3280 = vmax.f32 %v3208, 0.0
  %v3281 = vmax.f32 %v3211, 0.0
  %v3282 = vmax.f32 %v3216, 0.0
  %v3283 = vmax.f32 %v3219, 0.0
  %v3284 = vmax.f32 %v3224, 0.0
  %v3285 = vmax.f32 %v3227, 0.0
  %v3286 = vmax.f32 %v3232, 0.0
  %v3287 = vmax.f32 %v3235, 0.0
  %v3288 = vmax.f32 %v3240, 0.0
  %v3289 = vmax.f32 %v3243, 0.0
  %v3290 = vmax.f32 %v3248, 0.0
  %v3291 = vmax.f32 %v3251, 0.0
  %v3292 = vmax.f32 %v3256, 0.0
  %v3293 = vmax.f32 %v3259, 0.0
  %v3294 = vsel %vm2086, %v3262, -inf
  %v3295 = vsel %vm2086, %v3270, -inf
  %v3296 = vmax.f32 %v3294, %v3295
  %v3297 = vsel %vm2086, %v3278, -inf
  %v3298 = vmax.f32 %v3296, %v3297
  %v3299 = vsel %vm2086, %v3286, -inf
  %v3300 = vmax.f32 %v3298, %v3299
  %v3301 = vsel %vm2086, %v3263, -inf
  %v3302 = vsel %vm2086, %v3271, -inf
  %v3303 = vmax.f32 %v3301, %v3302
  %v3304 = vsel %vm2086, %v3279, -inf
  %v3305 = vmax.f32 %v3303, %v3304
  %v3306 = vsel %vm2086, %v3287, -inf
  %v3307 = vmax.f32 %v3305, %v3306
  %v3308 = vsel %vm2086, %v3264, -inf
  %v3309 = vsel %vm2086, %v3272, -inf
  %v3310 = vmax.f32 %v3308, %v3309
  %v3311 = vsel %vm2086, %v3280, -inf
  %v3312 = vmax.f32 %v3310, %v3311
  %v3313 = vsel %vm2086, %v3288, -inf
  %v3314 = vmax.f32 %v3312, %v3313
  %v3315 = vsel %vm2086, %v3265, -inf
  %v3316 = vsel %vm2086, %v3273, -inf
  %v3317 = vmax.f32 %v3315, %v3316
  %v3318 = vsel %vm2086, %v3281, -inf
  %v3319 = vmax.f32 %v3317, %v3318
  %v3320 = vsel %vm2086, %v3289, -inf
  %v3321 = vmax.f32 %v3319, %v3320
  %v3322 = vsel %vm2086, %v3266, -inf
  %v3323 = vsel %vm2086, %v3274, -inf
  %v3324 = vmax.f32 %v3322, %v3323
  %v3325 = vsel %vm2086, %v3282, -inf
  %v3326 = vmax.f32 %v3324, %v3325
  %v3327 = vsel %vm2086, %v3290, -inf
  %v3328 = vmax.f32 %v3326, %v3327
  %v3329 = vsel %vm2086, %v3267, -inf
  %v3330 = vsel %vm2086, %v3275, -inf
  %v3331 = vmax.f32 %v3329, %v3330
  %v3332 = vsel %vm2086, %v3283, -inf
  %v3333 = vmax.f32 %v3331, %v3332
  %v3334 = vsel %vm2086, %v3291, -inf
  %v3335 = vmax.f32 %v3333, %v3334
  %v3336 = vsel %vm2086, %v3268, -inf
  %v3337 = vsel %vm2086, %v3276, -inf
  %v3338 = vmax.f32 %v3336, %v3337
  %v3339 = vsel %vm2086, %v3284, -inf
  %v3340 = vmax.f32 %v3338, %v3339
  %v3341 = vsel %vm2086, %v3292, -inf
  %v3342 = vmax.f32 %v3340, %v3341
  %v3343 = vsel %vm2086, %v3269, -inf
  %v3344 = vsel %vm2086, %v3277, -inf
  %v3345 = vmax.f32 %v3343, %v3344
  %v3346 = vsel %vm2086, %v3285, -inf
  %v3347 = vmax.f32 %v3345, %v3346
  %v3348 = vsel %vm2086, %v3293, -inf
  %v3349 = vmax.f32 %v3347, %v3348
  %v3350 = vpack.c.bf16 %v3307, %v3300
  %v3351 = vpack.c.bf16 %v3321, %v3314
  %v3352 = vpack.c.bf16 %v3335, %v3328
  %v3353 = vpack.c.bf16 %v3349, %v3342
  %v3358 = vunpack.c.l.b16 %v3350
  %v3359 = vunpack.c.h.b16 %v3350
  %v3360 = vunpack.c.l.b16 %v3351
  %v3361 = vunpack.c.h.b16 %v3351
  %v3362 = vunpack.c.l.b16 %v3352
  %v3363 = vunpack.c.h.b16 %v3352
  %v3364 = vunpack.c.l.b16 %v3353
  %v3365 = vunpack.c.h.b16 %v3353
  %v3366 = vpack.c.b16 %v3358, %v3358
  %v3367 = vpack.c.b16 %v3359, %v3359
  %v3368 = vpack.c.b16 %v3360, %v3360
  %v3369 = vpack.c.b16 %v3361, %v3361
  %v3370 = vpack.c.b16 %v3362, %v3362
  %v3371 = vpack.c.b16 %v3363, %v3363
  %v3372 = vpack.c.b16 %v3364, %v3364
  %v3373 = vpack.c.b16 %v3365, %v3365
  %vm3382 = vcmask 519168
  %3383 = vst.msk [vmem:[%s3] sm:$0xf] %vm3382, %v3366
  %3384 = vst.msk [vmem:[%s3 + $0x4] sm:$0xf] %vm3382, %v3367
  %3385 = vst.msk [vmem:[%s3 + $0x8] sm:$0xf] %vm3382, %v3368
  %3386 = vst.msk [vmem:[%s3 + $0xc] sm:$0xf] %vm3382, %v3369
  %3387 = vst.msk [vmem:[%s3 + $0x10] sm:$0xf] %vm3382, %v3370
  %3388 = vst.msk [vmem:[%s3 + $0x14] sm:$0xf] %vm3382, %v3371
  %3389 = vst.msk [vmem:[%s3 + $0x18] sm:$0xf] %vm3382, %v3372
  %3390 = vst.msk [vmem:[%s3 + $0x1c] sm:$0xf] %vm3382, %v3373
  // Predicated region
  $region14: #{lenet5_forward.4} parent=0 // pred_check
    _
  $region15: #{lenet5_forward.4} parent=0 // pred_check_branch
    %3392 = sbr.rel (0) target = $region17
  $region16: #{lenet5_forward.4} parent=0 // pred_region
    _
  $region17: #{lenet5_forward.4} parent=0 // pred_fallthru
    _
  // Predicated region
  $region18: #{lenet5_forward.4} parent=0 // pred_check
    _
  $region19: #{lenet5_forward.4} parent=0 // pred_check_branch
    %3394 = sbr.rel (0) target = $region21
  $region20: #{lenet5_forward.4} parent=0 // pred_region
    _
  $region21: #{lenet5_forward.4} parent=0 // pred_fallthru
    _

// kernel: lenet5_forward.5
$region0: #{lenet5_forward.5}
  #allocation0 [shape = 'u32[]', space=smem, size = 0x4, offset = 0x4, fixed_abs, tag = 'smem constant byte address 0x4 - core index']
  #allocation1 [shape = 'u32[144,128]{1,0:T(1,128)}', space=vmem, size = 0x12000, scoped, tag = 'internal scratch']
  %s0 = inlined_call_operand.vmem [shape: bf16[16,1600], index: 0, kind: input, shape index: {}]
  %s1 = inlined_call_operand.vmem [shape: bf16[1600,384], index: 1, kind: input, shape index: {}]
  %s2 = inlined_call_operand.vmem [shape: f32[1,384], index: 2, kind: input, shape index: {}]
  %s3 = inlined_call_operand.vmem [shape: bf16[384,192], index: 3, kind: input, shape index: {}]
  %s4 = inlined_call_operand.vmem [shape: f32[1,192], index: 4, kind: input, shape index: {}]
  %s5 = inlined_call_operand.vmem [shape: bf16[192,128], index: 5, kind: input, shape index: {}]
  %s6 = inlined_call_operand.vmem [shape: f32[1,128], index: 6, kind: input, shape index: {}]
  %s7 = inlined_call_operand.vmem [shape: f32[16,128], index: 7, kind: output, shape index: {}]
  %s8 = sld [smem:[#allocation0]]
  $region38: #{lenet5_forward.5} parent=0
    _
  %s10 = ssub.s32 1, %s8
  %s11 = scalar_select 0, %s10, %s8
  // Predicated region
  $region2: #{lenet5_forward.5} parent=0 // pred_check
    _
  $region3: #{lenet5_forward.5} parent=0 // pred_check_branch
    %13 = sbr.rel (0) target = $region5
  $region4: #{lenet5_forward.5} parent=0 // pred_region
    _
  $region5: #{lenet5_forward.5} parent=0 // pred_fallthru
    _
  // Predicated region
  $region6: #{lenet5_forward.5} parent=0 // pred_check
    _
  $region7: #{lenet5_forward.5} parent=0 // pred_check_branch
    %15 = sbr.rel (0) target = $region9
  $region8: #{lenet5_forward.5} parent=0 // pred_region
    _
  $region9: #{lenet5_forward.5} parent=0 // pred_fallthru
    _
  // Predicated region
  $region10: #{lenet5_forward.5} parent=0 // pred_check
    _
  $region11: #{lenet5_forward.5} parent=0 // pred_check_branch
    %17 = sbr.rel (0) target = $region13
  $region12: #{lenet5_forward.5} parent=0 // pred_region
    _
  $region13: #{lenet5_forward.5} parent=0 // pred_fallthru
    _
  // Predicated region
  $region14: #{lenet5_forward.5} parent=0 // pred_check
    _
  $region15: #{lenet5_forward.5} parent=0 // pred_check_branch
    %19 = sbr.rel (0) target = $region17
  $region16: #{lenet5_forward.5} parent=0 // pred_region
    _
  $region17: #{lenet5_forward.5} parent=0 // pred_fallthru
    _
  // Predicated region
  $region18: #{lenet5_forward.5} parent=0 // pred_check
    _
  $region19: #{lenet5_forward.5} parent=0 // pred_check_branch
    %21 = sbr.rel (0) target = $region21
  $region20: #{lenet5_forward.5} parent=0 // pred_region
    _
  $region21: #{lenet5_forward.5} parent=0 // pred_fallthru
    _
  // Predicated region
  $region22: #{lenet5_forward.5} parent=0 // pred_check
    _
  $region23: #{lenet5_forward.5} parent=0 // pred_check_branch
    %23 = sbr.rel (0) target = $region25
  $region24: #{lenet5_forward.5} parent=0 // pred_region
    _
  $region25: #{lenet5_forward.5} parent=0 // pred_fallthru
    _
  // Predicated region
  $region26: #{lenet5_forward.5} parent=0 // pred_check
    _
  $region27: #{lenet5_forward.5} parent=0 // pred_check_branch
    %25 = sbr.rel (0) target = $region29
  $region28: #{lenet5_forward.5} parent=0 // pred_region
    _
  $region29: #{lenet5_forward.5} parent=0 // pred_fallthru
    _
  %v27 = vld [vmem:[%s0] sm:$0xff]
  %v28 = vld [vmem:[%s0 + $0x8] sm:$0xff]
  %v29 = vld [vmem:[%s0 + $0x10] sm:$0xff]
  %v30 = vld [vmem:[%s0 + $0x18] sm:$0xff]
  %v31 = vld [vmem:[%s0 + $0x20] sm:$0xff]
  %v32 = vld [vmem:[%s0 + $0x28] sm:$0xff]
  %v33 = vld [vmem:[%s0 + $0x30] sm:$0xf]
  %v34 = vld [vmem:[%s0 + $0x34] sm:$0xff]
  %v35 = vld [vmem:[%s0 + $0x3c] sm:$0xff]
  %v36 = vld [vmem:[%s0 + $0x44] sm:$0xff]
  %v37 = vld [vmem:[%s0 + $0x4c] sm:$0xff]
  %v38 = vld [vmem:[%s0 + $0x54] sm:$0xff]
  %v39 = vld [vmem:[%s0 + $0x5c] sm:$0xff]
  %v40 = vld [vmem:[%s0 + $0x64] sm:$0xf]
  %v41 = vld [vmem:[%s1] sm:$0xff]
  %v42 = vld [vmem:[%s1 + $0x8] sm:$0xf]
  %v43 = vld [vmem:[%s1 + $0xc] sm:$0xff]
  %v44 = vld [vmem:[%s1 + $0x14] sm:$0xf]
  %v45 = vld [vmem:[%s1 + $0x18] sm:$0xff]
  %v46 = vld [vmem:[%s1 + $0x20] sm:$0xf]
  %v47 = vld [vmem:[%s1 + $0x24] sm:$0xff]
  %v48 = vld [vmem:[%s1 + $0x2c] sm:$0xf]
  %v49 = vld [vmem:[%s1 + $0x30] sm:$0xff]
  %v50 = vld [vmem:[%s1 + $0x38] sm:$0xf]
  %v51 = vld [vmem:[%s1 + $0x3c] sm:$0xff]
  %v52 = vld [vmem:[%s1 + $0x44] sm:$0xf]
  %v53 = vld [vmem:[%s1 + $0x48] sm:$0xff]
  %v54 = vld [vmem:[%s1 + $0x50] sm:$0xf]
  %v55 = vld [vmem:[%s1 + $0x54] sm:$0xff]
  %v56 = vld [vmem:[%s1 + $0x5c] sm:$0xf]
  %v57 = vld [vmem:[%s1 + $0x60] sm:$0xff]
  %v58 = vld [vmem:[%s1 + $0x68] sm:$0xf]
  %v59 = vld [vmem:[%s1 + $0x6c] sm:$0xff]
  %v60 = vld [vmem:[%s1 + $0x74] sm:$0xf]
  %v61 = vld [vmem:[%s1 + $0x78] sm:$0xff]
  %v62 = vld [vmem:[%s1 + $0x80] sm:$0xf]
  %v63 = vld [vmem:[%s1 + $0x84] sm:$0xff]
  %v64 = vld [vmem:[%s1 + $0x8c] sm:$0xf]
  %v65 = vld [vmem:[%s1 + $0x90] sm:$0xff]
  %v66 = vld [vmem:[%s1 + $0x98] sm:$0xf]
  %v67 = vld [vmem:[%s1 + $0x9c] sm:$0xff]
  %v68 = vld [vmem:[%s1 + $0xa4] sm:$0xf]
  %v69 = vld [vmem:[%s1 + $0xa8] sm:$0xff]
  %v70 = vld [vmem:[%s1 + $0xb0] sm:$0xf]
  %v71 = vld [vmem:[%s1 + $0xb4] sm:$0xff]
  %v72 = vld [vmem:[%s1 + $0xbc] sm:$0xf]
  %v73 = vld [vmem:[%s1 + $0xc0] sm:$0xff]
  %v74 = vld [vmem:[%s1 + $0xc8] sm:$0xf]
  %v75 = vld [vmem:[%s1 + $0xcc] sm:$0xff]
  %v76 = vld [vmem:[%s1 + $0xd4] sm:$0xf]
  %v77 = vld [vmem:[%s1 + $0xd8] sm:$0xff]
  %v78 = vld [vmem:[%s1 + $0xe0] sm:$0xf]
  %v79 = vld [vmem:[%s1 + $0xe4] sm:$0xff]
  %v80 = vld [vmem:[%s1 + $0xec] sm:$0xf]
  %v81 = vld [vmem:[%s1 + $0xf0] sm:$0xff]
  %v82 = vld [vmem:[%s1 + $0xf8] sm:$0xf]
  %v83 = vld [vmem:[%s1 + $0xfc] sm:$0xff]
  %v84 = vld [vmem:[%s1 + $0x104] sm:$0xf]
  %v85 = vld [vmem:[%s1 + $0x108] sm:$0xff]
  %v86 = vld [vmem:[%s1 + $0x110] sm:$0xf]
  %v87 = vld [vmem:[%s1 + $0x114] sm:$0xff]
  %v88 = vld [vmem:[%s1 + $0x11c] sm:$0xf]
  %v89 = vld [vmem:[%s1 + $0x120] sm:$0xff]
  %v90 = vld [vmem:[%s1 + $0x128] sm:$0xf]
  %v91 = vld [vmem:[%s1 + $0x12c] sm:$0xff]
  %v92 = vld [vmem:[%s1 + $0x134] sm:$0xf]
  %v93 = vld [vmem:[%s1 + $0x138] sm:$0xff]
  %v94 = vld [vmem:[%s1 + $0x140] sm:$0xf]
  %v95 = vld [vmem:[%s1 + $0x144] sm:$0xff]
  %v96 = vld [vmem:[%s1 + $0x14c] sm:$0xf]
  %v97 = vld [vmem:[%s1 + $0x150] sm:$0xff]
  %v98 = vld [vmem:[%s1 + $0x158] sm:$0xf]
  %v99 = vld [vmem:[%s1 + $0x15c] sm:$0xff]
  %v100 = vld [vmem:[%s1 + $0x164] sm:$0xf]
  %v101 = vld [vmem:[%s1 + $0x168] sm:$0xff]
  %v102 = vld [vmem:[%s1 + $0x170] sm:$0xf]
  %v103 = vld [vmem:[%s1 + $0x174] sm:$0xff]
  %v104 = vld [vmem:[%s1 + $0x17c] sm:$0xf]
  %v105 = vld [vmem:[%s1 + $0x180] sm:$0xff]
  %v106 = vld [vmem:[%s1 + $0x188] sm:$0xf]
  %v107 = vld [vmem:[%s1 + $0x18c] sm:$0xff]
  %v108 = vld [vmem:[%s1 + $0x194] sm:$0xf]
  %v109 = vld [vmem:[%s1 + $0x198] sm:$0xff]
  %v110 = vld [vmem:[%s1 + $0x1a0] sm:$0xf]
  %v111 = vld [vmem:[%s1 + $0x1a4] sm:$0xff]
  %v112 = vld [vmem:[%s1 + $0x1ac] sm:$0xf]
  %v113 = vld [vmem:[%s1 + $0x1b0] sm:$0xff]
  %v114 = vld [vmem:[%s1 + $0x1b8] sm:$0xf]
  %v115 = vld [vmem:[%s1 + $0x1bc] sm:$0xff]
  %v116 = vld [vmem:[%s1 + $0x1c4] sm:$0xf]
  %v117 = vld [vmem:[%s1 + $0x1c8] sm:$0xff]
  %v118 = vld [vmem:[%s1 + $0x1d0] sm:$0xf]
  %v119 = vld [vmem:[%s1 + $0x1d4] sm:$0xff]
  %v120 = vld [vmem:[%s1 + $0x1dc] sm:$0xf]
  %v121 = vld [vmem:[%s1 + $0x1e0] sm:$0xff]
  %v122 = vld [vmem:[%s1 + $0x1e8] sm:$0xf]
  %v123 = vld [vmem:[%s1 + $0x1ec] sm:$0xff]
  %v124 = vld [vmem:[%s1 + $0x1f4] sm:$0xf]
  %v125 = vld [vmem:[%s1 + $0x1f8] sm:$0xff]
  %v126 = vld [vmem:[%s1 + $0x200] sm:$0xf]
  %v127 = vld [vmem:[%s1 + $0x204] sm:$0xff]
  %v128 = vld [vmem:[%s1 + $0x20c] sm:$0xf]
  %v129 = vld [vmem:[%s1 + $0x210] sm:$0xff]
  %v130 = vld [vmem:[%s1 + $0x218] sm:$0xf]
  %v131 = vld [vmem:[%s1 + $0x21c] sm:$0xff]
  %v132 = vld [vmem:[%s1 + $0x224] sm:$0xf]
  %v133 = vld [vmem:[%s1 + $0x228] sm:$0xff]
  %v134 = vld [vmem:[%s1 + $0x230] sm:$0xf]
  %v135 = vld [vmem:[%s1 + $0x234] sm:$0xff]
  %v136 = vld [vmem:[%s1 + $0x23c] sm:$0xf]
  %v137 = vld [vmem:[%s1 + $0x240] sm:$0xff]
  %v138 = vld [vmem:[%s1 + $0x248] sm:$0xf]
  %v139 = vld [vmem:[%s1 + $0x24c] sm:$0xff]
  %v140 = vld [vmem:[%s1 + $0x254] sm:$0xf]
  %v141 = vld [vmem:[%s1 + $0x258] sm:$0xff]
  %v142 = vld [vmem:[%s1 + $0x260] sm:$0xf]
  %v143 = vld [vmem:[%s1 + $0x264] sm:$0xff]
  %v144 = vld [vmem:[%s1 + $0x26c] sm:$0xf]
  %v145 = vld [vmem:[%s1 + $0x270] sm:$0xff]
  %v146 = vld [vmem:[%s1 + $0x278] sm:$0xf]
  %v147 = vld [vmem:[%s1 + $0x27c] sm:$0xff]
  %v148 = vld [vmem:[%s1 + $0x284] sm:$0xf]
  %v149 = vld [vmem:[%s1 + $0x288] sm:$0xff]
  %v150 = vld [vmem:[%s1 + $0x290] sm:$0xf]
  %v151 = vld [vmem:[%s1 + $0x294] sm:$0xff]
  %v152 = vld [vmem:[%s1 + $0x29c] sm:$0xf]
  %v153 = vld [vmem:[%s1 + $0x2a0] sm:$0xff]
  %v154 = vld [vmem:[%s1 + $0x2a8] sm:$0xf]
  %v155 = vld [vmem:[%s1 + $0x2ac] sm:$0xff]
  %v156 = vld [vmem:[%s1 + $0x2b4] sm:$0xf]
  %v157 = vld [vmem:[%s1 + $0x2b8] sm:$0xff]
  %v158 = vld [vmem:[%s1 + $0x2c0] sm:$0xf]
  %v159 = vld [vmem:[%s1 + $0x2c4] sm:$0xff]
  %v160 = vld [vmem:[%s1 + $0x2cc] sm:$0xf]
  %v161 = vld [vmem:[%s1 + $0x2d0] sm:$0xff]
  %v162 = vld [vmem:[%s1 + $0x2d8] sm:$0xf]
  %v163 = vld [vmem:[%s1 + $0x2dc] sm:$0xff]
  %v164 = vld [vmem:[%s1 + $0x2e4] sm:$0xf]
  %v165 = vld [vmem:[%s1 + $0x2e8] sm:$0xff]
  %v166 = vld [vmem:[%s1 + $0x2f0] sm:$0xf]
  %v167 = vld [vmem:[%s1 + $0x2f4] sm:$0xff]
  %v168 = vld [vmem:[%s1 + $0x2fc] sm:$0xf]
  %v169 = vld [vmem:[%s1 + $0x300] sm:$0xff]
  %v170 = vld [vmem:[%s1 + $0x308] sm:$0xf]
  %v171 = vld [vmem:[%s1 + $0x30c] sm:$0xff]
  %v172 = vld [vmem:[%s1 + $0x314] sm:$0xf]
  %v173 = vld [vmem:[%s1 + $0x318] sm:$0xff]
  %v174 = vld [vmem:[%s1 + $0x320] sm:$0xf]
  %v175 = vld [vmem:[%s1 + $0x324] sm:$0xff]
  %v176 = vld [vmem:[%s1 + $0x32c] sm:$0xf]
  %v177 = vld [vmem:[%s1 + $0x330] sm:$0xff]
  %v178 = vld [vmem:[%s1 + $0x338] sm:$0xf]
  %v179 = vld [vmem:[%s1 + $0x33c] sm:$0xff]
  %v180 = vld [vmem:[%s1 + $0x344] sm:$0xf]
  %v181 = vld [vmem:[%s1 + $0x348] sm:$0xff]
  %v182 = vld [vmem:[%s1 + $0x350] sm:$0xf]
  %v183 = vld [vmem:[%s1 + $0x354] sm:$0xff]
  %v184 = vld [vmem:[%s1 + $0x35c] sm:$0xf]
  %v185 = vld [vmem:[%s1 + $0x360] sm:$0xff]
  %v186 = vld [vmem:[%s1 + $0x368] sm:$0xf]
  %v187 = vld [vmem:[%s1 + $0x36c] sm:$0xff]
  %v188 = vld [vmem:[%s1 + $0x374] sm:$0xf]
  %v189 = vld [vmem:[%s1 + $0x378] sm:$0xff]
  %v190 = vld [vmem:[%s1 + $0x380] sm:$0xf]
  %v191 = vld [vmem:[%s1 + $0x384] sm:$0xff]
  %v192 = vld [vmem:[%s1 + $0x38c] sm:$0xf]
  %v193 = vld [vmem:[%s1 + $0x390] sm:$0xff]
  %v194 = vld [vmem:[%s1 + $0x398] sm:$0xf]
  %v195 = vld [vmem:[%s1 + $0x39c] sm:$0xff]
  %v196 = vld [vmem:[%s1 + $0x3a4] sm:$0xf]
  %v197 = vld [vmem:[%s1 + $0x3a8] sm:$0xff]
  %v198 = vld [vmem:[%s1 + $0x3b0] sm:$0xf]
  %v199 = vld [vmem:[%s1 + $0x3b4] sm:$0xff]
  %v200 = vld [vmem:[%s1 + $0x3bc] sm:$0xf]
  %v201 = vld [vmem:[%s1 + $0x3c0] sm:$0xff]
  %v202 = vld [vmem:[%s1 + $0x3c8] sm:$0xf]
  %v203 = vld [vmem:[%s1 + $0x3cc] sm:$0xff]
  %v204 = vld [vmem:[%s1 + $0x3d4] sm:$0xf]
  %v205 = vld [vmem:[%s1 + $0x3d8] sm:$0xff]
  %v206 = vld [vmem:[%s1 + $0x3e0] sm:$0xf]
  %v207 = vld [vmem:[%s1 + $0x3e4] sm:$0xff]
  %v208 = vld [vmem:[%s1 + $0x3ec] sm:$0xf]
  %v209 = vld [vmem:[%s1 + $0x3f0] sm:$0xff]
  %v210 = vld [vmem:[%s1 + $0x3f8] sm:$0xf]
  %v211 = vld [vmem:[%s1 + $0x3fc] sm:$0xff]
  %v212 = vld [vmem:[%s1 + $0x404] sm:$0xf]
  %v213 = vld [vmem:[%s1 + $0x408] sm:$0xff]
  %v214 = vld [vmem:[%s1 + $0x410] sm:$0xf]
  %v215 = vld [vmem:[%s1 + $0x414] sm:$0xff]
  %v216 = vld [vmem:[%s1 + $0x41c] sm:$0xf]
  %v217 = vld [vmem:[%s1 + $0x420] sm:$0xff]
  %v218 = vld [vmem:[%s1 + $0x428] sm:$0xf]
  %v219 = vld [vmem:[%s1 + $0x42c] sm:$0xff]
  %v220 = vld [vmem:[%s1 + $0x434] sm:$0xf]
  %v221 = vld [vmem:[%s1 + $0x438] sm:$0xff]
  %v222 = vld [vmem:[%s1 + $0x440] sm:$0xf]
  %v223 = vld [vmem:[%s1 + $0x444] sm:$0xff]
  %v224 = vld [vmem:[%s1 + $0x44c] sm:$0xf]
  %v225 = vld [vmem:[%s1 + $0x450] sm:$0xff]
  %v226 = vld [vmem:[%s1 + $0x458] sm:$0xf]
  %v227 = vld [vmem:[%s1 + $0x45c] sm:$0xff]
  %v228 = vld [vmem:[%s1 + $0x464] sm:$0xf]
  %v229 = vld [vmem:[%s1 + $0x468] sm:$0xff]
  %v230 = vld [vmem:[%s1 + $0x470] sm:$0xf]
  %v231 = vld [vmem:[%s1 + $0x474] sm:$0xff]
  %v232 = vld [vmem:[%s1 + $0x47c] sm:$0xf]
  %v233 = vld [vmem:[%s1 + $0x480] sm:$0xff]
  %v234 = vld [vmem:[%s1 + $0x488] sm:$0xf]
  %v235 = vld [vmem:[%s1 + $0x48c] sm:$0xff]
  %v236 = vld [vmem:[%s1 + $0x494] sm:$0xf]
  %v237 = vld [vmem:[%s1 + $0x498] sm:$0xff]
  %v238 = vld [vmem:[%s1 + $0x4a0] sm:$0xf]
  %v239 = vld [vmem:[%s1 + $0x4a4] sm:$0xff]
  %v240 = vld [vmem:[%s1 + $0x4ac] sm:$0xf]
  %v241 = vld [vmem:[%s1 + $0x4b0] sm:$0xff]
  %v242 = vld [vmem:[%s1 + $0x4b8] sm:$0xf]
  %v243 = vld [vmem:[%s1 + $0x4bc] sm:$0xff]
  %v244 = vld [vmem:[%s1 + $0x4c4] sm:$0xf]
  %v245 = vld [vmem:[%s1 + $0x4c8] sm:$0xff]
  %v246 = vld [vmem:[%s1 + $0x4d0] sm:$0xf]
  %v247 = vld [vmem:[%s1 + $0x4d4] sm:$0xff]
  %v248 = vld [vmem:[%s1 + $0x4dc] sm:$0xf]
  %v249 = vld [vmem:[%s1 + $0x4e0] sm:$0xff]
  %v250 = vld [vmem:[%s1 + $0x4e8] sm:$0xf]
  %v251 = vld [vmem:[%s1 + $0x4ec] sm:$0xff]
  %v252 = vld [vmem:[%s1 + $0x4f4] sm:$0xf]
  %v253 = vld [vmem:[%s1 + $0x4f8] sm:$0xff]
  %v254 = vld [vmem:[%s1 + $0x500] sm:$0xf]
  %v255 = vld [vmem:[%s1 + $0x504] sm:$0xff]
  %v256 = vld [vmem:[%s1 + $0x50c] sm:$0xf]
  %v257 = vld [vmem:[%s1 + $0x510] sm:$0xff]
  %v258 = vld [vmem:[%s1 + $0x518] sm:$0xf]
  %v259 = vld [vmem:[%s1 + $0x51c] sm:$0xff]
  %v260 = vld [vmem:[%s1 + $0x524] sm:$0xf]
  %v261 = vld [vmem:[%s1 + $0x528] sm:$0xff]
  %v262 = vld [vmem:[%s1 + $0x530] sm:$0xf]
  %v263 = vld [vmem:[%s1 + $0x534] sm:$0xff]
  %v264 = vld [vmem:[%s1 + $0x53c] sm:$0xf]
  %v265 = vld [vmem:[%s1 + $0x540] sm:$0xff]
  %v266 = vld [vmem:[%s1 + $0x548] sm:$0xf]
  %v267 = vld [vmem:[%s1 + $0x54c] sm:$0xff]
  %v268 = vld [vmem:[%s1 + $0x554] sm:$0xf]
  %v269 = vld [vmem:[%s1 + $0x558] sm:$0xff]
  %v270 = vld [vmem:[%s1 + $0x560] sm:$0xf]
  %v271 = vld [vmem:[%s1 + $0x564] sm:$0xff]
  %v272 = vld [vmem:[%s1 + $0x56c] sm:$0xf]
  %v273 = vld [vmem:[%s1 + $0x570] sm:$0xff]
  %v274 = vld [vmem:[%s1 + $0x578] sm:$0xf]
  %v275 = vld [vmem:[%s1 + $0x57c] sm:$0xff]
  %v276 = vld [vmem:[%s1 + $0x584] sm:$0xf]
  %v277 = vld [vmem:[%s1 + $0x588] sm:$0xff]
  %v278 = vld [vmem:[%s1 + $0x590] sm:$0xf]
  %v279 = vld [vmem:[%s1 + $0x594] sm:$0xff]
  %v280 = vld [vmem:[%s1 + $0x59c] sm:$0xf]
  %v281 = vld [vmem:[%s1 + $0x5a0] sm:$0xff]
  %v282 = vld [vmem:[%s1 + $0x5a8] sm:$0xf]
  %v283 = vld [vmem:[%s1 + $0x5ac] sm:$0xff]
  %v284 = vld [vmem:[%s1 + $0x5b4] sm:$0xf]
  %v285 = vld [vmem:[%s1 + $0x5b8] sm:$0xff]
  %v286 = vld [vmem:[%s1 + $0x5c0] sm:$0xf]
  %v287 = vld [vmem:[%s1 + $0x5c4] sm:$0xff]
  %v288 = vld [vmem:[%s1 + $0x5cc] sm:$0xf]
  %v289 = vld [vmem:[%s1 + $0x5d0] sm:$0xff]
  %v290 = vld [vmem:[%s1 + $0x5d8] sm:$0xf]
  %v291 = vld [vmem:[%s1 + $0x5dc] sm:$0xff]
  %v292 = vld [vmem:[%s1 + $0x5e4] sm:$0xf]
  %v293 = vld [vmem:[%s1 + $0x5e8] sm:$0xff]
  %v294 = vld [vmem:[%s1 + $0x5f0] sm:$0xf]
  %v295 = vld [vmem:[%s1 + $0x5f4] sm:$0xff]
  %v296 = vld [vmem:[%s1 + $0x5fc] sm:$0xf]
  %v297 = vld [vmem:[%s1 + $0x600] sm:$0xff]
  %v298 = vld [vmem:[%s1 + $0x608] sm:$0xf]
  %v299 = vld [vmem:[%s1 + $0x60c] sm:$0xff]
  %v300 = vld [vmem:[%s1 + $0x614] sm:$0xf]
  %v301 = vld [vmem:[%s1 + $0x618] sm:$0xff]
  %v302 = vld [vmem:[%s1 + $0x620] sm:$0xf]
  %v303 = vld [vmem:[%s1 + $0x624] sm:$0xff]
  %v304 = vld [vmem:[%s1 + $0x62c] sm:$0xf]
  %v305 = vld [vmem:[%s1 + $0x630] sm:$0xff]
  %v306 = vld [vmem:[%s1 + $0x638] sm:$0xf]
  %v307 = vld [vmem:[%s1 + $0x63c] sm:$0xff]
  %v308 = vld [vmem:[%s1 + $0x644] sm:$0xf]
  %v309 = vld [vmem:[%s1 + $0x648] sm:$0xff]
  %v310 = vld [vmem:[%s1 + $0x650] sm:$0xf]
  %v311 = vld [vmem:[%s1 + $0x654] sm:$0xff]
  %v312 = vld [vmem:[%s1 + $0x65c] sm:$0xf]
  %v313 = vld [vmem:[%s1 + $0x660] sm:$0xff]
  %v314 = vld [vmem:[%s1 + $0x668] sm:$0xf]
  %v315 = vld [vmem:[%s1 + $0x66c] sm:$0xff]
  %v316 = vld [vmem:[%s1 + $0x674] sm:$0xf]
  %v317 = vld [vmem:[%s1 + $0x678] sm:$0xff]
  %v318 = vld [vmem:[%s1 + $0x680] sm:$0xf]
  %v319 = vld [vmem:[%s1 + $0x684] sm:$0xff]
  %v320 = vld [vmem:[%s1 + $0x68c] sm:$0xf]
  %v321 = vld [vmem:[%s1 + $0x690] sm:$0xff]
  %v322 = vld [vmem:[%s1 + $0x698] sm:$0xf]
  %v323 = vld [vmem:[%s1 + $0x69c] sm:$0xff]
  %v324 = vld [vmem:[%s1 + $0x6a4] sm:$0xf]
  %v325 = vld [vmem:[%s1 + $0x6a8] sm:$0xff]
  %v326 = vld [vmem:[%s1 + $0x6b0] sm:$0xf]
  %v327 = vld [vmem:[%s1 + $0x6b4] sm:$0xff]
  %v328 = vld [vmem:[%s1 + $0x6bc] sm:$0xf]
  %v329 = vld [vmem:[%s1 + $0x6c0] sm:$0xff]
  %v330 = vld [vmem:[%s1 + $0x6c8] sm:$0xf]
  %v331 = vld [vmem:[%s1 + $0x6cc] sm:$0xff]
  %v332 = vld [vmem:[%s1 + $0x6d4] sm:$0xf]
  %v333 = vld [vmem:[%s1 + $0x6d8] sm:$0xff]
  %v334 = vld [vmem:[%s1 + $0x6e0] sm:$0xf]
  %v335 = vld [vmem:[%s1 + $0x6e4] sm:$0xff]
  %v336 = vld [vmem:[%s1 + $0x6ec] sm:$0xf]
  %v337 = vld [vmem:[%s1 + $0x6f0] sm:$0xff]
  %v338 = vld [vmem:[%s1 + $0x6f8] sm:$0xf]
  %v339 = vld [vmem:[%s1 + $0x6fc] sm:$0xff]
  %v340 = vld [vmem:[%s1 + $0x704] sm:$0xf]
  %v341 = vld [vmem:[%s1 + $0x708] sm:$0xff]
  %v342 = vld [vmem:[%s1 + $0x710] sm:$0xf]
  %v343 = vld [vmem:[%s1 + $0x714] sm:$0xff]
  %v344 = vld [vmem:[%s1 + $0x71c] sm:$0xf]
  %v345 = vld [vmem:[%s1 + $0x720] sm:$0xff]
  %v346 = vld [vmem:[%s1 + $0x728] sm:$0xf]
  %v347 = vld [vmem:[%s1 + $0x72c] sm:$0xff]
  %v348 = vld [vmem:[%s1 + $0x734] sm:$0xf]
  %v349 = vld [vmem:[%s1 + $0x738] sm:$0xff]
  %v350 = vld [vmem:[%s1 + $0x740] sm:$0xf]
  %v351 = vld [vmem:[%s1 + $0x744] sm:$0xff]
  %v352 = vld [vmem:[%s1 + $0x74c] sm:$0xf]
  %v353 = vld [vmem:[%s1 + $0x750] sm:$0xff]
  %v354 = vld [vmem:[%s1 + $0x758] sm:$0xf]
  %v355 = vld [vmem:[%s1 + $0x75c] sm:$0xff]
  %v356 = vld [vmem:[%s1 + $0x764] sm:$0xf]
  %v357 = vld [vmem:[%s1 + $0x768] sm:$0xff]
  %v358 = vld [vmem:[%s1 + $0x770] sm:$0xf]
  %v359 = vld [vmem:[%s1 + $0x774] sm:$0xff]
  %v360 = vld [vmem:[%s1 + $0x77c] sm:$0xf]
  %v361 = vld [vmem:[%s1 + $0x780] sm:$0xff]
  %v362 = vld [vmem:[%s1 + $0x788] sm:$0xf]
  %v363 = vld [vmem:[%s1 + $0x78c] sm:$0xff]
  %v364 = vld [vmem:[%s1 + $0x794] sm:$0xf]
  %v365 = vld [vmem:[%s1 + $0x798] sm:$0xff]
  %v366 = vld [vmem:[%s1 + $0x7a0] sm:$0xf]
  %v367 = vld [vmem:[%s1 + $0x7a4] sm:$0xff]
  %v368 = vld [vmem:[%s1 + $0x7ac] sm:$0xf]
  %v369 = vld [vmem:[%s1 + $0x7b0] sm:$0xff]
  %v370 = vld [vmem:[%s1 + $0x7b8] sm:$0xf]
  %v371 = vld [vmem:[%s1 + $0x7bc] sm:$0xff]
  %v372 = vld [vmem:[%s1 + $0x7c4] sm:$0xf]
  %v373 = vld [vmem:[%s1 + $0x7c8] sm:$0xff]
  %v374 = vld [vmem:[%s1 + $0x7d0] sm:$0xf]
  %v375 = vld [vmem:[%s1 + $0x7d4] sm:$0xff]
  %v376 = vld [vmem:[%s1 + $0x7dc] sm:$0xf]
  %v377 = vld [vmem:[%s1 + $0x7e0] sm:$0xff]
  %v378 = vld [vmem:[%s1 + $0x7e8] sm:$0xf]
  %v379 = vld [vmem:[%s1 + $0x7ec] sm:$0xff]
  %v380 = vld [vmem:[%s1 + $0x7f4] sm:$0xf]
  %v381 = vld [vmem:[%s1 + $0x7f8] sm:$0xff]
  %v382 = vld [vmem:[%s1 + $0x800] sm:$0xf]
  %v383 = vld [vmem:[%s1 + $0x804] sm:$0xff]
  %v384 = vld [vmem:[%s1 + $0x80c] sm:$0xf]
  %v385 = vld [vmem:[%s1 + $0x810] sm:$0xff]
  %v386 = vld [vmem:[%s1 + $0x818] sm:$0xf]
  %v387 = vld [vmem:[%s1 + $0x81c] sm:$0xff]
  %v388 = vld [vmem:[%s1 + $0x824] sm:$0xf]
  %v389 = vld [vmem:[%s1 + $0x828] sm:$0xff]
  %v390 = vld [vmem:[%s1 + $0x830] sm:$0xf]
  %v391 = vld [vmem:[%s1 + $0x834] sm:$0xff]
  %v392 = vld [vmem:[%s1 + $0x83c] sm:$0xf]
  %v393 = vld [vmem:[%s1 + $0x840] sm:$0xff]
  %v394 = vld [vmem:[%s1 + $0x848] sm:$0xf]
  %v395 = vld [vmem:[%s1 + $0x84c] sm:$0xff]
  %v396 = vld [vmem:[%s1 + $0x854] sm:$0xf]
  %v397 = vld [vmem:[%s1 + $0x858] sm:$0xff]
  %v398 = vld [vmem:[%s1 + $0x860] sm:$0xf]
  %v399 = vld [vmem:[%s1 + $0x864] sm:$0xff]
  %v400 = vld [vmem:[%s1 + $0x86c] sm:$0xf]
  %v401 = vld [vmem:[%s1 + $0x870] sm:$0xff]
  %v402 = vld [vmem:[%s1 + $0x878] sm:$0xf]
  %v403 = vld [vmem:[%s1 + $0x87c] sm:$0xff]
  %v404 = vld [vmem:[%s1 + $0x884] sm:$0xf]
  %v405 = vld [vmem:[%s1 + $0x888] sm:$0xff]
  %v406 = vld [vmem:[%s1 + $0x890] sm:$0xf]
  %v407 = vld [vmem:[%s1 + $0x894] sm:$0xff]
  %v408 = vld [vmem:[%s1 + $0x89c] sm:$0xf]
  %v409 = vld [vmem:[%s1 + $0x8a0] sm:$0xff]
  %v410 = vld [vmem:[%s1 + $0x8a8] sm:$0xf]
  %v411 = vld [vmem:[%s1 + $0x8ac] sm:$0xff]
  %v412 = vld [vmem:[%s1 + $0x8b4] sm:$0xf]
  %v413 = vld [vmem:[%s1 + $0x8b8] sm:$0xff]
  %v414 = vld [vmem:[%s1 + $0x8c0] sm:$0xf]
  %v415 = vld [vmem:[%s1 + $0x8c4] sm:$0xff]
  %v416 = vld [vmem:[%s1 + $0x8cc] sm:$0xf]
  %v417 = vld [vmem:[%s1 + $0x8d0] sm:$0xff]
  %v418 = vld [vmem:[%s1 + $0x8d8] sm:$0xf]
  %v419 = vld [vmem:[%s1 + $0x8dc] sm:$0xff]
  %v420 = vld [vmem:[%s1 + $0x8e4] sm:$0xf]
  %v421 = vld [vmem:[%s1 + $0x8e8] sm:$0xff]
  %v422 = vld [vmem:[%s1 + $0x8f0] sm:$0xf]
  %v423 = vld [vmem:[%s1 + $0x8f4] sm:$0xff]
  %v424 = vld [vmem:[%s1 + $0x8fc] sm:$0xf]
  %v425 = vld [vmem:[%s1 + $0x900] sm:$0xff]
  %v426 = vld [vmem:[%s1 + $0x908] sm:$0xf]
  %v427 = vld [vmem:[%s1 + $0x90c] sm:$0xff]
  %v428 = vld [vmem:[%s1 + $0x914] sm:$0xf]
  %v429 = vld [vmem:[%s1 + $0x918] sm:$0xff]
  %v430 = vld [vmem:[%s1 + $0x920] sm:$0xf]
  %v431 = vld [vmem:[%s1 + $0x924] sm:$0xff]
  %v432 = vld [vmem:[%s1 + $0x92c] sm:$0xf]
  %v433 = vld [vmem:[%s1 + $0x930] sm:$0xff]
  %v434 = vld [vmem:[%s1 + $0x938] sm:$0xf]
  %v435 = vld [vmem:[%s1 + $0x93c] sm:$0xff]
  %v436 = vld [vmem:[%s1 + $0x944] sm:$0xf]
  %v437 = vld [vmem:[%s1 + $0x948] sm:$0xff]
  %v438 = vld [vmem:[%s1 + $0x950] sm:$0xf]
  %v439 = vld [vmem:[%s1 + $0x954] sm:$0xff]
  %v440 = vld [vmem:[%s1 + $0x95c] sm:$0xf]
  %v441 = vld [vmem:[%s2] sm:$0x7]
  %v443 = vlaneseq
  %v444 = vshrl.u32 %v443, 7
  %v445 = vsub.s32 0, %v444
  %v446 = vrot.slane %v441, %v445
  %v447 = vlaneseq
  %v448 = vshrl.u32 %v447, 7
  %v449 = vsub.s32 1, %v448
  %v450 = vrot.slane %v441, %v449
  %v451 = vlaneseq
  %v452 = vshrl.u32 %v451, 7
  %v453 = vsub.s32 2, %v452
  %v454 = vrot.slane %v441, %v453
  %v472 = vunpack.c.l.b16 %v27
  %v473 = vunpack.c.h.b16 %v27
  %v474 = vunpack.c.l.b16 %v28
  %v475 = vunpack.c.h.b16 %v28
  %v476 = vunpack.c.l.b16 %v29
  %v477 = vunpack.c.h.b16 %v29
  %v478 = vunpack.c.l.b16 %v30
  %v479 = vunpack.c.h.b16 %v30
  %v480 = vunpack.c.l.b16 %v31
  %v481 = vunpack.c.h.b16 %v31
  %v482 = vunpack.c.l.b16 %v32
  %v483 = vunpack.c.h.b16 %v32
  %v484 = vunpack.c.l.b16 %v33
  %v485 = vunpack.c.l.b16 %v34
  %v486 = vunpack.c.h.b16 %v34
  %v487 = vunpack.c.l.b16 %v35
  %v488 = vunpack.c.h.b16 %v35
  %v489 = vunpack.c.l.b16 %v36
  %v490 = vunpack.c.h.b16 %v36
  %v491 = vunpack.c.l.b16 %v37
  %v492 = vunpack.c.h.b16 %v37
  %v493 = vunpack.c.l.b16 %v38
  %v494 = vunpack.c.h.b16 %v38
  %v495 = vunpack.c.l.b16 %v39
  %v496 = vunpack.c.h.b16 %v39
  %v497 = vunpack.c.l.b16 %v40
  %v498 = vpack.c.b16 %v485, %v472
  %v499 = vpack.c.b16 %v486, %v473
  %v500 = vpack.c.b16 %v487, %v474
  %v501 = vpack.c.b16 %v488, %v475
  %v502 = vpack.c.b16 %v489, %v476
  %v503 = vpack.c.b16 %v490, %v477
  %v504 = vpack.c.b16 %v491, %v478
  %v505 = vpack.c.b16 %v492, %v479
  %v506 = vpack.c.b16 %v493, %v480
  %v507 = vpack.c.b16 %v494, %v481
  %v508 = vpack.c.b16 %v495, %v482
  %v509 = vpack.c.b16 %v496, %v483
  %v510 = vpack.c.b16 %v497, %v484
  %v923 = vunpack.c.l.b16 %v41
  %v924 = vunpack.c.h.b16 %v41
  %v925 = vunpack.c.l.b16 %v42
  %v926 = vunpack.c.l.b16 %v43
  %v927 = vunpack.c.h.b16 %v43
  %v928 = vunpack.c.l.b16 %v44
  %v929 = vunpack.c.l.b16 %v45
  %v930 = vunpack.c.h.b16 %v45
  %v931 = vunpack.c.l.b16 %v46
  %v932 = vunpack.c.l.b16 %v47
  %v933 = vunpack.c.h.b16 %v47
  %v934 = vunpack.c.l.b16 %v48
  %v935 = vunpack.c.l.b16 %v49
  %v936 = vunpack.c.h.b16 %v49
  %v937 = vunpack.c.l.b16 %v50
  %v938 = vunpack.c.l.b16 %v51
  %v939 = vunpack.c.h.b16 %v51
  %v940 = vunpack.c.l.b16 %v52
  %v941 = vunpack.c.l.b16 %v53
  %v942 = vunpack.c.h.b16 %v53
  %v943 = vunpack.c.l.b16 %v54
  %v944 = vunpack.c.l.b16 %v55
  %v945 = vunpack.c.h.b16 %v55
  %v946 = vunpack.c.l.b16 %v56
  %v947 = vunpack.c.l.b16 %v57
  %v948 = vunpack.c.h.b16 %v57
  %v949 = vunpack.c.l.b16 %v58
  %v950 = vunpack.c.l.b16 %v59
  %v951 = vunpack.c.h.b16 %v59
  %v952 = vunpack.c.l.b16 %v60
  %v953 = vunpack.c.l.b16 %v61
  %v954 = vunpack.c.h.b16 %v61
  %v955 = vunpack.c.l.b16 %v62
  %v956 = vunpack.c.l.b16 %v63
  %v957 = vunpack.c.h.b16 %v63
  %v958 = vunpack.c.l.b16 %v64
  %v959 = vunpack.c.l.b16 %v65
  %v960 = vunpack.c.h.b16 %v65
  %v961 = vunpack.c.l.b16 %v66
  %v962 = vunpack.c.l.b16 %v67
  %v963 = vunpack.c.h.b16 %v67
  %v964 = vunpack.c.l.b16 %v68
  %v965 = vunpack.c.l.b16 %v69
  %v966 = vunpack.c.h.b16 %v69
  %v967 = vunpack.c.l.b16 %v70
  %v968 = vunpack.c.l.b16 %v71
  %v969 = vunpack.c.h.b16 %v71
  %v970 = vunpack.c.l.b16 %v72
  %v971 = vunpack.c.l.b16 %v73
  %v972 = vunpack.c.h.b16 %v73
  %v973 = vunpack.c.l.b16 %v74
  %v974 = vunpack.c.l.b16 %v75
  %v975 = vunpack.c.h.b16 %v75
  %v976 = vunpack.c.l.b16 %v76
  %v977 = vunpack.c.l.b16 %v77
  %v978 = vunpack.c.h.b16 %v77
  %v979 = vunpack.c.l.b16 %v78
  %v980 = vunpack.c.l.b16 %v79
  %v981 = vunpack.c.h.b16 %v79
  %v982 = vunpack.c.l.b16 %v80
  %v983 = vunpack.c.l.b16 %v81
  %v984 = vunpack.c.h.b16 %v81
  %v985 = vunpack.c.l.b16 %v82
  %v986 = vunpack.c.l.b16 %v83
  %v987 = vunpack.c.h.b16 %v83
  %v988 = vunpack.c.l.b16 %v84
  %v989 = vunpack.c.l.b16 %v85
  %v990 = vunpack.c.h.b16 %v85
  %v991 = vunpack.c.l.b16 %v86
  %v992 = vunpack.c.l.b16 %v87
  %v993 = vunpack.c.h.b16 %v87
  %v994 = vunpack.c.l.b16 %v88
  %v995 = vunpack.c.l.b16 %v89
  %v996 = vunpack.c.h.b16 %v89
  %v997 = vunpack.c.l.b16 %v90
  %v998 = vunpack.c.l.b16 %v91
  %v999 = vunpack.c.h.b16 %v91
  %v1000 = vunpack.c.l.b16 %v92
  %v1001 = vunpack.c.l.b16 %v93
  %v1002 = vunpack.c.h.b16 %v93
  %v1003 = vunpack.c.l.b16 %v94
  %v1004 = vunpack.c.l.b16 %v95
  %v1005 = vunpack.c.h.b16 %v95
  %v1006 = vunpack.c.l.b16 %v96
  %v1007 = vunpack.c.l.b16 %v97
  %v1008 = vunpack.c.h.b16 %v97
  %v1009 = vunpack.c.l.b16 %v98
  %v1010 = vunpack.c.l.b16 %v99
  %v1011 = vunpack.c.h.b16 %v99
  %v1012 = vunpack.c.l.b16 %v100
  %v1013 = vunpack.c.l.b16 %v101
  %v1014 = vunpack.c.h.b16 %v101
  %v1015 = vunpack.c.l.b16 %v102
  %v1016 = vunpack.c.l.b16 %v103
  %v1017 = vunpack.c.h.b16 %v103
  %v1018 = vunpack.c.l.b16 %v104
  %v1019 = vunpack.c.l.b16 %v105
  %v1020 = vunpack.c.h.b16 %v105
  %v1021 = vunpack.c.l.b16 %v106
  %v1022 = vunpack.c.l.b16 %v107
  %v1023 = vunpack.c.h.b16 %v107
  %v1024 = vunpack.c.l.b16 %v108
  %v1025 = vunpack.c.l.b16 %v109
  %v1026 = vunpack.c.h.b16 %v109
  %v1027 = vunpack.c.l.b16 %v110
  %v1028 = vunpack.c.l.b16 %v111
  %v1029 = vunpack.c.h.b16 %v111
  %v1030 = vunpack.c.l.b16 %v112
  %v1031 = vunpack.c.l.b16 %v113
  %v1032 = vunpack.c.h.b16 %v113
  %v1033 = vunpack.c.l.b16 %v114
  %v1034 = vunpack.c.l.b16 %v115
  %v1035 = vunpack.c.h.b16 %v115
  %v1036 = vunpack.c.l.b16 %v116
  %v1037 = vunpack.c.l.b16 %v117
  %v1038 = vunpack.c.h.b16 %v117
  %v1039 = vunpack.c.l.b16 %v118
  %v1040 = vunpack.c.l.b16 %v119
  %v1041 = vunpack.c.h.b16 %v119
  %v1042 = vunpack.c.l.b16 %v120
  %v1043 = vunpack.c.l.b16 %v121
  %v1044 = vunpack.c.h.b16 %v121
  %v1045 = vunpack.c.l.b16 %v122
  %v1046 = vunpack.c.l.b16 %v123
  %v1047 = vunpack.c.h.b16 %v123
  %v1048 = vunpack.c.l.b16 %v124
  %v1049 = vunpack.c.l.b16 %v125
  %v1050 = vunpack.c.h.b16 %v125
  %v1051 = vunpack.c.l.b16 %v126
  %v1052 = vunpack.c.l.b16 %v127
  %v1053 = vunpack.c.h.b16 %v127
  %v1054 = vunpack.c.l.b16 %v128
  %v1055 = vunpack.c.l.b16 %v129
  %v1056 = vunpack.c.h.b16 %v129
  %v1057 = vunpack.c.l.b16 %v130
  %v1058 = vunpack.c.l.b16 %v131
  %v1059 = vunpack.c.h.b16 %v131
  %v1060 = vunpack.c.l.b16 %v132
  %v1061 = vunpack.c.l.b16 %v133
  %v1062 = vunpack.c.h.b16 %v133
  %v1063 = vunpack.c.l.b16 %v134
  %v1064 = vunpack.c.l.b16 %v135
  %v1065 = vunpack.c.h.b16 %v135
  %v1066 = vunpack.c.l.b16 %v136
  %v1067 = vunpack.c.l.b16 %v137
  %v1068 = vunpack.c.h.b16 %v137
  %v1069 = vunpack.c.l.b16 %v138
  %v1070 = vunpack.c.l.b16 %v139
  %v1071 = vunpack.c.h.b16 %v139
  %v1072 = vunpack.c.l.b16 %v140
  %v1073 = vunpack.c.l.b16 %v141
  %v1074 = vunpack.c.h.b16 %v141
  %v1075 = vunpack.c.l.b16 %v142
  %v1076 = vunpack.c.l.b16 %v143
  %v1077 = vunpack.c.h.b16 %v143
  %v1078 = vunpack.c.l.b16 %v144
  %v1079 = vunpack.c.l.b16 %v145
  %v1080 = vunpack.c.h.b16 %v145
  %v1081 = vunpack.c.l.b16 %v146
  %v1082 = vunpack.c.l.b16 %v147
  %v1083 = vunpack.c.h.b16 %v147
  %v1084 = vunpack.c.l.b16 %v148
  %v1085 = vunpack.c.l.b16 %v149
  %v1086 = vunpack.c.h.b16 %v149
  %v1087 = vunpack.c.l.b16 %v150
  %v1088 = vunpack.c.l.b16 %v151
  %v1089 = vunpack.c.h.b16 %v151
  %v1090 = vunpack.c.l.b16 %v152
  %v1091 = vunpack.c.l.b16 %v153
  %v1092 = vunpack.c.h.b16 %v153
  %v1093 = vunpack.c.l.b16 %v154
  %v1094 = vunpack.c.l.b16 %v155
  %v1095 = vunpack.c.h.b16 %v155
  %v1096 = vunpack.c.l.b16 %v156
  %v1097 = vunpack.c.l.b16 %v157
  %v1098 = vunpack.c.h.b16 %v157
  %v1099 = vunpack.c.l.b16 %v158
  %v1100 = vunpack.c.l.b16 %v159
  %v1101 = vunpack.c.h.b16 %v159
  %v1102 = vunpack.c.l.b16 %v160
  %v1103 = vunpack.c.l.b16 %v161
  %v1104 = vunpack.c.h.b16 %v161
  %v1105 = vunpack.c.l.b16 %v162
  %v1106 = vunpack.c.l.b16 %v163
  %v1107 = vunpack.c.h.b16 %v163
  %v1108 = vunpack.c.l.b16 %v164
  %v1109 = vunpack.c.l.b16 %v165
  %v1110 = vunpack.c.h.b16 %v165
  %v1111 = vunpack.c.l.b16 %v166
  %v1112 = vunpack.c.l.b16 %v167
  %v1113 = vunpack.c.h.b16 %v167
  %v1114 = vunpack.c.l.b16 %v168
  %v1115 = vunpack.c.l.b16 %v169
  %v1116 = vunpack.c.h.b16 %v169
  %v1117 = vunpack.c.l.b16 %v170
  %v1118 = vunpack.c.l.b16 %v171
  %v1119 = vunpack.c.h.b16 %v171
  %v1120 = vunpack.c.l.b16 %v172
  %v1121 = vunpack.c.l.b16 %v173
  %v1122 = vunpack.c.h.b16 %v173
  %v1123 = vunpack.c.l.b16 %v174
  %v1124 = vunpack.c.l.b16 %v175
  %v1125 = vunpack.c.h.b16 %v175
  %v1126 = vunpack.c.l.b16 %v176
  %v1127 = vunpack.c.l.b16 %v177
  %v1128 = vunpack.c.h.b16 %v177
  %v1129 = vunpack.c.l.b16 %v178
  %v1130 = vunpack.c.l.b16 %v179
  %v1131 = vunpack.c.h.b16 %v179
  %v1132 = vunpack.c.l.b16 %v180
  %v1133 = vunpack.c.l.b16 %v181
  %v1134 = vunpack.c.h.b16 %v181
  %v1135 = vunpack.c.l.b16 %v182
  %v1136 = vunpack.c.l.b16 %v183
  %v1137 = vunpack.c.h.b16 %v183
  %v1138 = vunpack.c.l.b16 %v184
  %v1139 = vunpack.c.l.b16 %v185
  %v1140 = vunpack.c.h.b16 %v185
  %v1141 = vunpack.c.l.b16 %v186
  %v1142 = vunpack.c.l.b16 %v187
  %v1143 = vunpack.c.h.b16 %v187
  %v1144 = vunpack.c.l.b16 %v188
  %v1145 = vunpack.c.l.b16 %v189
  %v1146 = vunpack.c.h.b16 %v189
  %v1147 = vunpack.c.l.b16 %v190
  %v1148 = vunpack.c.l.b16 %v191
  %v1149 = vunpack.c.h.b16 %v191
  %v1150 = vunpack.c.l.b16 %v192
  %v1151 = vunpack.c.l.b16 %v193
  %v1152 = vunpack.c.h.b16 %v193
  %v1153 = vunpack.c.l.b16 %v194
  %v1154 = vunpack.c.l.b16 %v195
  %v1155 = vunpack.c.h.b16 %v195
  %v1156 = vunpack.c.l.b16 %v196
  %v1157 = vunpack.c.l.b16 %v197
  %v1158 = vunpack.c.h.b16 %v197
  %v1159 = vunpack.c.l.b16 %v198
  %v1160 = vunpack.c.l.b16 %v199
  %v1161 = vunpack.c.h.b16 %v199
  %v1162 = vunpack.c.l.b16 %v200
  %v1163 = vunpack.c.l.b16 %v201
  %v1164 = vunpack.c.h.b16 %v201
  %v1165 = vunpack.c.l.b16 %v202
  %v1166 = vunpack.c.l.b16 %v203
  %v1167 = vunpack.c.h.b16 %v203
  %v1168 = vunpack.c.l.b16 %v204
  %v1169 = vunpack.c.l.b16 %v205
  %v1170 = vunpack.c.h.b16 %v205
  %v1171 = vunpack.c.l.b16 %v206
  %v1172 = vunpack.c.l.b16 %v207
  %v1173 = vunpack.c.h.b16 %v207
  %v1174 = vunpack.c.l.b16 %v208
  %v1175 = vunpack.c.l.b16 %v209
  %v1176 = vunpack.c.h.b16 %v209
  %v1177 = vunpack.c.l.b16 %v210
  %v1178 = vunpack.c.l.b16 %v211
  %v1179 = vunpack.c.h.b16 %v211
  %v1180 = vunpack.c.l.b16 %v212
  %v1181 = vunpack.c.l.b16 %v213
  %v1182 = vunpack.c.h.b16 %v213
  %v1183 = vunpack.c.l.b16 %v214
  %v1184 = vunpack.c.l.b16 %v215
  %v1185 = vunpack.c.h.b16 %v215
  %v1186 = vunpack.c.l.b16 %v216
  %v1187 = vunpack.c.l.b16 %v217
  %v1188 = vunpack.c.h.b16 %v217
  %v1189 = vunpack.c.l.b16 %v218
  %v1190 = vunpack.c.l.b16 %v219
  %v1191 = vunpack.c.h.b16 %v219
  %v1192 = vunpack.c.l.b16 %v220
  %v1193 = vunpack.c.l.b16 %v221
  %v1194 = vunpack.c.h.b16 %v221
  %v1195 = vunpack.c.l.b16 %v222
  %v1196 = vunpack.c.l.b16 %v223
  %v1197 = vunpack.c.h.b16 %v223
  %v1198 = vunpack.c.l.b16 %v224
  %v1199 = vunpack.c.l.b16 %v225
  %v1200 = vunpack.c.h.b16 %v225
  %v1201 = vunpack.c.l.b16 %v226
  %v1202 = vunpack.c.l.b16 %v227
  %v1203 = vunpack.c.h.b16 %v227
  %v1204 = vunpack.c.l.b16 %v228
  %v1205 = vunpack.c.l.b16 %v229
  %v1206 = vunpack.c.h.b16 %v229
  %v1207 = vunpack.c.l.b16 %v230
  %v1208 = vunpack.c.l.b16 %v231
  %v1209 = vunpack.c.h.b16 %v231
  %v1210 = vunpack.c.l.b16 %v232
  %v1211 = vunpack.c.l.b16 %v233
  %v1212 = vunpack.c.h.b16 %v233
  %v1213 = vunpack.c.l.b16 %v234
  %v1214 = vunpack.c.l.b16 %v235
  %v1215 = vunpack.c.h.b16 %v235
  %v1216 = vunpack.c.l.b16 %v236
  %v1217 = vunpack.c.l.b16 %v237
  %v1218 = vunpack.c.h.b16 %v237
  %v1219 = vunpack.c.l.b16 %v238
  %v1220 = vunpack.c.l.b16 %v239
  %v1221 = vunpack.c.h.b16 %v239
  %v1222 = vunpack.c.l.b16 %v240
  %v1223 = vunpack.c.l.b16 %v241
  %v1224 = vunpack.c.h.b16 %v241
  %v1225 = vunpack.c.l.b16 %v242
  %v1226 = vunpack.c.l.b16 %v243
  %v1227 = vunpack.c.h.b16 %v243
  %v1228 = vunpack.c.l.b16 %v244
  %v1229 = vunpack.c.l.b16 %v245
  %v1230 = vunpack.c.h.b16 %v245
  %v1231 = vunpack.c.l.b16 %v246
  %v1232 = vunpack.c.l.b16 %v247
  %v1233 = vunpack.c.h.b16 %v247
  %v1234 = vunpack.c.l.b16 %v248
  %v1235 = vunpack.c.l.b16 %v249
  %v1236 = vunpack.c.h.b16 %v249
  %v1237 = vunpack.c.l.b16 %v250
  %v1238 = vunpack.c.l.b16 %v251
  %v1239 = vunpack.c.h.b16 %v251
  %v1240 = vunpack.c.l.b16 %v252
  %v1241 = vunpack.c.l.b16 %v253
  %v1242 = vunpack.c.h.b16 %v253
  %v1243 = vunpack.c.l.b16 %v254
  %v1244 = vunpack.c.l.b16 %v255
  %v1245 = vunpack.c.h.b16 %v255
  %v1246 = vunpack.c.l.b16 %v256
  %v1247 = vunpack.c.l.b16 %v257
  %v1248 = vunpack.c.h.b16 %v257
  %v1249 = vunpack.c.l.b16 %v258
  %v1250 = vunpack.c.l.b16 %v259
  %v1251 = vunpack.c.h.b16 %v259
  %v1252 = vunpack.c.l.b16 %v260
  %v1253 = vunpack.c.l.b16 %v261
  %v1254 = vunpack.c.h.b16 %v261
  %v1255 = vunpack.c.l.b16 %v262
  %v1256 = vunpack.c.l.b16 %v263
  %v1257 = vunpack.c.h.b16 %v263
  %v1258 = vunpack.c.l.b16 %v264
  %v1259 = vunpack.c.l.b16 %v265
  %v1260 = vunpack.c.h.b16 %v265
  %v1261 = vunpack.c.l.b16 %v266
  %v1262 = vunpack.c.l.b16 %v267
  %v1263 = vunpack.c.h.b16 %v267
  %v1264 = vunpack.c.l.b16 %v268
  %v1265 = vunpack.c.l.b16 %v269
  %v1266 = vunpack.c.h.b16 %v269
  %v1267 = vunpack.c.l.b16 %v270
  %v1268 = vunpack.c.l.b16 %v271
  %v1269 = vunpack.c.h.b16 %v271
  %v1270 = vunpack.c.l.b16 %v272
  %v1271 = vunpack.c.l.b16 %v273
  %v1272 = vunpack.c.h.b16 %v273
  %v1273 = vunpack.c.l.b16 %v274
  %v1274 = vunpack.c.l.b16 %v275
  %v1275 = vunpack.c.h.b16 %v275
  %v1276 = vunpack.c.l.b16 %v276
  %v1277 = vunpack.c.l.b16 %v277
  %v1278 = vunpack.c.h.b16 %v277
  %v1279 = vunpack.c.l.b16 %v278
  %v1280 = vunpack.c.l.b16 %v279
  %v1281 = vunpack.c.h.b16 %v279
  %v1282 = vunpack.c.l.b16 %v280
  %v1283 = vunpack.c.l.b16 %v281
  %v1284 = vunpack.c.h.b16 %v281
  %v1285 = vunpack.c.l.b16 %v282
  %v1286 = vunpack.c.l.b16 %v283
  %v1287 = vunpack.c.h.b16 %v283
  %v1288 = vunpack.c.l.b16 %v284
  %v1289 = vunpack.c.l.b16 %v285
  %v1290 = vunpack.c.h.b16 %v285
  %v1291 = vunpack.c.l.b16 %v286
  %v1292 = vunpack.c.l.b16 %v287
  %v1293 = vunpack.c.h.b16 %v287
  %v1294 = vunpack.c.l.b16 %v288
  %v1295 = vunpack.c.l.b16 %v289
  %v1296 = vunpack.c.h.b16 %v289
  %v1297 = vunpack.c.l.b16 %v290
  %v1298 = vunpack.c.l.b16 %v291
  %v1299 = vunpack.c.h.b16 %v291
  %v1300 = vunpack.c.l.b16 %v292
  %v1301 = vunpack.c.l.b16 %v293
  %v1302 = vunpack.c.h.b16 %v293
  %v1303 = vunpack.c.l.b16 %v294
  %v1304 = vunpack.c.l.b16 %v295
  %v1305 = vunpack.c.h.b16 %v295
  %v1306 = vunpack.c.l.b16 %v296
  %v1307 = vunpack.c.l.b16 %v297
  %v1308 = vunpack.c.h.b16 %v297
  %v1309 = vunpack.c.l.b16 %v298
  %v1310 = vunpack.c.l.b16 %v299
  %v1311 = vunpack.c.h.b16 %v299
  %v1312 = vunpack.c.l.b16 %v300
  %v1313 = vunpack.c.l.b16 %v301
  %v1314 = vunpack.c.h.b16 %v301
  %v1315 = vunpack.c.l.b16 %v302
  %v1316 = vunpack.c.l.b16 %v303
  %v1317 = vunpack.c.h.b16 %v303
  %v1318 = vunpack.c.l.b16 %v304
  %v1319 = vunpack.c.l.b16 %v305
  %v1320 = vunpack.c.h.b16 %v305
  %v1321 = vunpack.c.l.b16 %v306
  %v1322 = vunpack.c.l.b16 %v307
  %v1323 = vunpack.c.h.b16 %v307
  %v1324 = vunpack.c.l.b16 %v308
  %v1325 = vunpack.c.l.b16 %v309
  %v1326 = vunpack.c.h.b16 %v309
  %v1327 = vunpack.c.l.b16 %v310
  %v1328 = vunpack.c.l.b16 %v311
  %v1329 = vunpack.c.h.b16 %v311
  %v1330 = vunpack.c.l.b16 %v312
  %v1331 = vunpack.c.l.b16 %v313
  %v1332 = vunpack.c.h.b16 %v313
  %v1333 = vunpack.c.l.b16 %v314
  %v1334 = vunpack.c.l.b16 %v315
  %v1335 = vunpack.c.h.b16 %v315
  %v1336 = vunpack.c.l.b16 %v316
  %v1337 = vunpack.c.l.b16 %v317
  %v1338 = vunpack.c.h.b16 %v317
  %v1339 = vunpack.c.l.b16 %v318
  %v1340 = vunpack.c.l.b16 %v319
  %v1341 = vunpack.c.h.b16 %v319
  %v1342 = vunpack.c.l.b16 %v320
  %v1343 = vunpack.c.l.b16 %v321
  %v1344 = vunpack.c.h.b16 %v321
  %v1345 = vunpack.c.l.b16 %v322
  %v1346 = vunpack.c.l.b16 %v323
  %v1347 = vunpack.c.h.b16 %v323
  %v1348 = vunpack.c.l.b16 %v324
  %v1349 = vunpack.c.l.b16 %v325
  %v1350 = vunpack.c.h.b16 %v325
  %v1351 = vunpack.c.l.b16 %v326
  %v1352 = vunpack.c.l.b16 %v327
  %v1353 = vunpack.c.h.b16 %v327
  %v1354 = vunpack.c.l.b16 %v328
  %v1355 = vunpack.c.l.b16 %v329
  %v1356 = vunpack.c.h.b16 %v329
  %v1357 = vunpack.c.l.b16 %v330
  %v1358 = vunpack.c.l.b16 %v331
  %v1359 = vunpack.c.h.b16 %v331
  %v1360 = vunpack.c.l.b16 %v332
  %v1361 = vunpack.c.l.b16 %v333
  %v1362 = vunpack.c.h.b16 %v333
  %v1363 = vunpack.c.l.b16 %v334
  %v1364 = vunpack.c.l.b16 %v335
  %v1365 = vunpack.c.h.b16 %v335
  %v1366 = vunpack.c.l.b16 %v336
  %v1367 = vunpack.c.l.b16 %v337
  %v1368 = vunpack.c.h.b16 %v337
  %v1369 = vunpack.c.l.b16 %v338
  %v1370 = vunpack.c.l.b16 %v339
  %v1371 = vunpack.c.h.b16 %v339
  %v1372 = vunpack.c.l.b16 %v340
  %v1373 = vunpack.c.l.b16 %v341
  %v1374 = vunpack.c.h.b16 %v341
  %v1375 = vunpack.c.l.b16 %v342
  %v1376 = vunpack.c.l.b16 %v343
  %v1377 = vunpack.c.h.b16 %v343
  %v1378 = vunpack.c.l.b16 %v344
  %v1379 = vunpack.c.l.b16 %v345
  %v1380 = vunpack.c.h.b16 %v345
  %v1381 = vunpack.c.l.b16 %v346
  %v1382 = vunpack.c.l.b16 %v347
  %v1383 = vunpack.c.h.b16 %v347
  %v1384 = vunpack.c.l.b16 %v348
  %v1385 = vunpack.c.l.b16 %v349
  %v1386 = vunpack.c.h.b16 %v349
  %v1387 = vunpack.c.l.b16 %v350
  %v1388 = vunpack.c.l.b16 %v351
  %v1389 = vunpack.c.h.b16 %v351
  %v1390 = vunpack.c.l.b16 %v352
  %v1391 = vunpack.c.l.b16 %v353
  %v1392 = vunpack.c.h.b16 %v353
  %v1393 = vunpack.c.l.b16 %v354
  %v1394 = vunpack.c.l.b16 %v355
  %v1395 = vunpack.c.h.b16 %v355
  %v1396 = vunpack.c.l.b16 %v356
  %v1397 = vunpack.c.l.b16 %v357
  %v1398 = vunpack.c.h.b16 %v357
  %v1399 = vunpack.c.l.b16 %v358
  %v1400 = vunpack.c.l.b16 %v359
  %v1401 = vunpack.c.h.b16 %v359
  %v1402 = vunpack.c.l.b16 %v360
  %v1403 = vunpack.c.l.b16 %v361
  %v1404 = vunpack.c.h.b16 %v361
  %v1405 = vunpack.c.l.b16 %v362
  %v1406 = vunpack.c.l.b16 %v363
  %v1407 = vunpack.c.h.b16 %v363
  %v1408 = vunpack.c.l.b16 %v364
  %v1409 = vunpack.c.l.b16 %v365
  %v1410 = vunpack.c.h.b16 %v365
  %v1411 = vunpack.c.l.b16 %v366
  %v1412 = vunpack.c.l.b16 %v367
  %v1413 = vunpack.c.h.b16 %v367
  %v1414 = vunpack.c.l.b16 %v368
  %v1415 = vunpack.c.l.b16 %v369
  %v1416 = vunpack.c.h.b16 %v369
  %v1417 = vunpack.c.l.b16 %v370
  %v1418 = vunpack.c.l.b16 %v371
  %v1419 = vunpack.c.h.b16 %v371
  %v1420 = vunpack.c.l.b16 %v372
  %v1421 = vunpack.c.l.b16 %v373
  %v1422 = vunpack.c.h.b16 %v373
  %v1423 = vunpack.c.l.b16 %v374
  %v1424 = vunpack.c.l.b16 %v375
  %v1425 = vunpack.c.h.b16 %v375
  %v1426 = vunpack.c.l.b16 %v376
  %v1427 = vunpack.c.l.b16 %v377
  %v1428 = vunpack.c.h.b16 %v377
  %v1429 = vunpack.c.l.b16 %v378
  %v1430 = vunpack.c.l.b16 %v379
  %v1431 = vunpack.c.h.b16 %v379
  %v1432 = vunpack.c.l.b16 %v380
  %v1433 = vunpack.c.l.b16 %v381
  %v1434 = vunpack.c.h.b16 %v381
  %v1435 = vunpack.c.l.b16 %v382
  %v1436 = vunpack.c.l.b16 %v383
  %v1437 = vunpack.c.h.b16 %v383
  %v1438 = vunpack.c.l.b16 %v384
  %v1439 = vunpack.c.l.b16 %v385
  %v1440 = vunpack.c.h.b16 %v385
  %v1441 = vunpack.c.l.b16 %v386
  %v1442 = vunpack.c.l.b16 %v387
  %v1443 = vunpack.c.h.b16 %v387
  %v1444 = vunpack.c.l.b16 %v388
  %v1445 = vunpack.c.l.b16 %v389
  %v1446 = vunpack.c.h.b16 %v389
  %v1447 = vunpack.c.l.b16 %v390
  %v1448 = vunpack.c.l.b16 %v391
  %v1449 = vunpack.c.h.b16 %v391
  %v1450 = vunpack.c.l.b16 %v392
  %v1451 = vunpack.c.l.b16 %v393
  %v1452 = vunpack.c.h.b16 %v393
  %v1453 = vunpack.c.l.b16 %v394
  %v1454 = vunpack.c.l.b16 %v395
  %v1455 = vunpack.c.h.b16 %v395
  %v1456 = vunpack.c.l.b16 %v396
  %v1457 = vunpack.c.l.b16 %v397
  %v1458 = vunpack.c.h.b16 %v397
  %v1459 = vunpack.c.l.b16 %v398
  %v1460 = vunpack.c.l.b16 %v399
  %v1461 = vunpack.c.h.b16 %v399
  %v1462 = vunpack.c.l.b16 %v400
  %v1463 = vunpack.c.l.b16 %v401
  %v1464 = vunpack.c.h.b16 %v401
  %v1465 = vunpack.c.l.b16 %v402
  %v1466 = vunpack.c.l.b16 %v403
  %v1467 = vunpack.c.h.b16 %v403
  %v1468 = vunpack.c.l.b16 %v404
  %v1469 = vunpack.c.l.b16 %v405
  %v1470 = vunpack.c.h.b16 %v405
  %v1471 = vunpack.c.l.b16 %v406
  %v1472 = vunpack.c.l.b16 %v407
  %v1473 = vunpack.c.h.b16 %v407
  %v1474 = vunpack.c.l.b16 %v408
  %v1475 = vunpack.c.l.b16 %v409
  %v1476 = vunpack.c.h.b16 %v409
  %v1477 = vunpack.c.l.b16 %v410
  %v1478 = vunpack.c.l.b16 %v411
  %v1479 = vunpack.c.h.b16 %v411
  %v1480 = vunpack.c.l.b16 %v412
  %v1481 = vunpack.c.l.b16 %v413
  %v1482 = vunpack.c.h.b16 %v413
  %v1483 = vunpack.c.l.b16 %v414
  %v1484 = vunpack.c.l.b16 %v415
  %v1485 = vunpack.c.h.b16 %v415
  %v1486 = vunpack.c.l.b16 %v416
  %v1487 = vunpack.c.l.b16 %v417
  %v1488 = vunpack.c.h.b16 %v417
  %v1489 = vunpack.c.l.b16 %v418
  %v1490 = vunpack.c.l.b16 %v419
  %v1491 = vunpack.c.h.b16 %v419
  %v1492 = vunpack.c.l.b16 %v420
  %v1493 = vunpack.c.l.b16 %v421
  %v1494 = vunpack.c.h.b16 %v421
  %v1495 = vunpack.c.l.b16 %v422
  %v1496 = vunpack.c.l.b16 %v423
  %v1497 = vunpack.c.h.b16 %v423
  %v1498 = vunpack.c.l.b16 %v424
  %v1499 = vunpack.c.l.b16 %v425
  %v1500 = vunpack.c.h.b16 %v425
  %v1501 = vunpack.c.l.b16 %v426
  %v1502 = vunpack.c.l.b16 %v427
  %v1503 = vunpack.c.h.b16 %v427
  %v1504 = vunpack.c.l.b16 %v428
  %v1505 = vunpack.c.l.b16 %v429
  %v1506 = vunpack.c.h.b16 %v429
  %v1507 = vunpack.c.l.b16 %v430
  %v1508 = vunpack.c.l.b16 %v431
  %v1509 = vunpack.c.h.b16 %v431
  %v1510 = vunpack.c.l.b16 %v432
  %v1511 = vunpack.c.l.b16 %v433
  %v1512 = vunpack.c.h.b16 %v433
  %v1513 = vunpack.c.l.b16 %v434
  %v1514 = vunpack.c.l.b16 %v435
  %v1515 = vunpack.c.h.b16 %v435
  %v1516 = vunpack.c.l.b16 %v436
  %v1517 = vunpack.c.l.b16 %v437
  %v1518 = vunpack.c.h.b16 %v437
  %v1519 = vunpack.c.l.b16 %v438
  %v1520 = vunpack.c.l.b16 %v439
  %v1521 = vunpack.c.h.b16 %v439
  %v1522 = vunpack.c.l.b16 %v440
  %v1523 = vpack.c.b16 %v926, %v923
  %v1524 = vpack.c.b16 %v927, %v924
  %v1525 = vpack.c.b16 %v928, %v925
  %v1526 = vpack.c.b16 %v932, %v929
  %v1527 = vpack.c.b16 %v933, %v930
  %v1528 = vpack.c.b16 %v934, %v931
  %v1529 = vpack.c.b16 %v938, %v935
  %v1530 = vpack.c.b16 %v939, %v936
  %v1531 = vpack.c.b16 %v940, %v937
  %v1532 = vpack.c.b16 %v944, %v941
  %v1533 = vpack.c.b16 %v945, %v942
  %v1534 = vpack.c.b16 %v946, %v943
  %v1535 = vpack.c.b16 %v950, %v947
  %v1536 = vpack.c.b16 %v951, %v948
  %v1537 = vpack.c.b16 %v952, %v949
  %v1538 = vpack.c.b16 %v956, %v953
  %v1539 = vpack.c.b16 %v957, %v954
  %v1540 = vpack.c.b16 %v958, %v955
  %v1541 = vpack.c.b16 %v962, %v959
  %v1542 = vpack.c.b16 %v963, %v960
  %v1543 = vpack.c.b16 %v964, %v961
  %v1544 = vpack.c.b16 %v968, %v965
  %v1545 = vpack.c.b16 %v969, %v966
  %v1546 = vpack.c.b16 %v970, %v967
  %v1547 = vpack.c.b16 %v974, %v971
  %v1548 = vpack.c.b16 %v975, %v972
  %v1549 = vpack.c.b16 %v976, %v973
  %v1550 = vpack.c.b16 %v980, %v977
  %v1551 = vpack.c.b16 %v981, %v978
  %v1552 = vpack.c.b16 %v982, %v979
  %v1553 = vpack.c.b16 %v986, %v983
  %v1554 = vpack.c.b16 %v987, %v984
  %v1555 = vpack.c.b16 %v988, %v985
  %v1556 = vpack.c.b16 %v992, %v989
  %v1557 = vpack.c.b16 %v993, %v990
  %v1558 = vpack.c.b16 %v994, %v991
  %v1559 = vpack.c.b16 %v998, %v995
  %v1560 = vpack.c.b16 %v999, %v996
  %v1561 = vpack.c.b16 %v1000, %v997
  %v1562 = vpack.c.b16 %v1004, %v1001
  %v1563 = vpack.c.b16 %v1005, %v1002
  %v1564 = vpack.c.b16 %v1006, %v1003
  %v1565 = vpack.c.b16 %v1010, %v1007
  %v1566 = vpack.c.b16 %v1011, %v1008
  %v1567 = vpack.c.b16 %v1012, %v1009
  %v1568 = vpack.c.b16 %v1016, %v1013
  %v1569 = vpack.c.b16 %v1017, %v1014
  %v1570 = vpack.c.b16 %v1018, %v1015
  %v1571 = vpack.c.b16 %v1022, %v1019
  %v1572 = vpack.c.b16 %v1023, %v1020
  %v1573 = vpack.c.b16 %v1024, %v1021
  %v1574 = vpack.c.b16 %v1028, %v1025
  %v1575 = vpack.c.b16 %v1029, %v1026
  %v1576 = vpack.c.b16 %v1030, %v1027
  %v1577 = vpack.c.b16 %v1034, %v1031
  %v1578 = vpack.c.b16 %v1035, %v1032
  %v1579 = vpack.c.b16 %v1036, %v1033
  %v1580 = vpack.c.b16 %v1040, %v1037
  %v1581 = vpack.c.b16 %v1041, %v1038
  %v1582 = vpack.c.b16 %v1042, %v1039
  %v1583 = vpack.c.b16 %v1046, %v1043
  %v1584 = vpack.c.b16 %v1047, %v1044
  %v1585 = vpack.c.b16 %v1048, %v1045
  %v1586 = vpack.c.b16 %v1052, %v1049
  %v1587 = vpack.c.b16 %v1053, %v1050
  %v1588 = vpack.c.b16 %v1054, %v1051
  %v1589 = vpack.c.b16 %v1058, %v1055
  %v1590 = vpack.c.b16 %v1059, %v1056
  %v1591 = vpack.c.b16 %v1060, %v1057
  %v1592 = vpack.c.b16 %v1064, %v1061
  %v1593 = vpack.c.b16 %v1065, %v1062
  %v1594 = vpack.c.b16 %v1066, %v1063
  %v1595 = vpack.c.b16 %v1070, %v1067
  %v1596 = vpack.c.b16 %v1071, %v1068
  %v1597 = vpack.c.b16 %v1072, %v1069
  %v1598 = vpack.c.b16 %v1076, %v1073
  %v1599 = vpack.c.b16 %v1077, %v1074
  %v1600 = vpack.c.b16 %v1078, %v1075
  %v1601 = vpack.c.b16 %v1082, %v1079
  %v1602 = vpack.c.b16 %v1083, %v1080
  %v1603 = vpack.c.b16 %v1084, %v1081
  %v1604 = vpack.c.b16 %v1088, %v1085
  %v1605 = vpack.c.b16 %v1089, %v1086
  %v1606 = vpack.c.b16 %v1090, %v1087
  %v1607 = vpack.c.b16 %v1094, %v1091
  %v1608 = vpack.c.b16 %v1095, %v1092
  %v1609 = vpack.c.b16 %v1096, %v1093
  %v1610 = vpack.c.b16 %v1100, %v1097
  %v1611 = vpack.c.b16 %v1101, %v1098
  %v1612 = vpack.c.b16 %v1102, %v1099
  %v1613 = vpack.c.b16 %v1106, %v1103
  %v1614 = vpack.c.b16 %v1107, %v1104
  %v1615 = vpack.c.b16 %v1108, %v1105
  %v1616 = vpack.c.b16 %v1112, %v1109
  %v1617 = vpack.c.b16 %v1113, %v1110
  %v1618 = vpack.c.b16 %v1114, %v1111
  %v1619 = vpack.c.b16 %v1118, %v1115
  %v1620 = vpack.c.b16 %v1119, %v1116
  %v1621 = vpack.c.b16 %v1120, %v1117
  %v1622 = vpack.c.b16 %v1124, %v1121
  %v1623 = vpack.c.b16 %v1125, %v1122
  %v1624 = vpack.c.b16 %v1126, %v1123
  %v1625 = vpack.c.b16 %v1130, %v1127
  %v1626 = vpack.c.b16 %v1131, %v1128
  %v1627 = vpack.c.b16 %v1132, %v1129
  %v1628 = vpack.c.b16 %v1136, %v1133
  %v1629 = vpack.c.b16 %v1137, %v1134
  %v1630 = vpack.c.b16 %v1138, %v1135
  %v1631 = vpack.c.b16 %v1142, %v1139
  %v1632 = vpack.c.b16 %v1143, %v1140
  %v1633 = vpack.c.b16 %v1144, %v1141
  %v1634 = vpack.c.b16 %v1148, %v1145
  %v1635 = vpack.c.b16 %v1149, %v1146
  %v1636 = vpack.c.b16 %v1150, %v1147
  %v1637 = vpack.c.b16 %v1154, %v1151
  %v1638 = vpack.c.b16 %v1155, %v1152
  %v1639 = vpack.c.b16 %v1156, %v1153
  %v1640 = vpack.c.b16 %v1160, %v1157
  %v1641 = vpack.c.b16 %v1161, %v1158
  %v1642 = vpack.c.b16 %v1162, %v1159
  %v1643 = vpack.c.b16 %v1166, %v1163
  %v1644 = vpack.c.b16 %v1167, %v1164
  %v1645 = vpack.c.b16 %v1168, %v1165
  %v1646 = vpack.c.b16 %v1172, %v1169
  %v1647 = vpack.c.b16 %v1173, %v1170
  %v1648 = vpack.c.b16 %v1174, %v1171
  %v1649 = vpack.c.b16 %v1178, %v1175
  %v1650 = vpack.c.b16 %v1179, %v1176
  %v1651 = vpack.c.b16 %v1180, %v1177
  %v1652 = vpack.c.b16 %v1184, %v1181
  %v1653 = vpack.c.b16 %v1185, %v1182
  %v1654 = vpack.c.b16 %v1186, %v1183
  %v1655 = vpack.c.b16 %v1190, %v1187
  %v1656 = vpack.c.b16 %v1191, %v1188
  %v1657 = vpack.c.b16 %v1192, %v1189
  %v1658 = vpack.c.b16 %v1196, %v1193
  %v1659 = vpack.c.b16 %v1197, %v1194
  %v1660 = vpack.c.b16 %v1198, %v1195
  %v1661 = vpack.c.b16 %v1202, %v1199
  %v1662 = vpack.c.b16 %v1203, %v1200
  %v1663 = vpack.c.b16 %v1204, %v1201
  %v1664 = vpack.c.b16 %v1208, %v1205
  %v1665 = vpack.c.b16 %v1209, %v1206
  %v1666 = vpack.c.b16 %v1210, %v1207
  %v1667 = vpack.c.b16 %v1214, %v1211
  %v1668 = vpack.c.b16 %v1215, %v1212
  %v1669 = vpack.c.b16 %v1216, %v1213
  %v1670 = vpack.c.b16 %v1220, %v1217
  %v1671 = vpack.c.b16 %v1221, %v1218
  %v1672 = vpack.c.b16 %v1222, %v1219
  %v1673 = vpack.c.b16 %v1226, %v1223
  %v1674 = vpack.c.b16 %v1227, %v1224
  %v1675 = vpack.c.b16 %v1228, %v1225
  %v1676 = vpack.c.b16 %v1232, %v1229
  %v1677 = vpack.c.b16 %v1233, %v1230
  %v1678 = vpack.c.b16 %v1234, %v1231
  %v1679 = vpack.c.b16 %v1238, %v1235
  %v1680 = vpack.c.b16 %v1239, %v1236
  %v1681 = vpack.c.b16 %v1240, %v1237
  %v1682 = vpack.c.b16 %v1244, %v1241
  %v1683 = vpack.c.b16 %v1245, %v1242
  %v1684 = vpack.c.b16 %v1246, %v1243
  %v1685 = vpack.c.b16 %v1250, %v1247
  %v1686 = vpack.c.b16 %v1251, %v1248
  %v1687 = vpack.c.b16 %v1252, %v1249
  %v1688 = vpack.c.b16 %v1256, %v1253
  %v1689 = vpack.c.b16 %v1257, %v1254
  %v1690 = vpack.c.b16 %v1258, %v1255
  %v1691 = vpack.c.b16 %v1262, %v1259
  %v1692 = vpack.c.b16 %v1263, %v1260
  %v1693 = vpack.c.b16 %v1264, %v1261
  %v1694 = vpack.c.b16 %v1268, %v1265
  %v1695 = vpack.c.b16 %v1269, %v1266
  %v1696 = vpack.c.b16 %v1270, %v1267
  %v1697 = vpack.c.b16 %v1274, %v1271
  %v1698 = vpack.c.b16 %v1275, %v1272
  %v1699 = vpack.c.b16 %v1276, %v1273
  %v1700 = vpack.c.b16 %v1280, %v1277
  %v1701 = vpack.c.b16 %v1281, %v1278
  %v1702 = vpack.c.b16 %v1282, %v1279
  %v1703 = vpack.c.b16 %v1286, %v1283
  %v1704 = vpack.c.b16 %v1287, %v1284
  %v1705 = vpack.c.b16 %v1288, %v1285
  %v1706 = vpack.c.b16 %v1292, %v1289
  %v1707 = vpack.c.b16 %v1293, %v1290
  %v1708 = vpack.c.b16 %v1294, %v1291
  %v1709 = vpack.c.b16 %v1298, %v1295
  %v1710 = vpack.c.b16 %v1299, %v1296
  %v1711 = vpack.c.b16 %v1300, %v1297
  %v1712 = vpack.c.b16 %v1304, %v1301
  %v1713 = vpack.c.b16 %v1305, %v1302
  %v1714 = vpack.c.b16 %v1306, %v1303
  %v1715 = vpack.c.b16 %v1310, %v1307
  %v1716 = vpack.c.b16 %v1311, %v1308
  %v1717 = vpack.c.b16 %v1312, %v1309
  %v1718 = vpack.c.b16 %v1316, %v1313
  %v1719 = vpack.c.b16 %v1317, %v1314
  %v1720 = vpack.c.b16 %v1318, %v1315
  %v1721 = vpack.c.b16 %v1322, %v1319
  %v1722 = vpack.c.b16 %v1323, %v1320
  %v1723 = vpack.c.b16 %v1324, %v1321
  %v1724 = vpack.c.b16 %v1328, %v1325
  %v1725 = vpack.c.b16 %v1329, %v1326
  %v1726 = vpack.c.b16 %v1330, %v1327
  %v1727 = vpack.c.b16 %v1334, %v1331
  %v1728 = vpack.c.b16 %v1335, %v1332
  %v1729 = vpack.c.b16 %v1336, %v1333
  %v1730 = vpack.c.b16 %v1340, %v1337
  %v1731 = vpack.c.b16 %v1341, %v1338
  %v1732 = vpack.c.b16 %v1342, %v1339
  %v1733 = vpack.c.b16 %v1346, %v1343
  %v1734 = vpack.c.b16 %v1347, %v1344
  %v1735 = vpack.c.b16 %v1348, %v1345
  %v1736 = vpack.c.b16 %v1352, %v1349
  %v1737 = vpack.c.b16 %v1353, %v1350
  %v1738 = vpack.c.b16 %v1354, %v1351
  %v1739 = vpack.c.b16 %v1358, %v1355
  %v1740 = vpack.c.b16 %v1359, %v1356
  %v1741 = vpack.c.b16 %v1360, %v1357
  %v1742 = vpack.c.b16 %v1364, %v1361
  %v1743 = vpack.c.b16 %v1365, %v1362
  %v1744 = vpack.c.b16 %v1366, %v1363
  %v1745 = vpack.c.b16 %v1370, %v1367
  %v1746 = vpack.c.b16 %v1371, %v1368
  %v1747 = vpack.c.b16 %v1372, %v1369
  %v1748 = vpack.c.b16 %v1376, %v1373
  %v1749 = vpack.c.b16 %v1377, %v1374
  %v1750 = vpack.c.b16 %v1378, %v1375
  %v1751 = vpack.c.b16 %v1382, %v1379
  %v1752 = vpack.c.b16 %v1383, %v1380
  %v1753 = vpack.c.b16 %v1384, %v1381
  %v1754 = vpack.c.b16 %v1388, %v1385
  %v1755 = vpack.c.b16 %v1389, %v1386
  %v1756 = vpack.c.b16 %v1390, %v1387
  %v1757 = vpack.c.b16 %v1394, %v1391
  %v1758 = vpack.c.b16 %v1395, %v1392
  %v1759 = vpack.c.b16 %v1396, %v1393
  %v1760 = vpack.c.b16 %v1400, %v1397
  %v1761 = vpack.c.b16 %v1401, %v1398
  %v1762 = vpack.c.b16 %v1402, %v1399
  %v1763 = vpack.c.b16 %v1406, %v1403
  %v1764 = vpack.c.b16 %v1407, %v1404
  %v1765 = vpack.c.b16 %v1408, %v1405
  %v1766 = vpack.c.b16 %v1412, %v1409
  %v1767 = vpack.c.b16 %v1413, %v1410
  %v1768 = vpack.c.b16 %v1414, %v1411
  %v1769 = vpack.c.b16 %v1418, %v1415
  %v1770 = vpack.c.b16 %v1419, %v1416
  %v1771 = vpack.c.b16 %v1420, %v1417
  %v1772 = vpack.c.b16 %v1424, %v1421
  %v1773 = vpack.c.b16 %v1425, %v1422
  %v1774 = vpack.c.b16 %v1426, %v1423
  %v1775 = vpack.c.b16 %v1430, %v1427
  %v1776 = vpack.c.b16 %v1431, %v1428
  %v1777 = vpack.c.b16 %v1432, %v1429
  %v1778 = vpack.c.b16 %v1436, %v1433
  %v1779 = vpack.c.b16 %v1437, %v1434
  %v1780 = vpack.c.b16 %v1438, %v1435
  %v1781 = vpack.c.b16 %v1442, %v1439
  %v1782 = vpack.c.b16 %v1443, %v1440
  %v1783 = vpack.c.b16 %v1444, %v1441
  %v1784 = vpack.c.b16 %v1448, %v1445
  %v1785 = vpack.c.b16 %v1449, %v1446
  %v1786 = vpack.c.b16 %v1450, %v1447
  %v1787 = vpack.c.b16 %v1454, %v1451
  %v1788 = vpack.c.b16 %v1455, %v1452
  %v1789 = vpack.c.b16 %v1456, %v1453
  %v1790 = vpack.c.b16 %v1460, %v1457
  %v1791 = vpack.c.b16 %v1461, %v1458
  %v1792 = vpack.c.b16 %v1462, %v1459
  %v1793 = vpack.c.b16 %v1466, %v1463
  %v1794 = vpack.c.b16 %v1467, %v1464
  %v1795 = vpack.c.b16 %v1468, %v1465
  %v1796 = vpack.c.b16 %v1472, %v1469
  %v1797 = vpack.c.b16 %v1473, %v1470
  %v1798 = vpack.c.b16 %v1474, %v1471
  %v1799 = vpack.c.b16 %v1478, %v1475
  %v1800 = vpack.c.b16 %v1479, %v1476
  %v1801 = vpack.c.b16 %v1480, %v1477
  %v1802 = vpack.c.b16 %v1484, %v1481
  %v1803 = vpack.c.b16 %v1485, %v1482
  %v1804 = vpack.c.b16 %v1486, %v1483
  %v1805 = vpack.c.b16 %v1490, %v1487
  %v1806 = vpack.c.b16 %v1491, %v1488
  %v1807 = vpack.c.b16 %v1492, %v1489
  %v1808 = vpack.c.b16 %v1496, %v1493
  %v1809 = vpack.c.b16 %v1497, %v1494
  %v1810 = vpack.c.b16 %v1498, %v1495
  %v1811 = vpack.c.b16 %v1502, %v1499
  %v1812 = vpack.c.b16 %v1503, %v1500
  %v1813 = vpack.c.b16 %v1504, %v1501
  %v1814 = vpack.c.b16 %v1508, %v1505
  %v1815 = vpack.c.b16 %v1509, %v1506
  %v1816 = vpack.c.b16 %v1510, %v1507
  %v1817 = vpack.c.b16 %v1514, %v1511
  %v1818 = vpack.c.b16 %v1515, %v1512
  %v1819 = vpack.c.b16 %v1516, %v1513
  %v1820 = vpack.c.b16 %v1520, %v1517
  %v1821 = vpack.c.b16 %v1521, %v1518
  %v1822 = vpack.c.b16 %v1522, %v1519
  %vm2123 = vcmask 523264
  %v2125 = vsel %vm2123, %v510, 0
  %2127 = vmatprep.subr.bf16.mxu0 %v1524
  %2128 = vmatpush1.bf16.msra.mxu0 %v1523
  %2129 = vmatprep.subr.bf16.mxu0 %v1527
  %2130 = vmatpush1.bf16.msra.mxu0 %v1526
  %2131 = vmatprep.subr.bf16.mxu0 %v1530
  %2132 = vmatpush1.bf16.msra.mxu0 %v1529
  %2133 = vmatprep.subr.bf16.mxu0 %v1533
  %2134 = vmatpush1.bf16.msra.mxu0 %v1532
  %2135 = vmatprep.subr.bf16.mxu0 %v1536
  %2136 = vmatpush1.bf16.msra.mxu0 %v1535
  %2137 = vmatprep.subr.bf16.mxu0 %v1539
  %2138 = vmatpush1.bf16.msra.mxu0 %v1538
  %2139 = vmatprep.subr.bf16.mxu0 %v1542
  %2140 = vmatpush1.bf16.msra.mxu0 %v1541
  %2141 = vmatprep.subr.bf16.mxu0 %v1545
  %2142 = vmatpush1.bf16.msra.mxu0 %v1544
  %2143 = vmatprep.subr.bf16.mxu0 %v1548
  %2144 = vmatpush1.bf16.msra.mxu0 %v1547
  %2145 = vmatprep.subr.bf16.mxu0 %v1551
  %2146 = vmatpush1.bf16.msra.mxu0 %v1550
  %2147 = vmatprep.subr.bf16.mxu0 %v1554
  %2148 = vmatpush1.bf16.msra.mxu0 %v1553
  %2149 = vmatprep.subr.bf16.mxu0 %v1557
  %2150 = vmatpush1.bf16.msra.mxu0 %v1556
  %2151 = vmatprep.subr.bf16.mxu0 %v1560
  %2152 = vmatpush1.bf16.msra.mxu0 %v1559
  %2153 = vmatprep.subr.bf16.mxu0 %v1563
  %2154 = vmatpush1.bf16.msra.mxu0 %v1562
  %2155 = vmatprep.subr.bf16.mxu0 %v1566
  %2156 = vmatpush1.bf16.msra.mxu0 %v1565
  %2157 = vmatprep.subr.bf16.mxu0 %v1569
  %2158 = vmatpush1.bf16.msra.mxu0 %v1568
  %2159 = vmatprep.mubr.bf16.mxu0 %v499
  %2160 = vmatmul.mubr.bf16.gmra.mrb[0].mxu0 %v498
  %v2161 = vpop.f32.mrb[0].mxu0
  %v2162 = vadd.f32 %v446, %v2161
  %v2163 = vpop.f32.mrb[0].mxu0
  %v2164 = vadd.f32 %v450, %v2163
  %v2165 = vpop.f32.mrb[0].mxu0
  %v2166 = vadd.f32 %v446, %v2165
  %v2167 = vpop.f32.mrb[0].mxu0
  %v2168 = vadd.f32 %v450, %v2167
  %2169 = vdwg.mxu0
  %2170 = vmatprep.subr.bf16.mxu0 %v1572
  %2171 = vmatpush1.bf16.msra.mxu0 %v1571
  %2172 = vmatprep.subr.bf16.mxu0 %v1575
  %2173 = vmatpush1.bf16.msra.mxu0 %v1574
  %2174 = vmatprep.subr.bf16.mxu0 %v1578
  %2175 = vmatpush1.bf16.msra.mxu0 %v1577
  %2176 = vmatprep.subr.bf16.mxu0 %v1581
  %2177 = vmatpush1.bf16.msra.mxu0 %v1580
  %2178 = vmatprep.subr.bf16.mxu0 %v1584
  %2179 = vmatpush1.bf16.msra.mxu0 %v1583
  %2180 = vmatprep.subr.bf16.mxu0 %v1587
  %2181 = vmatpush1.bf16.msra.mxu0 %v1586
  %2182 = vmatprep.subr.bf16.mxu0 %v1590
  %2183 = vmatpush1.bf16.msra.mxu0 %v1589
  %2184 = vmatprep.subr.bf16.mxu0 %v1593
  %2185 = vmatpush1.bf16.msra.mxu0 %v1592
  %2186 = vmatprep.subr.bf16.mxu0 %v1596
  %2187 = vmatpush1.bf16.msra.mxu0 %v1595
  %2188 = vmatprep.subr.bf16.mxu0 %v1599
  %2189 = vmatpush1.bf16.msra.mxu0 %v1598
  %2190 = vmatprep.subr.bf16.mxu0 %v1602
  %2191 = vmatpush1.bf16.msra.mxu0 %v1601
  %2192 = vmatprep.subr.bf16.mxu0 %v1605
  %2193 = vmatpush1.bf16.msra.mxu0 %v1604
  %2194 = vmatprep.subr.bf16.mxu0 %v1608
  %2195 = vmatpush1.bf16.msra.mxu0 %v1607
  %2196 = vmatprep.subr.bf16.mxu0 %v1611
  %2197 = vmatpush1.bf16.msra.mxu0 %v1610
  %2198 = vmatprep.subr.bf16.mxu0 %v1614
  %2199 = vmatpush1.bf16.msra.mxu0 %v1613
  %2200 = vmatprep.subr.bf16.mxu0 %v1617
  %2201 = vmatpush1.bf16.msra.mxu0 %v1616
  %2202 = vmatprep.mubr.bf16.mxu0 %v501
  %2203 = vmatmul.mubr.bf16.gmra.mrb[0].mxu0 %v500
  %v2204 = vpop.f32.mrb[0].mxu0
  %v2205 = vadd.f32 %v2162, %v2204
  %v2206 = vpop.f32.mrb[0].mxu0
  %v2207 = vadd.f32 %v2164, %v2206
  %v2208 = vpop.f32.mrb[0].mxu0
  %v2209 = vadd.f32 %v2166, %v2208
  %v2210 = vpop.f32.mrb[0].mxu0
  %v2211 = vadd.f32 %v2168, %v2210
  %2212 = vdwg.mxu0
  %2213 = vmatprep.subr.bf16.mxu0 %v1620
  %2214 = vmatpush1.bf16.msra.mxu0 %v1619
  %2215 = vmatprep.subr.bf16.mxu0 %v1623
  %2216 = vmatpush1.bf16.msra.mxu0 %v1622
  %2217 = vmatprep.subr.bf16.mxu0 %v1626
  %2218 = vmatpush1.bf16.msra.mxu0 %v1625
  %2219 = vmatprep.subr.bf16.mxu0 %v1629
  %2220 = vmatpush1.bf16.msra.mxu0 %v1628
  %2221 = vmatprep.subr.bf16.mxu0 %v1632
  %2222 = vmatpush1.bf16.msra.mxu0 %v1631
  %2223 = vmatprep.subr.bf16.mxu0 %v1635
  %2224 = vmatpush1.bf16.msra.mxu0 %v1634
  %2225 = vmatprep.subr.bf16.mxu0 %v1638
  %2226 = vmatpush1.bf16.msra.mxu0 %v1637
  %2227 = vmatprep.subr.bf16.mxu0 %v1641
  %2228 = vmatpush1.bf16.msra.mxu0 %v1640
  %2229 = vmatprep.subr.bf16.mxu0 %v1644
  %2230 = vmatpush1.bf16.msra.mxu0 %v1643
  %2231 = vmatprep.subr.bf16.mxu0 %v1647
  %2232 = vmatpush1.bf16.msra.mxu0 %v1646
  %2233 = vmatprep.subr.bf16.mxu0 %v1650
  %2234 = vmatpush1.bf16.msra.mxu0 %v1649
  %2235 = vmatprep.subr.bf16.mxu0 %v1653
  %2236 = vmatpush1.bf16.msra.mxu0 %v1652
  %2237 = vmatprep.subr.bf16.mxu0 %v1656
  %2238 = vmatpush1.bf16.msra.mxu0 %v1655
  %2239 = vmatprep.subr.bf16.mxu0 %v1659
  %2240 = vmatpush1.bf16.msra.mxu0 %v1658
  %2241 = vmatprep.subr.bf16.mxu0 %v1662
  %2242 = vmatpush1.bf16.msra.mxu0 %v1661
  %2243 = vmatprep.subr.bf16.mxu0 %v1665
  %2244 = vmatpush1.bf16.msra.mxu0 %v1664
  %2245 = vmatprep.mubr.bf16.mxu0 %v503
  %2246 = vmatmul.mubr.bf16.gmra.mrb[0].mxu0 %v502
  %v2247 = vpop.f32.mrb[0].mxu0
  %v2248 = vadd.f32 %v2205, %v2247
  %v2249 = vpop.f32.mrb[0].mxu0
  %v2250 = vadd.f32 %v2207, %v2249
  %v2251 = vpop.f32.mrb[0].mxu0
  %v2252 = vadd.f32 %v2209, %v2251
  %v2253 = vpop.f32.mrb[0].mxu0
  %v2254 = vadd.f32 %v2211, %v2253
  %2255 = vdwg.mxu0
  %2256 = vmatprep.subr.bf16.mxu0 %v1668
  %2257 = vmatpush1.bf16.msra.mxu0 %v1667
  %2258 = vmatprep.subr.bf16.mxu0 %v1671
  %2259 = vmatpush1.bf16.msra.mxu0 %v1670
  %2260 = vmatprep.subr.bf16.mxu0 %v1674
  %2261 = vmatpush1.bf16.msra.mxu0 %v1673
  %2262 = vmatprep.subr.bf16.mxu0 %v1677
  %2263 = vmatpush1.bf16.msra.mxu0 %v1676
  %2264 = vmatprep.subr.bf16.mxu0 %v1680
  %2265 = vmatpush1.bf16.msra.mxu0 %v1679
  %2266 = vmatprep.subr.bf16.mxu0 %v1683
  %2267 = vmatpush1.bf16.msra.mxu0 %v1682
  %2268 = vmatprep.subr.bf16.mxu0 %v1686
  %2269 = vmatpush1.bf16.msra.mxu0 %v1685
  %2270 = vmatprep.subr.bf16.mxu0 %v1689
  %2271 = vmatpush1.bf16.msra.mxu0 %v1688
  %2272 = vmatprep.subr.bf16.mxu0 %v1692
  %2273 = vmatpush1.bf16.msra.mxu0 %v1691
  %2274 = vmatprep.subr.bf16.mxu0 %v1695
  %2275 = vmatpush1.bf16.msra.mxu0 %v1694
  %2276 = vmatprep.subr.bf16.mxu0 %v1698
  %2277 = vmatpush1.bf16.msra.mxu0 %v1697
  %2278 = vmatprep.subr.bf16.mxu0 %v1701
  %2279 = vmatpush1.bf16.msra.mxu0 %v1700
  %2280 = vmatprep.subr.bf16.mxu0 %v1704
  %2281 = vmatpush1.bf16.msra.mxu0 %v1703
  %2282 = vmatprep.subr.bf16.mxu0 %v1707
  %2283 = vmatpush1.bf16.msra.mxu0 %v1706
  %2284 = vmatprep.subr.bf16.mxu0 %v1710
  %2285 = vmatpush1.bf16.msra.mxu0 %v1709
  %2286 = vmatprep.subr.bf16.mxu0 %v1713
  %2287 = vmatpush1.bf16.msra.mxu0 %v1712
  %2288 = vmatprep.mubr.bf16.mxu0 %v505
  %2289 = vmatmul.mubr.bf16.gmra.mrb[0].mxu0 %v504
  %v2290 = vpop.f32.mrb[0].mxu0
  %v2291 = vadd.f32 %v2248, %v2290
  %v2292 = vpop.f32.mrb[0].mxu0
  %v2293 = vadd.f32 %v2250, %v2292
  %v2294 = vpop.f32.mrb[0].mxu0
  %v2295 = vadd.f32 %v2252, %v2294
  %v2296 = vpop.f32.mrb[0].mxu0
  %v2297 = vadd.f32 %v2254, %v2296
  %2298 = vdwg.mxu0
  %2299 = vmatprep.subr.bf16.mxu0 %v1716
  %2300 = vmatpush1.bf16.msra.mxu0 %v1715
  %2301 = vmatprep.subr.bf16.mxu0 %v1719
  %2302 = vmatpush1.bf16.msra.mxu0 %v1718
  %2303 = vmatprep.subr.bf16.mxu0 %v1722
  %2304 = vmatpush1.bf16.msra.mxu0 %v1721
  %2305 = vmatprep.subr.bf16.mxu0 %v1725
  %2306 = vmatpush1.bf16.msra.mxu0 %v1724
  %2307 = vmatprep.subr.bf16.mxu0 %v1728
  %2308 = vmatpush1.bf16.msra.mxu0 %v1727
  %2309 = vmatprep.subr.bf16.mxu0 %v1731
  %2310 = vmatpush1.bf16.msra.mxu0 %v1730
  %2311 = vmatprep.subr.bf16.mxu0 %v1734
  %2312 = vmatpush1.bf16.msra.mxu0 %v1733
  %2313 = vmatprep.subr.bf16.mxu0 %v1737
  %2314 = vmatpush1.bf16.msra.mxu0 %v1736
  %2315 = vmatprep.subr.bf16.mxu0 %v1740
  %2316 = vmatpush1.bf16.msra.mxu0 %v1739
  %2317 = vmatprep.subr.bf16.mxu0 %v1743
  %2318 = vmatpush1.bf16.msra.mxu0 %v1742
  %2319 = vmatprep.subr.bf16.mxu0 %v1746
  %2320 = vmatpush1.bf16.msra.mxu0 %v1745
  %2321 = vmatprep.subr.bf16.mxu0 %v1749
  %2322 = vmatpush1.bf16.msra.mxu0 %v1748
  %2323 = vmatprep.subr.bf16.mxu0 %v1752
  %2324 = vmatpush1.bf16.msra.mxu0 %v1751
  %2325 = vmatprep.subr.bf16.mxu0 %v1755
  %2326 = vmatpush1.bf16.msra.mxu0 %v1754
  %2327 = vmatprep.subr.bf16.mxu0 %v1758
  %2328 = vmatpush1.bf16.msra.mxu0 %v1757
  %2329 = vmatprep.subr.bf16.mxu0 %v1761
  %2330 = vmatpush1.bf16.msra.mxu0 %v1760
  %2331 = vmatprep.mubr.bf16.mxu0 %v507
  %2332 = vmatmul.mubr.bf16.gmra.mrb[0].mxu0 %v506
  %v2333 = vpop.f32.mrb[0].mxu0
  %v2334 = vadd.f32 %v2291, %v2333
  %v2335 = vpop.f32.mrb[0].mxu0
  %v2336 = vadd.f32 %v2293, %v2335
  %v2337 = vpop.f32.mrb[0].mxu0
  %v2338 = vadd.f32 %v2295, %v2337
  %v2339 = vpop.f32.mrb[0].mxu0
  %v2340 = vadd.f32 %v2297, %v2339
  %2341 = vdwg.mxu0
  %2342 = vmatprep.subr.bf16.mxu0 %v1764
  %2343 = vmatpush1.bf16.msra.mxu0 %v1763
  %2344 = vmatprep.subr.bf16.mxu0 %v1767
  %2345 = vmatpush1.bf16.msra.mxu0 %v1766
  %2346 = vmatprep.subr.bf16.mxu0 %v1770
  %2347 = vmatpush1.bf16.msra.mxu0 %v1769
  %2348 = vmatprep.subr.bf16.mxu0 %v1773
  %2349 = vmatpush1.bf16.msra.mxu0 %v1772
  %2350 = vmatprep.subr.bf16.mxu0 %v1776
  %2351 = vmatpush1.bf16.msra.mxu0 %v1775
  %2352 = vmatprep.subr.bf16.mxu0 %v1779
  %2353 = vmatpush1.bf16.msra.mxu0 %v1778
  %2354 = vmatprep.subr.bf16.mxu0 %v1782
  %2355 = vmatpush1.bf16.msra.mxu0 %v1781
  %2356 = vmatprep.subr.bf16.mxu0 %v1785
  %2357 = vmatpush1.bf16.msra.mxu0 %v1784
  %2358 = vmatprep.subr.bf16.mxu0 %v1788
  %2359 = vmatpush1.bf16.msra.mxu0 %v1787
  %2360 = vmatprep.subr.bf16.mxu0 %v1791
  %2361 = vmatpush1.bf16.msra.mxu0 %v1790
  %2362 = vmatprep.subr.bf16.mxu0 %v1794
  %2363 = vmatpush1.bf16.msra.mxu0 %v1793
  %2364 = vmatprep.subr.bf16.mxu0 %v1797
  %2365 = vmatpush1.bf16.msra.mxu0 %v1796
  %2366 = vmatprep.subr.bf16.mxu0 %v1800
  %2367 = vmatpush1.bf16.msra.mxu0 %v1799
  %2368 = vmatprep.subr.bf16.mxu0 %v1803
  %2369 = vmatpush1.bf16.msra.mxu0 %v1802
  %2370 = vmatprep.subr.bf16.mxu0 %v1806
  %2371 = vmatpush1.bf16.msra.mxu0 %v1805
  %2372 = vmatprep.subr.bf16.mxu0 %v1809
  %2373 = vmatpush1.bf16.msra.mxu0 %v1808
  %2374 = vmatprep.mubr.bf16.mxu0 %v509
  %2375 = vmatmul.mubr.bf16.gmra.mrb[0].mxu0 %v508
  %v2376 = vpop.f32.mrb[0].mxu0
  %v2377 = vadd.f32 %v2334, %v2376
  %v2378 = vpop.f32.mrb[0].mxu0
  %v2379 = vadd.f32 %v2336, %v2378
  %v2380 = vpop.f32.mrb[0].mxu0
  %v2381 = vadd.f32 %v2338, %v2380
  %v2382 = vpop.f32.mrb[0].mxu0
  %v2383 = vadd.f32 %v2340, %v2382
  %2384 = vdwg.mxu0
  %2385 = vmatprep.subr.bf16.mxu0 %v1812
  %2386 = vmatpush1.bf16.msra.mxu0 %v1811
  %2387 = vmatprep.subr.bf16.mxu0 %v1815
  %2388 = vmatpush1.bf16.msra.mxu0 %v1814
  %2389 = vmatprep.subr.bf16.mxu0 %v1818
  %2390 = vmatpush1.bf16.msra.mxu0 %v1817
  %2391 = vmatprep.subr.bf16.mxu0 %v1821
  %2392 = vmatpush1.bf16.msra.mxu0 %v1820
  %2393 = vmatprep.subr.bf16.mxu0 0
  %2394 = vmatpush1.bf16.msra.mxu0 0
  %2395 = vmatprep.subr.bf16.mxu0 0
  %2396 = vmatpush1.bf16.msra.mxu0 0
  %2397 = vmatprep.subr.bf16.mxu0 0
  %2398 = vmatpush1.bf16.msra.mxu0 0
  %2399 = vmatprep.subr.bf16.mxu0 0
  %2400 = vmatpush1.bf16.msra.mxu0 0
  %2401 = vmatprep.subr.bf16.mxu0 0
  %2402 = vmatpush1.bf16.msra.mxu0 0
  %2403 = vmatprep.subr.bf16.mxu0 0
  %2404 = vmatpush1.bf16.msra.mxu0 0
  %2405 = vmatprep.subr.bf16.mxu0 0
  %2406 = vmatpush1.bf16.msra.mxu0 0
  %2407 = vmatprep.subr.bf16.mxu0 0
  %2408 = vmatpush1.bf16.msra.mxu0 0
  %2409 = vmatprep.subr.bf16.mxu0 0
  %2410 = vmatpush1.bf16.msra.mxu0 0
  %2411 = vmatprep.subr.bf16.mxu0 0
  %2412 = vmatpush1.bf16.msra.mxu0 0
  %2413 = vmatprep.subr.bf16.mxu0 0
  %2414 = vmatpush1.bf16.msra.mxu0 0
  %2415 = vmatprep.subr.bf16.mxu0 0
  %2416 = vmatpush1.bf16.msra.mxu0 0
  %2417 = vmatprep.mubr.bf16.mxu0 0
  %2418 = vmatmul.mubr.bf16.gmra.mrb[0].mxu0 %v2125
  %v2419 = vpop.f32.mrb[0].mxu0
  %v2420 = vadd.f32 %v2377, %v2419
  %v2421 = vpop.f32.mrb[0].mxu0
  %v2422 = vadd.f32 %v2379, %v2421
  %v2423 = vpop.f32.mrb[0].mxu0
  %v2424 = vadd.f32 %v2381, %v2423
  %v2425 = vpop.f32.mrb[0].mxu0
  %v2426 = vadd.f32 %v2383, %v2425
  %2427 = vdwg.mxu0
  %2428 = vmatprep.subr.bf16.mxu0 0
  %2429 = vmatpush1.bf16.msra.mxu0 %v1525
  %2430 = vmatprep.subr.bf16.mxu0 0
  %2431 = vmatpush1.bf16.msra.mxu0 %v1528
  %2432 = vmatprep.subr.bf16.mxu0 0
  %2433 = vmatpush1.bf16.msra.mxu0 %v1531
  %2434 = vmatprep.subr.bf16.mxu0 0
  %2435 = vmatpush1.bf16.msra.mxu0 %v1534
  %2436 = vmatprep.subr.bf16.mxu0 0
  %2437 = vmatpush1.bf16.msra.mxu0 %v1537
  %2438 = vmatprep.subr.bf16.mxu0 0
  %2439 = vmatpush1.bf16.msra.mxu0 %v1540
  %2440 = vmatprep.subr.bf16.mxu0 0
  %2441 = vmatpush1.bf16.msra.mxu0 %v1543
  %2442 = vmatprep.subr.bf16.mxu0 0
  %2443 = vmatpush1.bf16.msra.mxu0 %v1546
  %2444 = vmatprep.subr.bf16.mxu0 0
  %2445 = vmatpush1.bf16.msra.mxu0 %v1549
  %2446 = vmatprep.subr.bf16.mxu0 0
  %2447 = vmatpush1.bf16.msra.mxu0 %v1552
  %2448 = vmatprep.subr.bf16.mxu0 0
  %2449 = vmatpush1.bf16.msra.mxu0 %v1555
  %2450 = vmatprep.subr.bf16.mxu0 0
  %2451 = vmatpush1.bf16.msra.mxu0 %v1558
  %2452 = vmatprep.subr.bf16.mxu0 0
  %2453 = vmatpush1.bf16.msra.mxu0 %v1561
  %2454 = vmatprep.subr.bf16.mxu0 0
  %2455 = vmatpush1.bf16.msra.mxu0 %v1564
  %2456 = vmatprep.subr.bf16.mxu0 0
  %2457 = vmatpush1.bf16.msra.mxu0 %v1567
  %2458 = vmatprep.subr.bf16.mxu0 0
  %2459 = vmatpush1.bf16.msra.mxu0 %v1570
  %2460 = vmatprep.mubr.bf16.mxu0 %v499
  %2461 = vmatmul.mubr.bf16.gmra.mrb[0].mxu0 %v498
  %v2462 = vpop.f32.mrb[0].mxu0
  %v2463 = vadd.f32 %v454, %v2462
  %v2464 = vpop.f32.mrb[0].mxu0
  %v2465 = vpop.f32.mrb[0].mxu0
  %v2466 = vadd.f32 %v454, %v2465
  %v2467 = vpop.f32.mrb[0].mxu0
  %2468 = vdwg.mxu0
  %2469 = vmatprep.subr.bf16.mxu0 0
  %2470 = vmatpush1.bf16.msra.mxu0 %v1573
  %2471 = vmatprep.subr.bf16.mxu0 0
  %2472 = vmatpush1.bf16.msra.mxu0 %v1576
  %2473 = vmatprep.subr.bf16.mxu0 0
  %2474 = vmatpush1.bf16.msra.mxu0 %v1579
  %2475 = vmatprep.subr.bf16.mxu0 0
  %2476 = vmatpush1.bf16.msra.mxu0 %v1582
  %2477 = vmatprep.subr.bf16.mxu0 0
  %2478 = vmatpush1.bf16.msra.mxu0 %v1585
  %2479 = vmatprep.subr.bf16.mxu0 0
  %2480 = vmatpush1.bf16.msra.mxu0 %v1588
  %2481 = vmatprep.subr.bf16.mxu0 0
  %2482 = vmatpush1.bf16.msra.mxu0 %v1591
  %2483 = vmatprep.subr.bf16.mxu0 0
  %2484 = vmatpush1.bf16.msra.mxu0 %v1594
  %2485 = vmatprep.subr.bf16.mxu0 0
  %2486 = vmatpush1.bf16.msra.mxu0 %v1597
  %2487 = vmatprep.subr.bf16.mxu0 0
  %2488 = vmatpush1.bf16.msra.mxu0 %v1600
  %2489 = vmatprep.subr.bf16.mxu0 0
  %2490 = vmatpush1.bf16.msra.mxu0 %v1603
  %2491 = vmatprep.subr.bf16.mxu0 0
  %2492 = vmatpush1.bf16.msra.mxu0 %v1606
  %2493 = vmatprep.subr.bf16.mxu0 0
  %2494 = vmatpush1.bf16.msra.mxu0 %v1609
  %2495 = vmatprep.subr.bf16.mxu0 0
  %2496 = vmatpush1.bf16.msra.mxu0 %v1612
  %2497 = vmatprep.subr.bf16.mxu0 0
  %2498 = vmatpush1.bf16.msra.mxu0 %v1615
  %2499 = vmatprep.subr.bf16.mxu0 0
  %2500 = vmatpush1.bf16.msra.mxu0 %v1618
  %2501 = vmatprep.mubr.bf16.mxu0 %v501
  %2502 = vmatmul.mubr.bf16.gmra.mrb[0].mxu0 %v500
  %v2503 = vpop.f32.mrb[0].mxu0
  %v2504 = vadd.f32 %v2463, %v2503
  %v2505 = vpop.f32.mrb[0].mxu0
  %v2506 = vpop.f32.mrb[0].mxu0
  %v2507 = vadd.f32 %v2466, %v2506
  %v2508 = vpop.f32.mrb[0].mxu0
  %2509 = vdwg.mxu0
  %2510 = vmatprep.subr.bf16.mxu0 0
  %2511 = vmatpush1.bf16.msra.mxu0 %v1621
  %2512 = vmatprep.subr.bf16.mxu0 0
  %2513 = vmatpush1.bf16.msra.mxu0 %v1624
  %2514 = vmatprep.subr.bf16.mxu0 0
  %2515 = vmatpush1.bf16.msra.mxu0 %v1627
  %2516 = vmatprep.subr.bf16.mxu0 0
  %2517 = vmatpush1.bf16.msra.mxu0 %v1630
  %2518 = vmatprep.subr.bf16.mxu0 0
  %2519 = vmatpush1.bf16.msra.mxu0 %v1633
  %2520 = vmatprep.subr.bf16.mxu0 0
  %2521 = vmatpush1.bf16.msra.mxu0 %v1636
  %2522 = vmatprep.subr.bf16.mxu0 0
  %2523 = vmatpush1.bf16.msra.mxu0 %v1639
  %2524 = vmatprep.subr.bf16.mxu0 0
  %2525 = vmatpush1.bf16.msra.mxu0 %v1642
  %2526 = vmatprep.subr.bf16.mxu0 0
  %2527 = vmatpush1.bf16.msra.mxu0 %v1645
  %2528 = vmatprep.subr.bf16.mxu0 0
  %2529 = vmatpush1.bf16.msra.mxu0 %v1648
  %2530 = vmatprep.subr.bf16.mxu0 0
  %2531 = vmatpush1.bf16.msra.mxu0 %v1651
  %2532 = vmatprep.subr.bf16.mxu0 0
  %2533 = vmatpush1.bf16.msra.mxu0 %v1654
  %2534 = vmatprep.subr.bf16.mxu0 0
  %2535 = vmatpush1.bf16.msra.mxu0 %v1657
  %2536 = vmatprep.subr.bf16.mxu0 0
  %2537 = vmatpush1.bf16.msra.mxu0 %v1660
  %2538 = vmatprep.subr.bf16.mxu0 0
  %2539 = vmatpush1.bf16.msra.mxu0 %v1663
  %2540 = vmatprep.subr.bf16.mxu0 0
  %2541 = vmatpush1.bf16.msra.mxu0 %v1666
  %2542 = vmatprep.mubr.bf16.mxu0 %v503
  %2543 = vmatmul.mubr.bf16.gmra.mrb[0].mxu0 %v502
  %v2544 = vpop.f32.mrb[0].mxu0
  %v2545 = vadd.f32 %v2504, %v2544
  %v2546 = vpop.f32.mrb[0].mxu0
  %v2547 = vpop.f32.mrb[0].mxu0
  %v2548 = vadd.f32 %v2507, %v2547
  %v2549 = vpop.f32.mrb[0].mxu0
  %2550 = vdwg.mxu0
  %2551 = vmatprep.subr.bf16.mxu0 0
  %2552 = vmatpush1.bf16.msra.mxu0 %v1669
  %2553 = vmatprep.subr.bf16.mxu0 0
  %2554 = vmatpush1.bf16.msra.mxu0 %v1672
  %2555 = vmatprep.subr.bf16.mxu0 0
  %2556 = vmatpush1.bf16.msra.mxu0 %v1675
  %2557 = vmatprep.subr.bf16.mxu0 0
  %2558 = vmatpush1.bf16.msra.mxu0 %v1678
  %2559 = vmatprep.subr.bf16.mxu0 0
  %2560 = vmatpush1.bf16.msra.mxu0 %v1681
  %2561 = vmatprep.subr.bf16.mxu0 0
  %2562 = vmatpush1.bf16.msra.mxu0 %v1684
  %2563 = vmatprep.subr.bf16.mxu0 0
  %2564 = vmatpush1.bf16.msra.mxu0 %v1687
  %2565 = vmatprep.subr.bf16.mxu0 0
  %2566 = vmatpush1.bf16.msra.mxu0 %v1690
  %2567 = vmatprep.subr.bf16.mxu0 0
  %2568 = vmatpush1.bf16.msra.mxu0 %v1693
  %2569 = vmatprep.subr.bf16.mxu0 0
  %2570 = vmatpush1.bf16.msra.mxu0 %v1696
  %2571 = vmatprep.subr.bf16.mxu0 0
  %2572 = vmatpush1.bf16.msra.mxu0 %v1699
  %2573 = vmatprep.subr.bf16.mxu0 0
  %2574 = vmatpush1.bf16.msra.mxu0 %v1702
  %2575 = vmatprep.subr.bf16.mxu0 0
  %2576 = vmatpush1.bf16.msra.mxu0 %v1705
  %2577 = vmatprep.subr.bf16.mxu0 0
  %2578 = vmatpush1.bf16.msra.mxu0 %v1708
  %2579 = vmatprep.subr.bf16.mxu0 0
  %2580 = vmatpush1.bf16.msra.mxu0 %v1711
  %2581 = vmatprep.subr.bf16.mxu0 0
  %2582 = vmatpush1.bf16.msra.mxu0 %v1714
  %2583 = vmatprep.mubr.bf16.mxu0 %v505
  %2584 = vmatmul.mubr.bf16.gmra.mrb[0].mxu0 %v504
  %v2585 = vpop.f32.mrb[0].mxu0
  %v2586 = vadd.f32 %v2545, %v2585
  %v2587 = vpop.f32.mrb[0].mxu0
  %v2588 = vpop.f32.mrb[0].mxu0
  %v2589 = vadd.f32 %v2548, %v2588
  %v2590 = vpop.f32.mrb[0].mxu0
  %2591 = vdwg.mxu0
  %2592 = vmatprep.subr.bf16.mxu0 0
  %2593 = vmatpush1.bf16.msra.mxu0 %v1717
  %2594 = vmatprep.subr.bf16.mxu0 0
  %2595 = vmatpush1.bf16.msra.mxu0 %v1720
  %2596 = vmatprep.subr.bf16.mxu0 0
  %2597 = vmatpush1.bf16.msra.mxu0 %v1723
  %2598 = vmatprep.subr.bf16.mxu0 0
  %2599 = vmatpush1.bf16.msra.mxu0 %v1726
  %2600 = vmatprep.subr.bf16.mxu0 0
  %2601 = vmatpush1.bf16.msra.mxu0 %v1729
  %2602 = vmatprep.subr.bf16.mxu0 0
  %2603 = vmatpush1.bf16.msra.mxu0 %v1732
  %2604 = vmatprep.subr.bf16.mxu0 0
  %2605 = vmatpush1.bf16.msra.mxu0 %v1735
  %2606 = vmatprep.subr.bf16.mxu0 0
  %2607 = vmatpush1.bf16.msra.mxu0 %v1738
  %2608 = vmatprep.subr.bf16.mxu0 0
  %2609 = vmatpush1.bf16.msra.mxu0 %v1741
  %2610 = vmatprep.subr.bf16.mxu0 0
  %2611 = vmatpush1.bf16.msra.mxu0 %v1744
  %2612 = vmatprep.subr.bf16.mxu0 0
  %2613 = vmatpush1.bf16.msra.mxu0 %v1747
  %2614 = vmatprep.subr.bf16.mxu0 0
  %2615 = vmatpush1.bf16.msra.mxu0 %v1750
  %2616 = vmatprep.subr.bf16.mxu0 0
  %2617 = vmatpush1.bf16.msra.mxu0 %v1753
  %2618 = vmatprep.subr.bf16.mxu0 0
  %2619 = vmatpush1.bf16.msra.mxu0 %v1756
  %2620 = vmatprep.subr.bf16.mxu0 0
  %2621 = vmatpush1.bf16.msra.mxu0 %v1759
  %2622 = vmatprep.subr.bf16.mxu0 0
  %2623 = vmatpush1.bf16.msra.mxu0 %v1762
  %2624 = vmatprep.mubr.bf16.mxu0 %v507
  %2625 = vmatmul.mubr.bf16.gmra.mrb[0].mxu0 %v506
  %v2626 = vpop.f32.mrb[0].mxu0
  %v2627 = vadd.f32 %v2586, %v2626
  %v2628 = vpop.f32.mrb[0].mxu0
  %v2629 = vpop.f32.mrb[0].mxu0
  %v2630 = vadd.f32 %v2589, %v2629
  %v2631 = vpop.f32.mrb[0].mxu0
  %2632 = vdwg.mxu0
  %2633 = vmatprep.subr.bf16.mxu0 0
  %2634 = vmatpush1.bf16.msra.mxu0 %v1765
  %2635 = vmatprep.subr.bf16.mxu0 0
  %2636 = vmatpush1.bf16.msra.mxu0 %v1768
  %2637 = vmatprep.subr.bf16.mxu0 0
  %2638 = vmatpush1.bf16.msra.mxu0 %v1771
  %2639 = vmatprep.subr.bf16.mxu0 0
  %2640 = vmatpush1.bf16.msra.mxu0 %v1774
  %2641 = vmatprep.subr.bf16.mxu0 0
  %2642 = vmatpush1.bf16.msra.mxu0 %v1777
  %2643 = vmatprep.subr.bf16.mxu0 0
  %2644 = vmatpush1.bf16.msra.mxu0 %v1780
  %2645 = vmatprep.subr.bf16.mxu0 0
  %2646 = vmatpush1.bf16.msra.mxu0 %v1783
  %2647 = vmatprep.subr.bf16.mxu0 0
  %2648 = vmatpush1.bf16.msra.mxu0 %v1786
  %2649 = vmatprep.subr.bf16.mxu0 0
  %2650 = vmatpush1.bf16.msra.mxu0 %v1789
  %2651 = vmatprep.subr.bf16.mxu0 0
  %2652 = vmatpush1.bf16.msra.mxu0 %v1792
  %2653 = vmatprep.subr.bf16.mxu0 0
  %2654 = vmatpush1.bf16.msra.mxu0 %v1795
  %2655 = vmatprep.subr.bf16.mxu0 0
  %2656 = vmatpush1.bf16.msra.mxu0 %v1798
  %2657 = vmatprep.subr.bf16.mxu0 0
  %2658 = vmatpush1.bf16.msra.mxu0 %v1801
  %2659 = vmatprep.subr.bf16.mxu0 0
  %2660 = vmatpush1.bf16.msra.mxu0 %v1804
  %2661 = vmatprep.subr.bf16.mxu0 0
  %2662 = vmatpush1.bf16.msra.mxu0 %v1807
  %2663 = vmatprep.subr.bf16.mxu0 0
  %2664 = vmatpush1.bf16.msra.mxu0 %v1810
  %2665 = vmatprep.mubr.bf16.mxu0 %v509
  %2666 = vmatmul.mubr.bf16.gmra.mrb[0].mxu0 %v508
  %v2667 = vpop.f32.mrb[0].mxu0
  %v2668 = vadd.f32 %v2627, %v2667
  %v2669 = vpop.f32.mrb[0].mxu0
  %v2670 = vpop.f32.mrb[0].mxu0
  %v2671 = vadd.f32 %v2630, %v2670
  %v2672 = vpop.f32.mrb[0].mxu0
  %2673 = vdwg.mxu0
  %2674 = vmatprep.subr.bf16.mxu0 0
  %2675 = vmatpush1.bf16.msra.mxu0 %v1813
  %2676 = vmatprep.subr.bf16.mxu0 0
  %2677 = vmatpush1.bf16.msra.mxu0 %v1816
  %2678 = vmatprep.subr.bf16.mxu0 0
  %2679 = vmatpush1.bf16.msra.mxu0 %v1819
  %2680 = vmatprep.subr.bf16.mxu0 0
  %2681 = vmatpush1.bf16.msra.mxu0 %v1822
  %2682 = vmatprep.subr.bf16.mxu0 0
  %2683 = vmatpush1.bf16.msra.mxu0 0
  %2684 = vmatprep.subr.bf16.mxu0 0
  %2685 = vmatpush1.bf16.msra.mxu0 0
  %2686 = vmatprep.subr.bf16.mxu0 0
  %2687 = vmatpush1.bf16.msra.mxu0 0
  %2688 = vmatprep.subr.bf16.mxu0 0
  %2689 = vmatpush1.bf16.msra.mxu0 0
  %2690 = vmatprep.subr.bf16.mxu0 0
  %2691 = vmatpush1.bf16.msra.mxu0 0
  %2692 = vmatprep.subr.bf16.mxu0 0
  %2693 = vmatpush1.bf16.msra.mxu0 0
  %2694 = vmatprep.subr.bf16.mxu0 0
  %2695 = vmatpush1.bf16.msra.mxu0 0
  %2696 = vmatprep.subr.bf16.mxu0 0
  %2697 = vmatpush1.bf16.msra.mxu0 0
  %2698 = vmatprep.subr.bf16.mxu0 0
  %2699 = vmatpush1.bf16.msra.mxu0 0
  %2700 = vmatprep.subr.bf16.mxu0 0
  %2701 = vmatpush1.bf16.msra.mxu0 0
  %2702 = vmatprep.subr.bf16.mxu0 0
  %2703 = vmatpush1.bf16.msra.mxu0 0
  %2704 = vmatprep.subr.bf16.mxu0 0
  %2705 = vmatpush1.bf16.msra.mxu0 0
  %2706 = vmatprep.mubr.bf16.mxu0 0
  %2707 = vmatmul.mubr.bf16.gmra.mrb[0].mxu0 %v2125
  %v2708 = vpop.f32.mrb[0].mxu0
  %v2709 = vadd.f32 %v2668, %v2708
  %v2710 = vpop.f32.mrb[0].mxu0
  %v2711 = vpop.f32.mrb[0].mxu0
  %v2712 = vadd.f32 %v2671, %v2711
  %v2713 = vpop.f32.mrb[0].mxu0
  %2714 = vdwg.mxu0
  %v2715 = vmax.f32 %v2420, 0.0
  %v2716 = vmax.f32 %v2422, 0.0
  %v2717 = vmax.f32 %v2709, 0.0
  %v2718 = vmax.f32 %v2424, 0.0
  %v2719 = vmax.f32 %v2426, 0.0
  %v2720 = vmax.f32 %v2712, 0.0
  %v2721 = vpack.c.bf16 %v2718, %v2715
  %v2722 = vpack.c.bf16 %v2719, %v2716
  %v2723 = vpack.c.bf16 %v2720, %v2717
  %v2724 = vld [vmem:[%s3] sm:$0xff]
  %v2725 = vld [vmem:[%s3 + $0x8] sm:$0xff]
  %v2726 = vld [vmem:[%s3 + $0x10] sm:$0xff]
  %v2727 = vld [vmem:[%s3 + $0x18] sm:$0xff]
  %v2728 = vld [vmem:[%s3 + $0x20] sm:$0xff]
  %v2729 = vld [vmem:[%s3 + $0x28] sm:$0xff]
  %v2730 = vld [vmem:[%s3 + $0x30] sm:$0xff]
  %v2731 = vld [vmem:[%s3 + $0x38] sm:$0xff]
  %v2732 = vld [vmem:[%s3 + $0x40] sm:$0xff]
  %v2733 = vld [vmem:[%s3 + $0x48] sm:$0xff]
  %v2734 = vld [vmem:[%s3 + $0x50] sm:$0xff]
  %v2735 = vld [vmem:[%s3 + $0x58] sm:$0xff]
  %v2736 = vld [vmem:[%s3 + $0x60] sm:$0xff]
  %v2737 = vld [vmem:[%s3 + $0x68] sm:$0xff]
  %v2738 = vld [vmem:[%s3 + $0x70] sm:$0xff]
  %v2739 = vld [vmem:[%s3 + $0x78] sm:$0xff]
  %v2740 = vld [vmem:[%s3 + $0x80] sm:$0xff]
  %v2741 = vld [vmem:[%s3 + $0x88] sm:$0xff]
  %v2742 = vld [vmem:[%s3 + $0x90] sm:$0xff]
  %v2743 = vld [vmem:[%s3 + $0x98] sm:$0xff]
  %v2744 = vld [vmem:[%s3 + $0xa0] sm:$0xff]
  %v2745 = vld [vmem:[%s3 + $0xa8] sm:$0xff]
  %v2746 = vld [vmem:[%s3 + $0xb0] sm:$0xff]
  %v2747 = vld [vmem:[%s3 + $0xb8] sm:$0xff]
  %v2748 = vld [vmem:[%s3 + $0xc0] sm:$0xff]
  %v2749 = vld [vmem:[%s3 + $0xc8] sm:$0xff]
  %v2750 = vld [vmem:[%s3 + $0xd0] sm:$0xff]
  %v2751 = vld [vmem:[%s3 + $0xd8] sm:$0xff]
  %v2752 = vld [vmem:[%s3 + $0xe0] sm:$0xff]
  %v2753 = vld [vmem:[%s3 + $0xe8] sm:$0xff]
  %v2754 = vld [vmem:[%s3 + $0xf0] sm:$0xff]
  %v2755 = vld [vmem:[%s3 + $0xf8] sm:$0xff]
  %v2756 = vld [vmem:[%s3 + $0x100] sm:$0xff]
  %v2757 = vld [vmem:[%s3 + $0x108] sm:$0xff]
  %v2758 = vld [vmem:[%s3 + $0x110] sm:$0xff]
  %v2759 = vld [vmem:[%s3 + $0x118] sm:$0xff]
  %v2760 = vld [vmem:[%s3 + $0x120] sm:$0xff]
  %v2761 = vld [vmem:[%s3 + $0x128] sm:$0xff]
  %v2762 = vld [vmem:[%s3 + $0x130] sm:$0xff]
  %v2763 = vld [vmem:[%s3 + $0x138] sm:$0xff]
  %v2764 = vld [vmem:[%s3 + $0x140] sm:$0xff]
  %v2765 = vld [vmem:[%s3 + $0x148] sm:$0xff]
  %v2766 = vld [vmem:[%s3 + $0x150] sm:$0xff]
  %v2767 = vld [vmem:[%s3 + $0x158] sm:$0xff]
  %v2768 = vld [vmem:[%s3 + $0x160] sm:$0xff]
  %v2769 = vld [vmem:[%s3 + $0x168] sm:$0xff]
  %v2770 = vld [vmem:[%s3 + $0x170] sm:$0xff]
  %v2771 = vld [vmem:[%s3 + $0x178] sm:$0xff]
  %v2772 = vld [vmem:[%s4] sm:$0x3]
  %v2774 = vlaneseq
  %v2775 = vshrl.u32 %v2774, 7
  %v2776 = vsub.s32 0, %v2775
  %v2777 = vrot.slane %v2772, %v2776
  %v2778 = vlaneseq
  %v2779 = vshrl.u32 %v2778, 7
  %v2780 = vsub.s32 1, %v2779
  %v2781 = vrot.slane %v2772, %v2780
  %v2832 = vunpack.c.l.b16 %v2724
  %v2833 = vunpack.c.h.b16 %v2724
  %v2834 = vunpack.c.l.b16 %v2725
  %v2835 = vunpack.c.h.b16 %v2725
  %v2836 = vunpack.c.l.b16 %v2726
  %v2837 = vunpack.c.h.b16 %v2726
  %v2838 = vunpack.c.l.b16 %v2727
  %v2839 = vunpack.c.h.b16 %v2727
  %v2840 = vunpack.c.l.b16 %v2728
  %v2841 = vunpack.c.h.b16 %v2728
  %v2842 = vunpack.c.l.b16 %v2729
  %v2843 = vunpack.c.h.b16 %v2729
  %v2844 = vunpack.c.l.b16 %v2730
  %v2845 = vunpack.c.h.b16 %v2730
  %v2846 = vunpack.c.l.b16 %v2731
  %v2847 = vunpack.c.h.b16 %v2731
  %v2848 = vunpack.c.l.b16 %v2732
  %v2849 = vunpack.c.h.b16 %v2732
  %v2850 = vunpack.c.l.b16 %v2733
  %v2851 = vunpack.c.h.b16 %v2733
  %v2852 = vunpack.c.l.b16 %v2734
  %v2853 = vunpack.c.h.b16 %v2734
  %v2854 = vunpack.c.l.b16 %v2735
  %v2855 = vunpack.c.h.b16 %v2735
  %v2856 = vunpack.c.l.b16 %v2736
  %v2857 = vunpack.c.h.b16 %v2736
  %v2858 = vunpack.c.l.b16 %v2737
  %v2859 = vunpack.c.h.b16 %v2737
  %v2860 = vunpack.c.l.b16 %v2738
  %v2861 = vunpack.c.h.b16 %v2738
  %v2862 = vunpack.c.l.b16 %v2739
  %v2863 = vunpack.c.h.b16 %v2739
  %v2864 = vunpack.c.l.b16 %v2740
  %v2865 = vunpack.c.h.b16 %v2740
  %v2866 = vunpack.c.l.b16 %v2741
  %v2867 = vunpack.c.h.b16 %v2741
  %v2868 = vunpack.c.l.b16 %v2742
  %v2869 = vunpack.c.h.b16 %v2742
  %v2870 = vunpack.c.l.b16 %v2743
  %v2871 = vunpack.c.h.b16 %v2743
  %v2872 = vunpack.c.l.b16 %v2744
  %v2873 = vunpack.c.h.b16 %v2744
  %v2874 = vunpack.c.l.b16 %v2745
  %v2875 = vunpack.c.h.b16 %v2745
  %v2876 = vunpack.c.l.b16 %v2746
  %v2877 = vunpack.c.h.b16 %v2746
  %v2878 = vunpack.c.l.b16 %v2747
  %v2879 = vunpack.c.h.b16 %v2747
  %v2880 = vunpack.c.l.b16 %v2748
  %v2881 = vunpack.c.h.b16 %v2748
  %v2882 = vunpack.c.l.b16 %v2749
  %v2883 = vunpack.c.h.b16 %v2749
  %v2884 = vunpack.c.l.b16 %v2750
  %v2885 = vunpack.c.h.b16 %v2750
  %v2886 = vunpack.c.l.b16 %v2751
  %v2887 = vunpack.c.h.b16 %v2751
  %v2888 = vunpack.c.l.b16 %v2752
  %v2889 = vunpack.c.h.b16 %v2752
  %v2890 = vunpack.c.l.b16 %v2753
  %v2891 = vunpack.c.h.b16 %v2753
  %v2892 = vunpack.c.l.b16 %v2754
  %v2893 = vunpack.c.h.b16 %v2754
  %v2894 = vunpack.c.l.b16 %v2755
  %v2895 = vunpack.c.h.b16 %v2755
  %v2896 = vunpack.c.l.b16 %v2756
  %v2897 = vunpack.c.h.b16 %v2756
  %v2898 = vunpack.c.l.b16 %v2757
  %v2899 = vunpack.c.h.b16 %v2757
  %v2900 = vunpack.c.l.b16 %v2758
  %v2901 = vunpack.c.h.b16 %v2758
  %v2902 = vunpack.c.l.b16 %v2759
  %v2903 = vunpack.c.h.b16 %v2759
  %v2904 = vunpack.c.l.b16 %v2760
  %v2905 = vunpack.c.h.b16 %v2760
  %v2906 = vunpack.c.l.b16 %v2761
  %v2907 = vunpack.c.h.b16 %v2761
  %v2908 = vunpack.c.l.b16 %v2762
  %v2909 = vunpack.c.h.b16 %v2762
  %v2910 = vunpack.c.l.b16 %v2763
  %v2911 = vunpack.c.h.b16 %v2763
  %v2912 = vunpack.c.l.b16 %v2764
  %v2913 = vunpack.c.h.b16 %v2764
  %v2914 = vunpack.c.l.b16 %v2765
  %v2915 = vunpack.c.h.b16 %v2765
  %v2916 = vunpack.c.l.b16 %v2766
  %v2917 = vunpack.c.h.b16 %v2766
  %v2918 = vunpack.c.l.b16 %v2767
  %v2919 = vunpack.c.h.b16 %v2767
  %v2920 = vunpack.c.l.b16 %v2768
  %v2921 = vunpack.c.h.b16 %v2768
  %v2922 = vunpack.c.l.b16 %v2769
  %v2923 = vunpack.c.h.b16 %v2769
  %v2924 = vunpack.c.l.b16 %v2770
  %v2925 = vunpack.c.h.b16 %v2770
  %v2926 = vunpack.c.l.b16 %v2771
  %v2927 = vunpack.c.h.b16 %v2771
  %v2928 = vpack.c.b16 %v2834, %v2832
  %v2929 = vpack.c.b16 %v2835, %v2833
  %v2930 = vpack.c.b16 %v2838, %v2836
  %v2931 = vpack.c.b16 %v2839, %v2837
  %v2932 = vpack.c.b16 %v2842, %v2840
  %v2933 = vpack.c.b16 %v2843, %v2841
  %v2934 = vpack.c.b16 %v2846, %v2844
  %v2935 = vpack.c.b16 %v2847, %v2845
  %v2936 = vpack.c.b16 %v2850, %v2848
  %v2937 = vpack.c.b16 %v2851, %v2849
  %v2938 = vpack.c.b16 %v2854, %v2852
  %v2939 = vpack.c.b16 %v2855, %v2853
  %v2940 = vpack.c.b16 %v2858, %v2856
  %v2941 = vpack.c.b16 %v2859, %v2857
  %v2942 = vpack.c.b16 %v2862, %v2860
  %v2943 = vpack.c.b16 %v2863, %v2861
  %v2944 = vpack.c.b16 %v2866, %v2864
  %v2945 = vpack.c.b16 %v2867, %v2865
  %v2946 = vpack.c.b16 %v2870, %v2868
  %v2947 = vpack.c.b16 %v2871, %v2869
  %v2948 = vpack.c.b16 %v2874, %v2872
  %v2949 = vpack.c.b16 %v2875, %v2873
  %v2950 = vpack.c.b16 %v2878, %v2876
  %v2951 = vpack.c.b16 %v2879, %v2877
  %v2952 = vpack.c.b16 %v2882, %v2880
  %v2953 = vpack.c.b16 %v2883, %v2881
  %v2954 = vpack.c.b16 %v2886, %v2884
  %v2955 = vpack.c.b16 %v2887, %v2885
  %v2956 = vpack.c.b16 %v2890, %v2888
  %v2957 = vpack.c.b16 %v2891, %v2889
  %v2958 = vpack.c.b16 %v2894, %v2892
  %v2959 = vpack.c.b16 %v2895, %v2893
  %v2960 = vpack.c.b16 %v2898, %v2896
  %v2961 = vpack.c.b16 %v2899, %v2897
  %v2962 = vpack.c.b16 %v2902, %v2900
  %v2963 = vpack.c.b16 %v2903, %v2901
  %v2964 = vpack.c.b16 %v2906, %v2904
  %v2965 = vpack.c.b16 %v2907, %v2905
  %v2966 = vpack.c.b16 %v2910, %v2908
  %v2967 = vpack.c.b16 %v2911, %v2909
  %v2968 = vpack.c.b16 %v2914, %v2912
  %v2969 = vpack.c.b16 %v2915, %v2913
  %v2970 = vpack.c.b16 %v2918, %v2916
  %v2971 = vpack.c.b16 %v2919, %v2917
  %v2972 = vpack.c.b16 %v2922, %v2920
  %v2973 = vpack.c.b16 %v2923, %v2921
  %v2974 = vpack.c.b16 %v2926, %v2924
  %v2975 = vpack.c.b16 %v2927, %v2925
  %3024 = vmatprep.subr.bf16.mxu0 %v2929
  %3025 = vmatpush1.bf16.msra.mxu0 %v2928
  %3026 = vmatprep.subr.bf16.mxu0 %v2931
  %3027 = vmatpush1.bf16.msra.mxu0 %v2930
  %3028 = vmatprep.subr.bf16.mxu0 %v2933
  %3029 = vmatpush1.bf16.msra.mxu0 %v2932
  %3030 = vmatprep.subr.bf16.mxu0 %v2935
  %3031 = vmatpush1.bf16.msra.mxu0 %v2934
  %3032 = vmatprep.subr.bf16.mxu0 %v2937
  %3033 = vmatpush1.bf16.msra.mxu0 %v2936
  %3034 = vmatprep.subr.bf16.mxu0 %v2939
  %3035 = vmatpush1.bf16.msra.mxu0 %v2938
  %3036 = vmatprep.subr.bf16.mxu0 %v2941
  %3037 = vmatpush1.bf16.msra.mxu0 %v2940
  %3038 = vmatprep.subr.bf16.mxu0 %v2943
  %3039 = vmatpush1.bf16.msra.mxu0 %v2942
  %3040 = vmatprep.subr.bf16.mxu0 %v2945
  %3041 = vmatpush1.bf16.msra.mxu0 %v2944
  %3042 = vmatprep.subr.bf16.mxu0 %v2947
  %3043 = vmatpush1.bf16.msra.mxu0 %v2946
  %3044 = vmatprep.subr.bf16.mxu0 %v2949
  %3045 = vmatpush1.bf16.msra.mxu0 %v2948
  %3046 = vmatprep.subr.bf16.mxu0 %v2951
  %3047 = vmatpush1.bf16.msra.mxu0 %v2950
  %3048 = vmatprep.subr.bf16.mxu0 %v2953
  %3049 = vmatpush1.bf16.msra.mxu0 %v2952
  %3050 = vmatprep.subr.bf16.mxu0 %v2955
  %3051 = vmatpush1.bf16.msra.mxu0 %v2954
  %3052 = vmatprep.subr.bf16.mxu0 %v2957
  %3053 = vmatpush1.bf16.msra.mxu0 %v2956
  %3054 = vmatprep.subr.bf16.mxu0 %v2959
  %3055 = vmatpush1.bf16.msra.mxu0 %v2958
  %3056 = vmatprep.mubr.bf16.mxu0 %v2722
  %3057 = vmatmul.mubr.bf16.gmra.mrb[0].mxu0 %v2721
  %v3058 = vpop.f32.mrb[0].mxu0
  %v3059 = vadd.f32 %v2777, %v3058
  %v3060 = vpop.f32.mrb[0].mxu0
  %v3061 = vadd.f32 %v2781, %v3060
  %v3062 = vpop.f32.mrb[0].mxu0
  %v3063 = vadd.f32 %v2777, %v3062
  %v3064 = vpop.f32.mrb[0].mxu0
  %v3065 = vadd.f32 %v2781, %v3064
  %3066 = vdwg.mxu0
  %3067 = vmatprep.subr.bf16.mxu0 %v2961
  %3068 = vmatpush1.bf16.msra.mxu0 %v2960
  %3069 = vmatprep.subr.bf16.mxu0 %v2963
  %3070 = vmatpush1.bf16.msra.mxu0 %v2962
  %3071 = vmatprep.subr.bf16.mxu0 %v2965
  %3072 = vmatpush1.bf16.msra.mxu0 %v2964
  %3073 = vmatprep.subr.bf16.mxu0 %v2967
  %3074 = vmatpush1.bf16.msra.mxu0 %v2966
  %3075 = vmatprep.subr.bf16.mxu0 %v2969
  %3076 = vmatpush1.bf16.msra.mxu0 %v2968
  %3077 = vmatprep.subr.bf16.mxu0 %v2971
  %3078 = vmatpush1.bf16.msra.mxu0 %v2970
  %3079 = vmatprep.subr.bf16.mxu0 %v2973
  %3080 = vmatpush1.bf16.msra.mxu0 %v2972
  %3081 = vmatprep.subr.bf16.mxu0 %v2975
  %3082 = vmatpush1.bf16.msra.mxu0 %v2974
  %3083 = vmatprep.subr.bf16.mxu0 0
  %3084 = vmatpush1.bf16.msra.mxu0 0
  %3085 = vmatprep.subr.bf16.mxu0 0
  %3086 = vmatpush1.bf16.msra.mxu0 0
  %3087 = vmatprep.subr.bf16.mxu0 0
  %3088 = vmatpush1.bf16.msra.mxu0 0
  %3089 = vmatprep.subr.bf16.mxu0 0
  %3090 = vmatpush1.bf16.msra.mxu0 0
  %3091 = vmatprep.subr.bf16.mxu0 0
  %3092 = vmatpush1.bf16.msra.mxu0 0
  %3093 = vmatprep.subr.bf16.mxu0 0
  %3094 = vmatpush1.bf16.msra.mxu0 0
  %3095 = vmatprep.subr.bf16.mxu0 0
  %3096 = vmatpush1.bf16.msra.mxu0 0
  %3097 = vmatprep.subr.bf16.mxu0 0
  %3098 = vmatpush1.bf16.msra.mxu0 0
  %3099 = vmatprep.mubr.bf16.mxu0 0
  %3100 = vmatmul.mubr.bf16.gmra.mrb[0].mxu0 %v2723
  %v3101 = vpop.f32.mrb[0].mxu0
  %v3102 = vadd.f32 %v3059, %v3101
  %v3103 = vpop.f32.mrb[0].mxu0
  %v3104 = vadd.f32 %v3061, %v3103
  %v3105 = vpop.f32.mrb[0].mxu0
  %v3106 = vadd.f32 %v3063, %v3105
  %v3107 = vpop.f32.mrb[0].mxu0
  %v3108 = vadd.f32 %v3065, %v3107
  %3109 = vdwg.mxu0
  %v3110 = vmax.f32 %v3102, 0.0
  %v3111 = vmax.f32 %v3104, 0.0
  %v3112 = vmax.f32 %v3106, 0.0
  %v3113 = vmax.f32 %v3108, 0.0
  %v3114 = vpack.c.bf16 %v3112, %v3110
  %v3115 = vpack.c.bf16 %v3113, %v3111
  %v3116 = vld [vmem:[%s5] sm:$0xf]
  %v3117 = vld [vmem:[%s5 + $0x4] sm:$0xf]
  %v3118 = vld [vmem:[%s5 + $0x8] sm:$0xf]
  %v3119 = vld [vmem:[%s5 + $0xc] sm:$0xf]
  %v3120 = vld [vmem:[%s5 + $0x10] sm:$0xf]
  %v3121 = vld [vmem:[%s5 + $0x14] sm:$0xf]
  %v3122 = vld [vmem:[%s5 + $0x18] sm:$0xf]
  %v3123 = vld [vmem:[%s5 + $0x1c] sm:$0xf]
  %v3124 = vld [vmem:[%s5 + $0x20] sm:$0xf]
  %v3125 = vld [vmem:[%s5 + $0x24] sm:$0xf]
  %v3126 = vld [vmem:[%s5 + $0x28] sm:$0xf]
  %v3127 = vld [vmem:[%s5 + $0x2c] sm:$0xf]
  %v3128 = vld [vmem:[%s5 + $0x30] sm:$0xf]
  %v3129 = vld [vmem:[%s5 + $0x34] sm:$0xf]
  %v3130 = vld [vmem:[%s5 + $0x38] sm:$0xf]
  %v3131 = vld [vmem:[%s5 + $0x3c] sm:$0xf]
  %v3132 = vld [vmem:[%s5 + $0x40] sm:$0xf]
  %v3133 = vld [vmem:[%s5 + $0x44] sm:$0xf]
  %v3134 = vld [vmem:[%s5 + $0x48] sm:$0xf]
  %v3135 = vld [vmem:[%s5 + $0x4c] sm:$0xf]
  %v3136 = vld [vmem:[%s5 + $0x50] sm:$0xf]
  %v3137 = vld [vmem:[%s5 + $0x54] sm:$0xf]
  %v3138 = vld [vmem:[%s5 + $0x58] sm:$0xf]
  %v3139 = vld [vmem:[%s5 + $0x5c] sm:$0xf]
  %v3140 = vld [vmem:[%s6] sm:$0x1]
  %v3142 = vlaneseq
  %v3143 = vshrl.u32 %v3142, 7
  %v3144 = vsub.s32 0, %v3143
  %v3145 = vrot.slane %v3140, %v3144
  %v3171 = vunpack.c.l.b16 %v3116
  %v3172 = vunpack.c.l.b16 %v3117
  %v3173 = vunpack.c.l.b16 %v3118
  %v3174 = vunpack.c.l.b16 %v3119
  %v3175 = vunpack.c.l.b16 %v3120
  %v3176 = vunpack.c.l.b16 %v3121
  %v3177 = vunpack.c.l.b16 %v3122
  %v3178 = vunpack.c.l.b16 %v3123
  %v3179 = vunpack.c.l.b16 %v3124
  %v3180 = vunpack.c.l.b16 %v3125
  %v3181 = vunpack.c.l.b16 %v3126
  %v3182 = vunpack.c.l.b16 %v3127
  %v3183 = vunpack.c.l.b16 %v3128
  %v3184 = vunpack.c.l.b16 %v3129
  %v3185 = vunpack.c.l.b16 %v3130
  %v3186 = vunpack.c.l.b16 %v3131
  %v3187 = vunpack.c.l.b16 %v3132
  %v3188 = vunpack.c.l.b16 %v3133
  %v3189 = vunpack.c.l.b16 %v3134
  %v3190 = vunpack.c.l.b16 %v3135
  %v3191 = vunpack.c.l.b16 %v3136
  %v3192 = vunpack.c.l.b16 %v3137
  %v3193 = vunpack.c.l.b16 %v3138
  %v3194 = vunpack.c.l.b16 %v3139
  %v3195 = vpack.c.b16 %v3172, %v3171
  %v3196 = vpack.c.b16 %v3174, %v3173
  %v3197 = vpack.c.b16 %v3176, %v3175
  %v3198 = vpack.c.b16 %v3178, %v3177
  %v3199 = vpack.c.b16 %v3180, %v3179
  %v3200 = vpack.c.b16 %v3182, %v3181
  %v3201 = vpack.c.b16 %v3184, %v3183
  %v3202 = vpack.c.b16 %v3186, %v3185
  %v3203 = vpack.c.b16 %v3188, %v3187
  %v3204 = vpack.c.b16 %v3190, %v3189
  %v3205 = vpack.c.b16 %v3192, %v3191
  %v3206 = vpack.c.b16 %v3194, %v3193
  %v3220 = vsel %vm2123, %v3115, 0
  %3222 = vmatprep.subr.bf16.mxu0 0
  %3223 = vmatpush1.bf16.msra.mxu0 %v3195
  %3224 = vmatprep.subr.bf16.mxu0 0
  %3225 = vmatpush1.bf16.msra.mxu0 %v3196
  %3226 = vmatprep.subr.bf16.mxu0 0
  %3227 = vmatpush1.bf16.msra.mxu0 %v3197
  %3228 = vmatprep.subr.bf16.mxu0 0
  %3229 = vmatpush1.bf16.msra.mxu0 %v3198
  %3230 = vmatprep.subr.bf16.mxu0 0
  %3231 = vmatpush1.bf16.msra.mxu0 %v3199
  %3232 = vmatprep.subr.bf16.mxu0 0
  %3233 = vmatpush1.bf16.msra.mxu0 %v3200
  %3234 = vmatprep.subr.bf16.mxu0 0
  %3235 = vmatpush1.bf16.msra.mxu0 %v3201
  %3236 = vmatprep.subr.bf16.mxu0 0
  %3237 = vmatpush1.bf16.msra.mxu0 %v3202
  %3238 = vmatprep.subr.bf16.mxu0 0
  %3239 = vmatpush1.bf16.msra.mxu0 %v3203
  %3240 = vmatprep.subr.bf16.mxu0 0
  %3241 = vmatpush1.bf16.msra.mxu0 %v3204
  %3242 = vmatprep.subr.bf16.mxu0 0
  %3243 = vmatpush1.bf16.msra.mxu0 %v3205
  %3244 = vmatprep.subr.bf16.mxu0 0
  %3245 = vmatpush1.bf16.msra.mxu0 %v3206
  %3246 = vmatprep.subr.bf16.mxu0 0
  %3247 = vmatpush1.bf16.msra.mxu0 0
  %3248 = vmatprep.subr.bf16.mxu0 0
  %3249 = vmatpush1.bf16.msra.mxu0 0
  %3250 = vmatprep.subr.bf16.mxu0 0
  %3251 = vmatpush1.bf16.msra.mxu0 0
  %3252 = vmatprep.subr.bf16.mxu0 0
  %3253 = vmatpush1.bf16.msra.mxu0 0
  %3254 = vmatprep.mubr.bf16.mxu0 %v3220
  %3255 = vmatmul.mubr.bf16.gmra.mrb[0].mxu0 %v3114
  %v3256 = vpop.f32.mrb[0].mxu0
  %v3257 = vadd.f32 %v3145, %v3256
  %v3258 = vpop.f32.mrb[0].mxu0
  %v3259 = vpop.f32.mrb[0].mxu0
  %v3260 = vadd.f32 %v3145, %v3259
  %v3261 = vpop.f32.mrb[0].mxu0
  %3262 = vdwg.mxu0
  %3263 = vmax.xlane.f32.xlu0 %v3257
  %v3264 = vpop.xlane.xlu0 %3263
  %3265 = vmax.xlane.f32.xlu0 %v3260
  %v3266 = vpop.xlane.xlu0 %3265
  %v3267 = vsub.f32 %v3257, %v3264
  %v3268 = vsub.f32 %v3260, %v3266
  %v3269 = vmul.f32 %v3267, 1.442695
  %v3270 = vpow.pop %v3269
  %v3271 = vmul.f32 %v3268, 1.442695
  %v3272 = vpow.pop %v3271
  %3273 = vadd.xlane.f32.xlu0 %v3270
  %v3274 = vpop.xlane.xlu0 %3273
  %3275 = vadd.xlane.f32.xlu0 %v3272
  %v3276 = vpop.xlane.xlu0 %3275
  %v3277 = vlog2.pop %v3274
  %v3278 = vmul.f32 %v3277, 0.6931472
  %v3279 = vlog2.pop %v3276
  %v3280 = vmul.f32 %v3279, 0.6931472
  %v3281 = vsub.f32 %v3267, %v3278
  %v3282 = vsub.f32 %v3268, %v3280
  %3283 = vst [vmem:[%s7] sm:$0xff] %v3281
  %3284 = vst [vmem:[%s7 + $0x8] sm:$0xff] %v3282
  // Predicated region
  $region30: #{lenet5_forward.5} parent=0 // pred_check
    _
  $region31: #{lenet5_forward.5} parent=0 // pred_check_branch
    %3286 = sbr.rel (0) target = $region33
  $region32: #{lenet5_forward.5} parent=0 // pred_region
    _
  $region33: #{lenet5_forward.5} parent=0 // pred_fallthru
    _
  // Predicated region
  $region34: #{lenet5_forward.5} parent=0 // pred_check
    _
  $region35: #{lenet5_forward.5} parent=0 // pred_check_branch
    %3288 = sbr.rel (0) target = $region37
  $region36: #{lenet5_forward.5} parent=0 // pred_region
    _
  $region37: #{lenet5_forward.5} parent=0 // pred_fallthru
    _

</llo_original>
